<compile_context>
chip_gen: v7x
topology: tpu7x:2x2x1
jax: 0.10.0
libtpu: 0.0.40
codegen_flags: <defaults>
</compile_context>

<pallas_src>
import math

import jax
import jax.numpy as jnp
from jax import lax
from jax.experimental import pallas as pl
from jax.experimental.pallas import tpu as pltpu

# ----------------------------- configuration -------------------------------
LATENT_SIZE = 16
QUERY_DIM = 3
DIMS = (32, 32, 32)

D0 = LATENT_SIZE + QUERY_DIM          # 19
D1 = DIMS[0]                          # 32
D2 = DIMS[1] - D0                     # 13  (layer-1 output; layer 2 is in latent_in)
D3 = DIMS[2]                          # 32
DOUT = 1

LN_EPS = 1e-5                         # torch LayerNorm default

# tanh-GELU routes the transcendental to the EUP; False -> exact erf (torch default).
USE_APPROX_GELU = True

# Points per grid step on the 128-lane axis.
MAX_TILE_N = 8192
MIN_TILE_N = 256

# Fits the T=8192 working set (~24 MiB) with margin; <= physical VMEM on
# v5e/v6e (128 MiB) and v7x (64 MiB per TensorCore).
VMEM_LIMIT_BYTES = 40 * 1024 * 1024

# ------------------------- packed-parameter layout ---------------------------
# Weight slab (W_ROWS x 32), all row offsets multiples of 8 sublanes:
#   rows   0: 64, cols 0:16 -> [W0_lat^T ; W2b_lat^T]   (fused input weight, lat half)
#   rows  64:128, cols 0: 3 -> [W0_xyz^T ; W2b_xyz^T]   (fused input weight, xyz half)
#   rows 128:141, cols 0:32 -> W1^T
#   rows 144:176, cols 0:13 -> W2a^T
#   rows 176:177, cols 0:32 -> Wo^T
R_WIN_LAT = 0
R_WIN_XYZ = 64
R_W1 = 128
R_W2A = 144
R_WO = 176
W_ROWS, W_COLS = 184, 32

# Vector slab: bias / gamma / beta stored as columns (feature dim on sublanes).
C_B0, C_G0, C_BE0 = 0, 1, 2
C_B1, C_G1, C_BE1 = 3, 4, 5
C_B2, C_G2, C_BE2 = 6, 7, 8
C_BO = 9
V_ROWS, V_COLS = 32, 16

# Contract the last dim of both operands (A @ B^T), flash-attention style.
_TRANS_B = (((1,), (1,)), ((), ()))


# ------------------------------ kernel helpers ------------------------------
def _gelu(x):
    # approximate=True -> tanh form (EUP); False -> erf (torch.nn.GELU default).
    return jax.nn.gelu(x, approximate=USE_APPROX_GELU)


def _layernorm(h, gamma, beta):
    # Features on axis 0 (sublanes); gamma/beta are (D, 1) lane-broadcasts.
    # One-pass statistics: var = E[x^2] - mean^2 (review micro-opt).
    mean = jnp.mean(h, axis=0, keepdims=True)
    msq = jnp.mean(h * h, axis=0, keepdims=True)
    var = msq - mean * mean
    return (h - mean) * lax.rsqrt(var + LN_EPS) * gamma + beta


# --------------------------------- kernel -----------------------------------
def sdf_decoder_kernel(lat_ref, xyz_ref, w_ref, v_ref, o_ref):
    # Row-major input tiles; cast operands to bf16 once (MXU-native, f32 accum).
    lat = lat_ref[...].astype(jnp.bfloat16)                   # (T, 16)
    xyz = xyz_ref[...].astype(jnp.bfloat16)                   # (T, 3)

    # Static slices of the VMEM-resident parameter slabs (bf16 weights).
    w_in_lat = w_ref[R_WIN_LAT:R_WIN_LAT + 2 * D1, :LATENT_SIZE]   # (64, 16)
    w_in_xyz = w_ref[R_WIN_XYZ:R_WIN_XYZ + 2 * D1, :QUERY_DIM]     # (64, 3)
    w1t = w_ref[R_W1:R_W1 + D2, :D1]                               # (13, 32)
    w2at = w_ref[R_W2A:R_W2A + D3, :D2]                            # (32, 13)
    wot = w_ref[R_WO:R_WO + DOUT, :D3]                             # (1, 32)

    b0, g0, be0 = (v_ref[:D1, C_B0:C_B0 + 1], v_ref[:D1, C_G0:C_G0 + 1],
                   v_ref[:D1, C_BE0:C_BE0 + 1])
    b1, g1, be1 = (v_ref[:D2, C_B1:C_B1 + 1], v_ref[:D2, C_G1:C_G1 + 1],
                   v_ref[:D2, C_BE1:C_BE1 + 1])
    b2, g2, be2 = (v_ref[:D3, C_B2:C_B2 + 1], v_ref[:D3, C_G2:C_G2 + 1],
                   v_ref[:D3, C_BE2:C_BE2 + 1])
    bo = v_ref[:DOUT, C_BO:C_BO + 1]

    # Fused input matmul: each input array streams through the MXU once and
    # produces both the layer-0 pre-activation (rows 0:32) and the W2b @ x term
    # used at layer 2 (rows 32:64), already in the N-on-lanes (64, T) layout.
    pre = (lax.dot_general(w_in_lat, lat, _TRANS_B,
                           preferred_element_type=jnp.float32)
           + lax.dot_general(w_in_xyz, xyz, _TRANS_B,
                             preferred_element_type=jnp.float32))   # (64, T) f32

    # layer 0: Linear(19 -> 32) + LayerNorm + GELU
    h = _gelu(_layernorm(pre[:D1, :] + b0, g0, be0))                 # (32, T)
    xw2b = pre[D1:, :]                                               # (32, T)

    # layer 1: Linear(32 -> 13) + LayerNorm + GELU
    h = jnp.dot(w1t, h.astype(jnp.bfloat16),
                preferred_element_type=jnp.float32) + b1
    h = _gelu(_layernorm(h, g1, be1))                                # (13, T)

    # layer 2 (latent_in): concat(h, x) @ W2  ==  W2a^T @ h + (W2b^T @ x)
    h = (jnp.dot(w2at, h.astype(jnp.bfloat16),
                 preferred_element_type=jnp.float32) + xw2b + b2)
    h = _gelu(_layernorm(h, g2, be2))                                # (32, T)

    # output layer + tanh — lane-dense (1, T) store
    y = jnp.dot(wot, h.astype(jnp.bfloat16),
                preferred_element_type=jnp.float32) + bo
    o_ref[...] = jnp.tanh(y).astype(o_ref.dtype)


# --------------------------------- wrapper ----------------------------------
def _pack_params(params):
    (w0, b0, g0, be0, w1, b1, g1, be1, w2, b2, g2, be2, wo, bo) = params
    # Split weights so no concat is ever needed:
    #   w0  (19, 32): rows 0:16 multiply lat, rows 16:19 multiply xyz
    #   w2  (32, 32): rows 0:13 multiply h (prev layer), rows 13:32 multiply x_input
    w0_lat, w0_xyz = w0[:LATENT_SIZE], w0[LATENT_SIZE:]
    w2a, w2b = w2[:D2], w2[D2:]
    w2b_lat, w2b_xyz = w2b[:LATENT_SIZE], w2b[LATENT_SIZE:]

    wslab = jnp.zeros((W_ROWS, W_COLS), jnp.float32)
    wslab = wslab.at[R_WIN_LAT:R_WIN_LAT + D1, :LATENT_SIZE].set(w0_lat.T)
    wslab = wslab.at[R_WIN_LAT + D1:R_WIN_LAT + 2 * D1, :LATENT_SIZE].set(w2b_lat.T)
    wslab = wslab.at[R_WIN_XYZ:R_WIN_XYZ + D1, :QUERY_DIM].set(w0_xyz.T)
    wslab = wslab.at[R_WIN_XYZ + D1:R_WIN_XYZ + 2 * D1, :QUERY_DIM].set(w2b_xyz.T)
    wslab = wslab.at[R_W1:R_W1 + D2, :D1].set(w1.T)
    wslab = wslab.at[R_W2A:R_W2A + D3, :D2].set(w2a.T)
    wslab = wslab.at[R_WO:R_WO + DOUT, :D3].set(wo.T)
    wslab = wslab.astype(jnp.bfloat16)          # MXU-native weights, tiny slab

    vslab = jnp.zeros((V_ROWS, V_COLS), jnp.float32)
    vslab = vslab.at[:D1, C_B0].set(b0)
    vslab = vslab.at[:D1, C_G0].set(g0)
    vslab = vslab.at[:D1, C_BE0].set(be0)
    vslab = vslab.at[:D2, C_B1].set(b1)
    vslab = vslab.at[:D2, C_G1].set(g1)
    vslab = vslab.at[:D2, C_BE1].set(be1)
    vslab = vslab.at[:D3, C_B2].set(b2)
    vslab = vslab.at[:D3, C_G2].set(g2)
    vslab = vslab.at[:D3, C_BE2].set(be2)
    vslab = vslab.at[:DOUT, C_BO].set(bo)
    return wslab, vslab


def _choose_tile(n):
    # Largest lane-dense tile, shrunk (halving) so the "parallel" grid keeps
    # >= 2 steps when possible (v7x has 2 TensorCores fed by parallel axes;
    # on v5e/v6e the tag is a no-op so no further penalty is taken).
    tile = MAX_TILE_N
    while tile > MIN_TILE_N and pl.cdiv(n, tile) < 2:
        tile //= 2
    return tile


@jax.jit
def sdf_decoder_forward(lat_vecs, xyz, params):
    assert lat_vecs.ndim == 2 and xyz.ndim == 2
    assert lat_vecs.shape[0] == xyz.shape[0]
    assert lat_vecs.shape[1] == LATENT_SIZE and xyz.shape[1] == QUERY_DIM
    n = lat_vecs.shape[0]
    tile_n = _choose_tile(n)
    grid_n = pl.cdiv(n, tile_n)

    wslab, vslab = _pack_params(params)

    out = pl.pallas_call(
        sdf_decoder_kernel,
        out_shape=jax.ShapeDtypeStruct((1, n), jnp.float32),
        grid_spec=pltpu.PrefetchScalarGridSpec(
            num_scalar_prefetch=0,
            grid=(grid_n,),
            in_specs=[
                # Row-major inputs, last dim == full array dim (legal block).
                pl.BlockSpec((tile_n, LATENT_SIZE), lambda i: (i, 0)),
                pl.BlockSpec((tile_n, QUERY_DIM), lambda i: (i, 0)),
                # Parameter slabs stay VMEM-resident across the grid.
                pl.BlockSpec((W_ROWS, W_COLS), lambda i: (0, 0)),
                pl.BlockSpec((V_ROWS, V_COLS), lambda i: (0, 0)),
            ],
            out_specs=pl.BlockSpec((1, tile_n), lambda i: (0, i)),
        ),
        compiler_params=pltpu.CompilerParams(
            dimension_semantics=("parallel",),
            vmem_limit_bytes=VMEM_LIMIT_BYTES,
        ),
    )(lat_vecs, xyz, wslab, vslab)

    # (1, N) -> (N, 1): row-major reshape (free), matching the torch module.
    return out.reshape(n, DOUT)


# ------------------------- pure-JAX reference (check) ------------------------
def sdf_decoder_ref(lat_vecs, xyz, params):
    (w0, b0, g0, be0, w1, b1, g1, be1, w2, b2, g2, be2, wo, bo) = params
    x = jnp.concatenate([lat_vecs, xyz], axis=-1).astype(jnp.float32)
    x_input = x

    def dot(a, b):
        # Same bf16-operand / f32-accumulate regime the kernel's MXU dots use.
        return jnp.dot(a.astype(jnp.bfloat16), b.astype(jnp.bfloat16),
                       preferred_element_type=jnp.float32)

    def ln(h, g, b):
        m = jnp.mean(h, axis=-1, keepdims=True)
        v = jnp.mean(jnp.square(h - m), axis=-1, keepdims=True)
        return (h - m) / jnp.sqrt(v + LN_EPS) * g + b

    def gelu(h):
        return jax.nn.gelu(h, approximate=USE_APPROX_GELU)

    h = gelu(ln(dot(x, w0) + b0, g0, be0))
    h = gelu(ln(dot(h, w1) + b1, g1, be1))
    h = jnp.concatenate([h, x_input], axis=1)
    h = gelu(ln(dot(h, w2) + b2, g2, be2))
    return jnp.tanh(dot(h, wo) + bo)


# ---------------------------------- main -------------------------------------
def init_params(key):
    keys = jax.random.split(key, 4)

    def linear(kw, din, dout):
        bound = 1.0 / math.sqrt(din)
        w = jax.random.uniform(kw, (din, dout), jnp.float32, -bound, bound)
        b = jax.random.uniform(jax.random.fold_in(kw, 1), (dout,), jnp.float32,
                               -bound, bound)
        return w, b

    w0, b0 = linear(keys[0], D0, D1)
    w1, b1 = linear(keys[1], D1, D2)
    w2, b2 = linear(keys[2], D2 + D0, D3)   # layer-2 input is concat(h, x_input)
    wo, bo = linear(keys[3], D3, DOUT)
    g0, be0 = jnp.ones((D1,), jnp.float32), jnp.zeros((D1,), jnp.float32)
    g1, be1 = jnp.ones((D2,), jnp.float32), jnp.zeros((D2,), jnp.float32)
    g2, be2 = jnp.ones((D3,), jnp.float32), jnp.zeros((D3,), jnp.float32)
    return (w0, b0, g0, be0, w1, b1, g1, be1, w2, b2, g2, be2, wo, bo)


if __name__ == "__main__":
    key = jax.random.PRNGKey(0)
    k_lat, k_xyz, k_par = jax.random.split(key, 3)

    # N deliberately NOT a multiple of the tile or of 128: exercises pl.cdiv,
    # partial tail blocks on inputs and output, and a 2-step parallel grid.
    N = 3000
    lat_vecs = jax.random.normal(k_lat, (N, LATENT_SIZE), jnp.float32)
    xyz = jax.random.normal(k_xyz, (N, QUERY_DIM), jnp.float32)
    params = init_params(k_par)

    out = jax.block_until_ready(sdf_decoder_forward(lat_vecs, xyz, params))

    ref = sdf_decoder_ref(lat_vecs, xyz, params)
    assert out.shape == (N, DOUT)
    max_err = float(jnp.max(jnp.abs(out - ref)))
    # Both sides use bf16 MXU operands with f32 accumulation; remaining diffs
    # come from accumulation order / LN reduction order only.
    assert jnp.allclose(out, ref, atol=5e-3, rtol=5e-3), (
        f"mismatch vs reference (max abs err {max_err})")

    print("KERNEL_OK")
</pallas_src>

<mosaic_0001>
module attributes {stable_mosaic.version = 11 : i64} {
  func.func @sdf_decoder_kernel(%arg0: i32, %arg1: memref<2048x16xf32, #tpu.memory_space<vmem>>, %arg2: memref<2048x3xf32, #tpu.memory_space<vmem>>, %arg3: memref<184x32xbf16, #tpu.memory_space<vmem>>, %arg4: memref<32x16xf32, #tpu.memory_space<vmem>>, %arg5: memref<1x2048xf32, #tpu.memory_space<vmem>>) attributes {dimension_semantics = [#tpu.dimension_semantics<parallel>], iteration_bounds = array<i64: 2>, scalar_prefetch = 0 : i64, scratch_operands = 0 : i64, tpu.core_type = #tpu.core_type<tc>, window_params = [{transform_indices = @transform_0, window_bounds = array<i64: 2048, 16>}, {transform_indices = @transform_1, window_bounds = array<i64: 2048, 3>}, {pipeline_mode = #tpu.pipeline_mode<synchronous>, transform_indices = @transform_2, window_bounds = array<i64: 184, 32>}, {pipeline_mode = #tpu.pipeline_mode<synchronous>, transform_indices = @transform_3, window_bounds = array<i64: 32, 16>}, {transform_indices = @transform_4, window_bounds = array<i64: 1, 2048>}]} {
    %c0 = arith.constant 0 : index
    %c0_0 = arith.constant 0 : index
    %0 = vector.load %arg1[%c0, %c0_0] : memref<2048x16xf32, #tpu.memory_space<vmem>>, vector<2048x16xf32>
    %1 = arith.truncf %0 : vector<2048x16xf32> to vector<2048x16xbf16>
    %c0_1 = arith.constant 0 : index
    %c0_2 = arith.constant 0 : index
    %2 = vector.load %arg2[%c0_1, %c0_2] : memref<2048x3xf32, #tpu.memory_space<vmem>>, vector<2048x3xf32>
    %3 = arith.truncf %2 : vector<2048x3xf32> to vector<2048x3xbf16>
    %c0_3 = arith.constant 0 : index
    %c0_4 = arith.constant 0 : index
    %4 = vector.load %arg3[%c0_3, %c0_4] : memref<184x32xbf16, #tpu.memory_space<vmem>>, vector<64x16xbf16>
    %c64 = arith.constant 64 : index
    %c0_5 = arith.constant 0 : index
    %5 = vector.load %arg3[%c64, %c0_5] : memref<184x32xbf16, #tpu.memory_space<vmem>>, vector<64x3xbf16>
    %c128 = arith.constant 128 : index
    %c0_6 = arith.constant 0 : index
    %6 = vector.load %arg3[%c128, %c0_6] : memref<184x32xbf16, #tpu.memory_space<vmem>>, vector<13x32xbf16>
    %c144 = arith.constant 144 : index
    %c0_7 = arith.constant 0 : index
    %7 = vector.load %arg3[%c144, %c0_7] : memref<184x32xbf16, #tpu.memory_space<vmem>>, vector<32x13xbf16>
    %c176 = arith.constant 176 : index
    %c0_8 = arith.constant 0 : index
    %8 = vector.load %arg3[%c176, %c0_8] : memref<184x32xbf16, #tpu.memory_space<vmem>>, vector<1x32xbf16>
    %c0_9 = arith.constant 0 : index
    %c0_10 = arith.constant 0 : index
    %9 = vector.load %arg4[%c0_9, %c0_10] : memref<32x16xf32, #tpu.memory_space<vmem>>, vector<32x1xf32>
    %c0_11 = arith.constant 0 : index
    %c1 = arith.constant 1 : index
    %10 = vector.load %arg4[%c0_11, %c1] : memref<32x16xf32, #tpu.memory_space<vmem>>, vector<32x1xf32>
    %c0_12 = arith.constant 0 : index
    %c2 = arith.constant 2 : index
    %11 = vector.load %arg4[%c0_12, %c2] : memref<32x16xf32, #tpu.memory_space<vmem>>, vector<32x1xf32>
    %c0_13 = arith.constant 0 : index
    %c3 = arith.constant 3 : index
    %12 = vector.load %arg4[%c0_13, %c3] : memref<32x16xf32, #tpu.memory_space<vmem>>, vector<13x1xf32>
    %c0_14 = arith.constant 0 : index
    %c4 = arith.constant 4 : index
    %13 = vector.load %arg4[%c0_14, %c4] : memref<32x16xf32, #tpu.memory_space<vmem>>, vector<13x1xf32>
    %c0_15 = arith.constant 0 : index
    %c5 = arith.constant 5 : index
    %14 = vector.load %arg4[%c0_15, %c5] : memref<32x16xf32, #tpu.memory_space<vmem>>, vector<13x1xf32>
    %c0_16 = arith.constant 0 : index
    %c6 = arith.constant 6 : index
    %15 = vector.load %arg4[%c0_16, %c6] : memref<32x16xf32, #tpu.memory_space<vmem>>, vector<32x1xf32>
    %c0_17 = arith.constant 0 : index
    %c7 = arith.constant 7 : index
    %16 = vector.load %arg4[%c0_17, %c7] : memref<32x16xf32, #tpu.memory_space<vmem>>, vector<32x1xf32>
    %c0_18 = arith.constant 0 : index
    %c8 = arith.constant 8 : index
    %17 = vector.load %arg4[%c0_18, %c8] : memref<32x16xf32, #tpu.memory_space<vmem>>, vector<32x1xf32>
    %c0_19 = arith.constant 0 : index
    %c9 = arith.constant 9 : index
    %18 = vector.load %arg4[%c0_19, %c9] : memref<32x16xf32, #tpu.memory_space<vmem>>, vector<1x1xf32>
    %cst = arith.constant dense<0.000000e+00> : vector<64x2048xf32>
    %19 = tpu.matmul %4, %1, %cst {dimension_numbers = #tpu.dot_dimension_numbers<[1], [1], [0], [0], [0, 0, 1, 0], [], []>} : vector<64x16xbf16>, vector<2048x16xbf16>, vector<64x2048xf32> -> vector<64x2048xf32>
    %cst_20 = arith.constant dense<0.000000e+00> : vector<64x2048xf32>
    %20 = tpu.matmul %5, %3, %cst_20 {dimension_numbers = #tpu.dot_dimension_numbers<[1], [1], [0], [0], [0, 0, 1, 0], [], []>} : vector<64x3xbf16>, vector<2048x3xbf16>, vector<64x2048xf32> -> vector<64x2048xf32>
    %21 = arith.addf %19, %20 : vector<64x2048xf32>
    %22 = vector.extract_strided_slice %21 {offsets = [0, 0], sizes = [32, 2048], strides = [1, 1]} : vector<64x2048xf32> to vector<32x2048xf32>
    %23 = vector.broadcast %9 : vector<32x1xf32> to vector<32x2048xf32>
    %24 = arith.addf %22, %23 : vector<32x2048xf32>
    %cst_21 = arith.constant dense<0.000000e+00> : vector<2048xf32>
    %25 = vector.multi_reduction <add>, %24, %cst_21 [0] : vector<32x2048xf32> to vector<2048xf32>
    %26 = vector.shape_cast %25 : vector<2048xf32> to vector<1x2048xf32>
    %cst_22 = arith.constant 3.200000e+01 : f32
    %27 = vector.broadcast %cst_22 : f32 to vector<1x2048xf32>
    %28 = arith.divf %26, %27 : vector<1x2048xf32>
    %29 = arith.mulf %24, %24 : vector<32x2048xf32>
    %cst_23 = arith.constant dense<0.000000e+00> : vector<2048xf32>
    %30 = vector.multi_reduction <add>, %29, %cst_23 [0] : vector<32x2048xf32> to vector<2048xf32>
    %31 = vector.shape_cast %30 : vector<2048xf32> to vector<1x2048xf32>
    %cst_24 = arith.constant 3.200000e+01 : f32
    %32 = vector.broadcast %cst_24 : f32 to vector<1x2048xf32>
    %33 = arith.divf %31, %32 : vector<1x2048xf32>
    %34 = arith.mulf %28, %28 : vector<1x2048xf32>
    %35 = arith.subf %33, %34 : vector<1x2048xf32>
    %36 = vector.broadcast %28 : vector<1x2048xf32> to vector<32x2048xf32>
    %37 = arith.subf %24, %36 : vector<32x2048xf32>
    %cst_25 = arith.constant 9.99999974E-6 : f32
    %38 = vector.broadcast %cst_25 : f32 to vector<1x2048xf32>
    %39 = arith.addf %35, %38 : vector<1x2048xf32>
    %40 = math.rsqrt %39 : vector<1x2048xf32>
    %41 = vector.broadcast %40 : vector<1x2048xf32> to vector<32x2048xf32>
    %42 = arith.mulf %37, %41 : vector<32x2048xf32>
    %43 = vector.broadcast %10 : vector<32x1xf32> to vector<32x2048xf32>
    %44 = arith.mulf %42, %43 : vector<32x2048xf32>
    %45 = vector.broadcast %11 : vector<32x1xf32> to vector<32x2048xf32>
    %46 = arith.addf %44, %45 : vector<32x2048xf32>
    %47 = arith.mulf %46, %46 : vector<32x2048xf32>
    %48 = arith.mulf %46, %47 : vector<32x2048xf32>
    %cst_26 = arith.constant 4.471500e-02 : f32
    %49 = vector.broadcast %cst_26 : f32 to vector<32x2048xf32>
    %50 = arith.mulf %49, %48 : vector<32x2048xf32>
    %51 = arith.addf %46, %50 : vector<32x2048xf32>
    %cst_27 = arith.constant 0.797884583 : f32
    %52 = vector.broadcast %cst_27 : f32 to vector<32x2048xf32>
    %53 = arith.mulf %52, %51 : vector<32x2048xf32>
    %54 = math.tanh %53 : vector<32x2048xf32>
    %cst_28 = arith.constant 1.000000e+00 : f32
    %55 = vector.broadcast %cst_28 : f32 to vector<32x2048xf32>
    %56 = arith.addf %55, %54 : vector<32x2048xf32>
    %cst_29 = arith.constant 5.000000e-01 : f32
    %57 = vector.broadcast %cst_29 : f32 to vector<32x2048xf32>
    %58 = arith.mulf %57, %56 : vector<32x2048xf32>
    %59 = arith.mulf %46, %58 : vector<32x2048xf32>
    %60 = vector.extract_strided_slice %21 {offsets = [32, 0], sizes = [32, 2048], strides = [1, 1]} : vector<64x2048xf32> to vector<32x2048xf32>
    %61 = arith.truncf %59 : vector<32x2048xf32> to vector<32x2048xbf16>
    %cst_30 = arith.constant dense<0.000000e+00> : vector<13x2048xf32>
    %62 = tpu.matmul %6, %61, %cst_30 {dimension_numbers = #tpu.dot_dimension_numbers<[1], [0], [0], [1], [0, 0, 1, 1], [], []>} : vector<13x32xbf16>, vector<32x2048xbf16>, vector<13x2048xf32> -> vector<13x2048xf32>
    %63 = vector.broadcast %12 : vector<13x1xf32> to vector<13x2048xf32>
    %64 = arith.addf %62, %63 : vector<13x2048xf32>
    %cst_31 = arith.constant dense<0.000000e+00> : vector<2048xf32>
    %65 = vector.multi_reduction <add>, %64, %cst_31 [0] : vector<13x2048xf32> to vector<2048xf32>
    %66 = vector.shape_cast %65 : vector<2048xf32> to vector<1x2048xf32>
    %cst_32 = arith.constant 1.300000e+01 : f32
    %67 = vector.broadcast %cst_32 : f32 to vector<1x2048xf32>
    %68 = arith.divf %66, %67 : vector<1x2048xf32>
    %69 = arith.mulf %64, %64 : vector<13x2048xf32>
    %cst_33 = arith.constant dense<0.000000e+00> : vector<2048xf32>
    %70 = vector.multi_reduction <add>, %69, %cst_33 [0] : vector<13x2048xf32> to vector<2048xf32>
    %71 = vector.shape_cast %70 : vector<2048xf32> to vector<1x2048xf32>
    %cst_34 = arith.constant 1.300000e+01 : f32
    %72 = vector.broadcast %cst_34 : f32 to vector<1x2048xf32>
    %73 = arith.divf %71, %72 : vector<1x2048xf32>
    %74 = arith.mulf %68, %68 : vector<1x2048xf32>
    %75 = arith.subf %73, %74 : vector<1x2048xf32>
    %76 = vector.broadcast %68 : vector<1x2048xf32> to vector<13x2048xf32>
    %77 = arith.subf %64, %76 : vector<13x2048xf32>
    %cst_35 = arith.constant 9.99999974E-6 : f32
    %78 = vector.broadcast %cst_35 : f32 to vector<1x2048xf32>
    %79 = arith.addf %75, %78 : vector<1x2048xf32>
    %80 = math.rsqrt %79 : vector<1x2048xf32>
    %81 = vector.broadcast %80 : vector<1x2048xf32> to vector<13x2048xf32>
    %82 = arith.mulf %77, %81 : vector<13x2048xf32>
    %83 = vector.broadcast %13 : vector<13x1xf32> to vector<13x2048xf32>
    %84 = arith.mulf %82, %83 : vector<13x2048xf32>
    %85 = vector.broadcast %14 : vector<13x1xf32> to vector<13x2048xf32>
    %86 = arith.addf %84, %85 : vector<13x2048xf32>
    %87 = arith.mulf %86, %86 : vector<13x2048xf32>
    %88 = arith.mulf %86, %87 : vector<13x2048xf32>
    %cst_36 = arith.constant 4.471500e-02 : f32
    %89 = vector.broadcast %cst_36 : f32 to vector<13x2048xf32>
    %90 = arith.mulf %89, %88 : vector<13x2048xf32>
    %91 = arith.addf %86, %90 : vector<13x2048xf32>
    %cst_37 = arith.constant 0.797884583 : f32
    %92 = vector.broadcast %cst_37 : f32 to vector<13x2048xf32>
    %93 = arith.mulf %92, %91 : vector<13x2048xf32>
    %94 = math.tanh %93 : vector<13x2048xf32>
    %cst_38 = arith.constant 1.000000e+00 : f32
    %95 = vector.broadcast %cst_38 : f32 to vector<13x2048xf32>
    %96 = arith.addf %95, %94 : vector<13x2048xf32>
    %cst_39 = arith.constant 5.000000e-01 : f32
    %97 = vector.broadcast %cst_39 : f32 to vector<13x2048xf32>
    %98 = arith.mulf %97, %96 : vector<13x2048xf32>
    %99 = arith.mulf %86, %98 : vector<13x2048xf32>
    %100 = arith.truncf %99 : vector<13x2048xf32> to vector<13x2048xbf16>
    %cst_40 = arith.constant dense<0.000000e+00> : vector<32x2048xf32>
    %101 = tpu.matmul %7, %100, %cst_40 {dimension_numbers = #tpu.dot_dimension_numbers<[1], [0], [0], [1], [0, 0, 1, 1], [], []>} : vector<32x13xbf16>, vector<13x2048xbf16>, vector<32x2048xf32> -> vector<32x2048xf32>
    %102 = arith.addf %101, %60 : vector<32x2048xf32>
    %103 = vector.broadcast %15 : vector<32x1xf32> to vector<32x2048xf32>
    %104 = arith.addf %102, %103 : vector<32x2048xf32>
    %cst_41 = arith.constant dense<0.000000e+00> : vector<2048xf32>
    %105 = vector.multi_reduction <add>, %104, %cst_41 [0] : vector<32x2048xf32> to vector<2048xf32>
    %106 = vector.shape_cast %105 : vector<2048xf32> to vector<1x2048xf32>
    %cst_42 = arith.constant 3.200000e+01 : f32
    %107 = vector.broadcast %cst_42 : f32 to vector<1x2048xf32>
    %108 = arith.divf %106, %107 : vector<1x2048xf32>
    %109 = arith.mulf %104, %104 : vector<32x2048xf32>
    %cst_43 = arith.constant dense<0.000000e+00> : vector<2048xf32>
    %110 = vector.multi_reduction <add>, %109, %cst_43 [0] : vector<32x2048xf32> to vector<2048xf32>
    %111 = vector.shape_cast %110 : vector<2048xf32> to vector<1x2048xf32>
    %cst_44 = arith.constant 3.200000e+01 : f32
    %112 = vector.broadcast %cst_44 : f32 to vector<1x2048xf32>
    %113 = arith.divf %111, %112 : vector<1x2048xf32>
    %114 = arith.mulf %108, %108 : vector<1x2048xf32>
    %115 = arith.subf %113, %114 : vector<1x2048xf32>
    %116 = vector.broadcast %108 : vector<1x2048xf32> to vector<32x2048xf32>
    %117 = arith.subf %104, %116 : vector<32x2048xf32>
    %cst_45 = arith.constant 9.99999974E-6 : f32
    %118 = vector.broadcast %cst_45 : f32 to vector<1x2048xf32>
    %119 = arith.addf %115, %118 : vector<1x2048xf32>
    %120 = math.rsqrt %119 : vector<1x2048xf32>
    %121 = vector.broadcast %120 : vector<1x2048xf32> to vector<32x2048xf32>
    %122 = arith.mulf %117, %121 : vector<32x2048xf32>
    %123 = vector.broadcast %16 : vector<32x1xf32> to vector<32x2048xf32>
    %124 = arith.mulf %122, %123 : vector<32x2048xf32>
    %125 = vector.broadcast %17 : vector<32x1xf32> to vector<32x2048xf32>
    %126 = arith.addf %124, %125 : vector<32x2048xf32>
    %127 = arith.mulf %126, %126 : vector<32x2048xf32>
    %128 = arith.mulf %126, %127 : vector<32x2048xf32>
    %cst_46 = arith.constant 4.471500e-02 : f32
    %129 = vector.broadcast %cst_46 : f32 to vector<32x2048xf32>
    %130 = arith.mulf %129, %128 : vector<32x2048xf32>
    %131 = arith.addf %126, %130 : vector<32x2048xf32>
    %cst_47 = arith.constant 0.797884583 : f32
    %132 = vector.broadcast %cst_47 : f32 to vector<32x2048xf32>
    %133 = arith.mulf %132, %131 : vector<32x2048xf32>
    %134 = math.tanh %133 : vector<32x2048xf32>
    %cst_48 = arith.constant 1.000000e+00 : f32
    %135 = vector.broadcast %cst_48 : f32 to vector<32x2048xf32>
    %136 = arith.addf %135, %134 : vector<32x2048xf32>
    %cst_49 = arith.constant 5.000000e-01 : f32
    %137 = vector.broadcast %cst_49 : f32 to vector<32x2048xf32>
    %138 = arith.mulf %137, %136 : vector<32x2048xf32>
    %139 = arith.mulf %126, %138 : vector<32x2048xf32>
    %140 = arith.truncf %139 : vector<32x2048xf32> to vector<32x2048xbf16>
    %cst_50 = arith.constant dense<0.000000e+00> : vector<1x2048xf32>
    %141 = tpu.matmul %8, %140, %cst_50 {dimension_numbers = #tpu.dot_dimension_numbers<[1], [0], [0], [1], [0, 0, 1, 1], [], []>} : vector<1x32xbf16>, vector<32x2048xbf16>, vector<1x2048xf32> -> vector<1x2048xf32>
    %142 = vector.broadcast %18 : vector<1x1xf32> to vector<1x2048xf32>
    %143 = arith.addf %141, %142 : vector<1x2048xf32>
    %144 = math.tanh %143 : vector<1x2048xf32>
    %c0_51 = arith.constant 0 : index
    %c0_52 = arith.constant 0 : index
    %145 = vector.load %arg5[%c0_51, %c0_52] : memref<1x2048xf32, #tpu.memory_space<vmem>>, vector<1x2048xf32>
    tpu.vector_store %arg5[%c0_51, %c0_52], %144 {strides = array<i32>} : memref<1x2048xf32, #tpu.memory_space<vmem>>, vector<1x2048xf32>,
    return
  }
  func.func @transform_0(%arg0: i32) -> (i32, i32) {
    %c0_i32 = arith.constant 0 : i32
    %c0_i32_0 = arith.constant 0 : i32
    return %arg0, %c0_i32 : i32, i32
  }
  func.func @transform_1(%arg0: i32) -> (i32, i32) {
    %c0_i32 = arith.constant 0 : i32
    %c0_i32_0 = arith.constant 0 : i32
    return %arg0, %c0_i32 : i32, i32
  }
  func.func @transform_2(%arg0: i32) -> (i32, i32) {
    %c0_i32 = arith.constant 0 : i32
    %c0_i32_0 = arith.constant 0 : i32
    %c0_i32_1 = arith.constant 0 : i32
    return %c0_i32, %c0_i32_0 : i32, i32
  }
  func.func @transform_3(%arg0: i32) -> (i32, i32) {
    %c0_i32 = arith.constant 0 : i32
    %c0_i32_0 = arith.constant 0 : i32
    %c0_i32_1 = arith.constant 0 : i32
    return %c0_i32, %c0_i32_0 : i32, i32
  }
  func.func @transform_4(%arg0: i32) -> (i32, i32) {
    %c0_i32 = arith.constant 0 : i32
    %c0_i32_0 = arith.constant 0 : i32
    return %c0_i32, %arg0 : i32, i32
  }
}

</mosaic_0001>

<llo_original>
// kernel: sdf_decoder_forward.1
$region0: #{sdf_decoder_forward.1}
  #allocation0 [shape = 'u32[]', space=smem, size = 0x4, offset = 0x4, fixed_abs, tag = 'smem constant byte address 0x4 - core index']
  #allocation1 [shape = 'u32[144,128]{1,0:T(1,128)}', space=vmem, size = 0x12000, scoped, tag = 'internal scratch']
  %s0 = inlined_call_operand.vmem [shape: f32[3000,16], index: 0, kind: input, shape index: {}]
  %s1 = inlined_call_operand.vmem [shape: f32[3000,3], index: 1, kind: input, shape index: {}]
  %s2 = inlined_call_operand.vmem [shape: bf16[184,32], index: 2, kind: input, shape index: {}]
  %s3 = inlined_call_operand.vmem [shape: f32[32,16], index: 3, kind: input, shape index: {}]
  %s4 = inlined_call_operand.hbm [shape: f32[1,3000], index: 4, kind: output, shape index: {}]
  %s5 = sld [smem:[#allocation0]]
  $region49: #{sdf_decoder_forward.1} parent=0
    _
  %s7 = ssub.s32 1, %s5
  %s8 = scalar_select 0, %s7, %s5
  $region1: #{sdf_decoder_forward.1} parent=0
    #allocation2 [shape = 'u8[16384]{0}', space=vmem, size = 0x4000, scoped, tag = 'output window, operand 0']
    #allocation3 [shape = 's32[2]{0}', space=sflag, size = 0x8, scoped, tag = 'scoped memory for sdf_decoder_forward.1']
    %9 = vsyncpa [#allocation3], 0
    %s10 = scalar_lea.sflag [#allocation3], 1
    %11 = vsyncpa %s10, 0
    loop: start=0, step=1, limit=4
    $region2: #{sdf_decoder_forward.1} parent=1 // loop_pre_header
      _
    $region3: #{sdf_decoder_forward.1} parent=1 // loop_header
      %s13 = sphi 0, %s17
      %p14 = scmp.ge.s32.totalorder %s13, 4
      %s23 = sphi 0, %s25
      %s26 = sphi 0, %s23
      %s27 = sphi 0, %s26
      %s43 = sphi 0, %s27
      %s49 = sphi 0, %s51
      %s52 = sphi 0, %s49
      %s53 = sphi 0, %s52
      %s69 = sphi 0, %s53
      %s73 = sphi 0, %s73
      %s75 = sphi 0, %s73
      %s76 = sphi 0, %s75
      %s90 = sphi 0, %s76
      %s94 = sphi 0, %s94
      %s96 = sphi 0, %s94
      %s97 = sphi 0, %s96
      %s111 = sphi 0, %s97
      %s117 = sphi 0, %s119
      %s120 = sphi 0, %s117
      %s121 = sphi 0, %s120
      %s137 = sphi 0, %s121
    $region4: #{sdf_decoder_forward.1} parent=1 // loop_header_branch
      %16 = sbr.rel (%p14) target = $region8
    $region5: #{sdf_decoder_forward.1} parent=1 // loop_body
      %s18 = ssub.s32 %s13, 1
      %s19 = ssub.s32 %s13, 2
      %s20 = sadd.s32 %s13, 1
      %s21 = ssub.s32 %s13, %s20
      %p22 = scmp.eq.s32.totalorder %s21, 0
      %s24 = sadd.s32 %s23, 1
      %s25 = scalar_select %p22, %s23, %s24
      %p28 = pneg %p22
      %p29 = scmp.eq.s32.totalorder %s13, 1
      %p30 = por %p28, %p29
      %p31 = scmp.ne.s32.totalorder %s23, %s26
      %p32 = scmp.eq.s32.totalorder %s13, 0
      %p33 = por %p31, %p32
      %p34 = scmp.ne.s32.totalorder %s23, %s26
      %p35 = scmp.eq.s32.totalorder %s18, 1
      %p36 = por %p34, %p35
      %p37 = scmp.ne.s32.totalorder %s26, %s27
      %p38 = scmp.eq.s32.totalorder %s18, 0
      %p39 = por %p37, %p38
      %p40 = scmp.ne.s32.totalorder %s26, %s27
      %p41 = scmp.eq.s32.totalorder %s19, 1
      %p42 = por %p40, %p41
      %p44 = scmp.ne.s32.totalorder %s27, %s43
      %p45 = scmp.eq.s32.totalorder %s19, 0
      %p46 = por %p44, %p45
      %s47 = ssub.s32 %s13, %s20
      %p48 = scmp.eq.s32.totalorder %s47, 0
      %s50 = sadd.s32 %s49, 1
      %s51 = scalar_select %p48, %s49, %s50
      %p54 = pneg %p48
      %p55 = scmp.eq.s32.totalorder %s13, 1
      %p56 = por %p54, %p55
      %p57 = scmp.ne.s32.totalorder %s49, %s52
      %p58 = scmp.eq.s32.totalorder %s13, 0
      %p59 = por %p57, %p58
      %p60 = scmp.ne.s32.totalorder %s49, %s52
      %p61 = scmp.eq.s32.totalorder %s18, 1
      %p62 = por %p60, %p61
      %p63 = scmp.ne.s32.totalorder %s52, %s53
      %p64 = scmp.eq.s32.totalorder %s18, 0
      %p65 = por %p63, %p64
      %p66 = scmp.ne.s32.totalorder %s52, %s53
      %p67 = scmp.eq.s32.totalorder %s19, 1
      %p68 = por %p66, %p67
      %p70 = scmp.ne.s32.totalorder %s53, %s69
      %p71 = scmp.eq.s32.totalorder %s19, 0
      %p72 = por %p70, %p71
      %s74 = sadd.s32 %s73, 1
      %p77 = scmp.eq.s32.totalorder %s13, 1
      %p78 = scmp.ne.s32.totalorder %s73, %s75
      %p79 = scmp.eq.s32.totalorder %s13, 0
      %p80 = por %p78, %p79
      %p81 = scmp.ne.s32.totalorder %s73, %s75
      %p82 = scmp.eq.s32.totalorder %s18, 1
      %p83 = por %p81, %p82
      %p84 = scmp.ne.s32.totalorder %s75, %s76
      %p85 = scmp.eq.s32.totalorder %s18, 0
      %p86 = por %p84, %p85
      %p87 = scmp.ne.s32.totalorder %s75, %s76
      %p88 = scmp.eq.s32.totalorder %s19, 1
      %p89 = por %p87, %p88
      %p91 = scmp.ne.s32.totalorder %s76, %s90
      %p92 = scmp.eq.s32.totalorder %s19, 0
      %p93 = por %p91, %p92
      %s95 = sadd.s32 %s94, 1
      %p98 = scmp.eq.s32.totalorder %s13, 1
      %p99 = scmp.ne.s32.totalorder %s94, %s96
      %p100 = scmp.eq.s32.totalorder %s13, 0
      %p101 = por %p99, %p100
      %p102 = scmp.ne.s32.totalorder %s94, %s96
      %p103 = scmp.eq.s32.totalorder %s18, 1
      %p104 = por %p102, %p103
      %p105 = scmp.ne.s32.totalorder %s96, %s97
      %p106 = scmp.eq.s32.totalorder %s18, 0
      %p107 = por %p105, %p106
      %p108 = scmp.ne.s32.totalorder %s96, %s97
      %p109 = scmp.eq.s32.totalorder %s19, 1
      %p110 = por %p108, %p109
      %p112 = scmp.ne.s32.totalorder %s97, %s111
      %p113 = scmp.eq.s32.totalorder %s19, 0
      %p114 = por %p112, %p113
      %s115 = ssub.s32 %s13, %s20
      %p116 = scmp.eq.s32.totalorder %s115, 0
      %s118 = sadd.s32 %s117, 1
      %s119 = scalar_select %p116, %s117, %s118
      %p122 = pneg %p116
      %p123 = scmp.eq.s32.totalorder %s13, 1
      %p124 = por %p122, %p123
      %p125 = scmp.ne.s32.totalorder %s117, %s120
      %p126 = scmp.eq.s32.totalorder %s13, 0
      %p127 = por %p125, %p126
      %p128 = scmp.ne.s32.totalorder %s117, %s120
      %p129 = scmp.eq.s32.totalorder %s18, 1
      %p130 = por %p128, %p129
      %p131 = scmp.ne.s32.totalorder %s120, %s121
      %p132 = scmp.eq.s32.totalorder %s18, 0
      %p133 = por %p131, %p132
      %p134 = scmp.ne.s32.totalorder %s120, %s121
      %p135 = scmp.eq.s32.totalorder %s19, 1
      %p136 = por %p134, %p135
      %p138 = scmp.ne.s32.totalorder %s121, %s137
      %p139 = scmp.eq.s32.totalorder %s19, 0
      %p140 = por %p138, %p139
      %p141 = scmp.le.s32.totalorder 1, %s13
      %p142 = scmp.lt.s32.totalorder %s13, 3
      %p143 = pnand %p141, %p142
      %p144 = pneg %p143
      // Predicated region
      $region9: #{sdf_decoder_forward.1} parent=5 // pred_check
        _
      $region10: #{sdf_decoder_forward.1} parent=5 // pred_check_branch
        %146 = sbr.rel (%p143) target = $region12
      $region11: #{sdf_decoder_forward.1} parent=5 // pred_region
        %s147 = ssub.s32 %s13, 1
        // Predicated region
        $region13: #{sdf_decoder_forward.1} parent=11 // pred_check
          %p148 = pneg %p86
        $region14: #{sdf_decoder_forward.1} parent=11 // pred_check_branch
          %150 = sbr.rel (%p148) target = $region16
        $region15: #{sdf_decoder_forward.1} parent=11 // pred_region
          _
        $region16: #{sdf_decoder_forward.1} parent=11 // pred_fallthru
          _
        // Predicated region
        $region17: #{sdf_decoder_forward.1} parent=11 // pred_check
          %p151 = pneg %p107
        $region18: #{sdf_decoder_forward.1} parent=11 // pred_check_branch
          %153 = sbr.rel (%p151) target = $region20
        $region19: #{sdf_decoder_forward.1} parent=11 // pred_region
          _
        $region20: #{sdf_decoder_forward.1} parent=11 // pred_fallthru
          _
      $region12: #{sdf_decoder_forward.1} parent=5 // pred_fallthru
        _
      %p154 = scmp.lt.s32.totalorder %s13, 2
      // Predicated region
      $region21: #{sdf_decoder_forward.1} parent=5 // pred_check
        %p155 = pneg %p154
      $region22: #{sdf_decoder_forward.1} parent=5 // pred_check_branch
        %157 = sbr.rel (%p155) target = $region24
      $region23: #{sdf_decoder_forward.1} parent=5 // pred_region
        // Predicated region
        $region25: #{sdf_decoder_forward.1} parent=23 // pred_check
          %p158 = pneg %p33
        $region26: #{sdf_decoder_forward.1} parent=23 // pred_check_branch
          %160 = sbr.rel (%p158) target = $region28
        $region27: #{sdf_decoder_forward.1} parent=23 // pred_region
          %s161 = smul.u32 256, %s13
          %s162 = ssub.s32 375, %s161
          %p163 = scmp.lt.s32.totalorder %s162, 256
          %s164 = scalar_select %p163, %s162, 256
          %s165 = smul.u32 128, %s164
          %p166 = scmp.lt.s32.totalorder %s161, 374
          %s167 = scalar_select %p166, %s161, 374
          %s168 = smul.addr %s167, 8
          %s169 = scalar_lea.vmem %s0, %s168
          %s170 = smul.u32 256, %s13
          %s171 = ssub.s32 375, %s170
          %p172 = scmp.lt.s32.totalorder %s171, 256
          %s173 = scalar_select %p172, %s171, 256
          %s174 = smul.u32 128, %s173
        $region28: #{sdf_decoder_forward.1} parent=23 // pred_fallthru
          _
        // Predicated region
        $region29: #{sdf_decoder_forward.1} parent=23 // pred_check
          %p175 = pneg %p59
        $region30: #{sdf_decoder_forward.1} parent=23 // pred_check_branch
          %177 = sbr.rel (%p175) target = $region32
        $region31: #{sdf_decoder_forward.1} parent=23 // pred_region
          %s178 = smul.u32 256, %s13
          %s179 = ssub.s32 375, %s178
          %p180 = scmp.lt.s32.totalorder %s179, 256
          %s181 = scalar_select %p180, %s179, 256
          %s182 = smul.u32 128, %s181
          %p183 = scmp.lt.s32.totalorder %s178, 374
          %s184 = scalar_select %p183, %s178, 374
          %s185 = smul.addr %s184, 8
          %s186 = scalar_lea.vmem %s1, %s185
          %s187 = smul.u32 256, %s13
          %s188 = ssub.s32 375, %s187
          %p189 = scmp.lt.s32.totalorder %s188, 256
          %s190 = scalar_select %p189, %s188, 256
          %s191 = smul.u32 128, %s190
        $region32: #{sdf_decoder_forward.1} parent=23 // pred_fallthru
          _
      $region24: #{sdf_decoder_forward.1} parent=5 // pred_fallthru
        _
      %p192 = scmp.le.s32.totalorder 1, %s13
      %p193 = scmp.lt.s32.totalorder %s13, 3
      %p194 = pnand %p192, %p193
      %p195 = pneg %p194
      // Predicated region
      $region33: #{sdf_decoder_forward.1} parent=5 // pred_check
        _
      $region34: #{sdf_decoder_forward.1} parent=5 // pred_check_branch
        %197 = sbr.rel (%p194) target = $region36
      $region35: #{sdf_decoder_forward.1} parent=5 // pred_region
        %s198 = ssub.s32 %s13, 1
        %s199 = smul.u32 256, %s18
        %s200 = ssub.s32 375, %s199
        %p201 = scmp.lt.s32.totalorder %s200, 256
        %s202 = scalar_select %p201, %s200, 256
        %s203 = smul.u32 128, %s202
        %p204 = scmp.lt.s32.totalorder %s199, 374
        %s205 = scalar_select %p204, %s199, 374
        %s206 = smul.addr %s205, 8
        %s207 = scalar_lea.vmem %s0, %s206
        %p208 = pneg %p39
        %p209 = pneg %p36
        %s210 = smul.u32 256, %s18
        %s211 = ssub.s32 375, %s210
        %p212 = scmp.lt.s32.totalorder %s211, 256
        %s213 = scalar_select %p212, %s211, 256
        %s214 = smul.u32 128, %s213
        %p215 = scmp.lt.s32.totalorder %s210, 374
        %s216 = scalar_select %p215, %s210, 374
        %s217 = smul.addr %s216, 8
        %s218 = scalar_lea.vmem %s1, %s217
        %p219 = pneg %p65
        %p220 = pneg %p62
        %p221 = pneg %p86
        %p222 = pneg %p83
        %p223 = pneg %p107
        %p224 = pneg %p104
        %p225 = pneg %p133
        %p226 = pneg %p130
        %s227 = sand.u32 %s120, 1
        %s228 = scalar_lea.sflag [#allocation3], %s227
        %s229 = sand.u32 %s120, 1
        %s230 = smul.addr %s229, 16
        %s231 = scalar_lea.vmem [#allocation2], %s230
        %s232 = smul.u32 256, %s18
        %s233 = ssub.s32 375, %s232
        %p234 = scmp.lt.s32.totalorder %s233, 256
        %s235 = scalar_select %p234, %s233, 256
        %s236 = smul.u32 128, %s235
        %p237 = scmp.lt.s32.totalorder %s232, 374
        %s238 = scalar_select %p237, %s232, 374
        %s239 = smul.addr %s238, 8
        %s240 = scalar_lea.vmem %s0, %s239
        %s241 = smul.u32 256, %s18
        %s242 = ssub.s32 375, %s241
        %p243 = scmp.lt.s32.totalorder %s242, 256
        %s244 = scalar_select %p243, %s242, 256
        %s245 = smul.u32 128, %s244
        %s246 = smul.u32 256, %s18
        %s247 = ssub.s32 375, %s246
        %p248 = scmp.lt.s32.totalorder %s247, 256
        %s249 = scalar_select %p248, %s247, 256
        %s250 = smul.u32 128, %s249
        %p251 = scmp.lt.s32.totalorder %s246, 374
        %s252 = scalar_select %p251, %s246, 374
        %s253 = smul.addr %s252, 8
        %s254 = scalar_lea.vmem %s1, %s253
        %s255 = smul.u32 256, %s18
        %s256 = ssub.s32 375, %s255
        %p257 = scmp.lt.s32.totalorder %s256, 256
        %s258 = scalar_select %p257, %s256, 256
        %s259 = smul.u32 128, %s258
        %s260 = smul.u32 16, %s18
        %s261 = ssub.s32 24, %s260
        %p262 = scmp.lt.s32.totalorder %s261, 16
        %s263 = scalar_select %p262, %s261, 16
        %s264 = smul.u32 16, %s263
        %v266 = vld [vmem:[%s240] sm:$0xff]
        %v267 = vld [vmem:[%s240 + $0x8] sm:$0xff]
        %v268 = vld [vmem:[%s240 + $0x10] sm:$0xff]
        %v269 = vld [vmem:[%s240 + $0x18] sm:$0xff]
        %v270 = vld [vmem:[%s240 + $0x20] sm:$0xff]
        %v271 = vld [vmem:[%s240 + $0x28] sm:$0xff]
        %v272 = vld [vmem:[%s240 + $0x30] sm:$0xff]
        %v273 = vld [vmem:[%s240 + $0x38] sm:$0xff]
        %v274 = vld [vmem:[%s240 + $0x40] sm:$0xff]
        %v275 = vld [vmem:[%s240 + $0x48] sm:$0xff]
        %v276 = vld [vmem:[%s240 + $0x50] sm:$0xff]
        %v277 = vld [vmem:[%s240 + $0x58] sm:$0xff]
        %v278 = vld [vmem:[%s240 + $0x60] sm:$0xff]
        %v279 = vld [vmem:[%s240 + $0x68] sm:$0xff]
        %v280 = vld [vmem:[%s240 + $0x70] sm:$0xff]
        %v281 = vld [vmem:[%s240 + $0x78] sm:$0xff]
        %v282 = vld [vmem:[%s240 + $0x80] sm:$0xff]
        %v283 = vld [vmem:[%s240 + $0x88] sm:$0xff]
        %v284 = vld [vmem:[%s240 + $0x90] sm:$0xff]
        %v285 = vld [vmem:[%s240 + $0x98] sm:$0xff]
        %v286 = vld [vmem:[%s240 + $0xa0] sm:$0xff]
        %v287 = vld [vmem:[%s240 + $0xa8] sm:$0xff]
        %v288 = vld [vmem:[%s240 + $0xb0] sm:$0xff]
        %v289 = vld [vmem:[%s240 + $0xb8] sm:$0xff]
        %v290 = vld [vmem:[%s240 + $0xc0] sm:$0xff]
        %v291 = vld [vmem:[%s240 + $0xc8] sm:$0xff]
        %v292 = vld [vmem:[%s240 + $0xd0] sm:$0xff]
        %v293 = vld [vmem:[%s240 + $0xd8] sm:$0xff]
        %v294 = vld [vmem:[%s240 + $0xe0] sm:$0xff]
        %v295 = vld [vmem:[%s240 + $0xe8] sm:$0xff]
        %v296 = vld [vmem:[%s240 + $0xf0] sm:$0xff]
        %v297 = vld [vmem:[%s240 + $0xf8] sm:$0xff]
        %v298 = vld [vmem:[%s240 + $0x100] sm:$0xff]
        %v299 = vld [vmem:[%s240 + $0x108] sm:$0xff]
        %v300 = vld [vmem:[%s240 + $0x110] sm:$0xff]
        %v301 = vld [vmem:[%s240 + $0x118] sm:$0xff]
        %v302 = vld [vmem:[%s240 + $0x120] sm:$0xff]
        %v303 = vld [vmem:[%s240 + $0x128] sm:$0xff]
        %v304 = vld [vmem:[%s240 + $0x130] sm:$0xff]
        %v305 = vld [vmem:[%s240 + $0x138] sm:$0xff]
        %v306 = vld [vmem:[%s240 + $0x140] sm:$0xff]
        %v307 = vld [vmem:[%s240 + $0x148] sm:$0xff]
        %v308 = vld [vmem:[%s240 + $0x150] sm:$0xff]
        %v309 = vld [vmem:[%s240 + $0x158] sm:$0xff]
        %v310 = vld [vmem:[%s240 + $0x160] sm:$0xff]
        %v311 = vld [vmem:[%s240 + $0x168] sm:$0xff]
        %v312 = vld [vmem:[%s240 + $0x170] sm:$0xff]
        %v313 = vld [vmem:[%s240 + $0x178] sm:$0xff]
        %v314 = vld [vmem:[%s240 + $0x180] sm:$0xff]
        %v315 = vld [vmem:[%s240 + $0x188] sm:$0xff]
        %v316 = vld [vmem:[%s240 + $0x190] sm:$0xff]
        %v317 = vld [vmem:[%s240 + $0x198] sm:$0xff]
        %v318 = vld [vmem:[%s240 + $0x1a0] sm:$0xff]
        %v319 = vld [vmem:[%s240 + $0x1a8] sm:$0xff]
        %v320 = vld [vmem:[%s240 + $0x1b0] sm:$0xff]
        %v321 = vld [vmem:[%s240 + $0x1b8] sm:$0xff]
        %v322 = vld [vmem:[%s240 + $0x1c0] sm:$0xff]
        %v323 = vld [vmem:[%s240 + $0x1c8] sm:$0xff]
        %v324 = vld [vmem:[%s240 + $0x1d0] sm:$0xff]
        %v325 = vld [vmem:[%s240 + $0x1d8] sm:$0xff]
        %v326 = vld [vmem:[%s240 + $0x1e0] sm:$0xff]
        %v327 = vld [vmem:[%s240 + $0x1e8] sm:$0xff]
        %v328 = vld [vmem:[%s240 + $0x1f0] sm:$0xff]
        %v329 = vld [vmem:[%s240 + $0x1f8] sm:$0xff]
        %v330 = vld [vmem:[%s240 + $0x200] sm:$0xff]
        %v331 = vld [vmem:[%s240 + $0x208] sm:$0xff]
        %v332 = vld [vmem:[%s240 + $0x210] sm:$0xff]
        %v333 = vld [vmem:[%s240 + $0x218] sm:$0xff]
        %v334 = vld [vmem:[%s240 + $0x220] sm:$0xff]
        %v335 = vld [vmem:[%s240 + $0x228] sm:$0xff]
        %v336 = vld [vmem:[%s240 + $0x230] sm:$0xff]
        %v337 = vld [vmem:[%s240 + $0x238] sm:$0xff]
        %v338 = vld [vmem:[%s240 + $0x240] sm:$0xff]
        %v339 = vld [vmem:[%s240 + $0x248] sm:$0xff]
        %v340 = vld [vmem:[%s240 + $0x250] sm:$0xff]
        %v341 = vld [vmem:[%s240 + $0x258] sm:$0xff]
        %v342 = vld [vmem:[%s240 + $0x260] sm:$0xff]
        %v343 = vld [vmem:[%s240 + $0x268] sm:$0xff]
        %v344 = vld [vmem:[%s240 + $0x270] sm:$0xff]
        %v345 = vld [vmem:[%s240 + $0x278] sm:$0xff]
        %v346 = vld [vmem:[%s240 + $0x280] sm:$0xff]
        %v347 = vld [vmem:[%s240 + $0x288] sm:$0xff]
        %v348 = vld [vmem:[%s240 + $0x290] sm:$0xff]
        %v349 = vld [vmem:[%s240 + $0x298] sm:$0xff]
        %v350 = vld [vmem:[%s240 + $0x2a0] sm:$0xff]
        %v351 = vld [vmem:[%s240 + $0x2a8] sm:$0xff]
        %v352 = vld [vmem:[%s240 + $0x2b0] sm:$0xff]
        %v353 = vld [vmem:[%s240 + $0x2b8] sm:$0xff]
        %v354 = vld [vmem:[%s240 + $0x2c0] sm:$0xff]
        %v355 = vld [vmem:[%s240 + $0x2c8] sm:$0xff]
        %v356 = vld [vmem:[%s240 + $0x2d0] sm:$0xff]
        %v357 = vld [vmem:[%s240 + $0x2d8] sm:$0xff]
        %v358 = vld [vmem:[%s240 + $0x2e0] sm:$0xff]
        %v359 = vld [vmem:[%s240 + $0x2e8] sm:$0xff]
        %v360 = vld [vmem:[%s240 + $0x2f0] sm:$0xff]
        %v361 = vld [vmem:[%s240 + $0x2f8] sm:$0xff]
        %v362 = vld [vmem:[%s240 + $0x300] sm:$0xff]
        %v363 = vld [vmem:[%s240 + $0x308] sm:$0xff]
        %v364 = vld [vmem:[%s240 + $0x310] sm:$0xff]
        %v365 = vld [vmem:[%s240 + $0x318] sm:$0xff]
        %v366 = vld [vmem:[%s240 + $0x320] sm:$0xff]
        %v367 = vld [vmem:[%s240 + $0x328] sm:$0xff]
        %v368 = vld [vmem:[%s240 + $0x330] sm:$0xff]
        %v369 = vld [vmem:[%s240 + $0x338] sm:$0xff]
        %v370 = vld [vmem:[%s240 + $0x340] sm:$0xff]
        %v371 = vld [vmem:[%s240 + $0x348] sm:$0xff]
        %v372 = vld [vmem:[%s240 + $0x350] sm:$0xff]
        %v373 = vld [vmem:[%s240 + $0x358] sm:$0xff]
        %v374 = vld [vmem:[%s240 + $0x360] sm:$0xff]
        %v375 = vld [vmem:[%s240 + $0x368] sm:$0xff]
        %v376 = vld [vmem:[%s240 + $0x370] sm:$0xff]
        %v377 = vld [vmem:[%s240 + $0x378] sm:$0xff]
        %v378 = vld [vmem:[%s240 + $0x380] sm:$0xff]
        %v379 = vld [vmem:[%s240 + $0x388] sm:$0xff]
        %v380 = vld [vmem:[%s240 + $0x390] sm:$0xff]
        %v381 = vld [vmem:[%s240 + $0x398] sm:$0xff]
        %v382 = vld [vmem:[%s240 + $0x3a0] sm:$0xff]
        %v383 = vld [vmem:[%s240 + $0x3a8] sm:$0xff]
        %v384 = vld [vmem:[%s240 + $0x3b0] sm:$0xff]
        %v385 = vld [vmem:[%s240 + $0x3b8] sm:$0xff]
        %v386 = vld [vmem:[%s240 + $0x3c0] sm:$0xff]
        %v387 = vld [vmem:[%s240 + $0x3c8] sm:$0xff]
        %v388 = vld [vmem:[%s240 + $0x3d0] sm:$0xff]
        %v389 = vld [vmem:[%s240 + $0x3d8] sm:$0xff]
        %v390 = vld [vmem:[%s240 + $0x3e0] sm:$0xff]
        %v391 = vld [vmem:[%s240 + $0x3e8] sm:$0xff]
        %v392 = vld [vmem:[%s240 + $0x3f0] sm:$0xff]
        %v393 = vld [vmem:[%s240 + $0x3f8] sm:$0xff]
        %v394 = vld [vmem:[%s240 + $0x400] sm:$0xff]
        %v395 = vld [vmem:[%s240 + $0x408] sm:$0xff]
        %v396 = vld [vmem:[%s240 + $0x410] sm:$0xff]
        %v397 = vld [vmem:[%s240 + $0x418] sm:$0xff]
        %v398 = vld [vmem:[%s240 + $0x420] sm:$0xff]
        %v399 = vld [vmem:[%s240 + $0x428] sm:$0xff]
        %v400 = vld [vmem:[%s240 + $0x430] sm:$0xff]
        %v401 = vld [vmem:[%s240 + $0x438] sm:$0xff]
        %v402 = vld [vmem:[%s240 + $0x440] sm:$0xff]
        %v403 = vld [vmem:[%s240 + $0x448] sm:$0xff]
        %v404 = vld [vmem:[%s240 + $0x450] sm:$0xff]
        %v405 = vld [vmem:[%s240 + $0x458] sm:$0xff]
        %v406 = vld [vmem:[%s240 + $0x460] sm:$0xff]
        %v407 = vld [vmem:[%s240 + $0x468] sm:$0xff]
        %v408 = vld [vmem:[%s240 + $0x470] sm:$0xff]
        %v409 = vld [vmem:[%s240 + $0x478] sm:$0xff]
        %v410 = vld [vmem:[%s240 + $0x480] sm:$0xff]
        %v411 = vld [vmem:[%s240 + $0x488] sm:$0xff]
        %v412 = vld [vmem:[%s240 + $0x490] sm:$0xff]
        %v413 = vld [vmem:[%s240 + $0x498] sm:$0xff]
        %v414 = vld [vmem:[%s240 + $0x4a0] sm:$0xff]
        %v415 = vld [vmem:[%s240 + $0x4a8] sm:$0xff]
        %v416 = vld [vmem:[%s240 + $0x4b0] sm:$0xff]
        %v417 = vld [vmem:[%s240 + $0x4b8] sm:$0xff]
        %v418 = vld [vmem:[%s240 + $0x4c0] sm:$0xff]
        %v419 = vld [vmem:[%s240 + $0x4c8] sm:$0xff]
        %v420 = vld [vmem:[%s240 + $0x4d0] sm:$0xff]
        %v421 = vld [vmem:[%s240 + $0x4d8] sm:$0xff]
        %v422 = vld [vmem:[%s240 + $0x4e0] sm:$0xff]
        %v423 = vld [vmem:[%s240 + $0x4e8] sm:$0xff]
        %v424 = vld [vmem:[%s240 + $0x4f0] sm:$0xff]
        %v425 = vld [vmem:[%s240 + $0x4f8] sm:$0xff]
        %v426 = vld [vmem:[%s240 + $0x500] sm:$0xff]
        %v427 = vld [vmem:[%s240 + $0x508] sm:$0xff]
        %v428 = vld [vmem:[%s240 + $0x510] sm:$0xff]
        %v429 = vld [vmem:[%s240 + $0x518] sm:$0xff]
        %v430 = vld [vmem:[%s240 + $0x520] sm:$0xff]
        %v431 = vld [vmem:[%s240 + $0x528] sm:$0xff]
        %v432 = vld [vmem:[%s240 + $0x530] sm:$0xff]
        %v433 = vld [vmem:[%s240 + $0x538] sm:$0xff]
        %v434 = vld [vmem:[%s240 + $0x540] sm:$0xff]
        %v435 = vld [vmem:[%s240 + $0x548] sm:$0xff]
        %v436 = vld [vmem:[%s240 + $0x550] sm:$0xff]
        %v437 = vld [vmem:[%s240 + $0x558] sm:$0xff]
        %v438 = vld [vmem:[%s240 + $0x560] sm:$0xff]
        %v439 = vld [vmem:[%s240 + $0x568] sm:$0xff]
        %v440 = vld [vmem:[%s240 + $0x570] sm:$0xff]
        %v441 = vld [vmem:[%s240 + $0x578] sm:$0xff]
        %v442 = vld [vmem:[%s240 + $0x580] sm:$0xff]
        %v443 = vld [vmem:[%s240 + $0x588] sm:$0xff]
        %v444 = vld [vmem:[%s240 + $0x590] sm:$0xff]
        %v445 = vld [vmem:[%s240 + $0x598] sm:$0xff]
        %v446 = vld [vmem:[%s240 + $0x5a0] sm:$0xff]
        %v447 = vld [vmem:[%s240 + $0x5a8] sm:$0xff]
        %v448 = vld [vmem:[%s240 + $0x5b0] sm:$0xff]
        %v449 = vld [vmem:[%s240 + $0x5b8] sm:$0xff]
        %v450 = vld [vmem:[%s240 + $0x5c0] sm:$0xff]
        %v451 = vld [vmem:[%s240 + $0x5c8] sm:$0xff]
        %v452 = vld [vmem:[%s240 + $0x5d0] sm:$0xff]
        %v453 = vld [vmem:[%s240 + $0x5d8] sm:$0xff]
        %v454 = vld [vmem:[%s240 + $0x5e0] sm:$0xff]
        %v455 = vld [vmem:[%s240 + $0x5e8] sm:$0xff]
        %v456 = vld [vmem:[%s240 + $0x5f0] sm:$0xff]
        %v457 = vld [vmem:[%s240 + $0x5f8] sm:$0xff]
        %v458 = vld [vmem:[%s240 + $0x600] sm:$0xff]
        %v459 = vld [vmem:[%s240 + $0x608] sm:$0xff]
        %v460 = vld [vmem:[%s240 + $0x610] sm:$0xff]
        %v461 = vld [vmem:[%s240 + $0x618] sm:$0xff]
        %v462 = vld [vmem:[%s240 + $0x620] sm:$0xff]
        %v463 = vld [vmem:[%s240 + $0x628] sm:$0xff]
        %v464 = vld [vmem:[%s240 + $0x630] sm:$0xff]
        %v465 = vld [vmem:[%s240 + $0x638] sm:$0xff]
        %v466 = vld [vmem:[%s240 + $0x640] sm:$0xff]
        %v467 = vld [vmem:[%s240 + $0x648] sm:$0xff]
        %v468 = vld [vmem:[%s240 + $0x650] sm:$0xff]
        %v469 = vld [vmem:[%s240 + $0x658] sm:$0xff]
        %v470 = vld [vmem:[%s240 + $0x660] sm:$0xff]
        %v471 = vld [vmem:[%s240 + $0x668] sm:$0xff]
        %v472 = vld [vmem:[%s240 + $0x670] sm:$0xff]
        %v473 = vld [vmem:[%s240 + $0x678] sm:$0xff]
        %v474 = vld [vmem:[%s240 + $0x680] sm:$0xff]
        %v475 = vld [vmem:[%s240 + $0x688] sm:$0xff]
        %v476 = vld [vmem:[%s240 + $0x690] sm:$0xff]
        %v477 = vld [vmem:[%s240 + $0x698] sm:$0xff]
        %v478 = vld [vmem:[%s240 + $0x6a0] sm:$0xff]
        %v479 = vld [vmem:[%s240 + $0x6a8] sm:$0xff]
        %v480 = vld [vmem:[%s240 + $0x6b0] sm:$0xff]
        %v481 = vld [vmem:[%s240 + $0x6b8] sm:$0xff]
        %v482 = vld [vmem:[%s240 + $0x6c0] sm:$0xff]
        %v483 = vld [vmem:[%s240 + $0x6c8] sm:$0xff]
        %v484 = vld [vmem:[%s240 + $0x6d0] sm:$0xff]
        %v485 = vld [vmem:[%s240 + $0x6d8] sm:$0xff]
        %v486 = vld [vmem:[%s240 + $0x6e0] sm:$0xff]
        %v487 = vld [vmem:[%s240 + $0x6e8] sm:$0xff]
        %v488 = vld [vmem:[%s240 + $0x6f0] sm:$0xff]
        %v489 = vld [vmem:[%s240 + $0x6f8] sm:$0xff]
        %v490 = vld [vmem:[%s240 + $0x700] sm:$0xff]
        %v491 = vld [vmem:[%s240 + $0x708] sm:$0xff]
        %v492 = vld [vmem:[%s240 + $0x710] sm:$0xff]
        %v493 = vld [vmem:[%s240 + $0x718] sm:$0xff]
        %v494 = vld [vmem:[%s240 + $0x720] sm:$0xff]
        %v495 = vld [vmem:[%s240 + $0x728] sm:$0xff]
        %v496 = vld [vmem:[%s240 + $0x730] sm:$0xff]
        %v497 = vld [vmem:[%s240 + $0x738] sm:$0xff]
        %v498 = vld [vmem:[%s240 + $0x740] sm:$0xff]
        %v499 = vld [vmem:[%s240 + $0x748] sm:$0xff]
        %v500 = vld [vmem:[%s240 + $0x750] sm:$0xff]
        %v501 = vld [vmem:[%s240 + $0x758] sm:$0xff]
        %v502 = vld [vmem:[%s240 + $0x760] sm:$0xff]
        %v503 = vld [vmem:[%s240 + $0x768] sm:$0xff]
        %v504 = vld [vmem:[%s240 + $0x770] sm:$0xff]
        %v505 = vld [vmem:[%s240 + $0x778] sm:$0xff]
        %v506 = vld [vmem:[%s240 + $0x780] sm:$0xff]
        %v507 = vld [vmem:[%s240 + $0x788] sm:$0xff]
        %v508 = vld [vmem:[%s240 + $0x790] sm:$0xff]
        %v509 = vld [vmem:[%s240 + $0x798] sm:$0xff]
        %v510 = vld [vmem:[%s240 + $0x7a0] sm:$0xff]
        %v511 = vld [vmem:[%s240 + $0x7a8] sm:$0xff]
        %v512 = vld [vmem:[%s240 + $0x7b0] sm:$0xff]
        %v513 = vld [vmem:[%s240 + $0x7b8] sm:$0xff]
        %v514 = vld [vmem:[%s240 + $0x7c0] sm:$0xff]
        %v515 = vld [vmem:[%s240 + $0x7c8] sm:$0xff]
        %v516 = vld [vmem:[%s240 + $0x7d0] sm:$0xff]
        %v517 = vld [vmem:[%s240 + $0x7d8] sm:$0xff]
        %v518 = vld [vmem:[%s240 + $0x7e0] sm:$0xff]
        %v519 = vld [vmem:[%s240 + $0x7e8] sm:$0xff]
        %v520 = vld [vmem:[%s240 + $0x7f0] sm:$0xff]
        %v521 = vld [vmem:[%s240 + $0x7f8] sm:$0xff]
        %v522 = vpack.c.bf16 %v267, %v266
        %v523 = vpack.c.bf16 %v269, %v268
        %v524 = vpack.c.bf16 %v271, %v270
        %v525 = vpack.c.bf16 %v273, %v272
        %v526 = vpack.c.bf16 %v275, %v274
        %v527 = vpack.c.bf16 %v277, %v276
        %v528 = vpack.c.bf16 %v279, %v278
        %v529 = vpack.c.bf16 %v281, %v280
        %v530 = vpack.c.bf16 %v283, %v282
        %v531 = vpack.c.bf16 %v285, %v284
        %v532 = vpack.c.bf16 %v287, %v286
        %v533 = vpack.c.bf16 %v289, %v288
        %v534 = vpack.c.bf16 %v291, %v290
        %v535 = vpack.c.bf16 %v293, %v292
        %v536 = vpack.c.bf16 %v295, %v294
        %v537 = vpack.c.bf16 %v297, %v296
        %v538 = vpack.c.bf16 %v299, %v298
        %v539 = vpack.c.bf16 %v301, %v300
        %v540 = vpack.c.bf16 %v303, %v302
        %v541 = vpack.c.bf16 %v305, %v304
        %v542 = vpack.c.bf16 %v307, %v306
        %v543 = vpack.c.bf16 %v309, %v308
        %v544 = vpack.c.bf16 %v311, %v310
        %v545 = vpack.c.bf16 %v313, %v312
        %v546 = vpack.c.bf16 %v315, %v314
        %v547 = vpack.c.bf16 %v317, %v316
        %v548 = vpack.c.bf16 %v319, %v318
        %v549 = vpack.c.bf16 %v321, %v320
        %v550 = vpack.c.bf16 %v323, %v322
        %v551 = vpack.c.bf16 %v325, %v324
        %v552 = vpack.c.bf16 %v327, %v326
        %v553 = vpack.c.bf16 %v329, %v328
        %v554 = vpack.c.bf16 %v331, %v330
        %v555 = vpack.c.bf16 %v333, %v332
        %v556 = vpack.c.bf16 %v335, %v334
        %v557 = vpack.c.bf16 %v337, %v336
        %v558 = vpack.c.bf16 %v339, %v338
        %v559 = vpack.c.bf16 %v341, %v340
        %v560 = vpack.c.bf16 %v343, %v342
        %v561 = vpack.c.bf16 %v345, %v344
        %v562 = vpack.c.bf16 %v347, %v346
        %v563 = vpack.c.bf16 %v349, %v348
        %v564 = vpack.c.bf16 %v351, %v350
        %v565 = vpack.c.bf16 %v353, %v352
        %v566 = vpack.c.bf16 %v355, %v354
        %v567 = vpack.c.bf16 %v357, %v356
        %v568 = vpack.c.bf16 %v359, %v358
        %v569 = vpack.c.bf16 %v361, %v360
        %v570 = vpack.c.bf16 %v363, %v362
        %v571 = vpack.c.bf16 %v365, %v364
        %v572 = vpack.c.bf16 %v367, %v366
        %v573 = vpack.c.bf16 %v369, %v368
        %v574 = vpack.c.bf16 %v371, %v370
        %v575 = vpack.c.bf16 %v373, %v372
        %v576 = vpack.c.bf16 %v375, %v374
        %v577 = vpack.c.bf16 %v377, %v376
        %v578 = vpack.c.bf16 %v379, %v378
        %v579 = vpack.c.bf16 %v381, %v380
        %v580 = vpack.c.bf16 %v383, %v382
        %v581 = vpack.c.bf16 %v385, %v384
        %v582 = vpack.c.bf16 %v387, %v386
        %v583 = vpack.c.bf16 %v389, %v388
        %v584 = vpack.c.bf16 %v391, %v390
        %v585 = vpack.c.bf16 %v393, %v392
        %v586 = vpack.c.bf16 %v395, %v394
        %v587 = vpack.c.bf16 %v397, %v396
        %v588 = vpack.c.bf16 %v399, %v398
        %v589 = vpack.c.bf16 %v401, %v400
        %v590 = vpack.c.bf16 %v403, %v402
        %v591 = vpack.c.bf16 %v405, %v404
        %v592 = vpack.c.bf16 %v407, %v406
        %v593 = vpack.c.bf16 %v409, %v408
        %v594 = vpack.c.bf16 %v411, %v410
        %v595 = vpack.c.bf16 %v413, %v412
        %v596 = vpack.c.bf16 %v415, %v414
        %v597 = vpack.c.bf16 %v417, %v416
        %v598 = vpack.c.bf16 %v419, %v418
        %v599 = vpack.c.bf16 %v421, %v420
        %v600 = vpack.c.bf16 %v423, %v422
        %v601 = vpack.c.bf16 %v425, %v424
        %v602 = vpack.c.bf16 %v427, %v426
        %v603 = vpack.c.bf16 %v429, %v428
        %v604 = vpack.c.bf16 %v431, %v430
        %v605 = vpack.c.bf16 %v433, %v432
        %v606 = vpack.c.bf16 %v435, %v434
        %v607 = vpack.c.bf16 %v437, %v436
        %v608 = vpack.c.bf16 %v439, %v438
        %v609 = vpack.c.bf16 %v441, %v440
        %v610 = vpack.c.bf16 %v443, %v442
        %v611 = vpack.c.bf16 %v445, %v444
        %v612 = vpack.c.bf16 %v447, %v446
        %v613 = vpack.c.bf16 %v449, %v448
        %v614 = vpack.c.bf16 %v451, %v450
        %v615 = vpack.c.bf16 %v453, %v452
        %v616 = vpack.c.bf16 %v455, %v454
        %v617 = vpack.c.bf16 %v457, %v456
        %v618 = vpack.c.bf16 %v459, %v458
        %v619 = vpack.c.bf16 %v461, %v460
        %v620 = vpack.c.bf16 %v463, %v462
        %v621 = vpack.c.bf16 %v465, %v464
        %v622 = vpack.c.bf16 %v467, %v466
        %v623 = vpack.c.bf16 %v469, %v468
        %v624 = vpack.c.bf16 %v471, %v470
        %v625 = vpack.c.bf16 %v473, %v472
        %v626 = vpack.c.bf16 %v475, %v474
        %v627 = vpack.c.bf16 %v477, %v476
        %v628 = vpack.c.bf16 %v479, %v478
        %v629 = vpack.c.bf16 %v481, %v480
        %v630 = vpack.c.bf16 %v483, %v482
        %v631 = vpack.c.bf16 %v485, %v484
        %v632 = vpack.c.bf16 %v487, %v486
        %v633 = vpack.c.bf16 %v489, %v488
        %v634 = vpack.c.bf16 %v491, %v490
        %v635 = vpack.c.bf16 %v493, %v492
        %v636 = vpack.c.bf16 %v495, %v494
        %v637 = vpack.c.bf16 %v497, %v496
        %v638 = vpack.c.bf16 %v499, %v498
        %v639 = vpack.c.bf16 %v501, %v500
        %v640 = vpack.c.bf16 %v503, %v502
        %v641 = vpack.c.bf16 %v505, %v504
        %v642 = vpack.c.bf16 %v507, %v506
        %v643 = vpack.c.bf16 %v509, %v508
        %v644 = vpack.c.bf16 %v511, %v510
        %v645 = vpack.c.bf16 %v513, %v512
        %v646 = vpack.c.bf16 %v515, %v514
        %v647 = vpack.c.bf16 %v517, %v516
        %v648 = vpack.c.bf16 %v519, %v518
        %v649 = vpack.c.bf16 %v521, %v520
        %v650 = vld [vmem:[%s254] sm:$0xff]
        %v651 = vld [vmem:[%s254 + $0x8] sm:$0xff]
        %v652 = vld [vmem:[%s254 + $0x10] sm:$0xff]
        %v653 = vld [vmem:[%s254 + $0x18] sm:$0xff]
        %v654 = vld [vmem:[%s254 + $0x20] sm:$0xff]
        %v655 = vld [vmem:[%s254 + $0x28] sm:$0xff]
        %v656 = vld [vmem:[%s254 + $0x30] sm:$0xff]
        %v657 = vld [vmem:[%s254 + $0x38] sm:$0xff]
        %v658 = vld [vmem:[%s254 + $0x40] sm:$0xff]
        %v659 = vld [vmem:[%s254 + $0x48] sm:$0xff]
        %v660 = vld [vmem:[%s254 + $0x50] sm:$0xff]
        %v661 = vld [vmem:[%s254 + $0x58] sm:$0xff]
        %v662 = vld [vmem:[%s254 + $0x60] sm:$0xff]
        %v663 = vld [vmem:[%s254 + $0x68] sm:$0xff]
        %v664 = vld [vmem:[%s254 + $0x70] sm:$0xff]
        %v665 = vld [vmem:[%s254 + $0x78] sm:$0xff]
        %v666 = vld [vmem:[%s254 + $0x80] sm:$0xff]
        %v667 = vld [vmem:[%s254 + $0x88] sm:$0xff]
        %v668 = vld [vmem:[%s254 + $0x90] sm:$0xff]
        %v669 = vld [vmem:[%s254 + $0x98] sm:$0xff]
        %v670 = vld [vmem:[%s254 + $0xa0] sm:$0xff]
        %v671 = vld [vmem:[%s254 + $0xa8] sm:$0xff]
        %v672 = vld [vmem:[%s254 + $0xb0] sm:$0xff]
        %v673 = vld [vmem:[%s254 + $0xb8] sm:$0xff]
        %v674 = vld [vmem:[%s254 + $0xc0] sm:$0xff]
        %v675 = vld [vmem:[%s254 + $0xc8] sm:$0xff]
        %v676 = vld [vmem:[%s254 + $0xd0] sm:$0xff]
        %v677 = vld [vmem:[%s254 + $0xd8] sm:$0xff]
        %v678 = vld [vmem:[%s254 + $0xe0] sm:$0xff]
        %v679 = vld [vmem:[%s254 + $0xe8] sm:$0xff]
        %v680 = vld [vmem:[%s254 + $0xf0] sm:$0xff]
        %v681 = vld [vmem:[%s254 + $0xf8] sm:$0xff]
        %v682 = vld [vmem:[%s254 + $0x100] sm:$0xff]
        %v683 = vld [vmem:[%s254 + $0x108] sm:$0xff]
        %v684 = vld [vmem:[%s254 + $0x110] sm:$0xff]
        %v685 = vld [vmem:[%s254 + $0x118] sm:$0xff]
        %v686 = vld [vmem:[%s254 + $0x120] sm:$0xff]
        %v687 = vld [vmem:[%s254 + $0x128] sm:$0xff]
        %v688 = vld [vmem:[%s254 + $0x130] sm:$0xff]
        %v689 = vld [vmem:[%s254 + $0x138] sm:$0xff]
        %v690 = vld [vmem:[%s254 + $0x140] sm:$0xff]
        %v691 = vld [vmem:[%s254 + $0x148] sm:$0xff]
        %v692 = vld [vmem:[%s254 + $0x150] sm:$0xff]
        %v693 = vld [vmem:[%s254 + $0x158] sm:$0xff]
        %v694 = vld [vmem:[%s254 + $0x160] sm:$0xff]
        %v695 = vld [vmem:[%s254 + $0x168] sm:$0xff]
        %v696 = vld [vmem:[%s254 + $0x170] sm:$0xff]
        %v697 = vld [vmem:[%s254 + $0x178] sm:$0xff]
        %v698 = vld [vmem:[%s254 + $0x180] sm:$0xff]
        %v699 = vld [vmem:[%s254 + $0x188] sm:$0xff]
        %v700 = vld [vmem:[%s254 + $0x190] sm:$0xff]
        %v701 = vld [vmem:[%s254 + $0x198] sm:$0xff]
        %v702 = vld [vmem:[%s254 + $0x1a0] sm:$0xff]
        %v703 = vld [vmem:[%s254 + $0x1a8] sm:$0xff]
        %v704 = vld [vmem:[%s254 + $0x1b0] sm:$0xff]
        %v705 = vld [vmem:[%s254 + $0x1b8] sm:$0xff]
        %v706 = vld [vmem:[%s254 + $0x1c0] sm:$0xff]
        %v707 = vld [vmem:[%s254 + $0x1c8] sm:$0xff]
        %v708 = vld [vmem:[%s254 + $0x1d0] sm:$0xff]
        %v709 = vld [vmem:[%s254 + $0x1d8] sm:$0xff]
        %v710 = vld [vmem:[%s254 + $0x1e0] sm:$0xff]
        %v711 = vld [vmem:[%s254 + $0x1e8] sm:$0xff]
        %v712 = vld [vmem:[%s254 + $0x1f0] sm:$0xff]
        %v713 = vld [vmem:[%s254 + $0x1f8] sm:$0xff]
        %v714 = vld [vmem:[%s254 + $0x200] sm:$0xff]
        %v715 = vld [vmem:[%s254 + $0x208] sm:$0xff]
        %v716 = vld [vmem:[%s254 + $0x210] sm:$0xff]
        %v717 = vld [vmem:[%s254 + $0x218] sm:$0xff]
        %v718 = vld [vmem:[%s254 + $0x220] sm:$0xff]
        %v719 = vld [vmem:[%s254 + $0x228] sm:$0xff]
        %v720 = vld [vmem:[%s254 + $0x230] sm:$0xff]
        %v721 = vld [vmem:[%s254 + $0x238] sm:$0xff]
        %v722 = vld [vmem:[%s254 + $0x240] sm:$0xff]
        %v723 = vld [vmem:[%s254 + $0x248] sm:$0xff]
        %v724 = vld [vmem:[%s254 + $0x250] sm:$0xff]
        %v725 = vld [vmem:[%s254 + $0x258] sm:$0xff]
        %v726 = vld [vmem:[%s254 + $0x260] sm:$0xff]
        %v727 = vld [vmem:[%s254 + $0x268] sm:$0xff]
        %v728 = vld [vmem:[%s254 + $0x270] sm:$0xff]
        %v729 = vld [vmem:[%s254 + $0x278] sm:$0xff]
        %v730 = vld [vmem:[%s254 + $0x280] sm:$0xff]
        %v731 = vld [vmem:[%s254 + $0x288] sm:$0xff]
        %v732 = vld [vmem:[%s254 + $0x290] sm:$0xff]
        %v733 = vld [vmem:[%s254 + $0x298] sm:$0xff]
        %v734 = vld [vmem:[%s254 + $0x2a0] sm:$0xff]
        %v735 = vld [vmem:[%s254 + $0x2a8] sm:$0xff]
        %v736 = vld [vmem:[%s254 + $0x2b0] sm:$0xff]
        %v737 = vld [vmem:[%s254 + $0x2b8] sm:$0xff]
        %v738 = vld [vmem:[%s254 + $0x2c0] sm:$0xff]
        %v739 = vld [vmem:[%s254 + $0x2c8] sm:$0xff]
        %v740 = vld [vmem:[%s254 + $0x2d0] sm:$0xff]
        %v741 = vld [vmem:[%s254 + $0x2d8] sm:$0xff]
        %v742 = vld [vmem:[%s254 + $0x2e0] sm:$0xff]
        %v743 = vld [vmem:[%s254 + $0x2e8] sm:$0xff]
        %v744 = vld [vmem:[%s254 + $0x2f0] sm:$0xff]
        %v745 = vld [vmem:[%s254 + $0x2f8] sm:$0xff]
        %v746 = vld [vmem:[%s254 + $0x300] sm:$0xff]
        %v747 = vld [vmem:[%s254 + $0x308] sm:$0xff]
        %v748 = vld [vmem:[%s254 + $0x310] sm:$0xff]
        %v749 = vld [vmem:[%s254 + $0x318] sm:$0xff]
        %v750 = vld [vmem:[%s254 + $0x320] sm:$0xff]
        %v751 = vld [vmem:[%s254 + $0x328] sm:$0xff]
        %v752 = vld [vmem:[%s254 + $0x330] sm:$0xff]
        %v753 = vld [vmem:[%s254 + $0x338] sm:$0xff]
        %v754 = vld [vmem:[%s254 + $0x340] sm:$0xff]
        %v755 = vld [vmem:[%s254 + $0x348] sm:$0xff]
        %v756 = vld [vmem:[%s254 + $0x350] sm:$0xff]
        %v757 = vld [vmem:[%s254 + $0x358] sm:$0xff]
        %v758 = vld [vmem:[%s254 + $0x360] sm:$0xff]
        %v759 = vld [vmem:[%s254 + $0x368] sm:$0xff]
        %v760 = vld [vmem:[%s254 + $0x370] sm:$0xff]
        %v761 = vld [vmem:[%s254 + $0x378] sm:$0xff]
        %v762 = vld [vmem:[%s254 + $0x380] sm:$0xff]
        %v763 = vld [vmem:[%s254 + $0x388] sm:$0xff]
        %v764 = vld [vmem:[%s254 + $0x390] sm:$0xff]
        %v765 = vld [vmem:[%s254 + $0x398] sm:$0xff]
        %v766 = vld [vmem:[%s254 + $0x3a0] sm:$0xff]
        %v767 = vld [vmem:[%s254 + $0x3a8] sm:$0xff]
        %v768 = vld [vmem:[%s254 + $0x3b0] sm:$0xff]
        %v769 = vld [vmem:[%s254 + $0x3b8] sm:$0xff]
        %v770 = vld [vmem:[%s254 + $0x3c0] sm:$0xff]
        %v771 = vld [vmem:[%s254 + $0x3c8] sm:$0xff]
        %v772 = vld [vmem:[%s254 + $0x3d0] sm:$0xff]
        %v773 = vld [vmem:[%s254 + $0x3d8] sm:$0xff]
        %v774 = vld [vmem:[%s254 + $0x3e0] sm:$0xff]
        %v775 = vld [vmem:[%s254 + $0x3e8] sm:$0xff]
        %v776 = vld [vmem:[%s254 + $0x3f0] sm:$0xff]
        %v777 = vld [vmem:[%s254 + $0x3f8] sm:$0xff]
        %v778 = vld [vmem:[%s254 + $0x400] sm:$0xff]
        %v779 = vld [vmem:[%s254 + $0x408] sm:$0xff]
        %v780 = vld [vmem:[%s254 + $0x410] sm:$0xff]
        %v781 = vld [vmem:[%s254 + $0x418] sm:$0xff]
        %v782 = vld [vmem:[%s254 + $0x420] sm:$0xff]
        %v783 = vld [vmem:[%s254 + $0x428] sm:$0xff]
        %v784 = vld [vmem:[%s254 + $0x430] sm:$0xff]
        %v785 = vld [vmem:[%s254 + $0x438] sm:$0xff]
        %v786 = vld [vmem:[%s254 + $0x440] sm:$0xff]
        %v787 = vld [vmem:[%s254 + $0x448] sm:$0xff]
        %v788 = vld [vmem:[%s254 + $0x450] sm:$0xff]
        %v789 = vld [vmem:[%s254 + $0x458] sm:$0xff]
        %v790 = vld [vmem:[%s254 + $0x460] sm:$0xff]
        %v791 = vld [vmem:[%s254 + $0x468] sm:$0xff]
        %v792 = vld [vmem:[%s254 + $0x470] sm:$0xff]
        %v793 = vld [vmem:[%s254 + $0x478] sm:$0xff]
        %v794 = vld [vmem:[%s254 + $0x480] sm:$0xff]
        %v795 = vld [vmem:[%s254 + $0x488] sm:$0xff]
        %v796 = vld [vmem:[%s254 + $0x490] sm:$0xff]
        %v797 = vld [vmem:[%s254 + $0x498] sm:$0xff]
        %v798 = vld [vmem:[%s254 + $0x4a0] sm:$0xff]
        %v799 = vld [vmem:[%s254 + $0x4a8] sm:$0xff]
        %v800 = vld [vmem:[%s254 + $0x4b0] sm:$0xff]
        %v801 = vld [vmem:[%s254 + $0x4b8] sm:$0xff]
        %v802 = vld [vmem:[%s254 + $0x4c0] sm:$0xff]
        %v803 = vld [vmem:[%s254 + $0x4c8] sm:$0xff]
        %v804 = vld [vmem:[%s254 + $0x4d0] sm:$0xff]
        %v805 = vld [vmem:[%s254 + $0x4d8] sm:$0xff]
        %v806 = vld [vmem:[%s254 + $0x4e0] sm:$0xff]
        %v807 = vld [vmem:[%s254 + $0x4e8] sm:$0xff]
        %v808 = vld [vmem:[%s254 + $0x4f0] sm:$0xff]
        %v809 = vld [vmem:[%s254 + $0x4f8] sm:$0xff]
        %v810 = vld [vmem:[%s254 + $0x500] sm:$0xff]
        %v811 = vld [vmem:[%s254 + $0x508] sm:$0xff]
        %v812 = vld [vmem:[%s254 + $0x510] sm:$0xff]
        %v813 = vld [vmem:[%s254 + $0x518] sm:$0xff]
        %v814 = vld [vmem:[%s254 + $0x520] sm:$0xff]
        %v815 = vld [vmem:[%s254 + $0x528] sm:$0xff]
        %v816 = vld [vmem:[%s254 + $0x530] sm:$0xff]
        %v817 = vld [vmem:[%s254 + $0x538] sm:$0xff]
        %v818 = vld [vmem:[%s254 + $0x540] sm:$0xff]
        %v819 = vld [vmem:[%s254 + $0x548] sm:$0xff]
        %v820 = vld [vmem:[%s254 + $0x550] sm:$0xff]
        %v821 = vld [vmem:[%s254 + $0x558] sm:$0xff]
        %v822 = vld [vmem:[%s254 + $0x560] sm:$0xff]
        %v823 = vld [vmem:[%s254 + $0x568] sm:$0xff]
        %v824 = vld [vmem:[%s254 + $0x570] sm:$0xff]
        %v825 = vld [vmem:[%s254 + $0x578] sm:$0xff]
        %v826 = vld [vmem:[%s254 + $0x580] sm:$0xff]
        %v827 = vld [vmem:[%s254 + $0x588] sm:$0xff]
        %v828 = vld [vmem:[%s254 + $0x590] sm:$0xff]
        %v829 = vld [vmem:[%s254 + $0x598] sm:$0xff]
        %v830 = vld [vmem:[%s254 + $0x5a0] sm:$0xff]
        %v831 = vld [vmem:[%s254 + $0x5a8] sm:$0xff]
        %v832 = vld [vmem:[%s254 + $0x5b0] sm:$0xff]
        %v833 = vld [vmem:[%s254 + $0x5b8] sm:$0xff]
        %v834 = vld [vmem:[%s254 + $0x5c0] sm:$0xff]
        %v835 = vld [vmem:[%s254 + $0x5c8] sm:$0xff]
        %v836 = vld [vmem:[%s254 + $0x5d0] sm:$0xff]
        %v837 = vld [vmem:[%s254 + $0x5d8] sm:$0xff]
        %v838 = vld [vmem:[%s254 + $0x5e0] sm:$0xff]
        %v839 = vld [vmem:[%s254 + $0x5e8] sm:$0xff]
        %v840 = vld [vmem:[%s254 + $0x5f0] sm:$0xff]
        %v841 = vld [vmem:[%s254 + $0x5f8] sm:$0xff]
        %v842 = vld [vmem:[%s254 + $0x600] sm:$0xff]
        %v843 = vld [vmem:[%s254 + $0x608] sm:$0xff]
        %v844 = vld [vmem:[%s254 + $0x610] sm:$0xff]
        %v845 = vld [vmem:[%s254 + $0x618] sm:$0xff]
        %v846 = vld [vmem:[%s254 + $0x620] sm:$0xff]
        %v847 = vld [vmem:[%s254 + $0x628] sm:$0xff]
        %v848 = vld [vmem:[%s254 + $0x630] sm:$0xff]
        %v849 = vld [vmem:[%s254 + $0x638] sm:$0xff]
        %v850 = vld [vmem:[%s254 + $0x640] sm:$0xff]
        %v851 = vld [vmem:[%s254 + $0x648] sm:$0xff]
        %v852 = vld [vmem:[%s254 + $0x650] sm:$0xff]
        %v853 = vld [vmem:[%s254 + $0x658] sm:$0xff]
        %v854 = vld [vmem:[%s254 + $0x660] sm:$0xff]
        %v855 = vld [vmem:[%s254 + $0x668] sm:$0xff]
        %v856 = vld [vmem:[%s254 + $0x670] sm:$0xff]
        %v857 = vld [vmem:[%s254 + $0x678] sm:$0xff]
        %v858 = vld [vmem:[%s254 + $0x680] sm:$0xff]
        %v859 = vld [vmem:[%s254 + $0x688] sm:$0xff]
        %v860 = vld [vmem:[%s254 + $0x690] sm:$0xff]
        %v861 = vld [vmem:[%s254 + $0x698] sm:$0xff]
        %v862 = vld [vmem:[%s254 + $0x6a0] sm:$0xff]
        %v863 = vld [vmem:[%s254 + $0x6a8] sm:$0xff]
        %v864 = vld [vmem:[%s254 + $0x6b0] sm:$0xff]
        %v865 = vld [vmem:[%s254 + $0x6b8] sm:$0xff]
        %v866 = vld [vmem:[%s254 + $0x6c0] sm:$0xff]
        %v867 = vld [vmem:[%s254 + $0x6c8] sm:$0xff]
        %v868 = vld [vmem:[%s254 + $0x6d0] sm:$0xff]
        %v869 = vld [vmem:[%s254 + $0x6d8] sm:$0xff]
        %v870 = vld [vmem:[%s254 + $0x6e0] sm:$0xff]
        %v871 = vld [vmem:[%s254 + $0x6e8] sm:$0xff]
        %v872 = vld [vmem:[%s254 + $0x6f0] sm:$0xff]
        %v873 = vld [vmem:[%s254 + $0x6f8] sm:$0xff]
        %v874 = vld [vmem:[%s254 + $0x700] sm:$0xff]
        %v875 = vld [vmem:[%s254 + $0x708] sm:$0xff]
        %v876 = vld [vmem:[%s254 + $0x710] sm:$0xff]
        %v877 = vld [vmem:[%s254 + $0x718] sm:$0xff]
        %v878 = vld [vmem:[%s254 + $0x720] sm:$0xff]
        %v879 = vld [vmem:[%s254 + $0x728] sm:$0xff]
        %v880 = vld [vmem:[%s254 + $0x730] sm:$0xff]
        %v881 = vld [vmem:[%s254 + $0x738] sm:$0xff]
        %v882 = vld [vmem:[%s254 + $0x740] sm:$0xff]
        %v883 = vld [vmem:[%s254 + $0x748] sm:$0xff]
        %v884 = vld [vmem:[%s254 + $0x750] sm:$0xff]
        %v885 = vld [vmem:[%s254 + $0x758] sm:$0xff]
        %v886 = vld [vmem:[%s254 + $0x760] sm:$0xff]
        %v887 = vld [vmem:[%s254 + $0x768] sm:$0xff]
        %v888 = vld [vmem:[%s254 + $0x770] sm:$0xff]
        %v889 = vld [vmem:[%s254 + $0x778] sm:$0xff]
        %v890 = vld [vmem:[%s254 + $0x780] sm:$0xff]
        %v891 = vld [vmem:[%s254 + $0x788] sm:$0xff]
        %v892 = vld [vmem:[%s254 + $0x790] sm:$0xff]
        %v893 = vld [vmem:[%s254 + $0x798] sm:$0xff]
        %v894 = vld [vmem:[%s254 + $0x7a0] sm:$0xff]
        %v895 = vld [vmem:[%s254 + $0x7a8] sm:$0xff]
        %v896 = vld [vmem:[%s254 + $0x7b0] sm:$0xff]
        %v897 = vld [vmem:[%s254 + $0x7b8] sm:$0xff]
        %v898 = vld [vmem:[%s254 + $0x7c0] sm:$0xff]
        %v899 = vld [vmem:[%s254 + $0x7c8] sm:$0xff]
        %v900 = vld [vmem:[%s254 + $0x7d0] sm:$0xff]
        %v901 = vld [vmem:[%s254 + $0x7d8] sm:$0xff]
        %v902 = vld [vmem:[%s254 + $0x7e0] sm:$0xff]
        %v903 = vld [vmem:[%s254 + $0x7e8] sm:$0xff]
        %v904 = vld [vmem:[%s254 + $0x7f0] sm:$0xff]
        %v905 = vld [vmem:[%s254 + $0x7f8] sm:$0xff]
        %v906 = vpack.c.bf16 %v651, %v650
        %v907 = vpack.c.bf16 %v653, %v652
        %v908 = vpack.c.bf16 %v655, %v654
        %v909 = vpack.c.bf16 %v657, %v656
        %v910 = vpack.c.bf16 %v659, %v658
        %v911 = vpack.c.bf16 %v661, %v660
        %v912 = vpack.c.bf16 %v663, %v662
        %v913 = vpack.c.bf16 %v665, %v664
        %v914 = vpack.c.bf16 %v667, %v666
        %v915 = vpack.c.bf16 %v669, %v668
        %v916 = vpack.c.bf16 %v671, %v670
        %v917 = vpack.c.bf16 %v673, %v672
        %v918 = vpack.c.bf16 %v675, %v674
        %v919 = vpack.c.bf16 %v677, %v676
        %v920 = vpack.c.bf16 %v679, %v678
        %v921 = vpack.c.bf16 %v681, %v680
        %v922 = vpack.c.bf16 %v683, %v682
        %v923 = vpack.c.bf16 %v685, %v684
        %v924 = vpack.c.bf16 %v687, %v686
        %v925 = vpack.c.bf16 %v689, %v688
        %v926 = vpack.c.bf16 %v691, %v690
        %v927 = vpack.c.bf16 %v693, %v692
        %v928 = vpack.c.bf16 %v695, %v694
        %v929 = vpack.c.bf16 %v697, %v696
        %v930 = vpack.c.bf16 %v699, %v698
        %v931 = vpack.c.bf16 %v701, %v700
        %v932 = vpack.c.bf16 %v703, %v702
        %v933 = vpack.c.bf16 %v705, %v704
        %v934 = vpack.c.bf16 %v707, %v706
        %v935 = vpack.c.bf16 %v709, %v708
        %v936 = vpack.c.bf16 %v711, %v710
        %v937 = vpack.c.bf16 %v713, %v712
        %v938 = vpack.c.bf16 %v715, %v714
        %v939 = vpack.c.bf16 %v717, %v716
        %v940 = vpack.c.bf16 %v719, %v718
        %v941 = vpack.c.bf16 %v721, %v720
        %v942 = vpack.c.bf16 %v723, %v722
        %v943 = vpack.c.bf16 %v725, %v724
        %v944 = vpack.c.bf16 %v727, %v726
        %v945 = vpack.c.bf16 %v729, %v728
        %v946 = vpack.c.bf16 %v731, %v730
        %v947 = vpack.c.bf16 %v733, %v732
        %v948 = vpack.c.bf16 %v735, %v734
        %v949 = vpack.c.bf16 %v737, %v736
        %v950 = vpack.c.bf16 %v739, %v738
        %v951 = vpack.c.bf16 %v741, %v740
        %v952 = vpack.c.bf16 %v743, %v742
        %v953 = vpack.c.bf16 %v745, %v744
        %v954 = vpack.c.bf16 %v747, %v746
        %v955 = vpack.c.bf16 %v749, %v748
        %v956 = vpack.c.bf16 %v751, %v750
        %v957 = vpack.c.bf16 %v753, %v752
        %v958 = vpack.c.bf16 %v755, %v754
        %v959 = vpack.c.bf16 %v757, %v756
        %v960 = vpack.c.bf16 %v759, %v758
        %v961 = vpack.c.bf16 %v761, %v760
        %v962 = vpack.c.bf16 %v763, %v762
        %v963 = vpack.c.bf16 %v765, %v764
        %v964 = vpack.c.bf16 %v767, %v766
        %v965 = vpack.c.bf16 %v769, %v768
        %v966 = vpack.c.bf16 %v771, %v770
        %v967 = vpack.c.bf16 %v773, %v772
        %v968 = vpack.c.bf16 %v775, %v774
        %v969 = vpack.c.bf16 %v777, %v776
        %v970 = vpack.c.bf16 %v779, %v778
        %v971 = vpack.c.bf16 %v781, %v780
        %v972 = vpack.c.bf16 %v783, %v782
        %v973 = vpack.c.bf16 %v785, %v784
        %v974 = vpack.c.bf16 %v787, %v786
        %v975 = vpack.c.bf16 %v789, %v788
        %v976 = vpack.c.bf16 %v791, %v790
        %v977 = vpack.c.bf16 %v793, %v792
        %v978 = vpack.c.bf16 %v795, %v794
        %v979 = vpack.c.bf16 %v797, %v796
        %v980 = vpack.c.bf16 %v799, %v798
        %v981 = vpack.c.bf16 %v801, %v800
        %v982 = vpack.c.bf16 %v803, %v802
        %v983 = vpack.c.bf16 %v805, %v804
        %v984 = vpack.c.bf16 %v807, %v806
        %v985 = vpack.c.bf16 %v809, %v808
        %v986 = vpack.c.bf16 %v811, %v810
        %v987 = vpack.c.bf16 %v813, %v812
        %v988 = vpack.c.bf16 %v815, %v814
        %v989 = vpack.c.bf16 %v817, %v816
        %v990 = vpack.c.bf16 %v819, %v818
        %v991 = vpack.c.bf16 %v821, %v820
        %v992 = vpack.c.bf16 %v823, %v822
        %v993 = vpack.c.bf16 %v825, %v824
        %v994 = vpack.c.bf16 %v827, %v826
        %v995 = vpack.c.bf16 %v829, %v828
        %v996 = vpack.c.bf16 %v831, %v830
        %v997 = vpack.c.bf16 %v833, %v832
        %v998 = vpack.c.bf16 %v835, %v834
        %v999 = vpack.c.bf16 %v837, %v836
        %v1000 = vpack.c.bf16 %v839, %v838
        %v1001 = vpack.c.bf16 %v841, %v840
        %v1002 = vpack.c.bf16 %v843, %v842
        %v1003 = vpack.c.bf16 %v845, %v844
        %v1004 = vpack.c.bf16 %v847, %v846
        %v1005 = vpack.c.bf16 %v849, %v848
        %v1006 = vpack.c.bf16 %v851, %v850
        %v1007 = vpack.c.bf16 %v853, %v852
        %v1008 = vpack.c.bf16 %v855, %v854
        %v1009 = vpack.c.bf16 %v857, %v856
        %v1010 = vpack.c.bf16 %v859, %v858
        %v1011 = vpack.c.bf16 %v861, %v860
        %v1012 = vpack.c.bf16 %v863, %v862
        %v1013 = vpack.c.bf16 %v865, %v864
        %v1014 = vpack.c.bf16 %v867, %v866
        %v1015 = vpack.c.bf16 %v869, %v868
        %v1016 = vpack.c.bf16 %v871, %v870
        %v1017 = vpack.c.bf16 %v873, %v872
        %v1018 = vpack.c.bf16 %v875, %v874
        %v1019 = vpack.c.bf16 %v877, %v876
        %v1020 = vpack.c.bf16 %v879, %v878
        %v1021 = vpack.c.bf16 %v881, %v880
        %v1022 = vpack.c.bf16 %v883, %v882
        %v1023 = vpack.c.bf16 %v885, %v884
        %v1024 = vpack.c.bf16 %v887, %v886
        %v1025 = vpack.c.bf16 %v889, %v888
        %v1026 = vpack.c.bf16 %v891, %v890
        %v1027 = vpack.c.bf16 %v893, %v892
        %v1028 = vpack.c.bf16 %v895, %v894
        %v1029 = vpack.c.bf16 %v897, %v896
        %v1030 = vpack.c.bf16 %v899, %v898
        %v1031 = vpack.c.bf16 %v901, %v900
        %v1032 = vpack.c.bf16 %v903, %v902
        %v1033 = vpack.c.bf16 %v905, %v904
        %v1034 = vld [vmem:[%s2] sm:$0xf]
        %v1035 = vld [vmem:[%s2 + $0x4] sm:$0xf]
        %v1036 = vld [vmem:[%s2 + $0x8] sm:$0xf]
        %v1037 = vld [vmem:[%s2 + $0xc] sm:$0xf]
        %v1038 = vld [vmem:[%s2 + $0x10] sm:$0xf]
        %v1039 = vld [vmem:[%s2 + $0x14] sm:$0xf]
        %v1040 = vld [vmem:[%s2 + $0x18] sm:$0xf]
        %v1041 = vld [vmem:[%s2 + $0x1c] sm:$0xf]
        %v1042 = vld [vmem:[%s2 + $0x20] sm:$0xf]
        %v1043 = vld [vmem:[%s2 + $0x24] sm:$0xf]
        %v1044 = vld [vmem:[%s2 + $0x28] sm:$0xf]
        %v1045 = vld [vmem:[%s2 + $0x2c] sm:$0xf]
        %v1046 = vld [vmem:[%s2 + $0x30] sm:$0xf]
        %v1047 = vld [vmem:[%s2 + $0x34] sm:$0xf]
        %v1048 = vld [vmem:[%s2 + $0x38] sm:$0xf]
        %v1049 = vld [vmem:[%s2 + $0x3c] sm:$0xf]
        %v1050 = vld [vmem:[%s2 + $0x40] sm:$0xf]
        %v1051 = vld [vmem:[%s2 + $0x44] sm:$0x7]
        %v1052 = vld [vmem:[%s2 + $0x48] sm:$0xf]
        %v1053 = vld [vmem:[%s2 + $0x4c] sm:$0xf]
        %v1054 = vld [vmem:[%s2 + $0x50] sm:$0xf]
        %v1055 = vld [vmem:[%s2 + $0x54] sm:$0xf]
        %v1056 = vld [vmem:[%s2 + $0x58] sm:$0x1]
        %v1057 = vld [vmem:[%s3] sm:$0xff]
        %v1058 = vld [vmem:[%s3 + $0x8] sm:$0xff]
        %v1059 = vld [vmem:[%s3 + $0x10] sm:$0xff]
        %v1060 = vld [vmem:[%s3 + $0x18] sm:$0xff]
        %v1061 = vld [vmem:[%s3 + $0x8] sm:$0x1f]
        %v1062 = vld [vmem:[%s3] sm:$0x1]
        %v1071 = vunpack.c.l.b16 %v1042
        %v1072 = vunpack.c.l.b16 %v1043
        %v1073 = vunpack.c.l.b16 %v1044
        %v1074 = vunpack.c.l.b16 %v1045
        %v1075 = vunpack.c.l.b16 %v1046
        %v1076 = vunpack.c.l.b16 %v1047
        %v1077 = vunpack.c.l.b16 %v1048
        %v1078 = vunpack.c.l.b16 %v1049
        %v1079 = vpack.c.b16 %v1072, %v1071
        %v1080 = vpack.c.b16 %v1074, %v1073
        %v1081 = vpack.c.b16 %v1076, %v1075
        %v1082 = vpack.c.b16 %v1078, %v1077
        %vm1083 = vcmask 23552
        %v1085 = vsel %vm1083, %v1079, 0
        %v1088 = vsel %vm1083, %v1080, 0
        %v1091 = vsel %vm1083, %v1081, 0
        %v1094 = vsel %vm1083, %v1082, 0
        %v1097 = vsel %vm1083, %v906, 0
        %v1100 = vsel %vm1083, %v907, 0
        %v1103 = vsel %vm1083, %v908, 0
        %v1106 = vsel %vm1083, %v909, 0
        %v1109 = vsel %vm1083, %v910, 0
        %v1112 = vsel %vm1083, %v911, 0
        %v1115 = vsel %vm1083, %v912, 0
        %v1118 = vsel %vm1083, %v913, 0
        %v1121 = vsel %vm1083, %v914, 0
        %v1124 = vsel %vm1083, %v915, 0
        %v1127 = vsel %vm1083, %v916, 0
        %v1130 = vsel %vm1083, %v917, 0
        %v1133 = vsel %vm1083, %v918, 0
        %v1136 = vsel %vm1083, %v919, 0
        %v1139 = vsel %vm1083, %v920, 0
        %v1142 = vsel %vm1083, %v921, 0
        %v1145 = vsel %vm1083, %v922, 0
        %v1148 = vsel %vm1083, %v923, 0
        %v1151 = vsel %vm1083, %v924, 0
        %v1154 = vsel %vm1083, %v925, 0
        %v1157 = vsel %vm1083, %v926, 0
        %v1160 = vsel %vm1083, %v927, 0
        %v1163 = vsel %vm1083, %v928, 0
        %v1166 = vsel %vm1083, %v929, 0
        %v1169 = vsel %vm1083, %v930, 0
        %v1172 = vsel %vm1083, %v931, 0
        %v1175 = vsel %vm1083, %v932, 0
        %v1178 = vsel %vm1083, %v933, 0
        %v1181 = vsel %vm1083, %v934, 0
        %v1184 = vsel %vm1083, %v935, 0
        %v1187 = vsel %vm1083, %v936, 0
        %v1190 = vsel %vm1083, %v937, 0
        %v1193 = vsel %vm1083, %v938, 0
        %v1196 = vsel %vm1083, %v939, 0
        %v1199 = vsel %vm1083, %v940, 0
        %v1202 = vsel %vm1083, %v941, 0
        %v1205 = vsel %vm1083, %v942, 0
        %v1208 = vsel %vm1083, %v943, 0
        %v1211 = vsel %vm1083, %v944, 0
        %v1214 = vsel %vm1083, %v945, 0
        %v1217 = vsel %vm1083, %v946, 0
        %v1220 = vsel %vm1083, %v947, 0
        %v1223 = vsel %vm1083, %v948, 0
        %v1226 = vsel %vm1083, %v949, 0
        %v1229 = vsel %vm1083, %v950, 0
        %v1232 = vsel %vm1083, %v951, 0
        %v1235 = vsel %vm1083, %v952, 0
        %v1238 = vsel %vm1083, %v953, 0
        %v1241 = vsel %vm1083, %v954, 0
        %v1244 = vsel %vm1083, %v955, 0
        %v1247 = vsel %vm1083, %v956, 0
        %v1250 = vsel %vm1083, %v957, 0
        %v1253 = vsel %vm1083, %v958, 0
        %v1256 = vsel %vm1083, %v959, 0
        %v1259 = vsel %vm1083, %v960, 0
        %v1262 = vsel %vm1083, %v961, 0
        %v1265 = vsel %vm1083, %v962, 0
        %v1268 = vsel %vm1083, %v963, 0
        %v1271 = vsel %vm1083, %v964, 0
        %v1274 = vsel %vm1083, %v965, 0
        %v1277 = vsel %vm1083, %v966, 0
        %v1280 = vsel %vm1083, %v967, 0
        %v1283 = vsel %vm1083, %v968, 0
        %v1286 = vsel %vm1083, %v969, 0
        %v1289 = vsel %vm1083, %v970, 0
        %v1292 = vsel %vm1083, %v971, 0
        %v1295 = vsel %vm1083, %v972, 0
        %v1298 = vsel %vm1083, %v973, 0
        %v1301 = vsel %vm1083, %v974, 0
        %v1304 = vsel %vm1083, %v975, 0
        %v1307 = vsel %vm1083, %v976, 0
        %v1310 = vsel %vm1083, %v977, 0
        %v1313 = vsel %vm1083, %v978, 0
        %v1316 = vsel %vm1083, %v979, 0
        %v1319 = vsel %vm1083, %v980, 0
        %v1322 = vsel %vm1083, %v981, 0
        %v1325 = vsel %vm1083, %v982, 0
        %v1328 = vsel %vm1083, %v983, 0
        %v1331 = vsel %vm1083, %v984, 0
        %v1334 = vsel %vm1083, %v985, 0
        %v1337 = vsel %vm1083, %v986, 0
        %v1340 = vsel %vm1083, %v987, 0
        %v1343 = vsel %vm1083, %v988, 0
        %v1346 = vsel %vm1083, %v989, 0
        %v1349 = vsel %vm1083, %v990, 0
        %v1352 = vsel %vm1083, %v991, 0
        %v1355 = vsel %vm1083, %v992, 0
        %v1358 = vsel %vm1083, %v993, 0
        %v1361 = vsel %vm1083, %v994, 0
        %v1364 = vsel %vm1083, %v995, 0
        %v1367 = vsel %vm1083, %v996, 0
        %v1370 = vsel %vm1083, %v997, 0
        %v1373 = vsel %vm1083, %v998, 0
        %v1376 = vsel %vm1083, %v999, 0
        %v1379 = vsel %vm1083, %v1000, 0
        %v1382 = vsel %vm1083, %v1001, 0
        %v1385 = vsel %vm1083, %v1002, 0
        %v1388 = vsel %vm1083, %v1003, 0
        %v1391 = vsel %vm1083, %v1004, 0
        %v1394 = vsel %vm1083, %v1005, 0
        %v1397 = vsel %vm1083, %v1006, 0
        %v1400 = vsel %vm1083, %v1007, 0
        %v1403 = vsel %vm1083, %v1008, 0
        %v1406 = vsel %vm1083, %v1009, 0
        %v1409 = vsel %vm1083, %v1010, 0
        %v1412 = vsel %vm1083, %v1011, 0
        %v1415 = vsel %vm1083, %v1012, 0
        %v1418 = vsel %vm1083, %v1013, 0
        %v1421 = vsel %vm1083, %v1014, 0
        %v1424 = vsel %vm1083, %v1015, 0
        %v1427 = vsel %vm1083, %v1016, 0
        %v1430 = vsel %vm1083, %v1017, 0
        %v1433 = vsel %vm1083, %v1018, 0
        %v1436 = vsel %vm1083, %v1019, 0
        %v1439 = vsel %vm1083, %v1020, 0
        %v1442 = vsel %vm1083, %v1021, 0
        %v1445 = vsel %vm1083, %v1022, 0
        %v1448 = vsel %vm1083, %v1023, 0
        %v1451 = vsel %vm1083, %v1024, 0
        %v1454 = vsel %vm1083, %v1025, 0
        %v1457 = vsel %vm1083, %v1026, 0
        %v1460 = vsel %vm1083, %v1027, 0
        %v1463 = vsel %vm1083, %v1028, 0
        %v1466 = vsel %vm1083, %v1029, 0
        %v1469 = vsel %vm1083, %v1030, 0
        %v1472 = vsel %vm1083, %v1031, 0
        %v1475 = vsel %vm1083, %v1032, 0
        %v1478 = vsel %vm1083, %v1033, 0
        %1480 = vmatprep.subr.bf16.mxu0 0
        %1481 = vmatpush1.bf16.xpose.msra.mxu0 %v1097
        %1482 = vmatprep.subr.bf16.mxu0 0
        %1483 = vmatpush1.bf16.xpose.msra.mxu0 %v1100
        %1484 = vmatprep.subr.bf16.mxu0 0
        %1485 = vmatpush1.bf16.xpose.msra.mxu0 %v1103
        %1486 = vmatprep.subr.bf16.mxu0 0
        %1487 = vmatpush1.bf16.xpose.msra.mxu0 %v1106
        %1488 = vmatprep.subr.bf16.mxu0 0
        %1489 = vmatpush1.bf16.xpose.msra.mxu0 %v1109
        %1490 = vmatprep.subr.bf16.mxu0 0
        %1491 = vmatpush1.bf16.xpose.msra.mxu0 %v1112
        %1492 = vmatprep.subr.bf16.mxu0 0
        %1493 = vmatpush1.bf16.xpose.msra.mxu0 %v1115
        %1494 = vmatprep.subr.bf16.mxu0 0
        %1495 = vmatpush1.bf16.xpose.msra.mxu0 %v1118
        %1496 = vmatprep.subr.bf16.mxu0 0
        %1497 = vmatpush1.bf16.xpose.msra.mxu0 %v1121
        %1498 = vmatprep.subr.bf16.mxu0 0
        %1499 = vmatpush1.bf16.xpose.msra.mxu0 %v1124
        %1500 = vmatprep.subr.bf16.mxu0 0
        %1501 = vmatpush1.bf16.xpose.msra.mxu0 %v1127
        %1502 = vmatprep.subr.bf16.mxu0 0
        %1503 = vmatpush1.bf16.xpose.msra.mxu0 %v1130
        %1504 = vmatprep.subr.bf16.mxu0 0
        %1505 = vmatpush1.bf16.xpose.msra.mxu0 %v1133
        %1506 = vmatprep.subr.bf16.mxu0 0
        %1507 = vmatpush1.bf16.xpose.msra.mxu0 %v1136
        %1508 = vmatprep.subr.bf16.mxu0 0
        %1509 = vmatpush1.bf16.xpose.msra.mxu0 %v1139
        %1510 = vmatprep.subr.bf16.mxu0 0
        %1511 = vmatpush1.bf16.xpose.msra.mxu0 %v1142
        %1512 = vmatprep.mubr.bf16.mxu0 0
        %1513 = vmatmul.mubr.bf16.gmra.mrb[0].mxu0 %v1085
        %v1514 = vpop.f32.mrb[0].mxu0
        %v1515 = vadd.f32 0.0, %v1514
        %v1516 = vpop.f32.mrb[0].mxu0
        %v1517 = vadd.f32 0.0, %v1516
        %v1518 = vpop.f32.mrb[0].mxu0
        %v1519 = vadd.f32 0.0, %v1518
        %v1520 = vpop.f32.mrb[0].mxu0
        %v1521 = vadd.f32 0.0, %v1520
        %1522 = vmatprep.mubr.bf16.mxu0 0
        %1523 = vmatmul.mubr.bf16.gmra.mrb[0].mxu0 %v1088
        %v1524 = vpop.f32.mrb[0].mxu0
        %v1525 = vadd.f32 0.0, %v1524
        %v1526 = vpop.f32.mrb[0].mxu0
        %v1527 = vadd.f32 0.0, %v1526
        %v1528 = vpop.f32.mrb[0].mxu0
        %v1529 = vadd.f32 0.0, %v1528
        %v1530 = vpop.f32.mrb[0].mxu0
        %v1531 = vadd.f32 0.0, %v1530
        %1532 = vmatprep.mubr.bf16.mxu0 0
        %1533 = vmatmul.mubr.bf16.gmra.mrb[0].mxu0 %v1091
        %v1534 = vpop.f32.mrb[0].mxu0
        %v1535 = vadd.f32 0.0, %v1534
        %v1536 = vpop.f32.mrb[0].mxu0
        %v1537 = vadd.f32 0.0, %v1536
        %v1538 = vpop.f32.mrb[0].mxu0
        %v1539 = vadd.f32 0.0, %v1538
        %v1540 = vpop.f32.mrb[0].mxu0
        %v1541 = vadd.f32 0.0, %v1540
        %1542 = vmatprep.mubr.bf16.mxu0 0
        %1543 = vmatmul.mubr.bf16.gmra.mrb[0].mxu0 %v1094
        %v1544 = vpop.f32.mrb[0].mxu0
        %v1545 = vadd.f32 0.0, %v1544
        %v1546 = vpop.f32.mrb[0].mxu0
        %v1547 = vadd.f32 0.0, %v1546
        %v1548 = vpop.f32.mrb[0].mxu0
        %v1549 = vadd.f32 0.0, %v1548
        %v1550 = vpop.f32.mrb[0].mxu0
        %v1551 = vadd.f32 0.0, %v1550
        %1552 = vdwg.mxu0
        %1553 = vmatprep.subr.bf16.mxu0 0
        %1554 = vmatpush1.bf16.xpose.msra.mxu0 %v1145
        %1555 = vmatprep.subr.bf16.mxu0 0
        %1556 = vmatpush1.bf16.xpose.msra.mxu0 %v1148
        %1557 = vmatprep.subr.bf16.mxu0 0
        %1558 = vmatpush1.bf16.xpose.msra.mxu0 %v1151
        %1559 = vmatprep.subr.bf16.mxu0 0
        %1560 = vmatpush1.bf16.xpose.msra.mxu0 %v1154
        %1561 = vmatprep.subr.bf16.mxu0 0
        %1562 = vmatpush1.bf16.xpose.msra.mxu0 %v1157
        %1563 = vmatprep.subr.bf16.mxu0 0
        %1564 = vmatpush1.bf16.xpose.msra.mxu0 %v1160
        %1565 = vmatprep.subr.bf16.mxu0 0
        %1566 = vmatpush1.bf16.xpose.msra.mxu0 %v1163
        %1567 = vmatprep.subr.bf16.mxu0 0
        %1568 = vmatpush1.bf16.xpose.msra.mxu0 %v1166
        %1569 = vmatprep.subr.bf16.mxu0 0
        %1570 = vmatpush1.bf16.xpose.msra.mxu0 %v1169
        %1571 = vmatprep.subr.bf16.mxu0 0
        %1572 = vmatpush1.bf16.xpose.msra.mxu0 %v1172
        %1573 = vmatprep.subr.bf16.mxu0 0
        %1574 = vmatpush1.bf16.xpose.msra.mxu0 %v1175
        %1575 = vmatprep.subr.bf16.mxu0 0
        %1576 = vmatpush1.bf16.xpose.msra.mxu0 %v1178
        %1577 = vmatprep.subr.bf16.mxu0 0
        %1578 = vmatpush1.bf16.xpose.msra.mxu0 %v1181
        %1579 = vmatprep.subr.bf16.mxu0 0
        %1580 = vmatpush1.bf16.xpose.msra.mxu0 %v1184
        %1581 = vmatprep.subr.bf16.mxu0 0
        %1582 = vmatpush1.bf16.xpose.msra.mxu0 %v1187
        %1583 = vmatprep.subr.bf16.mxu0 0
        %1584 = vmatpush1.bf16.xpose.msra.mxu0 %v1190
        %1585 = vmatprep.mubr.bf16.mxu0 0
        %1586 = vmatmul.mubr.bf16.gmra.mrb[0].mxu0 %v1085
        %v1587 = vpop.f32.mrb[0].mxu0
        %v1588 = vadd.f32 0.0, %v1587
        %v1589 = vpop.f32.mrb[0].mxu0
        %v1590 = vadd.f32 0.0, %v1589
        %v1591 = vpop.f32.mrb[0].mxu0
        %v1592 = vadd.f32 0.0, %v1591
        %v1593 = vpop.f32.mrb[0].mxu0
        %v1594 = vadd.f32 0.0, %v1593
        %1595 = vmatprep.mubr.bf16.mxu0 0
        %1596 = vmatmul.mubr.bf16.gmra.mrb[0].mxu0 %v1088
        %v1597 = vpop.f32.mrb[0].mxu0
        %v1598 = vadd.f32 0.0, %v1597
        %v1599 = vpop.f32.mrb[0].mxu0
        %v1600 = vadd.f32 0.0, %v1599
        %v1601 = vpop.f32.mrb[0].mxu0
        %v1602 = vadd.f32 0.0, %v1601
        %v1603 = vpop.f32.mrb[0].mxu0
        %v1604 = vadd.f32 0.0, %v1603
        %1605 = vmatprep.mubr.bf16.mxu0 0
        %1606 = vmatmul.mubr.bf16.gmra.mrb[0].mxu0 %v1091
        %v1607 = vpop.f32.mrb[0].mxu0
        %v1608 = vadd.f32 0.0, %v1607
        %v1609 = vpop.f32.mrb[0].mxu0
        %v1610 = vadd.f32 0.0, %v1609
        %v1611 = vpop.f32.mrb[0].mxu0
        %v1612 = vadd.f32 0.0, %v1611
        %v1613 = vpop.f32.mrb[0].mxu0
        %v1614 = vadd.f32 0.0, %v1613
        %1615 = vmatprep.mubr.bf16.mxu0 0
        %1616 = vmatmul.mubr.bf16.gmra.mrb[0].mxu0 %v1094
        %v1617 = vpop.f32.mrb[0].mxu0
        %v1618 = vadd.f32 0.0, %v1617
        %v1619 = vpop.f32.mrb[0].mxu0
        %v1620 = vadd.f32 0.0, %v1619
        %v1621 = vpop.f32.mrb[0].mxu0
        %v1622 = vadd.f32 0.0, %v1621
        %v1623 = vpop.f32.mrb[0].mxu0
        %v1624 = vadd.f32 0.0, %v1623
        %1625 = vdwg.mxu0
        %1626 = vmatprep.subr.bf16.mxu0 0
        %1627 = vmatpush1.bf16.xpose.msra.mxu0 %v1193
        %1628 = vmatprep.subr.bf16.mxu0 0
        %1629 = vmatpush1.bf16.xpose.msra.mxu0 %v1196
        %1630 = vmatprep.subr.bf16.mxu0 0
        %1631 = vmatpush1.bf16.xpose.msra.mxu0 %v1199
        %1632 = vmatprep.subr.bf16.mxu0 0
        %1633 = vmatpush1.bf16.xpose.msra.mxu0 %v1202
        %1634 = vmatprep.subr.bf16.mxu0 0
        %1635 = vmatpush1.bf16.xpose.msra.mxu0 %v1205
        %1636 = vmatprep.subr.bf16.mxu0 0
        %1637 = vmatpush1.bf16.xpose.msra.mxu0 %v1208
        %1638 = vmatprep.subr.bf16.mxu0 0
        %1639 = vmatpush1.bf16.xpose.msra.mxu0 %v1211
        %1640 = vmatprep.subr.bf16.mxu0 0
        %1641 = vmatpush1.bf16.xpose.msra.mxu0 %v1214
        %1642 = vmatprep.subr.bf16.mxu0 0
        %1643 = vmatpush1.bf16.xpose.msra.mxu0 %v1217
        %1644 = vmatprep.subr.bf16.mxu0 0
        %1645 = vmatpush1.bf16.xpose.msra.mxu0 %v1220
        %1646 = vmatprep.subr.bf16.mxu0 0
        %1647 = vmatpush1.bf16.xpose.msra.mxu0 %v1223
        %1648 = vmatprep.subr.bf16.mxu0 0
        %1649 = vmatpush1.bf16.xpose.msra.mxu0 %v1226
        %1650 = vmatprep.subr.bf16.mxu0 0
        %1651 = vmatpush1.bf16.xpose.msra.mxu0 %v1229
        %1652 = vmatprep.subr.bf16.mxu0 0
        %1653 = vmatpush1.bf16.xpose.msra.mxu0 %v1232
        %1654 = vmatprep.subr.bf16.mxu0 0
        %1655 = vmatpush1.bf16.xpose.msra.mxu0 %v1235
        %1656 = vmatprep.subr.bf16.mxu0 0
        %1657 = vmatpush1.bf16.xpose.msra.mxu0 %v1238
        %1658 = vmatprep.mubr.bf16.mxu0 0
        %1659 = vmatmul.mubr.bf16.gmra.mrb[0].mxu0 %v1085
        %v1660 = vpop.f32.mrb[0].mxu0
        %v1661 = vadd.f32 0.0, %v1660
        %v1662 = vpop.f32.mrb[0].mxu0
        %v1663 = vadd.f32 0.0, %v1662
        %v1664 = vpop.f32.mrb[0].mxu0
        %v1665 = vadd.f32 0.0, %v1664
        %v1666 = vpop.f32.mrb[0].mxu0
        %v1667 = vadd.f32 0.0, %v1666
        %1668 = vmatprep.mubr.bf16.mxu0 0
        %1669 = vmatmul.mubr.bf16.gmra.mrb[0].mxu0 %v1088
        %v1670 = vpop.f32.mrb[0].mxu0
        %v1671 = vadd.f32 0.0, %v1670
        %v1672 = vpop.f32.mrb[0].mxu0
        %v1673 = vadd.f32 0.0, %v1672
        %v1674 = vpop.f32.mrb[0].mxu0
        %v1675 = vadd.f32 0.0, %v1674
        %v1676 = vpop.f32.mrb[0].mxu0
        %v1677 = vadd.f32 0.0, %v1676
        %1678 = vmatprep.mubr.bf16.mxu0 0
        %1679 = vmatmul.mubr.bf16.gmra.mrb[0].mxu0 %v1091
        %v1680 = vpop.f32.mrb[0].mxu0
        %v1681 = vadd.f32 0.0, %v1680
        %v1682 = vpop.f32.mrb[0].mxu0
        %v1683 = vadd.f32 0.0, %v1682
        %v1684 = vpop.f32.mrb[0].mxu0
        %v1685 = vadd.f32 0.0, %v1684
        %v1686 = vpop.f32.mrb[0].mxu0
        %v1687 = vadd.f32 0.0, %v1686
        %1688 = vmatprep.mubr.bf16.mxu0 0
        %1689 = vmatmul.mubr.bf16.gmra.mrb[0].mxu0 %v1094
        %v1690 = vpop.f32.mrb[0].mxu0
        %v1691 = vadd.f32 0.0, %v1690
        %v1692 = vpop.f32.mrb[0].mxu0
        %v1693 = vadd.f32 0.0, %v1692
        %v1694 = vpop.f32.mrb[0].mxu0
        %v1695 = vadd.f32 0.0, %v1694
        %v1696 = vpop.f32.mrb[0].mxu0
        %v1697 = vadd.f32 0.0, %v1696
        %1698 = vdwg.mxu0
        %1699 = vmatprep.subr.bf16.mxu0 0
        %1700 = vmatpush1.bf16.xpose.msra.mxu0 %v1241
        %1701 = vmatprep.subr.bf16.mxu0 0
        %1702 = vmatpush1.bf16.xpose.msra.mxu0 %v1244
        %1703 = vmatprep.subr.bf16.mxu0 0
        %1704 = vmatpush1.bf16.xpose.msra.mxu0 %v1247
        %1705 = vmatprep.subr.bf16.mxu0 0
        %1706 = vmatpush1.bf16.xpose.msra.mxu0 %v1250
        %1707 = vmatprep.subr.bf16.mxu0 0
        %1708 = vmatpush1.bf16.xpose.msra.mxu0 %v1253
        %1709 = vmatprep.subr.bf16.mxu0 0
        %1710 = vmatpush1.bf16.xpose.msra.mxu0 %v1256
        %1711 = vmatprep.subr.bf16.mxu0 0
        %1712 = vmatpush1.bf16.xpose.msra.mxu0 %v1259
        %1713 = vmatprep.subr.bf16.mxu0 0
        %1714 = vmatpush1.bf16.xpose.msra.mxu0 %v1262
        %1715 = vmatprep.subr.bf16.mxu0 0
        %1716 = vmatpush1.bf16.xpose.msra.mxu0 %v1265
        %1717 = vmatprep.subr.bf16.mxu0 0
        %1718 = vmatpush1.bf16.xpose.msra.mxu0 %v1268
        %1719 = vmatprep.subr.bf16.mxu0 0
        %1720 = vmatpush1.bf16.xpose.msra.mxu0 %v1271
        %1721 = vmatprep.subr.bf16.mxu0 0
        %1722 = vmatpush1.bf16.xpose.msra.mxu0 %v1274
        %1723 = vmatprep.subr.bf16.mxu0 0
        %1724 = vmatpush1.bf16.xpose.msra.mxu0 %v1277
        %1725 = vmatprep.subr.bf16.mxu0 0
        %1726 = vmatpush1.bf16.xpose.msra.mxu0 %v1280
        %1727 = vmatprep.subr.bf16.mxu0 0
        %1728 = vmatpush1.bf16.xpose.msra.mxu0 %v1283
        %1729 = vmatprep.subr.bf16.mxu0 0
        %1730 = vmatpush1.bf16.xpose.msra.mxu0 %v1286
        %1731 = vmatprep.mubr.bf16.mxu0 0
        %1732 = vmatmul.mubr.bf16.gmra.mrb[0].mxu0 %v1085
        %v1733 = vpop.f32.mrb[0].mxu0
        %v1734 = vadd.f32 0.0, %v1733
        %v1735 = vpop.f32.mrb[0].mxu0
        %v1736 = vadd.f32 0.0, %v1735
        %v1737 = vpop.f32.mrb[0].mxu0
        %v1738 = vadd.f32 0.0, %v1737
        %v1739 = vpop.f32.mrb[0].mxu0
        %v1740 = vadd.f32 0.0, %v1739
        %1741 = vmatprep.mubr.bf16.mxu0 0
        %1742 = vmatmul.mubr.bf16.gmra.mrb[0].mxu0 %v1088
        %v1743 = vpop.f32.mrb[0].mxu0
        %v1744 = vadd.f32 0.0, %v1743
        %v1745 = vpop.f32.mrb[0].mxu0
        %v1746 = vadd.f32 0.0, %v1745
        %v1747 = vpop.f32.mrb[0].mxu0
        %v1748 = vadd.f32 0.0, %v1747
        %v1749 = vpop.f32.mrb[0].mxu0
        %v1750 = vadd.f32 0.0, %v1749
        %1751 = vmatprep.mubr.bf16.mxu0 0
        %1752 = vmatmul.mubr.bf16.gmra.mrb[0].mxu0 %v1091
        %v1753 = vpop.f32.mrb[0].mxu0
        %v1754 = vadd.f32 0.0, %v1753
        %v1755 = vpop.f32.mrb[0].mxu0
        %v1756 = vadd.f32 0.0, %v1755
        %v1757 = vpop.f32.mrb[0].mxu0
        %v1758 = vadd.f32 0.0, %v1757
        %v1759 = vpop.f32.mrb[0].mxu0
        %v1760 = vadd.f32 0.0, %v1759
        %1761 = vmatprep.mubr.bf16.mxu0 0
        %1762 = vmatmul.mubr.bf16.gmra.mrb[0].mxu0 %v1094
        %v1763 = vpop.f32.mrb[0].mxu0
        %v1764 = vadd.f32 0.0, %v1763
        %v1765 = vpop.f32.mrb[0].mxu0
        %v1766 = vadd.f32 0.0, %v1765
        %v1767 = vpop.f32.mrb[0].mxu0
        %v1768 = vadd.f32 0.0, %v1767
        %v1769 = vpop.f32.mrb[0].mxu0
        %v1770 = vadd.f32 0.0, %v1769
        %1771 = vdwg.mxu0
        %1772 = vmatprep.subr.bf16.mxu0 0
        %1773 = vmatpush1.bf16.xpose.msra.mxu0 %v1289
        %1774 = vmatprep.subr.bf16.mxu0 0
        %1775 = vmatpush1.bf16.xpose.msra.mxu0 %v1292
        %1776 = vmatprep.subr.bf16.mxu0 0
        %1777 = vmatpush1.bf16.xpose.msra.mxu0 %v1295
        %1778 = vmatprep.subr.bf16.mxu0 0
        %1779 = vmatpush1.bf16.xpose.msra.mxu0 %v1298
        %1780 = vmatprep.subr.bf16.mxu0 0
        %1781 = vmatpush1.bf16.xpose.msra.mxu0 %v1301
        %1782 = vmatprep.subr.bf16.mxu0 0
        %1783 = vmatpush1.bf16.xpose.msra.mxu0 %v1304
        %1784 = vmatprep.subr.bf16.mxu0 0
        %1785 = vmatpush1.bf16.xpose.msra.mxu0 %v1307
        %1786 = vmatprep.subr.bf16.mxu0 0
        %1787 = vmatpush1.bf16.xpose.msra.mxu0 %v1310
        %1788 = vmatprep.subr.bf16.mxu0 0
        %1789 = vmatpush1.bf16.xpose.msra.mxu0 %v1313
        %1790 = vmatprep.subr.bf16.mxu0 0
        %1791 = vmatpush1.bf16.xpose.msra.mxu0 %v1316
        %1792 = vmatprep.subr.bf16.mxu0 0
        %1793 = vmatpush1.bf16.xpose.msra.mxu0 %v1319
        %1794 = vmatprep.subr.bf16.mxu0 0
        %1795 = vmatpush1.bf16.xpose.msra.mxu0 %v1322
        %1796 = vmatprep.subr.bf16.mxu0 0
        %1797 = vmatpush1.bf16.xpose.msra.mxu0 %v1325
        %1798 = vmatprep.subr.bf16.mxu0 0
        %1799 = vmatpush1.bf16.xpose.msra.mxu0 %v1328
        %1800 = vmatprep.subr.bf16.mxu0 0
        %1801 = vmatpush1.bf16.xpose.msra.mxu0 %v1331
        %1802 = vmatprep.subr.bf16.mxu0 0
        %1803 = vmatpush1.bf16.xpose.msra.mxu0 %v1334
        %1804 = vmatprep.mubr.bf16.mxu0 0
        %1805 = vmatmul.mubr.bf16.gmra.mrb[0].mxu0 %v1085
        %v1806 = vpop.f32.mrb[0].mxu0
        %v1807 = vadd.f32 0.0, %v1806
        %v1808 = vpop.f32.mrb[0].mxu0
        %v1809 = vadd.f32 0.0, %v1808
        %v1810 = vpop.f32.mrb[0].mxu0
        %v1811 = vadd.f32 0.0, %v1810
        %v1812 = vpop.f32.mrb[0].mxu0
        %v1813 = vadd.f32 0.0, %v1812
        %1814 = vmatprep.mubr.bf16.mxu0 0
        %1815 = vmatmul.mubr.bf16.gmra.mrb[0].mxu0 %v1088
        %v1816 = vpop.f32.mrb[0].mxu0
        %v1817 = vadd.f32 0.0, %v1816
        %v1818 = vpop.f32.mrb[0].mxu0
        %v1819 = vadd.f32 0.0, %v1818
        %v1820 = vpop.f32.mrb[0].mxu0
        %v1821 = vadd.f32 0.0, %v1820
        %v1822 = vpop.f32.mrb[0].mxu0
        %v1823 = vadd.f32 0.0, %v1822
        %1824 = vmatprep.mubr.bf16.mxu0 0
        %1825 = vmatmul.mubr.bf16.gmra.mrb[0].mxu0 %v1091
        %v1826 = vpop.f32.mrb[0].mxu0
        %v1827 = vadd.f32 0.0, %v1826
        %v1828 = vpop.f32.mrb[0].mxu0
        %v1829 = vadd.f32 0.0, %v1828
        %v1830 = vpop.f32.mrb[0].mxu0
        %v1831 = vadd.f32 0.0, %v1830
        %v1832 = vpop.f32.mrb[0].mxu0
        %v1833 = vadd.f32 0.0, %v1832
        %1834 = vmatprep.mubr.bf16.mxu0 0
        %1835 = vmatmul.mubr.bf16.gmra.mrb[0].mxu0 %v1094
        %v1836 = vpop.f32.mrb[0].mxu0
        %v1837 = vadd.f32 0.0, %v1836
        %v1838 = vpop.f32.mrb[0].mxu0
        %v1839 = vadd.f32 0.0, %v1838
        %v1840 = vpop.f32.mrb[0].mxu0
        %v1841 = vadd.f32 0.0, %v1840
        %v1842 = vpop.f32.mrb[0].mxu0
        %v1843 = vadd.f32 0.0, %v1842
        %1844 = vdwg.mxu0
        %1845 = vmatprep.subr.bf16.mxu0 0
        %1846 = vmatpush1.bf16.xpose.msra.mxu0 %v1337
        %1847 = vmatprep.subr.bf16.mxu0 0
        %1848 = vmatpush1.bf16.xpose.msra.mxu0 %v1340
        %1849 = vmatprep.subr.bf16.mxu0 0
        %1850 = vmatpush1.bf16.xpose.msra.mxu0 %v1343
        %1851 = vmatprep.subr.bf16.mxu0 0
        %1852 = vmatpush1.bf16.xpose.msra.mxu0 %v1346
        %1853 = vmatprep.subr.bf16.mxu0 0
        %1854 = vmatpush1.bf16.xpose.msra.mxu0 %v1349
        %1855 = vmatprep.subr.bf16.mxu0 0
        %1856 = vmatpush1.bf16.xpose.msra.mxu0 %v1352
        %1857 = vmatprep.subr.bf16.mxu0 0
        %1858 = vmatpush1.bf16.xpose.msra.mxu0 %v1355
        %1859 = vmatprep.subr.bf16.mxu0 0
        %1860 = vmatpush1.bf16.xpose.msra.mxu0 %v1358
        %1861 = vmatprep.subr.bf16.mxu0 0
        %1862 = vmatpush1.bf16.xpose.msra.mxu0 %v1361
        %1863 = vmatprep.subr.bf16.mxu0 0
        %1864 = vmatpush1.bf16.xpose.msra.mxu0 %v1364
        %1865 = vmatprep.subr.bf16.mxu0 0
        %1866 = vmatpush1.bf16.xpose.msra.mxu0 %v1367
        %1867 = vmatprep.subr.bf16.mxu0 0
        %1868 = vmatpush1.bf16.xpose.msra.mxu0 %v1370
        %1869 = vmatprep.subr.bf16.mxu0 0
        %1870 = vmatpush1.bf16.xpose.msra.mxu0 %v1373
        %1871 = vmatprep.subr.bf16.mxu0 0
        %1872 = vmatpush1.bf16.xpose.msra.mxu0 %v1376
        %1873 = vmatprep.subr.bf16.mxu0 0
        %1874 = vmatpush1.bf16.xpose.msra.mxu0 %v1379
        %1875 = vmatprep.subr.bf16.mxu0 0
        %1876 = vmatpush1.bf16.xpose.msra.mxu0 %v1382
        %1877 = vmatprep.mubr.bf16.mxu0 0
        %1878 = vmatmul.mubr.bf16.gmra.mrb[0].mxu0 %v1085
        %v1879 = vpop.f32.mrb[0].mxu0
        %v1880 = vadd.f32 0.0, %v1879
        %v1881 = vpop.f32.mrb[0].mxu0
        %v1882 = vadd.f32 0.0, %v1881
        %v1883 = vpop.f32.mrb[0].mxu0
        %v1884 = vadd.f32 0.0, %v1883
        %v1885 = vpop.f32.mrb[0].mxu0
        %v1886 = vadd.f32 0.0, %v1885
        %1887 = vmatprep.mubr.bf16.mxu0 0
        %1888 = vmatmul.mubr.bf16.gmra.mrb[0].mxu0 %v1088
        %v1889 = vpop.f32.mrb[0].mxu0
        %v1890 = vadd.f32 0.0, %v1889
        %v1891 = vpop.f32.mrb[0].mxu0
        %v1892 = vadd.f32 0.0, %v1891
        %v1893 = vpop.f32.mrb[0].mxu0
        %v1894 = vadd.f32 0.0, %v1893
        %v1895 = vpop.f32.mrb[0].mxu0
        %v1896 = vadd.f32 0.0, %v1895
        %1897 = vmatprep.mubr.bf16.mxu0 0
        %1898 = vmatmul.mubr.bf16.gmra.mrb[0].mxu0 %v1091
        %v1899 = vpop.f32.mrb[0].mxu0
        %v1900 = vadd.f32 0.0, %v1899
        %v1901 = vpop.f32.mrb[0].mxu0
        %v1902 = vadd.f32 0.0, %v1901
        %v1903 = vpop.f32.mrb[0].mxu0
        %v1904 = vadd.f32 0.0, %v1903
        %v1905 = vpop.f32.mrb[0].mxu0
        %v1906 = vadd.f32 0.0, %v1905
        %1907 = vmatprep.mubr.bf16.mxu0 0
        %1908 = vmatmul.mubr.bf16.gmra.mrb[0].mxu0 %v1094
        %v1909 = vpop.f32.mrb[0].mxu0
        %v1910 = vadd.f32 0.0, %v1909
        %v1911 = vpop.f32.mrb[0].mxu0
        %v1912 = vadd.f32 0.0, %v1911
        %v1913 = vpop.f32.mrb[0].mxu0
        %v1914 = vadd.f32 0.0, %v1913
        %v1915 = vpop.f32.mrb[0].mxu0
        %v1916 = vadd.f32 0.0, %v1915
        %1917 = vdwg.mxu0
        %1918 = vmatprep.subr.bf16.mxu0 0
        %1919 = vmatpush1.bf16.xpose.msra.mxu0 %v1385
        %1920 = vmatprep.subr.bf16.mxu0 0
        %1921 = vmatpush1.bf16.xpose.msra.mxu0 %v1388
        %1922 = vmatprep.subr.bf16.mxu0 0
        %1923 = vmatpush1.bf16.xpose.msra.mxu0 %v1391
        %1924 = vmatprep.subr.bf16.mxu0 0
        %1925 = vmatpush1.bf16.xpose.msra.mxu0 %v1394
        %1926 = vmatprep.subr.bf16.mxu0 0
        %1927 = vmatpush1.bf16.xpose.msra.mxu0 %v1397
        %1928 = vmatprep.subr.bf16.mxu0 0
        %1929 = vmatpush1.bf16.xpose.msra.mxu0 %v1400
        %1930 = vmatprep.subr.bf16.mxu0 0
        %1931 = vmatpush1.bf16.xpose.msra.mxu0 %v1403
        %1932 = vmatprep.subr.bf16.mxu0 0
        %1933 = vmatpush1.bf16.xpose.msra.mxu0 %v1406
        %1934 = vmatprep.subr.bf16.mxu0 0
        %1935 = vmatpush1.bf16.xpose.msra.mxu0 %v1409
        %1936 = vmatprep.subr.bf16.mxu0 0
        %1937 = vmatpush1.bf16.xpose.msra.mxu0 %v1412
        %1938 = vmatprep.subr.bf16.mxu0 0
        %1939 = vmatpush1.bf16.xpose.msra.mxu0 %v1415
        %1940 = vmatprep.subr.bf16.mxu0 0
        %1941 = vmatpush1.bf16.xpose.msra.mxu0 %v1418
        %1942 = vmatprep.subr.bf16.mxu0 0
        %1943 = vmatpush1.bf16.xpose.msra.mxu0 %v1421
        %1944 = vmatprep.subr.bf16.mxu0 0
        %1945 = vmatpush1.bf16.xpose.msra.mxu0 %v1424
        %1946 = vmatprep.subr.bf16.mxu0 0
        %1947 = vmatpush1.bf16.xpose.msra.mxu0 %v1427
        %1948 = vmatprep.subr.bf16.mxu0 0
        %1949 = vmatpush1.bf16.xpose.msra.mxu0 %v1430
        %1950 = vmatprep.mubr.bf16.mxu0 0
        %1951 = vmatmul.mubr.bf16.gmra.mrb[0].mxu0 %v1085
        %v1952 = vpop.f32.mrb[0].mxu0
        %v1953 = vadd.f32 0.0, %v1952
        %v1954 = vpop.f32.mrb[0].mxu0
        %v1955 = vadd.f32 0.0, %v1954
        %v1956 = vpop.f32.mrb[0].mxu0
        %v1957 = vadd.f32 0.0, %v1956
        %v1958 = vpop.f32.mrb[0].mxu0
        %v1959 = vadd.f32 0.0, %v1958
        %1960 = vmatprep.mubr.bf16.mxu0 0
        %1961 = vmatmul.mubr.bf16.gmra.mrb[0].mxu0 %v1088
        %v1962 = vpop.f32.mrb[0].mxu0
        %v1963 = vadd.f32 0.0, %v1962
        %v1964 = vpop.f32.mrb[0].mxu0
        %v1965 = vadd.f32 0.0, %v1964
        %v1966 = vpop.f32.mrb[0].mxu0
        %v1967 = vadd.f32 0.0, %v1966
        %v1968 = vpop.f32.mrb[0].mxu0
        %v1969 = vadd.f32 0.0, %v1968
        %1970 = vmatprep.mubr.bf16.mxu0 0
        %1971 = vmatmul.mubr.bf16.gmra.mrb[0].mxu0 %v1091
        %v1972 = vpop.f32.mrb[0].mxu0
        %v1973 = vadd.f32 0.0, %v1972
        %v1974 = vpop.f32.mrb[0].mxu0
        %v1975 = vadd.f32 0.0, %v1974
        %v1976 = vpop.f32.mrb[0].mxu0
        %v1977 = vadd.f32 0.0, %v1976
        %v1978 = vpop.f32.mrb[0].mxu0
        %v1979 = vadd.f32 0.0, %v1978
        %1980 = vmatprep.mubr.bf16.mxu0 0
        %1981 = vmatmul.mubr.bf16.gmra.mrb[0].mxu0 %v1094
        %v1982 = vpop.f32.mrb[0].mxu0
        %v1983 = vadd.f32 0.0, %v1982
        %v1984 = vpop.f32.mrb[0].mxu0
        %v1985 = vadd.f32 0.0, %v1984
        %v1986 = vpop.f32.mrb[0].mxu0
        %v1987 = vadd.f32 0.0, %v1986
        %v1988 = vpop.f32.mrb[0].mxu0
        %v1989 = vadd.f32 0.0, %v1988
        %1990 = vdwg.mxu0
        %1991 = vmatprep.subr.bf16.mxu0 0
        %1992 = vmatpush1.bf16.xpose.msra.mxu0 %v1433
        %1993 = vmatprep.subr.bf16.mxu0 0
        %1994 = vmatpush1.bf16.xpose.msra.mxu0 %v1436
        %1995 = vmatprep.subr.bf16.mxu0 0
        %1996 = vmatpush1.bf16.xpose.msra.mxu0 %v1439
        %1997 = vmatprep.subr.bf16.mxu0 0
        %1998 = vmatpush1.bf16.xpose.msra.mxu0 %v1442
        %1999 = vmatprep.subr.bf16.mxu0 0
        %2000 = vmatpush1.bf16.xpose.msra.mxu0 %v1445
        %2001 = vmatprep.subr.bf16.mxu0 0
        %2002 = vmatpush1.bf16.xpose.msra.mxu0 %v1448
        %2003 = vmatprep.subr.bf16.mxu0 0
        %2004 = vmatpush1.bf16.xpose.msra.mxu0 %v1451
        %2005 = vmatprep.subr.bf16.mxu0 0
        %2006 = vmatpush1.bf16.xpose.msra.mxu0 %v1454
        %2007 = vmatprep.subr.bf16.mxu0 0
        %2008 = vmatpush1.bf16.xpose.msra.mxu0 %v1457
        %2009 = vmatprep.subr.bf16.mxu0 0
        %2010 = vmatpush1.bf16.xpose.msra.mxu0 %v1460
        %2011 = vmatprep.subr.bf16.mxu0 0
        %2012 = vmatpush1.bf16.xpose.msra.mxu0 %v1463
        %2013 = vmatprep.subr.bf16.mxu0 0
        %2014 = vmatpush1.bf16.xpose.msra.mxu0 %v1466
        %2015 = vmatprep.subr.bf16.mxu0 0
        %2016 = vmatpush1.bf16.xpose.msra.mxu0 %v1469
        %2017 = vmatprep.subr.bf16.mxu0 0
        %2018 = vmatpush1.bf16.xpose.msra.mxu0 %v1472
        %2019 = vmatprep.subr.bf16.mxu0 0
        %2020 = vmatpush1.bf16.xpose.msra.mxu0 %v1475
        %2021 = vmatprep.subr.bf16.mxu0 0
        %2022 = vmatpush1.bf16.xpose.msra.mxu0 %v1478
        %2023 = vmatprep.mubr.bf16.mxu0 0
        %2024 = vmatmul.mubr.bf16.gmra.mrb[0].mxu0 %v1085
        %v2025 = vpop.f32.mrb[0].mxu0
        %v2026 = vadd.f32 0.0, %v2025
        %v2027 = vpop.f32.mrb[0].mxu0
        %v2028 = vadd.f32 0.0, %v2027
        %v2029 = vpop.f32.mrb[0].mxu0
        %v2030 = vadd.f32 0.0, %v2029
        %v2031 = vpop.f32.mrb[0].mxu0
        %v2032 = vadd.f32 0.0, %v2031
        %2033 = vmatprep.mubr.bf16.mxu0 0
        %2034 = vmatmul.mubr.bf16.gmra.mrb[0].mxu0 %v1088
        %v2035 = vpop.f32.mrb[0].mxu0
        %v2036 = vadd.f32 0.0, %v2035
        %v2037 = vpop.f32.mrb[0].mxu0
        %v2038 = vadd.f32 0.0, %v2037
        %v2039 = vpop.f32.mrb[0].mxu0
        %v2040 = vadd.f32 0.0, %v2039
        %v2041 = vpop.f32.mrb[0].mxu0
        %v2042 = vadd.f32 0.0, %v2041
        %2043 = vmatprep.mubr.bf16.mxu0 0
        %2044 = vmatmul.mubr.bf16.gmra.mrb[0].mxu0 %v1091
        %v2045 = vpop.f32.mrb[0].mxu0
        %v2046 = vadd.f32 0.0, %v2045
        %v2047 = vpop.f32.mrb[0].mxu0
        %v2048 = vadd.f32 0.0, %v2047
        %v2049 = vpop.f32.mrb[0].mxu0
        %v2050 = vadd.f32 0.0, %v2049
        %v2051 = vpop.f32.mrb[0].mxu0
        %v2052 = vadd.f32 0.0, %v2051
        %2053 = vmatprep.mubr.bf16.mxu0 0
        %2054 = vmatmul.mubr.bf16.gmra.mrb[0].mxu0 %v1094
        %v2055 = vpop.f32.mrb[0].mxu0
        %v2056 = vadd.f32 0.0, %v2055
        %v2057 = vpop.f32.mrb[0].mxu0
        %v2058 = vadd.f32 0.0, %v2057
        %v2059 = vpop.f32.mrb[0].mxu0
        %v2060 = vadd.f32 0.0, %v2059
        %v2061 = vpop.f32.mrb[0].mxu0
        %v2062 = vadd.f32 0.0, %v2061
        %2063 = vdwg.mxu0
        %v2072 = vunpack.c.l.b16 %v1034
        %v2073 = vunpack.c.l.b16 %v1035
        %v2074 = vunpack.c.l.b16 %v1036
        %v2075 = vunpack.c.l.b16 %v1037
        %v2076 = vunpack.c.l.b16 %v1038
        %v2077 = vunpack.c.l.b16 %v1039
        %v2078 = vunpack.c.l.b16 %v1040
        %v2079 = vunpack.c.l.b16 %v1041
        %v2080 = vpack.c.b16 %v2073, %v2072
        %v2081 = vpack.c.b16 %v2075, %v2074
        %v2082 = vpack.c.b16 %v2077, %v2076
        %v2083 = vpack.c.b16 %v2079, %v2078
        %vm2084 = vcmask 130048
        %v2086 = vsel %vm2084, %v2080, 0
        %v2089 = vsel %vm2084, %v2081, 0
        %v2092 = vsel %vm2084, %v2082, 0
        %v2095 = vsel %vm2084, %v2083, 0
        %v2098 = vsel %vm2084, %v522, 0
        %v2101 = vsel %vm2084, %v523, 0
        %v2104 = vsel %vm2084, %v524, 0
        %v2107 = vsel %vm2084, %v525, 0
        %v2110 = vsel %vm2084, %v526, 0
        %v2113 = vsel %vm2084, %v527, 0
        %v2116 = vsel %vm2084, %v528, 0
        %v2119 = vsel %vm2084, %v529, 0
        %v2122 = vsel %vm2084, %v530, 0
        %v2125 = vsel %vm2084, %v531, 0
        %v2128 = vsel %vm2084, %v532, 0
        %v2131 = vsel %vm2084, %v533, 0
        %v2134 = vsel %vm2084, %v534, 0
        %v2137 = vsel %vm2084, %v535, 0
        %v2140 = vsel %vm2084, %v536, 0
        %v2143 = vsel %vm2084, %v537, 0
        %v2146 = vsel %vm2084, %v538, 0
        %v2149 = vsel %vm2084, %v539, 0
        %v2152 = vsel %vm2084, %v540, 0
        %v2155 = vsel %vm2084, %v541, 0
        %v2158 = vsel %vm2084, %v542, 0
        %v2161 = vsel %vm2084, %v543, 0
        %v2164 = vsel %vm2084, %v544, 0
        %v2167 = vsel %vm2084, %v545, 0
        %v2170 = vsel %vm2084, %v546, 0
        %v2173 = vsel %vm2084, %v547, 0
        %v2176 = vsel %vm2084, %v548, 0
        %v2179 = vsel %vm2084, %v549, 0
        %v2182 = vsel %vm2084, %v550, 0
        %v2185 = vsel %vm2084, %v551, 0
        %v2188 = vsel %vm2084, %v552, 0
        %v2191 = vsel %vm2084, %v553, 0
        %v2194 = vsel %vm2084, %v554, 0
        %v2197 = vsel %vm2084, %v555, 0
        %v2200 = vsel %vm2084, %v556, 0
        %v2203 = vsel %vm2084, %v557, 0
        %v2206 = vsel %vm2084, %v558, 0
        %v2209 = vsel %vm2084, %v559, 0
        %v2212 = vsel %vm2084, %v560, 0
        %v2215 = vsel %vm2084, %v561, 0
        %v2218 = vsel %vm2084, %v562, 0
        %v2221 = vsel %vm2084, %v563, 0
        %v2224 = vsel %vm2084, %v564, 0
        %v2227 = vsel %vm2084, %v565, 0
        %v2230 = vsel %vm2084, %v566, 0
        %v2233 = vsel %vm2084, %v567, 0
        %v2236 = vsel %vm2084, %v568, 0
        %v2239 = vsel %vm2084, %v569, 0
        %v2242 = vsel %vm2084, %v570, 0
        %v2245 = vsel %vm2084, %v571, 0
        %v2248 = vsel %vm2084, %v572, 0
        %v2251 = vsel %vm2084, %v573, 0
        %v2254 = vsel %vm2084, %v574, 0
        %v2257 = vsel %vm2084, %v575, 0
        %v2260 = vsel %vm2084, %v576, 0
        %v2263 = vsel %vm2084, %v577, 0
        %v2266 = vsel %vm2084, %v578, 0
        %v2269 = vsel %vm2084, %v579, 0
        %v2272 = vsel %vm2084, %v580, 0
        %v2275 = vsel %vm2084, %v581, 0
        %v2278 = vsel %vm2084, %v582, 0
        %v2281 = vsel %vm2084, %v583, 0
        %v2284 = vsel %vm2084, %v584, 0
        %v2287 = vsel %vm2084, %v585, 0
        %v2290 = vsel %vm2084, %v586, 0
        %v2293 = vsel %vm2084, %v587, 0
        %v2296 = vsel %vm2084, %v588, 0
        %v2299 = vsel %vm2084, %v589, 0
        %v2302 = vsel %vm2084, %v590, 0
        %v2305 = vsel %vm2084, %v591, 0
        %v2308 = vsel %vm2084, %v592, 0
        %v2311 = vsel %vm2084, %v593, 0
        %v2314 = vsel %vm2084, %v594, 0
        %v2317 = vsel %vm2084, %v595, 0
        %v2320 = vsel %vm2084, %v596, 0
        %v2323 = vsel %vm2084, %v597, 0
        %v2326 = vsel %vm2084, %v598, 0
        %v2329 = vsel %vm2084, %v599, 0
        %v2332 = vsel %vm2084, %v600, 0
        %v2335 = vsel %vm2084, %v601, 0
        %v2338 = vsel %vm2084, %v602, 0
        %v2341 = vsel %vm2084, %v603, 0
        %v2344 = vsel %vm2084, %v604, 0
        %v2347 = vsel %vm2084, %v605, 0
        %v2350 = vsel %vm2084, %v606, 0
        %v2353 = vsel %vm2084, %v607, 0
        %v2356 = vsel %vm2084, %v608, 0
        %v2359 = vsel %vm2084, %v609, 0
        %v2362 = vsel %vm2084, %v610, 0
        %v2365 = vsel %vm2084, %v611, 0
        %v2368 = vsel %vm2084, %v612, 0
        %v2371 = vsel %vm2084, %v613, 0
        %v2374 = vsel %vm2084, %v614, 0
        %v2377 = vsel %vm2084, %v615, 0
        %v2380 = vsel %vm2084, %v616, 0
        %v2383 = vsel %vm2084, %v617, 0
        %v2386 = vsel %vm2084, %v618, 0
        %v2389 = vsel %vm2084, %v619, 0
        %v2392 = vsel %vm2084, %v620, 0
        %v2395 = vsel %vm2084, %v621, 0
        %v2398 = vsel %vm2084, %v622, 0
        %v2401 = vsel %vm2084, %v623, 0
        %v2404 = vsel %vm2084, %v624, 0
        %v2407 = vsel %vm2084, %v625, 0
        %v2410 = vsel %vm2084, %v626, 0
        %v2413 = vsel %vm2084, %v627, 0
        %v2416 = vsel %vm2084, %v628, 0
        %v2419 = vsel %vm2084, %v629, 0
        %v2422 = vsel %vm2084, %v630, 0
        %v2425 = vsel %vm2084, %v631, 0
        %v2428 = vsel %vm2084, %v632, 0
        %v2431 = vsel %vm2084, %v633, 0
        %v2434 = vsel %vm2084, %v634, 0
        %v2437 = vsel %vm2084, %v635, 0
        %v2440 = vsel %vm2084, %v636, 0
        %v2443 = vsel %vm2084, %v637, 0
        %v2446 = vsel %vm2084, %v638, 0
        %v2449 = vsel %vm2084, %v639, 0
        %v2452 = vsel %vm2084, %v640, 0
        %v2455 = vsel %vm2084, %v641, 0
        %v2458 = vsel %vm2084, %v642, 0
        %v2461 = vsel %vm2084, %v643, 0
        %v2464 = vsel %vm2084, %v644, 0
        %v2467 = vsel %vm2084, %v645, 0
        %v2470 = vsel %vm2084, %v646, 0
        %v2473 = vsel %vm2084, %v647, 0
        %v2476 = vsel %vm2084, %v648, 0
        %v2479 = vsel %vm2084, %v649, 0
        %2481 = vmatprep.subr.bf16.mxu0 0
        %2482 = vmatpush1.bf16.xpose.msra.mxu0 %v2098
        %2483 = vmatprep.subr.bf16.mxu0 0
        %2484 = vmatpush1.bf16.xpose.msra.mxu0 %v2101
        %2485 = vmatprep.subr.bf16.mxu0 0
        %2486 = vmatpush1.bf16.xpose.msra.mxu0 %v2104
        %2487 = vmatprep.subr.bf16.mxu0 0
        %2488 = vmatpush1.bf16.xpose.msra.mxu0 %v2107
        %2489 = vmatprep.subr.bf16.mxu0 0
        %2490 = vmatpush1.bf16.xpose.msra.mxu0 %v2110
        %2491 = vmatprep.subr.bf16.mxu0 0
        %2492 = vmatpush1.bf16.xpose.msra.mxu0 %v2113
        %2493 = vmatprep.subr.bf16.mxu0 0
        %2494 = vmatpush1.bf16.xpose.msra.mxu0 %v2116
        %2495 = vmatprep.subr.bf16.mxu0 0
        %2496 = vmatpush1.bf16.xpose.msra.mxu0 %v2119
        %2497 = vmatprep.subr.bf16.mxu0 0
        %2498 = vmatpush1.bf16.xpose.msra.mxu0 %v2122
        %2499 = vmatprep.subr.bf16.mxu0 0
        %2500 = vmatpush1.bf16.xpose.msra.mxu0 %v2125
        %2501 = vmatprep.subr.bf16.mxu0 0
        %2502 = vmatpush1.bf16.xpose.msra.mxu0 %v2128
        %2503 = vmatprep.subr.bf16.mxu0 0
        %2504 = vmatpush1.bf16.xpose.msra.mxu0 %v2131
        %2505 = vmatprep.subr.bf16.mxu0 0
        %2506 = vmatpush1.bf16.xpose.msra.mxu0 %v2134
        %2507 = vmatprep.subr.bf16.mxu0 0
        %2508 = vmatpush1.bf16.xpose.msra.mxu0 %v2137
        %2509 = vmatprep.subr.bf16.mxu0 0
        %2510 = vmatpush1.bf16.xpose.msra.mxu0 %v2140
        %2511 = vmatprep.subr.bf16.mxu0 0
        %2512 = vmatpush1.bf16.xpose.msra.mxu0 %v2143
        %2513 = vmatprep.mubr.bf16.mxu0 0
        %2514 = vmatmul.mubr.bf16.gmra.mrb[0].mxu0 %v2086
        %v2515 = vpop.f32.mrb[0].mxu0
        %v2516 = vadd.f32 %v1515, %v2515
        %v2517 = vpop.f32.mrb[0].mxu0
        %v2518 = vadd.f32 %v1517, %v2517
        %v2519 = vpop.f32.mrb[0].mxu0
        %v2520 = vadd.f32 %v1519, %v2519
        %v2521 = vpop.f32.mrb[0].mxu0
        %v2522 = vadd.f32 %v1521, %v2521
        %2523 = vmatprep.mubr.bf16.mxu0 0
        %2524 = vmatmul.mubr.bf16.gmra.mrb[0].mxu0 %v2089
        %v2525 = vpop.f32.mrb[0].mxu0
        %v2526 = vadd.f32 %v1525, %v2525
        %v2527 = vpop.f32.mrb[0].mxu0
        %v2528 = vadd.f32 %v1527, %v2527
        %v2529 = vpop.f32.mrb[0].mxu0
        %v2530 = vadd.f32 %v1529, %v2529
        %v2531 = vpop.f32.mrb[0].mxu0
        %v2532 = vadd.f32 %v1531, %v2531
        %2533 = vmatprep.mubr.bf16.mxu0 0
        %2534 = vmatmul.mubr.bf16.gmra.mrb[0].mxu0 %v2092
        %v2535 = vpop.f32.mrb[0].mxu0
        %v2536 = vadd.f32 %v1535, %v2535
        %v2537 = vpop.f32.mrb[0].mxu0
        %v2538 = vadd.f32 %v1537, %v2537
        %v2539 = vpop.f32.mrb[0].mxu0
        %v2540 = vadd.f32 %v1539, %v2539
        %v2541 = vpop.f32.mrb[0].mxu0
        %v2542 = vadd.f32 %v1541, %v2541
        %2543 = vmatprep.mubr.bf16.mxu0 0
        %2544 = vmatmul.mubr.bf16.gmra.mrb[0].mxu0 %v2095
        %v2545 = vpop.f32.mrb[0].mxu0
        %v2546 = vadd.f32 %v1545, %v2545
        %v2547 = vpop.f32.mrb[0].mxu0
        %v2548 = vadd.f32 %v1547, %v2547
        %v2549 = vpop.f32.mrb[0].mxu0
        %v2550 = vadd.f32 %v1549, %v2549
        %v2551 = vpop.f32.mrb[0].mxu0
        %v2552 = vadd.f32 %v1551, %v2551
        %2553 = vdwg.mxu0
        %2554 = vmatprep.subr.bf16.mxu0 0
        %2555 = vmatpush1.bf16.xpose.msra.mxu0 %v2146
        %2556 = vmatprep.subr.bf16.mxu0 0
        %2557 = vmatpush1.bf16.xpose.msra.mxu0 %v2149
        %2558 = vmatprep.subr.bf16.mxu0 0
        %2559 = vmatpush1.bf16.xpose.msra.mxu0 %v2152
        %2560 = vmatprep.subr.bf16.mxu0 0
        %2561 = vmatpush1.bf16.xpose.msra.mxu0 %v2155
        %2562 = vmatprep.subr.bf16.mxu0 0
        %2563 = vmatpush1.bf16.xpose.msra.mxu0 %v2158
        %2564 = vmatprep.subr.bf16.mxu0 0
        %2565 = vmatpush1.bf16.xpose.msra.mxu0 %v2161
        %2566 = vmatprep.subr.bf16.mxu0 0
        %2567 = vmatpush1.bf16.xpose.msra.mxu0 %v2164
        %2568 = vmatprep.subr.bf16.mxu0 0
        %2569 = vmatpush1.bf16.xpose.msra.mxu0 %v2167
        %2570 = vmatprep.subr.bf16.mxu0 0
        %2571 = vmatpush1.bf16.xpose.msra.mxu0 %v2170
        %2572 = vmatprep.subr.bf16.mxu0 0
        %2573 = vmatpush1.bf16.xpose.msra.mxu0 %v2173
        %2574 = vmatprep.subr.bf16.mxu0 0
        %2575 = vmatpush1.bf16.xpose.msra.mxu0 %v2176
        %2576 = vmatprep.subr.bf16.mxu0 0
        %2577 = vmatpush1.bf16.xpose.msra.mxu0 %v2179
        %2578 = vmatprep.subr.bf16.mxu0 0
        %2579 = vmatpush1.bf16.xpose.msra.mxu0 %v2182
        %2580 = vmatprep.subr.bf16.mxu0 0
        %2581 = vmatpush1.bf16.xpose.msra.mxu0 %v2185
        %2582 = vmatprep.subr.bf16.mxu0 0
        %2583 = vmatpush1.bf16.xpose.msra.mxu0 %v2188
        %2584 = vmatprep.subr.bf16.mxu0 0
        %2585 = vmatpush1.bf16.xpose.msra.mxu0 %v2191
        %2586 = vmatprep.mubr.bf16.mxu0 0
        %2587 = vmatmul.mubr.bf16.gmra.mrb[0].mxu0 %v2086
        %v2588 = vpop.f32.mrb[0].mxu0
        %v2589 = vadd.f32 %v1588, %v2588
        %v2590 = vpop.f32.mrb[0].mxu0
        %v2591 = vadd.f32 %v1590, %v2590
        %v2592 = vpop.f32.mrb[0].mxu0
        %v2593 = vadd.f32 %v1592, %v2592
        %v2594 = vpop.f32.mrb[0].mxu0
        %v2595 = vadd.f32 %v1594, %v2594
        %2596 = vmatprep.mubr.bf16.mxu0 0
        %2597 = vmatmul.mubr.bf16.gmra.mrb[0].mxu0 %v2089
        %v2598 = vpop.f32.mrb[0].mxu0
        %v2599 = vadd.f32 %v1598, %v2598
        %v2600 = vpop.f32.mrb[0].mxu0
        %v2601 = vadd.f32 %v1600, %v2600
        %v2602 = vpop.f32.mrb[0].mxu0
        %v2603 = vadd.f32 %v1602, %v2602
        %v2604 = vpop.f32.mrb[0].mxu0
        %v2605 = vadd.f32 %v1604, %v2604
        %2606 = vmatprep.mubr.bf16.mxu0 0
        %2607 = vmatmul.mubr.bf16.gmra.mrb[0].mxu0 %v2092
        %v2608 = vpop.f32.mrb[0].mxu0
        %v2609 = vadd.f32 %v1608, %v2608
        %v2610 = vpop.f32.mrb[0].mxu0
        %v2611 = vadd.f32 %v1610, %v2610
        %v2612 = vpop.f32.mrb[0].mxu0
        %v2613 = vadd.f32 %v1612, %v2612
        %v2614 = vpop.f32.mrb[0].mxu0
        %v2615 = vadd.f32 %v1614, %v2614
        %2616 = vmatprep.mubr.bf16.mxu0 0
        %2617 = vmatmul.mubr.bf16.gmra.mrb[0].mxu0 %v2095
        %v2618 = vpop.f32.mrb[0].mxu0
        %v2619 = vadd.f32 %v1618, %v2618
        %v2620 = vpop.f32.mrb[0].mxu0
        %v2621 = vadd.f32 %v1620, %v2620
        %v2622 = vpop.f32.mrb[0].mxu0
        %v2623 = vadd.f32 %v1622, %v2622
        %v2624 = vpop.f32.mrb[0].mxu0
        %v2625 = vadd.f32 %v1624, %v2624
        %2626 = vdwg.mxu0
        %2627 = vmatprep.subr.bf16.mxu0 0
        %2628 = vmatpush1.bf16.xpose.msra.mxu0 %v2194
        %2629 = vmatprep.subr.bf16.mxu0 0
        %2630 = vmatpush1.bf16.xpose.msra.mxu0 %v2197
        %2631 = vmatprep.subr.bf16.mxu0 0
        %2632 = vmatpush1.bf16.xpose.msra.mxu0 %v2200
        %2633 = vmatprep.subr.bf16.mxu0 0
        %2634 = vmatpush1.bf16.xpose.msra.mxu0 %v2203
        %2635 = vmatprep.subr.bf16.mxu0 0
        %2636 = vmatpush1.bf16.xpose.msra.mxu0 %v2206
        %2637 = vmatprep.subr.bf16.mxu0 0
        %2638 = vmatpush1.bf16.xpose.msra.mxu0 %v2209
        %2639 = vmatprep.subr.bf16.mxu0 0
        %2640 = vmatpush1.bf16.xpose.msra.mxu0 %v2212
        %2641 = vmatprep.subr.bf16.mxu0 0
        %2642 = vmatpush1.bf16.xpose.msra.mxu0 %v2215
        %2643 = vmatprep.subr.bf16.mxu0 0
        %2644 = vmatpush1.bf16.xpose.msra.mxu0 %v2218
        %2645 = vmatprep.subr.bf16.mxu0 0
        %2646 = vmatpush1.bf16.xpose.msra.mxu0 %v2221
        %2647 = vmatprep.subr.bf16.mxu0 0
        %2648 = vmatpush1.bf16.xpose.msra.mxu0 %v2224
        %2649 = vmatprep.subr.bf16.mxu0 0
        %2650 = vmatpush1.bf16.xpose.msra.mxu0 %v2227
        %2651 = vmatprep.subr.bf16.mxu0 0
        %2652 = vmatpush1.bf16.xpose.msra.mxu0 %v2230
        %2653 = vmatprep.subr.bf16.mxu0 0
        %2654 = vmatpush1.bf16.xpose.msra.mxu0 %v2233
        %2655 = vmatprep.subr.bf16.mxu0 0
        %2656 = vmatpush1.bf16.xpose.msra.mxu0 %v2236
        %2657 = vmatprep.subr.bf16.mxu0 0
        %2658 = vmatpush1.bf16.xpose.msra.mxu0 %v2239
        %2659 = vmatprep.mubr.bf16.mxu0 0
        %2660 = vmatmul.mubr.bf16.gmra.mrb[0].mxu0 %v2086
        %v2661 = vpop.f32.mrb[0].mxu0
        %v2662 = vadd.f32 %v1661, %v2661
        %v2663 = vpop.f32.mrb[0].mxu0
        %v2664 = vadd.f32 %v1663, %v2663
        %v2665 = vpop.f32.mrb[0].mxu0
        %v2666 = vadd.f32 %v1665, %v2665
        %v2667 = vpop.f32.mrb[0].mxu0
        %v2668 = vadd.f32 %v1667, %v2667
        %2669 = vmatprep.mubr.bf16.mxu0 0
        %2670 = vmatmul.mubr.bf16.gmra.mrb[0].mxu0 %v2089
        %v2671 = vpop.f32.mrb[0].mxu0
        %v2672 = vadd.f32 %v1671, %v2671
        %v2673 = vpop.f32.mrb[0].mxu0
        %v2674 = vadd.f32 %v1673, %v2673
        %v2675 = vpop.f32.mrb[0].mxu0
        %v2676 = vadd.f32 %v1675, %v2675
        %v2677 = vpop.f32.mrb[0].mxu0
        %v2678 = vadd.f32 %v1677, %v2677
        %2679 = vmatprep.mubr.bf16.mxu0 0
        %2680 = vmatmul.mubr.bf16.gmra.mrb[0].mxu0 %v2092
        %v2681 = vpop.f32.mrb[0].mxu0
        %v2682 = vadd.f32 %v1681, %v2681
        %v2683 = vpop.f32.mrb[0].mxu0
        %v2684 = vadd.f32 %v1683, %v2683
        %v2685 = vpop.f32.mrb[0].mxu0
        %v2686 = vadd.f32 %v1685, %v2685
        %v2687 = vpop.f32.mrb[0].mxu0
        %v2688 = vadd.f32 %v1687, %v2687
        %2689 = vmatprep.mubr.bf16.mxu0 0
        %2690 = vmatmul.mubr.bf16.gmra.mrb[0].mxu0 %v2095
        %v2691 = vpop.f32.mrb[0].mxu0
        %v2692 = vadd.f32 %v1691, %v2691
        %v2693 = vpop.f32.mrb[0].mxu0
        %v2694 = vadd.f32 %v1693, %v2693
        %v2695 = vpop.f32.mrb[0].mxu0
        %v2696 = vadd.f32 %v1695, %v2695
        %v2697 = vpop.f32.mrb[0].mxu0
        %v2698 = vadd.f32 %v1697, %v2697
        %2699 = vdwg.mxu0
        %2700 = vmatprep.subr.bf16.mxu0 0
        %2701 = vmatpush1.bf16.xpose.msra.mxu0 %v2242
        %2702 = vmatprep.subr.bf16.mxu0 0
        %2703 = vmatpush1.bf16.xpose.msra.mxu0 %v2245
        %2704 = vmatprep.subr.bf16.mxu0 0
        %2705 = vmatpush1.bf16.xpose.msra.mxu0 %v2248
        %2706 = vmatprep.subr.bf16.mxu0 0
        %2707 = vmatpush1.bf16.xpose.msra.mxu0 %v2251
        %2708 = vmatprep.subr.bf16.mxu0 0
        %2709 = vmatpush1.bf16.xpose.msra.mxu0 %v2254
        %2710 = vmatprep.subr.bf16.mxu0 0
        %2711 = vmatpush1.bf16.xpose.msra.mxu0 %v2257
        %2712 = vmatprep.subr.bf16.mxu0 0
        %2713 = vmatpush1.bf16.xpose.msra.mxu0 %v2260
        %2714 = vmatprep.subr.bf16.mxu0 0
        %2715 = vmatpush1.bf16.xpose.msra.mxu0 %v2263
        %2716 = vmatprep.subr.bf16.mxu0 0
        %2717 = vmatpush1.bf16.xpose.msra.mxu0 %v2266
        %2718 = vmatprep.subr.bf16.mxu0 0
        %2719 = vmatpush1.bf16.xpose.msra.mxu0 %v2269
        %2720 = vmatprep.subr.bf16.mxu0 0
        %2721 = vmatpush1.bf16.xpose.msra.mxu0 %v2272
        %2722 = vmatprep.subr.bf16.mxu0 0
        %2723 = vmatpush1.bf16.xpose.msra.mxu0 %v2275
        %2724 = vmatprep.subr.bf16.mxu0 0
        %2725 = vmatpush1.bf16.xpose.msra.mxu0 %v2278
        %2726 = vmatprep.subr.bf16.mxu0 0
        %2727 = vmatpush1.bf16.xpose.msra.mxu0 %v2281
        %2728 = vmatprep.subr.bf16.mxu0 0
        %2729 = vmatpush1.bf16.xpose.msra.mxu0 %v2284
        %2730 = vmatprep.subr.bf16.mxu0 0
        %2731 = vmatpush1.bf16.xpose.msra.mxu0 %v2287
        %2732 = vmatprep.mubr.bf16.mxu0 0
        %2733 = vmatmul.mubr.bf16.gmra.mrb[0].mxu0 %v2086
        %v2734 = vpop.f32.mrb[0].mxu0
        %v2735 = vadd.f32 %v1734, %v2734
        %v2736 = vpop.f32.mrb[0].mxu0
        %v2737 = vadd.f32 %v1736, %v2736
        %v2738 = vpop.f32.mrb[0].mxu0
        %v2739 = vadd.f32 %v1738, %v2738
        %v2740 = vpop.f32.mrb[0].mxu0
        %v2741 = vadd.f32 %v1740, %v2740
        %2742 = vmatprep.mubr.bf16.mxu0 0
        %2743 = vmatmul.mubr.bf16.gmra.mrb[0].mxu0 %v2089
        %v2744 = vpop.f32.mrb[0].mxu0
        %v2745 = vadd.f32 %v1744, %v2744
        %v2746 = vpop.f32.mrb[0].mxu0
        %v2747 = vadd.f32 %v1746, %v2746
        %v2748 = vpop.f32.mrb[0].mxu0
        %v2749 = vadd.f32 %v1748, %v2748
        %v2750 = vpop.f32.mrb[0].mxu0
        %v2751 = vadd.f32 %v1750, %v2750
        %2752 = vmatprep.mubr.bf16.mxu0 0
        %2753 = vmatmul.mubr.bf16.gmra.mrb[0].mxu0 %v2092
        %v2754 = vpop.f32.mrb[0].mxu0
        %v2755 = vadd.f32 %v1754, %v2754
        %v2756 = vpop.f32.mrb[0].mxu0
        %v2757 = vadd.f32 %v1756, %v2756
        %v2758 = vpop.f32.mrb[0].mxu0
        %v2759 = vadd.f32 %v1758, %v2758
        %v2760 = vpop.f32.mrb[0].mxu0
        %v2761 = vadd.f32 %v1760, %v2760
        %2762 = vmatprep.mubr.bf16.mxu0 0
        %2763 = vmatmul.mubr.bf16.gmra.mrb[0].mxu0 %v2095
        %v2764 = vpop.f32.mrb[0].mxu0
        %v2765 = vadd.f32 %v1764, %v2764
        %v2766 = vpop.f32.mrb[0].mxu0
        %v2767 = vadd.f32 %v1766, %v2766
        %v2768 = vpop.f32.mrb[0].mxu0
        %v2769 = vadd.f32 %v1768, %v2768
        %v2770 = vpop.f32.mrb[0].mxu0
        %v2771 = vadd.f32 %v1770, %v2770
        %2772 = vdwg.mxu0
        %2773 = vmatprep.subr.bf16.mxu0 0
        %2774 = vmatpush1.bf16.xpose.msra.mxu0 %v2290
        %2775 = vmatprep.subr.bf16.mxu0 0
        %2776 = vmatpush1.bf16.xpose.msra.mxu0 %v2293
        %2777 = vmatprep.subr.bf16.mxu0 0
        %2778 = vmatpush1.bf16.xpose.msra.mxu0 %v2296
        %2779 = vmatprep.subr.bf16.mxu0 0
        %2780 = vmatpush1.bf16.xpose.msra.mxu0 %v2299
        %2781 = vmatprep.subr.bf16.mxu0 0
        %2782 = vmatpush1.bf16.xpose.msra.mxu0 %v2302
        %2783 = vmatprep.subr.bf16.mxu0 0
        %2784 = vmatpush1.bf16.xpose.msra.mxu0 %v2305
        %2785 = vmatprep.subr.bf16.mxu0 0
        %2786 = vmatpush1.bf16.xpose.msra.mxu0 %v2308
        %2787 = vmatprep.subr.bf16.mxu0 0
        %2788 = vmatpush1.bf16.xpose.msra.mxu0 %v2311
        %2789 = vmatprep.subr.bf16.mxu0 0
        %2790 = vmatpush1.bf16.xpose.msra.mxu0 %v2314
        %2791 = vmatprep.subr.bf16.mxu0 0
        %2792 = vmatpush1.bf16.xpose.msra.mxu0 %v2317
        %2793 = vmatprep.subr.bf16.mxu0 0
        %2794 = vmatpush1.bf16.xpose.msra.mxu0 %v2320
        %2795 = vmatprep.subr.bf16.mxu0 0
        %2796 = vmatpush1.bf16.xpose.msra.mxu0 %v2323
        %2797 = vmatprep.subr.bf16.mxu0 0
        %2798 = vmatpush1.bf16.xpose.msra.mxu0 %v2326
        %2799 = vmatprep.subr.bf16.mxu0 0
        %2800 = vmatpush1.bf16.xpose.msra.mxu0 %v2329
        %2801 = vmatprep.subr.bf16.mxu0 0
        %2802 = vmatpush1.bf16.xpose.msra.mxu0 %v2332
        %2803 = vmatprep.subr.bf16.mxu0 0
        %2804 = vmatpush1.bf16.xpose.msra.mxu0 %v2335
        %2805 = vmatprep.mubr.bf16.mxu0 0
        %2806 = vmatmul.mubr.bf16.gmra.mrb[0].mxu0 %v2086
        %v2807 = vpop.f32.mrb[0].mxu0
        %v2808 = vadd.f32 %v1807, %v2807
        %v2809 = vpop.f32.mrb[0].mxu0
        %v2810 = vadd.f32 %v1809, %v2809
        %v2811 = vpop.f32.mrb[0].mxu0
        %v2812 = vadd.f32 %v1811, %v2811
        %v2813 = vpop.f32.mrb[0].mxu0
        %v2814 = vadd.f32 %v1813, %v2813
        %2815 = vmatprep.mubr.bf16.mxu0 0
        %2816 = vmatmul.mubr.bf16.gmra.mrb[0].mxu0 %v2089
        %v2817 = vpop.f32.mrb[0].mxu0
        %v2818 = vadd.f32 %v1817, %v2817
        %v2819 = vpop.f32.mrb[0].mxu0
        %v2820 = vadd.f32 %v1819, %v2819
        %v2821 = vpop.f32.mrb[0].mxu0
        %v2822 = vadd.f32 %v1821, %v2821
        %v2823 = vpop.f32.mrb[0].mxu0
        %v2824 = vadd.f32 %v1823, %v2823
        %2825 = vmatprep.mubr.bf16.mxu0 0
        %2826 = vmatmul.mubr.bf16.gmra.mrb[0].mxu0 %v2092
        %v2827 = vpop.f32.mrb[0].mxu0
        %v2828 = vadd.f32 %v1827, %v2827
        %v2829 = vpop.f32.mrb[0].mxu0
        %v2830 = vadd.f32 %v1829, %v2829
        %v2831 = vpop.f32.mrb[0].mxu0
        %v2832 = vadd.f32 %v1831, %v2831
        %v2833 = vpop.f32.mrb[0].mxu0
        %v2834 = vadd.f32 %v1833, %v2833
        %2835 = vmatprep.mubr.bf16.mxu0 0
        %2836 = vmatmul.mubr.bf16.gmra.mrb[0].mxu0 %v2095
        %v2837 = vpop.f32.mrb[0].mxu0
        %v2838 = vadd.f32 %v1837, %v2837
        %v2839 = vpop.f32.mrb[0].mxu0
        %v2840 = vadd.f32 %v1839, %v2839
        %v2841 = vpop.f32.mrb[0].mxu0
        %v2842 = vadd.f32 %v1841, %v2841
        %v2843 = vpop.f32.mrb[0].mxu0
        %v2844 = vadd.f32 %v1843, %v2843
        %2845 = vdwg.mxu0
        %2846 = vmatprep.subr.bf16.mxu0 0
        %2847 = vmatpush1.bf16.xpose.msra.mxu0 %v2338
        %2848 = vmatprep.subr.bf16.mxu0 0
        %2849 = vmatpush1.bf16.xpose.msra.mxu0 %v2341
        %2850 = vmatprep.subr.bf16.mxu0 0
        %2851 = vmatpush1.bf16.xpose.msra.mxu0 %v2344
        %2852 = vmatprep.subr.bf16.mxu0 0
        %2853 = vmatpush1.bf16.xpose.msra.mxu0 %v2347
        %2854 = vmatprep.subr.bf16.mxu0 0
        %2855 = vmatpush1.bf16.xpose.msra.mxu0 %v2350
        %2856 = vmatprep.subr.bf16.mxu0 0
        %2857 = vmatpush1.bf16.xpose.msra.mxu0 %v2353
        %2858 = vmatprep.subr.bf16.mxu0 0
        %2859 = vmatpush1.bf16.xpose.msra.mxu0 %v2356
        %2860 = vmatprep.subr.bf16.mxu0 0
        %2861 = vmatpush1.bf16.xpose.msra.mxu0 %v2359
        %2862 = vmatprep.subr.bf16.mxu0 0
        %2863 = vmatpush1.bf16.xpose.msra.mxu0 %v2362
        %2864 = vmatprep.subr.bf16.mxu0 0
        %2865 = vmatpush1.bf16.xpose.msra.mxu0 %v2365
        %2866 = vmatprep.subr.bf16.mxu0 0
        %2867 = vmatpush1.bf16.xpose.msra.mxu0 %v2368
        %2868 = vmatprep.subr.bf16.mxu0 0
        %2869 = vmatpush1.bf16.xpose.msra.mxu0 %v2371
        %2870 = vmatprep.subr.bf16.mxu0 0
        %2871 = vmatpush1.bf16.xpose.msra.mxu0 %v2374
        %2872 = vmatprep.subr.bf16.mxu0 0
        %2873 = vmatpush1.bf16.xpose.msra.mxu0 %v2377
        %2874 = vmatprep.subr.bf16.mxu0 0
        %2875 = vmatpush1.bf16.xpose.msra.mxu0 %v2380
        %2876 = vmatprep.subr.bf16.mxu0 0
        %2877 = vmatpush1.bf16.xpose.msra.mxu0 %v2383
        %2878 = vmatprep.mubr.bf16.mxu0 0
        %2879 = vmatmul.mubr.bf16.gmra.mrb[0].mxu0 %v2086
        %v2880 = vpop.f32.mrb[0].mxu0
        %v2881 = vadd.f32 %v1880, %v2880
        %v2882 = vpop.f32.mrb[0].mxu0
        %v2883 = vadd.f32 %v1882, %v2882
        %v2884 = vpop.f32.mrb[0].mxu0
        %v2885 = vadd.f32 %v1884, %v2884
        %v2886 = vpop.f32.mrb[0].mxu0
        %v2887 = vadd.f32 %v1886, %v2886
        %2888 = vmatprep.mubr.bf16.mxu0 0
        %2889 = vmatmul.mubr.bf16.gmra.mrb[0].mxu0 %v2089
        %v2890 = vpop.f32.mrb[0].mxu0
        %v2891 = vadd.f32 %v1890, %v2890
        %v2892 = vpop.f32.mrb[0].mxu0
        %v2893 = vadd.f32 %v1892, %v2892
        %v2894 = vpop.f32.mrb[0].mxu0
        %v2895 = vadd.f32 %v1894, %v2894
        %v2896 = vpop.f32.mrb[0].mxu0
        %v2897 = vadd.f32 %v1896, %v2896
        %2898 = vmatprep.mubr.bf16.mxu0 0
        %2899 = vmatmul.mubr.bf16.gmra.mrb[0].mxu0 %v2092
        %v2900 = vpop.f32.mrb[0].mxu0
        %v2901 = vadd.f32 %v1900, %v2900
        %v2902 = vpop.f32.mrb[0].mxu0
        %v2903 = vadd.f32 %v1902, %v2902
        %v2904 = vpop.f32.mrb[0].mxu0
        %v2905 = vadd.f32 %v1904, %v2904
        %v2906 = vpop.f32.mrb[0].mxu0
        %v2907 = vadd.f32 %v1906, %v2906
        %2908 = vmatprep.mubr.bf16.mxu0 0
        %2909 = vmatmul.mubr.bf16.gmra.mrb[0].mxu0 %v2095
        %v2910 = vpop.f32.mrb[0].mxu0
        %v2911 = vadd.f32 %v1910, %v2910
        %v2912 = vpop.f32.mrb[0].mxu0
        %v2913 = vadd.f32 %v1912, %v2912
        %v2914 = vpop.f32.mrb[0].mxu0
        %v2915 = vadd.f32 %v1914, %v2914
        %v2916 = vpop.f32.mrb[0].mxu0
        %v2917 = vadd.f32 %v1916, %v2916
        %2918 = vdwg.mxu0
        %2919 = vmatprep.subr.bf16.mxu0 0
        %2920 = vmatpush1.bf16.xpose.msra.mxu0 %v2386
        %2921 = vmatprep.subr.bf16.mxu0 0
        %2922 = vmatpush1.bf16.xpose.msra.mxu0 %v2389
        %2923 = vmatprep.subr.bf16.mxu0 0
        %2924 = vmatpush1.bf16.xpose.msra.mxu0 %v2392
        %2925 = vmatprep.subr.bf16.mxu0 0
        %2926 = vmatpush1.bf16.xpose.msra.mxu0 %v2395
        %2927 = vmatprep.subr.bf16.mxu0 0
        %2928 = vmatpush1.bf16.xpose.msra.mxu0 %v2398
        %2929 = vmatprep.subr.bf16.mxu0 0
        %2930 = vmatpush1.bf16.xpose.msra.mxu0 %v2401
        %2931 = vmatprep.subr.bf16.mxu0 0
        %2932 = vmatpush1.bf16.xpose.msra.mxu0 %v2404
        %2933 = vmatprep.subr.bf16.mxu0 0
        %2934 = vmatpush1.bf16.xpose.msra.mxu0 %v2407
        %2935 = vmatprep.subr.bf16.mxu0 0
        %2936 = vmatpush1.bf16.xpose.msra.mxu0 %v2410
        %2937 = vmatprep.subr.bf16.mxu0 0
        %2938 = vmatpush1.bf16.xpose.msra.mxu0 %v2413
        %2939 = vmatprep.subr.bf16.mxu0 0
        %2940 = vmatpush1.bf16.xpose.msra.mxu0 %v2416
        %2941 = vmatprep.subr.bf16.mxu0 0
        %2942 = vmatpush1.bf16.xpose.msra.mxu0 %v2419
        %2943 = vmatprep.subr.bf16.mxu0 0
        %2944 = vmatpush1.bf16.xpose.msra.mxu0 %v2422
        %2945 = vmatprep.subr.bf16.mxu0 0
        %2946 = vmatpush1.bf16.xpose.msra.mxu0 %v2425
        %2947 = vmatprep.subr.bf16.mxu0 0
        %2948 = vmatpush1.bf16.xpose.msra.mxu0 %v2428
        %2949 = vmatprep.subr.bf16.mxu0 0
        %2950 = vmatpush1.bf16.xpose.msra.mxu0 %v2431
        %2951 = vmatprep.mubr.bf16.mxu0 0
        %2952 = vmatmul.mubr.bf16.gmra.mrb[0].mxu0 %v2086
        %v2953 = vpop.f32.mrb[0].mxu0
        %v2954 = vadd.f32 %v1953, %v2953
        %v2955 = vpop.f32.mrb[0].mxu0
        %v2956 = vadd.f32 %v1955, %v2955
        %v2957 = vpop.f32.mrb[0].mxu0
        %v2958 = vadd.f32 %v1957, %v2957
        %v2959 = vpop.f32.mrb[0].mxu0
        %v2960 = vadd.f32 %v1959, %v2959
        %2961 = vmatprep.mubr.bf16.mxu0 0
        %2962 = vmatmul.mubr.bf16.gmra.mrb[0].mxu0 %v2089
        %v2963 = vpop.f32.mrb[0].mxu0
        %v2964 = vadd.f32 %v1963, %v2963
        %v2965 = vpop.f32.mrb[0].mxu0
        %v2966 = vadd.f32 %v1965, %v2965
        %v2967 = vpop.f32.mrb[0].mxu0
        %v2968 = vadd.f32 %v1967, %v2967
        %v2969 = vpop.f32.mrb[0].mxu0
        %v2970 = vadd.f32 %v1969, %v2969
        %2971 = vmatprep.mubr.bf16.mxu0 0
        %2972 = vmatmul.mubr.bf16.gmra.mrb[0].mxu0 %v2092
        %v2973 = vpop.f32.mrb[0].mxu0
        %v2974 = vadd.f32 %v1973, %v2973
        %v2975 = vpop.f32.mrb[0].mxu0
        %v2976 = vadd.f32 %v1975, %v2975
        %v2977 = vpop.f32.mrb[0].mxu0
        %v2978 = vadd.f32 %v1977, %v2977
        %v2979 = vpop.f32.mrb[0].mxu0
        %v2980 = vadd.f32 %v1979, %v2979
        %2981 = vmatprep.mubr.bf16.mxu0 0
        %2982 = vmatmul.mubr.bf16.gmra.mrb[0].mxu0 %v2095
        %v2983 = vpop.f32.mrb[0].mxu0
        %v2984 = vadd.f32 %v1983, %v2983
        %v2985 = vpop.f32.mrb[0].mxu0
        %v2986 = vadd.f32 %v1985, %v2985
        %v2987 = vpop.f32.mrb[0].mxu0
        %v2988 = vadd.f32 %v1987, %v2987
        %v2989 = vpop.f32.mrb[0].mxu0
        %v2990 = vadd.f32 %v1989, %v2989
        %2991 = vdwg.mxu0
        %2992 = vmatprep.subr.bf16.mxu0 0
        %2993 = vmatpush1.bf16.xpose.msra.mxu0 %v2434
        %2994 = vmatprep.subr.bf16.mxu0 0
        %2995 = vmatpush1.bf16.xpose.msra.mxu0 %v2437
        %2996 = vmatprep.subr.bf16.mxu0 0
        %2997 = vmatpush1.bf16.xpose.msra.mxu0 %v2440
        %2998 = vmatprep.subr.bf16.mxu0 0
        %2999 = vmatpush1.bf16.xpose.msra.mxu0 %v2443
        %3000 = vmatprep.subr.bf16.mxu0 0
        %3001 = vmatpush1.bf16.xpose.msra.mxu0 %v2446
        %3002 = vmatprep.subr.bf16.mxu0 0
        %3003 = vmatpush1.bf16.xpose.msra.mxu0 %v2449
        %3004 = vmatprep.subr.bf16.mxu0 0
        %3005 = vmatpush1.bf16.xpose.msra.mxu0 %v2452
        %3006 = vmatprep.subr.bf16.mxu0 0
        %3007 = vmatpush1.bf16.xpose.msra.mxu0 %v2455
        %3008 = vmatprep.subr.bf16.mxu0 0
        %3009 = vmatpush1.bf16.xpose.msra.mxu0 %v2458
        %3010 = vmatprep.subr.bf16.mxu0 0
        %3011 = vmatpush1.bf16.xpose.msra.mxu0 %v2461
        %3012 = vmatprep.subr.bf16.mxu0 0
        %3013 = vmatpush1.bf16.xpose.msra.mxu0 %v2464
        %3014 = vmatprep.subr.bf16.mxu0 0
        %3015 = vmatpush1.bf16.xpose.msra.mxu0 %v2467
        %3016 = vmatprep.subr.bf16.mxu0 0
        %3017 = vmatpush1.bf16.xpose.msra.mxu0 %v2470
        %3018 = vmatprep.subr.bf16.mxu0 0
        %3019 = vmatpush1.bf16.xpose.msra.mxu0 %v2473
        %3020 = vmatprep.subr.bf16.mxu0 0
        %3021 = vmatpush1.bf16.xpose.msra.mxu0 %v2476
        %3022 = vmatprep.subr.bf16.mxu0 0
        %3023 = vmatpush1.bf16.xpose.msra.mxu0 %v2479
        %3024 = vmatprep.mubr.bf16.mxu0 0
        %3025 = vmatmul.mubr.bf16.gmra.mrb[0].mxu0 %v2086
        %v3026 = vpop.f32.mrb[0].mxu0
        %v3027 = vadd.f32 %v2026, %v3026
        %v3028 = vpop.f32.mrb[0].mxu0
        %v3029 = vadd.f32 %v2028, %v3028
        %v3030 = vpop.f32.mrb[0].mxu0
        %v3031 = vadd.f32 %v2030, %v3030
        %v3032 = vpop.f32.mrb[0].mxu0
        %v3033 = vadd.f32 %v2032, %v3032
        %3034 = vmatprep.mubr.bf16.mxu0 0
        %3035 = vmatmul.mubr.bf16.gmra.mrb[0].mxu0 %v2089
        %v3036 = vpop.f32.mrb[0].mxu0
        %v3037 = vadd.f32 %v2036, %v3036
        %v3038 = vpop.f32.mrb[0].mxu0
        %v3039 = vadd.f32 %v2038, %v3038
        %v3040 = vpop.f32.mrb[0].mxu0
        %v3041 = vadd.f32 %v2040, %v3040
        %v3042 = vpop.f32.mrb[0].mxu0
        %v3043 = vadd.f32 %v2042, %v3042
        %3044 = vmatprep.mubr.bf16.mxu0 0
        %3045 = vmatmul.mubr.bf16.gmra.mrb[0].mxu0 %v2092
        %v3046 = vpop.f32.mrb[0].mxu0
        %v3047 = vadd.f32 %v2046, %v3046
        %v3048 = vpop.f32.mrb[0].mxu0
        %v3049 = vadd.f32 %v2048, %v3048
        %v3050 = vpop.f32.mrb[0].mxu0
        %v3051 = vadd.f32 %v2050, %v3050
        %v3052 = vpop.f32.mrb[0].mxu0
        %v3053 = vadd.f32 %v2052, %v3052
        %3054 = vmatprep.mubr.bf16.mxu0 0
        %3055 = vmatmul.mubr.bf16.gmra.mrb[0].mxu0 %v2095
        %v3056 = vpop.f32.mrb[0].mxu0
        %v3057 = vadd.f32 %v2056, %v3056
        %v3058 = vpop.f32.mrb[0].mxu0
        %v3059 = vadd.f32 %v2058, %v3058
        %v3060 = vpop.f32.mrb[0].mxu0
        %v3061 = vadd.f32 %v2060, %v3060
        %v3062 = vpop.f32.mrb[0].mxu0
        %v3063 = vadd.f32 %v2062, %v3062
        %3064 = vdwg.mxu0
        %3066 = vset.pattern.permute.xlu0 0
        %3067 = vperm.xlu0 %3066, %v1057
        %v3068 = vpop.permute.xlu0 %3067
        %3071 = vset.pattern.permute.xlu0 0
        %3072 = vperm.xlu0 %3071, %v1058
        %v3073 = vpop.permute.xlu0 %3072
        %3076 = vset.pattern.permute.xlu0 0
        %3077 = vperm.xlu0 %3076, %v1059
        %v3078 = vpop.permute.xlu0 %3077
        %3081 = vset.pattern.permute.xlu0 0
        %3082 = vperm.xlu0 %3081, %v1060
        %v3083 = vpop.permute.xlu0 %3082
        %v3085 = vadd.f32 %v2516, %v3068
        %v3086 = vadd.f32 %v2518, %v3068
        %v3087 = vadd.f32 %v2589, %v3068
        %v3088 = vadd.f32 %v2591, %v3068
        %v3089 = vadd.f32 %v2662, %v3068
        %v3090 = vadd.f32 %v2664, %v3068
        %v3091 = vadd.f32 %v2735, %v3068
        %v3092 = vadd.f32 %v2737, %v3068
        %v3093 = vadd.f32 %v2808, %v3068
        %v3094 = vadd.f32 %v2810, %v3068
        %v3095 = vadd.f32 %v2881, %v3068
        %v3096 = vadd.f32 %v2883, %v3068
        %v3097 = vadd.f32 %v2954, %v3068
        %v3098 = vadd.f32 %v2956, %v3068
        %v3099 = vadd.f32 %v3027, %v3068
        %v3100 = vadd.f32 %v3029, %v3068
        %v3101 = vadd.f32 %v2520, %v3073
        %v3102 = vadd.f32 %v2522, %v3073
        %v3103 = vadd.f32 %v2593, %v3073
        %v3104 = vadd.f32 %v2595, %v3073
        %v3105 = vadd.f32 %v2666, %v3073
        %v3106 = vadd.f32 %v2668, %v3073
        %v3107 = vadd.f32 %v2739, %v3073
        %v3108 = vadd.f32 %v2741, %v3073
        %v3109 = vadd.f32 %v2812, %v3073
        %v3110 = vadd.f32 %v2814, %v3073
        %v3111 = vadd.f32 %v2885, %v3073
        %v3112 = vadd.f32 %v2887, %v3073
        %v3113 = vadd.f32 %v2958, %v3073
        %v3114 = vadd.f32 %v2960, %v3073
        %v3115 = vadd.f32 %v3031, %v3073
        %v3116 = vadd.f32 %v3033, %v3073
        %v3117 = vadd.f32 %v2526, %v3078
        %v3118 = vadd.f32 %v2528, %v3078
        %v3119 = vadd.f32 %v2599, %v3078
        %v3120 = vadd.f32 %v2601, %v3078
        %v3121 = vadd.f32 %v2672, %v3078
        %v3122 = vadd.f32 %v2674, %v3078
        %v3123 = vadd.f32 %v2745, %v3078
        %v3124 = vadd.f32 %v2747, %v3078
        %v3125 = vadd.f32 %v2818, %v3078
        %v3126 = vadd.f32 %v2820, %v3078
        %v3127 = vadd.f32 %v2891, %v3078
        %v3128 = vadd.f32 %v2893, %v3078
        %v3129 = vadd.f32 %v2964, %v3078
        %v3130 = vadd.f32 %v2966, %v3078
        %v3131 = vadd.f32 %v3037, %v3078
        %v3132 = vadd.f32 %v3039, %v3078
        %v3133 = vadd.f32 %v2530, %v3083
        %v3134 = vadd.f32 %v2532, %v3083
        %v3135 = vadd.f32 %v2603, %v3083
        %v3136 = vadd.f32 %v2605, %v3083
        %v3137 = vadd.f32 %v2676, %v3083
        %v3138 = vadd.f32 %v2678, %v3083
        %v3139 = vadd.f32 %v2749, %v3083
        %v3140 = vadd.f32 %v2751, %v3083
        %v3141 = vadd.f32 %v2822, %v3083
        %v3142 = vadd.f32 %v2824, %v3083
        %v3143 = vadd.f32 %v2895, %v3083
        %v3144 = vadd.f32 %v2897, %v3083
        %v3145 = vadd.f32 %v2968, %v3083
        %v3146 = vadd.f32 %v2970, %v3083
        %v3147 = vadd.f32 %v3041, %v3083
        %v3148 = vadd.f32 %v3043, %v3083
        %v3149 = vadd.f32 %v3085, %v3101
        %v3150 = vadd.f32 %v3149, %v3117
        %v3151 = vadd.f32 %v3150, %v3133
        %v3152 = vrot.slane %v3151, 4
        %v3153 = vadd.f32 %v3151, %v3152
        %v3154 = vrot.slane %v3153, 2
        %v3155 = vadd.f32 %v3153, %v3154
        %v3156 = vrot.slane %v3155, 1
        %v3157 = vadd.f32 %v3155, %v3156
        %v3158 = vadd.f32 %v3086, %v3102
        %v3159 = vadd.f32 %v3158, %v3118
        %v3160 = vadd.f32 %v3159, %v3134
        %v3161 = vrot.slane %v3160, 4
        %v3162 = vadd.f32 %v3160, %v3161
        %v3163 = vrot.slane %v3162, 2
        %v3164 = vadd.f32 %v3162, %v3163
        %v3165 = vrot.slane %v3164, 1
        %v3166 = vadd.f32 %v3164, %v3165
        %v3167 = vadd.f32 %v3087, %v3103
        %v3168 = vadd.f32 %v3167, %v3119
        %v3169 = vadd.f32 %v3168, %v3135
        %v3170 = vrot.slane %v3169, 4
        %v3171 = vadd.f32 %v3169, %v3170
        %v3172 = vrot.slane %v3171, 2
        %v3173 = vadd.f32 %v3171, %v3172
        %v3174 = vrot.slane %v3173, 1
        %v3175 = vadd.f32 %v3173, %v3174
        %v3176 = vadd.f32 %v3088, %v3104
        %v3177 = vadd.f32 %v3176, %v3120
        %v3178 = vadd.f32 %v3177, %v3136
        %v3179 = vrot.slane %v3178, 4
        %v3180 = vadd.f32 %v3178, %v3179
        %v3181 = vrot.slane %v3180, 2
        %v3182 = vadd.f32 %v3180, %v3181
        %v3183 = vrot.slane %v3182, 1
        %v3184 = vadd.f32 %v3182, %v3183
        %v3185 = vadd.f32 %v3089, %v3105
        %v3186 = vadd.f32 %v3185, %v3121
        %v3187 = vadd.f32 %v3186, %v3137
        %v3188 = vrot.slane %v3187, 4
        %v3189 = vadd.f32 %v3187, %v3188
        %v3190 = vrot.slane %v3189, 2
        %v3191 = vadd.f32 %v3189, %v3190
        %v3192 = vrot.slane %v3191, 1
        %v3193 = vadd.f32 %v3191, %v3192
        %v3194 = vadd.f32 %v3090, %v3106
        %v3195 = vadd.f32 %v3194, %v3122
        %v3196 = vadd.f32 %v3195, %v3138
        %v3197 = vrot.slane %v3196, 4
        %v3198 = vadd.f32 %v3196, %v3197
        %v3199 = vrot.slane %v3198, 2
        %v3200 = vadd.f32 %v3198, %v3199
        %v3201 = vrot.slane %v3200, 1
        %v3202 = vadd.f32 %v3200, %v3201
        %v3203 = vadd.f32 %v3091, %v3107
        %v3204 = vadd.f32 %v3203, %v3123
        %v3205 = vadd.f32 %v3204, %v3139
        %v3206 = vrot.slane %v3205, 4
        %v3207 = vadd.f32 %v3205, %v3206
        %v3208 = vrot.slane %v3207, 2
        %v3209 = vadd.f32 %v3207, %v3208
        %v3210 = vrot.slane %v3209, 1
        %v3211 = vadd.f32 %v3209, %v3210
        %v3212 = vadd.f32 %v3092, %v3108
        %v3213 = vadd.f32 %v3212, %v3124
        %v3214 = vadd.f32 %v3213, %v3140
        %v3215 = vrot.slane %v3214, 4
        %v3216 = vadd.f32 %v3214, %v3215
        %v3217 = vrot.slane %v3216, 2
        %v3218 = vadd.f32 %v3216, %v3217
        %v3219 = vrot.slane %v3218, 1
        %v3220 = vadd.f32 %v3218, %v3219
        %v3221 = vadd.f32 %v3093, %v3109
        %v3222 = vadd.f32 %v3221, %v3125
        %v3223 = vadd.f32 %v3222, %v3141
        %v3224 = vrot.slane %v3223, 4
        %v3225 = vadd.f32 %v3223, %v3224
        %v3226 = vrot.slane %v3225, 2
        %v3227 = vadd.f32 %v3225, %v3226
        %v3228 = vrot.slane %v3227, 1
        %v3229 = vadd.f32 %v3227, %v3228
        %v3230 = vadd.f32 %v3094, %v3110
        %v3231 = vadd.f32 %v3230, %v3126
        %v3232 = vadd.f32 %v3231, %v3142
        %v3233 = vrot.slane %v3232, 4
        %v3234 = vadd.f32 %v3232, %v3233
        %v3235 = vrot.slane %v3234, 2
        %v3236 = vadd.f32 %v3234, %v3235
        %v3237 = vrot.slane %v3236, 1
        %v3238 = vadd.f32 %v3236, %v3237
        %v3239 = vadd.f32 %v3095, %v3111
        %v3240 = vadd.f32 %v3239, %v3127
        %v3241 = vadd.f32 %v3240, %v3143
        %v3242 = vrot.slane %v3241, 4
        %v3243 = vadd.f32 %v3241, %v3242
        %v3244 = vrot.slane %v3243, 2
        %v3245 = vadd.f32 %v3243, %v3244
        %v3246 = vrot.slane %v3245, 1
        %v3247 = vadd.f32 %v3245, %v3246
        %v3248 = vadd.f32 %v3096, %v3112
        %v3249 = vadd.f32 %v3248, %v3128
        %v3250 = vadd.f32 %v3249, %v3144
        %v3251 = vrot.slane %v3250, 4
        %v3252 = vadd.f32 %v3250, %v3251
        %v3253 = vrot.slane %v3252, 2
        %v3254 = vadd.f32 %v3252, %v3253
        %v3255 = vrot.slane %v3254, 1
        %v3256 = vadd.f32 %v3254, %v3255
        %v3257 = vadd.f32 %v3097, %v3113
        %v3258 = vadd.f32 %v3257, %v3129
        %v3259 = vadd.f32 %v3258, %v3145
        %v3260 = vrot.slane %v3259, 4
        %v3261 = vadd.f32 %v3259, %v3260
        %v3262 = vrot.slane %v3261, 2
        %v3263 = vadd.f32 %v3261, %v3262
        %v3264 = vrot.slane %v3263, 1
        %v3265 = vadd.f32 %v3263, %v3264
        %v3266 = vadd.f32 %v3098, %v3114
        %v3267 = vadd.f32 %v3266, %v3130
        %v3268 = vadd.f32 %v3267, %v3146
        %v3269 = vrot.slane %v3268, 4
        %v3270 = vadd.f32 %v3268, %v3269
        %v3271 = vrot.slane %v3270, 2
        %v3272 = vadd.f32 %v3270, %v3271
        %v3273 = vrot.slane %v3272, 1
        %v3274 = vadd.f32 %v3272, %v3273
        %v3275 = vadd.f32 %v3099, %v3115
        %v3276 = vadd.f32 %v3275, %v3131
        %v3277 = vadd.f32 %v3276, %v3147
        %v3278 = vrot.slane %v3277, 4
        %v3279 = vadd.f32 %v3277, %v3278
        %v3280 = vrot.slane %v3279, 2
        %v3281 = vadd.f32 %v3279, %v3280
        %v3282 = vrot.slane %v3281, 1
        %v3283 = vadd.f32 %v3281, %v3282
        %v3284 = vadd.f32 %v3100, %v3116
        %v3285 = vadd.f32 %v3284, %v3132
        %v3286 = vadd.f32 %v3285, %v3148
        %v3287 = vrot.slane %v3286, 4
        %v3288 = vadd.f32 %v3286, %v3287
        %v3289 = vrot.slane %v3288, 2
        %v3290 = vadd.f32 %v3288, %v3289
        %v3291 = vrot.slane %v3290, 1
        %v3292 = vadd.f32 %v3290, %v3291
        %v3293 = vrcp.pop 32.0
        %v3294 = vmul.f32 %v3157, %v3293
        %v3295 = vmul.f32 %v3166, %v3293
        %v3296 = vmul.f32 %v3175, %v3293
        %v3297 = vmul.f32 %v3184, %v3293
        %v3298 = vmul.f32 %v3193, %v3293
        %v3299 = vmul.f32 %v3202, %v3293
        %v3300 = vmul.f32 %v3211, %v3293
        %v3301 = vmul.f32 %v3220, %v3293
        %v3302 = vmul.f32 %v3229, %v3293
        %v3303 = vmul.f32 %v3238, %v3293
        %v3304 = vmul.f32 %v3247, %v3293
        %v3305 = vmul.f32 %v3256, %v3293
        %v3306 = vmul.f32 %v3265, %v3293
        %v3307 = vmul.f32 %v3274, %v3293
        %v3308 = vmul.f32 %v3283, %v3293
        %v3309 = vmul.f32 %v3292, %v3293
        %v3310 = vmul.f32 %v3085, %v3085
        %v3311 = vmul.f32 %v3086, %v3086
        %v3312 = vmul.f32 %v3087, %v3087
        %v3313 = vmul.f32 %v3088, %v3088
        %v3314 = vmul.f32 %v3089, %v3089
        %v3315 = vmul.f32 %v3090, %v3090
        %v3316 = vmul.f32 %v3091, %v3091
        %v3317 = vmul.f32 %v3092, %v3092
        %v3318 = vmul.f32 %v3093, %v3093
        %v3319 = vmul.f32 %v3094, %v3094
        %v3320 = vmul.f32 %v3095, %v3095
        %v3321 = vmul.f32 %v3096, %v3096
        %v3322 = vmul.f32 %v3097, %v3097
        %v3323 = vmul.f32 %v3098, %v3098
        %v3324 = vmul.f32 %v3099, %v3099
        %v3325 = vmul.f32 %v3100, %v3100
        %v3326 = vmul.f32 %v3101, %v3101
        %v3327 = vmul.f32 %v3102, %v3102
        %v3328 = vmul.f32 %v3103, %v3103
        %v3329 = vmul.f32 %v3104, %v3104
        %v3330 = vmul.f32 %v3105, %v3105
        %v3331 = vmul.f32 %v3106, %v3106
        %v3332 = vmul.f32 %v3107, %v3107
        %v3333 = vmul.f32 %v3108, %v3108
        %v3334 = vmul.f32 %v3109, %v3109
        %v3335 = vmul.f32 %v3110, %v3110
        %v3336 = vmul.f32 %v3111, %v3111
        %v3337 = vmul.f32 %v3112, %v3112
        %v3338 = vmul.f32 %v3113, %v3113
        %v3339 = vmul.f32 %v3114, %v3114
        %v3340 = vmul.f32 %v3115, %v3115
        %v3341 = vmul.f32 %v3116, %v3116
        %v3342 = vmul.f32 %v3117, %v3117
        %v3343 = vmul.f32 %v3118, %v3118
        %v3344 = vmul.f32 %v3119, %v3119
        %v3345 = vmul.f32 %v3120, %v3120
        %v3346 = vmul.f32 %v3121, %v3121
        %v3347 = vmul.f32 %v3122, %v3122
        %v3348 = vmul.f32 %v3123, %v3123
        %v3349 = vmul.f32 %v3124, %v3124
        %v3350 = vmul.f32 %v3125, %v3125
        %v3351 = vmul.f32 %v3126, %v3126
        %v3352 = vmul.f32 %v3127, %v3127
        %v3353 = vmul.f32 %v3128, %v3128
        %v3354 = vmul.f32 %v3129, %v3129
        %v3355 = vmul.f32 %v3130, %v3130
        %v3356 = vmul.f32 %v3131, %v3131
        %v3357 = vmul.f32 %v3132, %v3132
        %v3358 = vmul.f32 %v3133, %v3133
        %v3359 = vmul.f32 %v3134, %v3134
        %v3360 = vmul.f32 %v3135, %v3135
        %v3361 = vmul.f32 %v3136, %v3136
        %v3362 = vmul.f32 %v3137, %v3137
        %v3363 = vmul.f32 %v3138, %v3138
        %v3364 = vmul.f32 %v3139, %v3139
        %v3365 = vmul.f32 %v3140, %v3140
        %v3366 = vmul.f32 %v3141, %v3141
        %v3367 = vmul.f32 %v3142, %v3142
        %v3368 = vmul.f32 %v3143, %v3143
        %v3369 = vmul.f32 %v3144, %v3144
        %v3370 = vmul.f32 %v3145, %v3145
        %v3371 = vmul.f32 %v3146, %v3146
        %v3372 = vmul.f32 %v3147, %v3147
        %v3373 = vmul.f32 %v3148, %v3148
        %v3374 = vadd.f32 %v3310, %v3326
        %v3375 = vadd.f32 %v3374, %v3342
        %v3376 = vadd.f32 %v3375, %v3358
        %v3377 = vrot.slane %v3376, 4
        %v3378 = vadd.f32 %v3376, %v3377
        %v3379 = vrot.slane %v3378, 2
        %v3380 = vadd.f32 %v3378, %v3379
        %v3381 = vrot.slane %v3380, 1
        %v3382 = vadd.f32 %v3380, %v3381
        %v3383 = vadd.f32 %v3311, %v3327
        %v3384 = vadd.f32 %v3383, %v3343
        %v3385 = vadd.f32 %v3384, %v3359
        %v3386 = vrot.slane %v3385, 4
        %v3387 = vadd.f32 %v3385, %v3386
        %v3388 = vrot.slane %v3387, 2
        %v3389 = vadd.f32 %v3387, %v3388
        %v3390 = vrot.slane %v3389, 1
        %v3391 = vadd.f32 %v3389, %v3390
        %v3392 = vadd.f32 %v3312, %v3328
        %v3393 = vadd.f32 %v3392, %v3344
        %v3394 = vadd.f32 %v3393, %v3360
        %v3395 = vrot.slane %v3394, 4
        %v3396 = vadd.f32 %v3394, %v3395
        %v3397 = vrot.slane %v3396, 2
        %v3398 = vadd.f32 %v3396, %v3397
        %v3399 = vrot.slane %v3398, 1
        %v3400 = vadd.f32 %v3398, %v3399
        %v3401 = vadd.f32 %v3313, %v3329
        %v3402 = vadd.f32 %v3401, %v3345
        %v3403 = vadd.f32 %v3402, %v3361
        %v3404 = vrot.slane %v3403, 4
        %v3405 = vadd.f32 %v3403, %v3404
        %v3406 = vrot.slane %v3405, 2
        %v3407 = vadd.f32 %v3405, %v3406
        %v3408 = vrot.slane %v3407, 1
        %v3409 = vadd.f32 %v3407, %v3408
        %v3410 = vadd.f32 %v3314, %v3330
        %v3411 = vadd.f32 %v3410, %v3346
        %v3412 = vadd.f32 %v3411, %v3362
        %v3413 = vrot.slane %v3412, 4
        %v3414 = vadd.f32 %v3412, %v3413
        %v3415 = vrot.slane %v3414, 2
        %v3416 = vadd.f32 %v3414, %v3415
        %v3417 = vrot.slane %v3416, 1
        %v3418 = vadd.f32 %v3416, %v3417
        %v3419 = vadd.f32 %v3315, %v3331
        %v3420 = vadd.f32 %v3419, %v3347
        %v3421 = vadd.f32 %v3420, %v3363
        %v3422 = vrot.slane %v3421, 4
        %v3423 = vadd.f32 %v3421, %v3422
        %v3424 = vrot.slane %v3423, 2
        %v3425 = vadd.f32 %v3423, %v3424
        %v3426 = vrot.slane %v3425, 1
        %v3427 = vadd.f32 %v3425, %v3426
        %v3428 = vadd.f32 %v3316, %v3332
        %v3429 = vadd.f32 %v3428, %v3348
        %v3430 = vadd.f32 %v3429, %v3364
        %v3431 = vrot.slane %v3430, 4
        %v3432 = vadd.f32 %v3430, %v3431
        %v3433 = vrot.slane %v3432, 2
        %v3434 = vadd.f32 %v3432, %v3433
        %v3435 = vrot.slane %v3434, 1
        %v3436 = vadd.f32 %v3434, %v3435
        %v3437 = vadd.f32 %v3317, %v3333
        %v3438 = vadd.f32 %v3437, %v3349
        %v3439 = vadd.f32 %v3438, %v3365
        %v3440 = vrot.slane %v3439, 4
        %v3441 = vadd.f32 %v3439, %v3440
        %v3442 = vrot.slane %v3441, 2
        %v3443 = vadd.f32 %v3441, %v3442
        %v3444 = vrot.slane %v3443, 1
        %v3445 = vadd.f32 %v3443, %v3444
        %v3446 = vadd.f32 %v3318, %v3334
        %v3447 = vadd.f32 %v3446, %v3350
        %v3448 = vadd.f32 %v3447, %v3366
        %v3449 = vrot.slane %v3448, 4
        %v3450 = vadd.f32 %v3448, %v3449
        %v3451 = vrot.slane %v3450, 2
        %v3452 = vadd.f32 %v3450, %v3451
        %v3453 = vrot.slane %v3452, 1
        %v3454 = vadd.f32 %v3452, %v3453
        %v3455 = vadd.f32 %v3319, %v3335
        %v3456 = vadd.f32 %v3455, %v3351
        %v3457 = vadd.f32 %v3456, %v3367
        %v3458 = vrot.slane %v3457, 4
        %v3459 = vadd.f32 %v3457, %v3458
        %v3460 = vrot.slane %v3459, 2
        %v3461 = vadd.f32 %v3459, %v3460
        %v3462 = vrot.slane %v3461, 1
        %v3463 = vadd.f32 %v3461, %v3462
        %v3464 = vadd.f32 %v3320, %v3336
        %v3465 = vadd.f32 %v3464, %v3352
        %v3466 = vadd.f32 %v3465, %v3368
        %v3467 = vrot.slane %v3466, 4
        %v3468 = vadd.f32 %v3466, %v3467
        %v3469 = vrot.slane %v3468, 2
        %v3470 = vadd.f32 %v3468, %v3469
        %v3471 = vrot.slane %v3470, 1
        %v3472 = vadd.f32 %v3470, %v3471
        %v3473 = vadd.f32 %v3321, %v3337
        %v3474 = vadd.f32 %v3473, %v3353
        %v3475 = vadd.f32 %v3474, %v3369
        %v3476 = vrot.slane %v3475, 4
        %v3477 = vadd.f32 %v3475, %v3476
        %v3478 = vrot.slane %v3477, 2
        %v3479 = vadd.f32 %v3477, %v3478
        %v3480 = vrot.slane %v3479, 1
        %v3481 = vadd.f32 %v3479, %v3480
        %v3482 = vadd.f32 %v3322, %v3338
        %v3483 = vadd.f32 %v3482, %v3354
        %v3484 = vadd.f32 %v3483, %v3370
        %v3485 = vrot.slane %v3484, 4
        %v3486 = vadd.f32 %v3484, %v3485
        %v3487 = vrot.slane %v3486, 2
        %v3488 = vadd.f32 %v3486, %v3487
        %v3489 = vrot.slane %v3488, 1
        %v3490 = vadd.f32 %v3488, %v3489
        %v3491 = vadd.f32 %v3323, %v3339
        %v3492 = vadd.f32 %v3491, %v3355
        %v3493 = vadd.f32 %v3492, %v3371
        %v3494 = vrot.slane %v3493, 4
        %v3495 = vadd.f32 %v3493, %v3494
        %v3496 = vrot.slane %v3495, 2
        %v3497 = vadd.f32 %v3495, %v3496
        %v3498 = vrot.slane %v3497, 1
        %v3499 = vadd.f32 %v3497, %v3498
        %v3500 = vadd.f32 %v3324, %v3340
        %v3501 = vadd.f32 %v3500, %v3356
        %v3502 = vadd.f32 %v3501, %v3372
        %v3503 = vrot.slane %v3502, 4
        %v3504 = vadd.f32 %v3502, %v3503
        %v3505 = vrot.slane %v3504, 2
        %v3506 = vadd.f32 %v3504, %v3505
        %v3507 = vrot.slane %v3506, 1
        %v3508 = vadd.f32 %v3506, %v3507
        %v3509 = vadd.f32 %v3325, %v3341
        %v3510 = vadd.f32 %v3509, %v3357
        %v3511 = vadd.f32 %v3510, %v3373
        %v3512 = vrot.slane %v3511, 4
        %v3513 = vadd.f32 %v3511, %v3512
        %v3514 = vrot.slane %v3513, 2
        %v3515 = vadd.f32 %v3513, %v3514
        %v3516 = vrot.slane %v3515, 1
        %v3517 = vadd.f32 %v3515, %v3516
        %v3518 = vmul.f32 %v3382, %v3293
        %v3519 = vmul.f32 %v3391, %v3293
        %v3520 = vmul.f32 %v3400, %v3293
        %v3521 = vmul.f32 %v3409, %v3293
        %v3522 = vmul.f32 %v3418, %v3293
        %v3523 = vmul.f32 %v3427, %v3293
        %v3524 = vmul.f32 %v3436, %v3293
        %v3525 = vmul.f32 %v3445, %v3293
        %v3526 = vmul.f32 %v3454, %v3293
        %v3527 = vmul.f32 %v3463, %v3293
        %v3528 = vmul.f32 %v3472, %v3293
        %v3529 = vmul.f32 %v3481, %v3293
        %v3530 = vmul.f32 %v3490, %v3293
        %v3531 = vmul.f32 %v3499, %v3293
        %v3532 = vmul.f32 %v3508, %v3293
        %v3533 = vmul.f32 %v3517, %v3293
        %v3534 = vmul.f32 %v3294, %v3294
        %v3535 = vmul.f32 %v3295, %v3295
        %v3536 = vmul.f32 %v3296, %v3296
        %v3537 = vmul.f32 %v3297, %v3297
        %v3538 = vmul.f32 %v3298, %v3298
        %v3539 = vmul.f32 %v3299, %v3299
        %v3540 = vmul.f32 %v3300, %v3300
        %v3541 = vmul.f32 %v3301, %v3301
        %v3542 = vmul.f32 %v3302, %v3302
        %v3543 = vmul.f32 %v3303, %v3303
        %v3544 = vmul.f32 %v3304, %v3304
        %v3545 = vmul.f32 %v3305, %v3305
        %v3546 = vmul.f32 %v3306, %v3306
        %v3547 = vmul.f32 %v3307, %v3307
        %v3548 = vmul.f32 %v3308, %v3308
        %v3549 = vmul.f32 %v3309, %v3309
        %v3550 = vsub.f32 %v3518, %v3534
        %v3551 = vsub.f32 %v3519, %v3535
        %v3552 = vsub.f32 %v3520, %v3536
        %v3553 = vsub.f32 %v3521, %v3537
        %v3554 = vsub.f32 %v3522, %v3538
        %v3555 = vsub.f32 %v3523, %v3539
        %v3556 = vsub.f32 %v3524, %v3540
        %v3557 = vsub.f32 %v3525, %v3541
        %v3558 = vsub.f32 %v3526, %v3542
        %v3559 = vsub.f32 %v3527, %v3543
        %v3560 = vsub.f32 %v3528, %v3544
        %v3561 = vsub.f32 %v3529, %v3545
        %v3562 = vsub.f32 %v3530, %v3546
        %v3563 = vsub.f32 %v3531, %v3547
        %v3564 = vsub.f32 %v3532, %v3548
        %v3565 = vsub.f32 %v3533, %v3549
        %v3566 = vsub.f32 %v3085, %v3294
        %v3567 = vsub.f32 %v3086, %v3295
        %v3568 = vsub.f32 %v3087, %v3296
        %v3569 = vsub.f32 %v3088, %v3297
        %v3570 = vsub.f32 %v3089, %v3298
        %v3571 = vsub.f32 %v3090, %v3299
        %v3572 = vsub.f32 %v3091, %v3300
        %v3573 = vsub.f32 %v3092, %v3301
        %v3574 = vsub.f32 %v3093, %v3302
        %v3575 = vsub.f32 %v3094, %v3303
        %v3576 = vsub.f32 %v3095, %v3304
        %v3577 = vsub.f32 %v3096, %v3305
        %v3578 = vsub.f32 %v3097, %v3306
        %v3579 = vsub.f32 %v3098, %v3307
        %v3580 = vsub.f32 %v3099, %v3308
        %v3581 = vsub.f32 %v3100, %v3309
        %v3582 = vsub.f32 %v3101, %v3294
        %v3583 = vsub.f32 %v3102, %v3295
        %v3584 = vsub.f32 %v3103, %v3296
        %v3585 = vsub.f32 %v3104, %v3297
        %v3586 = vsub.f32 %v3105, %v3298
        %v3587 = vsub.f32 %v3106, %v3299
        %v3588 = vsub.f32 %v3107, %v3300
        %v3589 = vsub.f32 %v3108, %v3301
        %v3590 = vsub.f32 %v3109, %v3302
        %v3591 = vsub.f32 %v3110, %v3303
        %v3592 = vsub.f32 %v3111, %v3304
        %v3593 = vsub.f32 %v3112, %v3305
        %v3594 = vsub.f32 %v3113, %v3306
        %v3595 = vsub.f32 %v3114, %v3307
        %v3596 = vsub.f32 %v3115, %v3308
        %v3597 = vsub.f32 %v3116, %v3309
        %v3598 = vsub.f32 %v3117, %v3294
        %v3599 = vsub.f32 %v3118, %v3295
        %v3600 = vsub.f32 %v3119, %v3296
        %v3601 = vsub.f32 %v3120, %v3297
        %v3602 = vsub.f32 %v3121, %v3298
        %v3603 = vsub.f32 %v3122, %v3299
        %v3604 = vsub.f32 %v3123, %v3300
        %v3605 = vsub.f32 %v3124, %v3301
        %v3606 = vsub.f32 %v3125, %v3302
        %v3607 = vsub.f32 %v3126, %v3303
        %v3608 = vsub.f32 %v3127, %v3304
        %v3609 = vsub.f32 %v3128, %v3305
        %v3610 = vsub.f32 %v3129, %v3306
        %v3611 = vsub.f32 %v3130, %v3307
        %v3612 = vsub.f32 %v3131, %v3308
        %v3613 = vsub.f32 %v3132, %v3309
        %v3614 = vsub.f32 %v3133, %v3294
        %v3615 = vsub.f32 %v3134, %v3295
        %v3616 = vsub.f32 %v3135, %v3296
        %v3617 = vsub.f32 %v3136, %v3297
        %v3618 = vsub.f32 %v3137, %v3298
        %v3619 = vsub.f32 %v3138, %v3299
        %v3620 = vsub.f32 %v3139, %v3300
        %v3621 = vsub.f32 %v3140, %v3301
        %v3622 = vsub.f32 %v3141, %v3302
        %v3623 = vsub.f32 %v3142, %v3303
        %v3624 = vsub.f32 %v3143, %v3304
        %v3625 = vsub.f32 %v3144, %v3305
        %v3626 = vsub.f32 %v3145, %v3306
        %v3627 = vsub.f32 %v3146, %v3307
        %v3628 = vsub.f32 %v3147, %v3308
        %v3629 = vsub.f32 %v3148, %v3309
        %v3630 = vadd.f32 %v3550, 1e-05
        %v3631 = vadd.f32 %v3551, 1e-05
        %v3632 = vadd.f32 %v3552, 1e-05
        %v3633 = vadd.f32 %v3553, 1e-05
        %v3634 = vadd.f32 %v3554, 1e-05
        %v3635 = vadd.f32 %v3555, 1e-05
        %v3636 = vadd.f32 %v3556, 1e-05
        %v3637 = vadd.f32 %v3557, 1e-05
        %v3638 = vadd.f32 %v3558, 1e-05
        %v3639 = vadd.f32 %v3559, 1e-05
        %v3640 = vadd.f32 %v3560, 1e-05
        %v3641 = vadd.f32 %v3561, 1e-05
        %v3642 = vadd.f32 %v3562, 1e-05
        %v3643 = vadd.f32 %v3563, 1e-05
        %v3644 = vadd.f32 %v3564, 1e-05
        %v3645 = vadd.f32 %v3565, 1e-05
        %v3646 = vrsqrt.pop %v3630
        %v3647 = vrsqrt.pop %v3631
        %v3648 = vrsqrt.pop %v3632
        %v3649 = vrsqrt.pop %v3633
        %v3650 = vrsqrt.pop %v3634
        %v3651 = vrsqrt.pop %v3635
        %v3652 = vrsqrt.pop %v3636
        %v3653 = vrsqrt.pop %v3637
        %v3654 = vrsqrt.pop %v3638
        %v3655 = vrsqrt.pop %v3639
        %v3656 = vrsqrt.pop %v3640
        %v3657 = vrsqrt.pop %v3641
        %v3658 = vrsqrt.pop %v3642
        %v3659 = vrsqrt.pop %v3643
        %v3660 = vrsqrt.pop %v3644
        %v3661 = vrsqrt.pop %v3645
        %v3662 = vmul.f32 %v3566, %v3646
        %v3663 = vmul.f32 %v3567, %v3647
        %v3664 = vmul.f32 %v3568, %v3648
        %v3665 = vmul.f32 %v3569, %v3649
        %v3666 = vmul.f32 %v3570, %v3650
        %v3667 = vmul.f32 %v3571, %v3651
        %v3668 = vmul.f32 %v3572, %v3652
        %v3669 = vmul.f32 %v3573, %v3653
        %v3670 = vmul.f32 %v3574, %v3654
        %v3671 = vmul.f32 %v3575, %v3655
        %v3672 = vmul.f32 %v3576, %v3656
        %v3673 = vmul.f32 %v3577, %v3657
        %v3674 = vmul.f32 %v3578, %v3658
        %v3675 = vmul.f32 %v3579, %v3659
        %v3676 = vmul.f32 %v3580, %v3660
        %v3677 = vmul.f32 %v3581, %v3661
        %v3678 = vmul.f32 %v3582, %v3646
        %v3679 = vmul.f32 %v3583, %v3647
        %v3680 = vmul.f32 %v3584, %v3648
        %v3681 = vmul.f32 %v3585, %v3649
        %v3682 = vmul.f32 %v3586, %v3650
        %v3683 = vmul.f32 %v3587, %v3651
        %v3684 = vmul.f32 %v3588, %v3652
        %v3685 = vmul.f32 %v3589, %v3653
        %v3686 = vmul.f32 %v3590, %v3654
        %v3687 = vmul.f32 %v3591, %v3655
        %v3688 = vmul.f32 %v3592, %v3656
        %v3689 = vmul.f32 %v3593, %v3657
        %v3690 = vmul.f32 %v3594, %v3658
        %v3691 = vmul.f32 %v3595, %v3659
        %v3692 = vmul.f32 %v3596, %v3660
        %v3693 = vmul.f32 %v3597, %v3661
        %v3694 = vmul.f32 %v3598, %v3646
        %v3695 = vmul.f32 %v3599, %v3647
        %v3696 = vmul.f32 %v3600, %v3648
        %v3697 = vmul.f32 %v3601, %v3649
        %v3698 = vmul.f32 %v3602, %v3650
        %v3699 = vmul.f32 %v3603, %v3651
        %v3700 = vmul.f32 %v3604, %v3652
        %v3701 = vmul.f32 %v3605, %v3653
        %v3702 = vmul.f32 %v3606, %v3654
        %v3703 = vmul.f32 %v3607, %v3655
        %v3704 = vmul.f32 %v3608, %v3656
        %v3705 = vmul.f32 %v3609, %v3657
        %v3706 = vmul.f32 %v3610, %v3658
        %v3707 = vmul.f32 %v3611, %v3659
        %v3708 = vmul.f32 %v3612, %v3660
        %v3709 = vmul.f32 %v3613, %v3661
        %v3710 = vmul.f32 %v3614, %v3646
        %v3711 = vmul.f32 %v3615, %v3647
        %v3712 = vmul.f32 %v3616, %v3648
        %v3713 = vmul.f32 %v3617, %v3649
        %v3714 = vmul.f32 %v3618, %v3650
        %v3715 = vmul.f32 %v3619, %v3651
        %v3716 = vmul.f32 %v3620, %v3652
        %v3717 = vmul.f32 %v3621, %v3653
        %v3718 = vmul.f32 %v3622, %v3654
        %v3719 = vmul.f32 %v3623, %v3655
        %v3720 = vmul.f32 %v3624, %v3656
        %v3721 = vmul.f32 %v3625, %v3657
        %v3722 = vmul.f32 %v3626, %v3658
        %v3723 = vmul.f32 %v3627, %v3659
        %v3724 = vmul.f32 %v3628, %v3660
        %v3725 = vmul.f32 %v3629, %v3661
        %3726 = vset.pattern.permute.xlu0 1
        %3727 = vperm.xlu0 %3726, %v1057
        %v3728 = vpop.permute.xlu0 %3727
        %3730 = vset.pattern.permute.xlu0 1
        %3731 = vperm.xlu0 %3730, %v1058
        %v3732 = vpop.permute.xlu0 %3731
        %3734 = vset.pattern.permute.xlu0 1
        %3735 = vperm.xlu0 %3734, %v1059
        %v3736 = vpop.permute.xlu0 %3735
        %3738 = vset.pattern.permute.xlu0 1
        %3739 = vperm.xlu0 %3738, %v1060
        %v3740 = vpop.permute.xlu0 %3739
        %v3742 = vmul.f32 %v3662, %v3728
        %v3743 = vmul.f32 %v3663, %v3728
        %v3744 = vmul.f32 %v3664, %v3728
        %v3745 = vmul.f32 %v3665, %v3728
        %v3746 = vmul.f32 %v3666, %v3728
        %v3747 = vmul.f32 %v3667, %v3728
        %v3748 = vmul.f32 %v3668, %v3728
        %v3749 = vmul.f32 %v3669, %v3728
        %v3750 = vmul.f32 %v3670, %v3728
        %v3751 = vmul.f32 %v3671, %v3728
        %v3752 = vmul.f32 %v3672, %v3728
        %v3753 = vmul.f32 %v3673, %v3728
        %v3754 = vmul.f32 %v3674, %v3728
        %v3755 = vmul.f32 %v3675, %v3728
        %v3756 = vmul.f32 %v3676, %v3728
        %v3757 = vmul.f32 %v3677, %v3728
        %v3758 = vmul.f32 %v3678, %v3732
        %v3759 = vmul.f32 %v3679, %v3732
        %v3760 = vmul.f32 %v3680, %v3732
        %v3761 = vmul.f32 %v3681, %v3732
        %v3762 = vmul.f32 %v3682, %v3732
        %v3763 = vmul.f32 %v3683, %v3732
        %v3764 = vmul.f32 %v3684, %v3732
        %v3765 = vmul.f32 %v3685, %v3732
        %v3766 = vmul.f32 %v3686, %v3732
        %v3767 = vmul.f32 %v3687, %v3732
        %v3768 = vmul.f32 %v3688, %v3732
        %v3769 = vmul.f32 %v3689, %v3732
        %v3770 = vmul.f32 %v3690, %v3732
        %v3771 = vmul.f32 %v3691, %v3732
        %v3772 = vmul.f32 %v3692, %v3732
        %v3773 = vmul.f32 %v3693, %v3732
        %v3774 = vmul.f32 %v3694, %v3736
        %v3775 = vmul.f32 %v3695, %v3736
        %v3776 = vmul.f32 %v3696, %v3736
        %v3777 = vmul.f32 %v3697, %v3736
        %v3778 = vmul.f32 %v3698, %v3736
        %v3779 = vmul.f32 %v3699, %v3736
        %v3780 = vmul.f32 %v3700, %v3736
        %v3781 = vmul.f32 %v3701, %v3736
        %v3782 = vmul.f32 %v3702, %v3736
        %v3783 = vmul.f32 %v3703, %v3736
        %v3784 = vmul.f32 %v3704, %v3736
        %v3785 = vmul.f32 %v3705, %v3736
        %v3786 = vmul.f32 %v3706, %v3736
        %v3787 = vmul.f32 %v3707, %v3736
        %v3788 = vmul.f32 %v3708, %v3736
        %v3789 = vmul.f32 %v3709, %v3736
        %v3790 = vmul.f32 %v3710, %v3740
        %v3791 = vmul.f32 %v3711, %v3740
        %v3792 = vmul.f32 %v3712, %v3740
        %v3793 = vmul.f32 %v3713, %v3740
        %v3794 = vmul.f32 %v3714, %v3740
        %v3795 = vmul.f32 %v3715, %v3740
        %v3796 = vmul.f32 %v3716, %v3740
        %v3797 = vmul.f32 %v3717, %v3740
        %v3798 = vmul.f32 %v3718, %v3740
        %v3799 = vmul.f32 %v3719, %v3740
        %v3800 = vmul.f32 %v3720, %v3740
        %v3801 = vmul.f32 %v3721, %v3740
        %v3802 = vmul.f32 %v3722, %v3740
        %v3803 = vmul.f32 %v3723, %v3740
        %v3804 = vmul.f32 %v3724, %v3740
        %v3805 = vmul.f32 %v3725, %v3740
        %3806 = vset.pattern.permute.xlu0 2
        %3807 = vperm.xlu0 %3806, %v1057
        %v3808 = vpop.permute.xlu0 %3807
        %3810 = vset.pattern.permute.xlu0 2
        %3811 = vperm.xlu0 %3810, %v1058
        %v3812 = vpop.permute.xlu0 %3811
        %3814 = vset.pattern.permute.xlu0 2
        %3815 = vperm.xlu0 %3814, %v1059
        %v3816 = vpop.permute.xlu0 %3815
        %3818 = vset.pattern.permute.xlu0 2
        %3819 = vperm.xlu0 %3818, %v1060
        %v3820 = vpop.permute.xlu0 %3819
        %v3822 = vadd.f32 %v3742, %v3808
        %v3823 = vadd.f32 %v3743, %v3808
        %v3824 = vadd.f32 %v3744, %v3808
        %v3825 = vadd.f32 %v3745, %v3808
        %v3826 = vadd.f32 %v3746, %v3808
        %v3827 = vadd.f32 %v3747, %v3808
        %v3828 = vadd.f32 %v3748, %v3808
        %v3829 = vadd.f32 %v3749, %v3808
        %v3830 = vadd.f32 %v3750, %v3808
        %v3831 = vadd.f32 %v3751, %v3808
        %v3832 = vadd.f32 %v3752, %v3808
        %v3833 = vadd.f32 %v3753, %v3808
        %v3834 = vadd.f32 %v3754, %v3808
        %v3835 = vadd.f32 %v3755, %v3808
        %v3836 = vadd.f32 %v3756, %v3808
        %v3837 = vadd.f32 %v3757, %v3808
        %v3838 = vadd.f32 %v3758, %v3812
        %v3839 = vadd.f32 %v3759, %v3812
        %v3840 = vadd.f32 %v3760, %v3812
        %v3841 = vadd.f32 %v3761, %v3812
        %v3842 = vadd.f32 %v3762, %v3812
        %v3843 = vadd.f32 %v3763, %v3812
        %v3844 = vadd.f32 %v3764, %v3812
        %v3845 = vadd.f32 %v3765, %v3812
        %v3846 = vadd.f32 %v3766, %v3812
        %v3847 = vadd.f32 %v3767, %v3812
        %v3848 = vadd.f32 %v3768, %v3812
        %v3849 = vadd.f32 %v3769, %v3812
        %v3850 = vadd.f32 %v3770, %v3812
        %v3851 = vadd.f32 %v3771, %v3812
        %v3852 = vadd.f32 %v3772, %v3812
        %v3853 = vadd.f32 %v3773, %v3812
        %v3854 = vadd.f32 %v3774, %v3816
        %v3855 = vadd.f32 %v3775, %v3816
        %v3856 = vadd.f32 %v3776, %v3816
        %v3857 = vadd.f32 %v3777, %v3816
        %v3858 = vadd.f32 %v3778, %v3816
        %v3859 = vadd.f32 %v3779, %v3816
        %v3860 = vadd.f32 %v3780, %v3816
        %v3861 = vadd.f32 %v3781, %v3816
        %v3862 = vadd.f32 %v3782, %v3816
        %v3863 = vadd.f32 %v3783, %v3816
        %v3864 = vadd.f32 %v3784, %v3816
        %v3865 = vadd.f32 %v3785, %v3816
        %v3866 = vadd.f32 %v3786, %v3816
        %v3867 = vadd.f32 %v3787, %v3816
        %v3868 = vadd.f32 %v3788, %v3816
        %v3869 = vadd.f32 %v3789, %v3816
        %v3870 = vadd.f32 %v3790, %v3820
        %v3871 = vadd.f32 %v3791, %v3820
        %v3872 = vadd.f32 %v3792, %v3820
        %v3873 = vadd.f32 %v3793, %v3820
        %v3874 = vadd.f32 %v3794, %v3820
        %v3875 = vadd.f32 %v3795, %v3820
        %v3876 = vadd.f32 %v3796, %v3820
        %v3877 = vadd.f32 %v3797, %v3820
        %v3878 = vadd.f32 %v3798, %v3820
        %v3879 = vadd.f32 %v3799, %v3820
        %v3880 = vadd.f32 %v3800, %v3820
        %v3881 = vadd.f32 %v3801, %v3820
        %v3882 = vadd.f32 %v3802, %v3820
        %v3883 = vadd.f32 %v3803, %v3820
        %v3884 = vadd.f32 %v3804, %v3820
        %v3885 = vadd.f32 %v3805, %v3820
        %v3886 = vmul.f32 %v3822, %v3822
        %v3887 = vmul.f32 %v3823, %v3823
        %v3888 = vmul.f32 %v3824, %v3824
        %v3889 = vmul.f32 %v3825, %v3825
        %v3890 = vmul.f32 %v3826, %v3826
        %v3891 = vmul.f32 %v3827, %v3827
        %v3892 = vmul.f32 %v3828, %v3828
        %v3893 = vmul.f32 %v3829, %v3829
        %v3894 = vmul.f32 %v3830, %v3830
        %v3895 = vmul.f32 %v3831, %v3831
        %v3896 = vmul.f32 %v3832, %v3832
        %v3897 = vmul.f32 %v3833, %v3833
        %v3898 = vmul.f32 %v3834, %v3834
        %v3899 = vmul.f32 %v3835, %v3835
        %v3900 = vmul.f32 %v3836, %v3836
        %v3901 = vmul.f32 %v3837, %v3837
        %v3902 = vmul.f32 %v3838, %v3838
        %v3903 = vmul.f32 %v3839, %v3839
        %v3904 = vmul.f32 %v3840, %v3840
        %v3905 = vmul.f32 %v3841, %v3841
        %v3906 = vmul.f32 %v3842, %v3842
        %v3907 = vmul.f32 %v3843, %v3843
        %v3908 = vmul.f32 %v3844, %v3844
        %v3909 = vmul.f32 %v3845, %v3845
        %v3910 = vmul.f32 %v3846, %v3846
        %v3911 = vmul.f32 %v3847, %v3847
        %v3912 = vmul.f32 %v3848, %v3848
        %v3913 = vmul.f32 %v3849, %v3849
        %v3914 = vmul.f32 %v3850, %v3850
        %v3915 = vmul.f32 %v3851, %v3851
        %v3916 = vmul.f32 %v3852, %v3852
        %v3917 = vmul.f32 %v3853, %v3853
        %v3918 = vmul.f32 %v3854, %v3854
        %v3919 = vmul.f32 %v3855, %v3855
        %v3920 = vmul.f32 %v3856, %v3856
        %v3921 = vmul.f32 %v3857, %v3857
        %v3922 = vmul.f32 %v3858, %v3858
        %v3923 = vmul.f32 %v3859, %v3859
        %v3924 = vmul.f32 %v3860, %v3860
        %v3925 = vmul.f32 %v3861, %v3861
        %v3926 = vmul.f32 %v3862, %v3862
        %v3927 = vmul.f32 %v3863, %v3863
        %v3928 = vmul.f32 %v3864, %v3864
        %v3929 = vmul.f32 %v3865, %v3865
        %v3930 = vmul.f32 %v3866, %v3866
        %v3931 = vmul.f32 %v3867, %v3867
        %v3932 = vmul.f32 %v3868, %v3868
        %v3933 = vmul.f32 %v3869, %v3869
        %v3934 = vmul.f32 %v3870, %v3870
        %v3935 = vmul.f32 %v3871, %v3871
        %v3936 = vmul.f32 %v3872, %v3872
        %v3937 = vmul.f32 %v3873, %v3873
        %v3938 = vmul.f32 %v3874, %v3874
        %v3939 = vmul.f32 %v3875, %v3875
        %v3940 = vmul.f32 %v3876, %v3876
        %v3941 = vmul.f32 %v3877, %v3877
        %v3942 = vmul.f32 %v3878, %v3878
        %v3943 = vmul.f32 %v3879, %v3879
        %v3944 = vmul.f32 %v3880, %v3880
        %v3945 = vmul.f32 %v3881, %v3881
        %v3946 = vmul.f32 %v3882, %v3882
        %v3947 = vmul.f32 %v3883, %v3883
        %v3948 = vmul.f32 %v3884, %v3884
        %v3949 = vmul.f32 %v3885, %v3885
        %v3950 = vmul.f32 %v3822, %v3886
        %v3951 = vmul.f32 %v3823, %v3887
        %v3952 = vmul.f32 %v3824, %v3888
        %v3953 = vmul.f32 %v3825, %v3889
        %v3954 = vmul.f32 %v3826, %v3890
        %v3955 = vmul.f32 %v3827, %v3891
        %v3956 = vmul.f32 %v3828, %v3892
        %v3957 = vmul.f32 %v3829, %v3893
        %v3958 = vmul.f32 %v3830, %v3894
        %v3959 = vmul.f32 %v3831, %v3895
        %v3960 = vmul.f32 %v3832, %v3896
        %v3961 = vmul.f32 %v3833, %v3897
        %v3962 = vmul.f32 %v3834, %v3898
        %v3963 = vmul.f32 %v3835, %v3899
        %v3964 = vmul.f32 %v3836, %v3900
        %v3965 = vmul.f32 %v3837, %v3901
        %v3966 = vmul.f32 %v3838, %v3902
        %v3967 = vmul.f32 %v3839, %v3903
        %v3968 = vmul.f32 %v3840, %v3904
        %v3969 = vmul.f32 %v3841, %v3905
        %v3970 = vmul.f32 %v3842, %v3906
        %v3971 = vmul.f32 %v3843, %v3907
        %v3972 = vmul.f32 %v3844, %v3908
        %v3973 = vmul.f32 %v3845, %v3909
        %v3974 = vmul.f32 %v3846, %v3910
        %v3975 = vmul.f32 %v3847, %v3911
        %v3976 = vmul.f32 %v3848, %v3912
        %v3977 = vmul.f32 %v3849, %v3913
        %v3978 = vmul.f32 %v3850, %v3914
        %v3979 = vmul.f32 %v3851, %v3915
        %v3980 = vmul.f32 %v3852, %v3916
        %v3981 = vmul.f32 %v3853, %v3917
        %v3982 = vmul.f32 %v3854, %v3918
        %v3983 = vmul.f32 %v3855, %v3919
        %v3984 = vmul.f32 %v3856, %v3920
        %v3985 = vmul.f32 %v3857, %v3921
        %v3986 = vmul.f32 %v3858, %v3922
        %v3987 = vmul.f32 %v3859, %v3923
        %v3988 = vmul.f32 %v3860, %v3924
        %v3989 = vmul.f32 %v3861, %v3925
        %v3990 = vmul.f32 %v3862, %v3926
        %v3991 = vmul.f32 %v3863, %v3927
        %v3992 = vmul.f32 %v3864, %v3928
        %v3993 = vmul.f32 %v3865, %v3929
        %v3994 = vmul.f32 %v3866, %v3930
        %v3995 = vmul.f32 %v3867, %v3931
        %v3996 = vmul.f32 %v3868, %v3932
        %v3997 = vmul.f32 %v3869, %v3933
        %v3998 = vmul.f32 %v3870, %v3934
        %v3999 = vmul.f32 %v3871, %v3935
        %v4000 = vmul.f32 %v3872, %v3936
        %v4001 = vmul.f32 %v3873, %v3937
        %v4002 = vmul.f32 %v3874, %v3938
        %v4003 = vmul.f32 %v3875, %v3939
        %v4004 = vmul.f32 %v3876, %v3940
        %v4005 = vmul.f32 %v3877, %v3941
        %v4006 = vmul.f32 %v3878, %v3942
        %v4007 = vmul.f32 %v3879, %v3943
        %v4008 = vmul.f32 %v3880, %v3944
        %v4009 = vmul.f32 %v3881, %v3945
        %v4010 = vmul.f32 %v3882, %v3946
        %v4011 = vmul.f32 %v3883, %v3947
        %v4012 = vmul.f32 %v3884, %v3948
        %v4013 = vmul.f32 %v3885, %v3949
        %v4014 = vmul.f32 %v3950, 0.044715
        %v4015 = vmul.f32 %v3951, 0.044715
        %v4016 = vmul.f32 %v3952, 0.044715
        %v4017 = vmul.f32 %v3953, 0.044715
        %v4018 = vmul.f32 %v3954, 0.044715
        %v4019 = vmul.f32 %v3955, 0.044715
        %v4020 = vmul.f32 %v3956, 0.044715
        %v4021 = vmul.f32 %v3957, 0.044715
        %v4022 = vmul.f32 %v3958, 0.044715
        %v4023 = vmul.f32 %v3959, 0.044715
        %v4024 = vmul.f32 %v3960, 0.044715
        %v4025 = vmul.f32 %v3961, 0.044715
        %v4026 = vmul.f32 %v3962, 0.044715
        %v4027 = vmul.f32 %v3963, 0.044715
        %v4028 = vmul.f32 %v3964, 0.044715
        %v4029 = vmul.f32 %v3965, 0.044715
        %v4030 = vmul.f32 %v3966, 0.044715
        %v4031 = vmul.f32 %v3967, 0.044715
        %v4032 = vmul.f32 %v3968, 0.044715
        %v4033 = vmul.f32 %v3969, 0.044715
        %v4034 = vmul.f32 %v3970, 0.044715
        %v4035 = vmul.f32 %v3971, 0.044715
        %v4036 = vmul.f32 %v3972, 0.044715
        %v4037 = vmul.f32 %v3973, 0.044715
        %v4038 = vmul.f32 %v3974, 0.044715
        %v4039 = vmul.f32 %v3975, 0.044715
        %v4040 = vmul.f32 %v3976, 0.044715
        %v4041 = vmul.f32 %v3977, 0.044715
        %v4042 = vmul.f32 %v3978, 0.044715
        %v4043 = vmul.f32 %v3979, 0.044715
        %v4044 = vmul.f32 %v3980, 0.044715
        %v4045 = vmul.f32 %v3981, 0.044715
        %v4046 = vmul.f32 %v3982, 0.044715
        %v4047 = vmul.f32 %v3983, 0.044715
        %v4048 = vmul.f32 %v3984, 0.044715
        %v4049 = vmul.f32 %v3985, 0.044715
        %v4050 = vmul.f32 %v3986, 0.044715
        %v4051 = vmul.f32 %v3987, 0.044715
        %v4052 = vmul.f32 %v3988, 0.044715
        %v4053 = vmul.f32 %v3989, 0.044715
        %v4054 = vmul.f32 %v3990, 0.044715
        %v4055 = vmul.f32 %v3991, 0.044715
        %v4056 = vmul.f32 %v3992, 0.044715
        %v4057 = vmul.f32 %v3993, 0.044715
        %v4058 = vmul.f32 %v3994, 0.044715
        %v4059 = vmul.f32 %v3995, 0.044715
        %v4060 = vmul.f32 %v3996, 0.044715
        %v4061 = vmul.f32 %v3997, 0.044715
        %v4062 = vmul.f32 %v3998, 0.044715
        %v4063 = vmul.f32 %v3999, 0.044715
        %v4064 = vmul.f32 %v4000, 0.044715
        %v4065 = vmul.f32 %v4001, 0.044715
        %v4066 = vmul.f32 %v4002, 0.044715
        %v4067 = vmul.f32 %v4003, 0.044715
        %v4068 = vmul.f32 %v4004, 0.044715
        %v4069 = vmul.f32 %v4005, 0.044715
        %v4070 = vmul.f32 %v4006, 0.044715
        %v4071 = vmul.f32 %v4007, 0.044715
        %v4072 = vmul.f32 %v4008, 0.044715
        %v4073 = vmul.f32 %v4009, 0.044715
        %v4074 = vmul.f32 %v4010, 0.044715
        %v4075 = vmul.f32 %v4011, 0.044715
        %v4076 = vmul.f32 %v4012, 0.044715
        %v4077 = vmul.f32 %v4013, 0.044715
        %v4078 = vadd.f32 %v3822, %v4014
        %v4079 = vadd.f32 %v3823, %v4015
        %v4080 = vadd.f32 %v3824, %v4016
        %v4081 = vadd.f32 %v3825, %v4017
        %v4082 = vadd.f32 %v3826, %v4018
        %v4083 = vadd.f32 %v3827, %v4019
        %v4084 = vadd.f32 %v3828, %v4020
        %v4085 = vadd.f32 %v3829, %v4021
        %v4086 = vadd.f32 %v3830, %v4022
        %v4087 = vadd.f32 %v3831, %v4023
        %v4088 = vadd.f32 %v3832, %v4024
        %v4089 = vadd.f32 %v3833, %v4025
        %v4090 = vadd.f32 %v3834, %v4026
        %v4091 = vadd.f32 %v3835, %v4027
        %v4092 = vadd.f32 %v3836, %v4028
        %v4093 = vadd.f32 %v3837, %v4029
        %v4094 = vadd.f32 %v3838, %v4030
        %v4095 = vadd.f32 %v3839, %v4031
        %v4096 = vadd.f32 %v3840, %v4032
        %v4097 = vadd.f32 %v3841, %v4033
        %v4098 = vadd.f32 %v3842, %v4034
        %v4099 = vadd.f32 %v3843, %v4035
        %v4100 = vadd.f32 %v3844, %v4036
        %v4101 = vadd.f32 %v3845, %v4037
        %v4102 = vadd.f32 %v3846, %v4038
        %v4103 = vadd.f32 %v3847, %v4039
        %v4104 = vadd.f32 %v3848, %v4040
        %v4105 = vadd.f32 %v3849, %v4041
        %v4106 = vadd.f32 %v3850, %v4042
        %v4107 = vadd.f32 %v3851, %v4043
        %v4108 = vadd.f32 %v3852, %v4044
        %v4109 = vadd.f32 %v3853, %v4045
        %v4110 = vadd.f32 %v3854, %v4046
        %v4111 = vadd.f32 %v3855, %v4047
        %v4112 = vadd.f32 %v3856, %v4048
        %v4113 = vadd.f32 %v3857, %v4049
        %v4114 = vadd.f32 %v3858, %v4050
        %v4115 = vadd.f32 %v3859, %v4051
        %v4116 = vadd.f32 %v3860, %v4052
        %v4117 = vadd.f32 %v3861, %v4053
        %v4118 = vadd.f32 %v3862, %v4054
        %v4119 = vadd.f32 %v3863, %v4055
        %v4120 = vadd.f32 %v3864, %v4056
        %v4121 = vadd.f32 %v3865, %v4057
        %v4122 = vadd.f32 %v3866, %v4058
        %v4123 = vadd.f32 %v3867, %v4059
        %v4124 = vadd.f32 %v3868, %v4060
        %v4125 = vadd.f32 %v3869, %v4061
        %v4126 = vadd.f32 %v3870, %v4062
        %v4127 = vadd.f32 %v3871, %v4063
        %v4128 = vadd.f32 %v3872, %v4064
        %v4129 = vadd.f32 %v3873, %v4065
        %v4130 = vadd.f32 %v3874, %v4066
        %v4131 = vadd.f32 %v3875, %v4067
        %v4132 = vadd.f32 %v3876, %v4068
        %v4133 = vadd.f32 %v3877, %v4069
        %v4134 = vadd.f32 %v3878, %v4070
        %v4135 = vadd.f32 %v3879, %v4071
        %v4136 = vadd.f32 %v3880, %v4072
        %v4137 = vadd.f32 %v3881, %v4073
        %v4138 = vadd.f32 %v3882, %v4074
        %v4139 = vadd.f32 %v3883, %v4075
        %v4140 = vadd.f32 %v3884, %v4076
        %v4141 = vadd.f32 %v3885, %v4077
        %v4142 = vmul.f32 %v4078, 0.7978846
        %v4143 = vmul.f32 %v4079, 0.7978846
        %v4144 = vmul.f32 %v4080, 0.7978846
        %v4145 = vmul.f32 %v4081, 0.7978846
        %v4146 = vmul.f32 %v4082, 0.7978846
        %v4147 = vmul.f32 %v4083, 0.7978846
        %v4148 = vmul.f32 %v4084, 0.7978846
        %v4149 = vmul.f32 %v4085, 0.7978846
        %v4150 = vmul.f32 %v4086, 0.7978846
        %v4151 = vmul.f32 %v4087, 0.7978846
        %v4152 = vmul.f32 %v4088, 0.7978846
        %v4153 = vmul.f32 %v4089, 0.7978846
        %v4154 = vmul.f32 %v4090, 0.7978846
        %v4155 = vmul.f32 %v4091, 0.7978846
        %v4156 = vmul.f32 %v4092, 0.7978846
        %v4157 = vmul.f32 %v4093, 0.7978846
        %v4158 = vmul.f32 %v4094, 0.7978846
        %v4159 = vmul.f32 %v4095, 0.7978846
        %v4160 = vmul.f32 %v4096, 0.7978846
        %v4161 = vmul.f32 %v4097, 0.7978846
        %v4162 = vmul.f32 %v4098, 0.7978846
        %v4163 = vmul.f32 %v4099, 0.7978846
        %v4164 = vmul.f32 %v4100, 0.7978846
        %v4165 = vmul.f32 %v4101, 0.7978846
        %v4166 = vmul.f32 %v4102, 0.7978846
        %v4167 = vmul.f32 %v4103, 0.7978846
        %v4168 = vmul.f32 %v4104, 0.7978846
        %v4169 = vmul.f32 %v4105, 0.7978846
        %v4170 = vmul.f32 %v4106, 0.7978846
        %v4171 = vmul.f32 %v4107, 0.7978846
        %v4172 = vmul.f32 %v4108, 0.7978846
        %v4173 = vmul.f32 %v4109, 0.7978846
        %v4174 = vmul.f32 %v4110, 0.7978846
        %v4175 = vmul.f32 %v4111, 0.7978846
        %v4176 = vmul.f32 %v4112, 0.7978846
        %v4177 = vmul.f32 %v4113, 0.7978846
        %v4178 = vmul.f32 %v4114, 0.7978846
        %v4179 = vmul.f32 %v4115, 0.7978846
        %v4180 = vmul.f32 %v4116, 0.7978846
        %v4181 = vmul.f32 %v4117, 0.7978846
        %v4182 = vmul.f32 %v4118, 0.7978846
        %v4183 = vmul.f32 %v4119, 0.7978846
        %v4184 = vmul.f32 %v4120, 0.7978846
        %v4185 = vmul.f32 %v4121, 0.7978846
        %v4186 = vmul.f32 %v4122, 0.7978846
        %v4187 = vmul.f32 %v4123, 0.7978846
        %v4188 = vmul.f32 %v4124, 0.7978846
        %v4189 = vmul.f32 %v4125, 0.7978846
        %v4190 = vmul.f32 %v4126, 0.7978846
        %v4191 = vmul.f32 %v4127, 0.7978846
        %v4192 = vmul.f32 %v4128, 0.7978846
        %v4193 = vmul.f32 %v4129, 0.7978846
        %v4194 = vmul.f32 %v4130, 0.7978846
        %v4195 = vmul.f32 %v4131, 0.7978846
        %v4196 = vmul.f32 %v4132, 0.7978846
        %v4197 = vmul.f32 %v4133, 0.7978846
        %v4198 = vmul.f32 %v4134, 0.7978846
        %v4199 = vmul.f32 %v4135, 0.7978846
        %v4200 = vmul.f32 %v4136, 0.7978846
        %v4201 = vmul.f32 %v4137, 0.7978846
        %v4202 = vmul.f32 %v4138, 0.7978846
        %v4203 = vmul.f32 %v4139, 0.7978846
        %v4204 = vmul.f32 %v4140, 0.7978846
        %v4205 = vmul.f32 %v4141, 0.7978846
        %v4206 = vtanh.pop %v4142
        %v4207 = vtanh.pop %v4143
        %v4208 = vtanh.pop %v4144
        %v4209 = vtanh.pop %v4145
        %v4210 = vtanh.pop %v4146
        %v4211 = vtanh.pop %v4147
        %v4212 = vtanh.pop %v4148
        %v4213 = vtanh.pop %v4149
        %v4214 = vtanh.pop %v4150
        %v4215 = vtanh.pop %v4151
        %v4216 = vtanh.pop %v4152
        %v4217 = vtanh.pop %v4153
        %v4218 = vtanh.pop %v4154
        %v4219 = vtanh.pop %v4155
        %v4220 = vtanh.pop %v4156
        %v4221 = vtanh.pop %v4157
        %v4222 = vtanh.pop %v4158
        %v4223 = vtanh.pop %v4159
        %v4224 = vtanh.pop %v4160
        %v4225 = vtanh.pop %v4161
        %v4226 = vtanh.pop %v4162
        %v4227 = vtanh.pop %v4163
        %v4228 = vtanh.pop %v4164
        %v4229 = vtanh.pop %v4165
        %v4230 = vtanh.pop %v4166
        %v4231 = vtanh.pop %v4167
        %v4232 = vtanh.pop %v4168
        %v4233 = vtanh.pop %v4169
        %v4234 = vtanh.pop %v4170
        %v4235 = vtanh.pop %v4171
        %v4236 = vtanh.pop %v4172
        %v4237 = vtanh.pop %v4173
        %v4238 = vtanh.pop %v4174
        %v4239 = vtanh.pop %v4175
        %v4240 = vtanh.pop %v4176
        %v4241 = vtanh.pop %v4177
        %v4242 = vtanh.pop %v4178
        %v4243 = vtanh.pop %v4179
        %v4244 = vtanh.pop %v4180
        %v4245 = vtanh.pop %v4181
        %v4246 = vtanh.pop %v4182
        %v4247 = vtanh.pop %v4183
        %v4248 = vtanh.pop %v4184
        %v4249 = vtanh.pop %v4185
        %v4250 = vtanh.pop %v4186
        %v4251 = vtanh.pop %v4187
        %v4252 = vtanh.pop %v4188
        %v4253 = vtanh.pop %v4189
        %v4254 = vtanh.pop %v4190
        %v4255 = vtanh.pop %v4191
        %v4256 = vtanh.pop %v4192
        %v4257 = vtanh.pop %v4193
        %v4258 = vtanh.pop %v4194
        %v4259 = vtanh.pop %v4195
        %v4260 = vtanh.pop %v4196
        %v4261 = vtanh.pop %v4197
        %v4262 = vtanh.pop %v4198
        %v4263 = vtanh.pop %v4199
        %v4264 = vtanh.pop %v4200
        %v4265 = vtanh.pop %v4201
        %v4266 = vtanh.pop %v4202
        %v4267 = vtanh.pop %v4203
        %v4268 = vtanh.pop %v4204
        %v4269 = vtanh.pop %v4205
        %v4270 = vadd.f32 %v4206, 1.0
        %v4271 = vadd.f32 %v4207, 1.0
        %v4272 = vadd.f32 %v4208, 1.0
        %v4273 = vadd.f32 %v4209, 1.0
        %v4274 = vadd.f32 %v4210, 1.0
        %v4275 = vadd.f32 %v4211, 1.0
        %v4276 = vadd.f32 %v4212, 1.0
        %v4277 = vadd.f32 %v4213, 1.0
        %v4278 = vadd.f32 %v4214, 1.0
        %v4279 = vadd.f32 %v4215, 1.0
        %v4280 = vadd.f32 %v4216, 1.0
        %v4281 = vadd.f32 %v4217, 1.0
        %v4282 = vadd.f32 %v4218, 1.0
        %v4283 = vadd.f32 %v4219, 1.0
        %v4284 = vadd.f32 %v4220, 1.0
        %v4285 = vadd.f32 %v4221, 1.0
        %v4286 = vadd.f32 %v4222, 1.0
        %v4287 = vadd.f32 %v4223, 1.0
        %v4288 = vadd.f32 %v4224, 1.0
        %v4289 = vadd.f32 %v4225, 1.0
        %v4290 = vadd.f32 %v4226, 1.0
        %v4291 = vadd.f32 %v4227, 1.0
        %v4292 = vadd.f32 %v4228, 1.0
        %v4293 = vadd.f32 %v4229, 1.0
        %v4294 = vadd.f32 %v4230, 1.0
        %v4295 = vadd.f32 %v4231, 1.0
        %v4296 = vadd.f32 %v4232, 1.0
        %v4297 = vadd.f32 %v4233, 1.0
        %v4298 = vadd.f32 %v4234, 1.0
        %v4299 = vadd.f32 %v4235, 1.0
        %v4300 = vadd.f32 %v4236, 1.0
        %v4301 = vadd.f32 %v4237, 1.0
        %v4302 = vadd.f32 %v4238, 1.0
        %v4303 = vadd.f32 %v4239, 1.0
        %v4304 = vadd.f32 %v4240, 1.0
        %v4305 = vadd.f32 %v4241, 1.0
        %v4306 = vadd.f32 %v4242, 1.0
        %v4307 = vadd.f32 %v4243, 1.0
        %v4308 = vadd.f32 %v4244, 1.0
        %v4309 = vadd.f32 %v4245, 1.0
        %v4310 = vadd.f32 %v4246, 1.0
        %v4311 = vadd.f32 %v4247, 1.0
        %v4312 = vadd.f32 %v4248, 1.0
        %v4313 = vadd.f32 %v4249, 1.0
        %v4314 = vadd.f32 %v4250, 1.0
        %v4315 = vadd.f32 %v4251, 1.0
        %v4316 = vadd.f32 %v4252, 1.0
        %v4317 = vadd.f32 %v4253, 1.0
        %v4318 = vadd.f32 %v4254, 1.0
        %v4319 = vadd.f32 %v4255, 1.0
        %v4320 = vadd.f32 %v4256, 1.0
        %v4321 = vadd.f32 %v4257, 1.0
        %v4322 = vadd.f32 %v4258, 1.0
        %v4323 = vadd.f32 %v4259, 1.0
        %v4324 = vadd.f32 %v4260, 1.0
        %v4325 = vadd.f32 %v4261, 1.0
        %v4326 = vadd.f32 %v4262, 1.0
        %v4327 = vadd.f32 %v4263, 1.0
        %v4328 = vadd.f32 %v4264, 1.0
        %v4329 = vadd.f32 %v4265, 1.0
        %v4330 = vadd.f32 %v4266, 1.0
        %v4331 = vadd.f32 %v4267, 1.0
        %v4332 = vadd.f32 %v4268, 1.0
        %v4333 = vadd.f32 %v4269, 1.0
        %v4334 = vmul.f32 %v4270, 0.5
        %v4335 = vmul.f32 %v4271, 0.5
        %v4336 = vmul.f32 %v4272, 0.5
        %v4337 = vmul.f32 %v4273, 0.5
        %v4338 = vmul.f32 %v4274, 0.5
        %v4339 = vmul.f32 %v4275, 0.5
        %v4340 = vmul.f32 %v4276, 0.5
        %v4341 = vmul.f32 %v4277, 0.5
        %v4342 = vmul.f32 %v4278, 0.5
        %v4343 = vmul.f32 %v4279, 0.5
        %v4344 = vmul.f32 %v4280, 0.5
        %v4345 = vmul.f32 %v4281, 0.5
        %v4346 = vmul.f32 %v4282, 0.5
        %v4347 = vmul.f32 %v4283, 0.5
        %v4348 = vmul.f32 %v4284, 0.5
        %v4349 = vmul.f32 %v4285, 0.5
        %v4350 = vmul.f32 %v4286, 0.5
        %v4351 = vmul.f32 %v4287, 0.5
        %v4352 = vmul.f32 %v4288, 0.5
        %v4353 = vmul.f32 %v4289, 0.5
        %v4354 = vmul.f32 %v4290, 0.5
        %v4355 = vmul.f32 %v4291, 0.5
        %v4356 = vmul.f32 %v4292, 0.5
        %v4357 = vmul.f32 %v4293, 0.5
        %v4358 = vmul.f32 %v4294, 0.5
        %v4359 = vmul.f32 %v4295, 0.5
        %v4360 = vmul.f32 %v4296, 0.5
        %v4361 = vmul.f32 %v4297, 0.5
        %v4362 = vmul.f32 %v4298, 0.5
        %v4363 = vmul.f32 %v4299, 0.5
        %v4364 = vmul.f32 %v4300, 0.5
        %v4365 = vmul.f32 %v4301, 0.5
        %v4366 = vmul.f32 %v4302, 0.5
        %v4367 = vmul.f32 %v4303, 0.5
        %v4368 = vmul.f32 %v4304, 0.5
        %v4369 = vmul.f32 %v4305, 0.5
        %v4370 = vmul.f32 %v4306, 0.5
        %v4371 = vmul.f32 %v4307, 0.5
        %v4372 = vmul.f32 %v4308, 0.5
        %v4373 = vmul.f32 %v4309, 0.5
        %v4374 = vmul.f32 %v4310, 0.5
        %v4375 = vmul.f32 %v4311, 0.5
        %v4376 = vmul.f32 %v4312, 0.5
        %v4377 = vmul.f32 %v4313, 0.5
        %v4378 = vmul.f32 %v4314, 0.5
        %v4379 = vmul.f32 %v4315, 0.5
        %v4380 = vmul.f32 %v4316, 0.5
        %v4381 = vmul.f32 %v4317, 0.5
        %v4382 = vmul.f32 %v4318, 0.5
        %v4383 = vmul.f32 %v4319, 0.5
        %v4384 = vmul.f32 %v4320, 0.5
        %v4385 = vmul.f32 %v4321, 0.5
        %v4386 = vmul.f32 %v4322, 0.5
        %v4387 = vmul.f32 %v4323, 0.5
        %v4388 = vmul.f32 %v4324, 0.5
        %v4389 = vmul.f32 %v4325, 0.5
        %v4390 = vmul.f32 %v4326, 0.5
        %v4391 = vmul.f32 %v4327, 0.5
        %v4392 = vmul.f32 %v4328, 0.5
        %v4393 = vmul.f32 %v4329, 0.5
        %v4394 = vmul.f32 %v4330, 0.5
        %v4395 = vmul.f32 %v4331, 0.5
        %v4396 = vmul.f32 %v4332, 0.5
        %v4397 = vmul.f32 %v4333, 0.5
        %v4398 = vmul.f32 %v3822, %v4334
        %v4399 = vmul.f32 %v3823, %v4335
        %v4400 = vmul.f32 %v3824, %v4336
        %v4401 = vmul.f32 %v3825, %v4337
        %v4402 = vmul.f32 %v3826, %v4338
        %v4403 = vmul.f32 %v3827, %v4339
        %v4404 = vmul.f32 %v3828, %v4340
        %v4405 = vmul.f32 %v3829, %v4341
        %v4406 = vmul.f32 %v3830, %v4342
        %v4407 = vmul.f32 %v3831, %v4343
        %v4408 = vmul.f32 %v3832, %v4344
        %v4409 = vmul.f32 %v3833, %v4345
        %v4410 = vmul.f32 %v3834, %v4346
        %v4411 = vmul.f32 %v3835, %v4347
        %v4412 = vmul.f32 %v3836, %v4348
        %v4413 = vmul.f32 %v3837, %v4349
        %v4414 = vmul.f32 %v3838, %v4350
        %v4415 = vmul.f32 %v3839, %v4351
        %v4416 = vmul.f32 %v3840, %v4352
        %v4417 = vmul.f32 %v3841, %v4353
        %v4418 = vmul.f32 %v3842, %v4354
        %v4419 = vmul.f32 %v3843, %v4355
        %v4420 = vmul.f32 %v3844, %v4356
        %v4421 = vmul.f32 %v3845, %v4357
        %v4422 = vmul.f32 %v3846, %v4358
        %v4423 = vmul.f32 %v3847, %v4359
        %v4424 = vmul.f32 %v3848, %v4360
        %v4425 = vmul.f32 %v3849, %v4361
        %v4426 = vmul.f32 %v3850, %v4362
        %v4427 = vmul.f32 %v3851, %v4363
        %v4428 = vmul.f32 %v3852, %v4364
        %v4429 = vmul.f32 %v3853, %v4365
        %v4430 = vmul.f32 %v3854, %v4366
        %v4431 = vmul.f32 %v3855, %v4367
        %v4432 = vmul.f32 %v3856, %v4368
        %v4433 = vmul.f32 %v3857, %v4369
        %v4434 = vmul.f32 %v3858, %v4370
        %v4435 = vmul.f32 %v3859, %v4371
        %v4436 = vmul.f32 %v3860, %v4372
        %v4437 = vmul.f32 %v3861, %v4373
        %v4438 = vmul.f32 %v3862, %v4374
        %v4439 = vmul.f32 %v3863, %v4375
        %v4440 = vmul.f32 %v3864, %v4376
        %v4441 = vmul.f32 %v3865, %v4377
        %v4442 = vmul.f32 %v3866, %v4378
        %v4443 = vmul.f32 %v3867, %v4379
        %v4444 = vmul.f32 %v3868, %v4380
        %v4445 = vmul.f32 %v3869, %v4381
        %v4446 = vmul.f32 %v3870, %v4382
        %v4447 = vmul.f32 %v3871, %v4383
        %v4448 = vmul.f32 %v3872, %v4384
        %v4449 = vmul.f32 %v3873, %v4385
        %v4450 = vmul.f32 %v3874, %v4386
        %v4451 = vmul.f32 %v3875, %v4387
        %v4452 = vmul.f32 %v3876, %v4388
        %v4453 = vmul.f32 %v3877, %v4389
        %v4454 = vmul.f32 %v3878, %v4390
        %v4455 = vmul.f32 %v3879, %v4391
        %v4456 = vmul.f32 %v3880, %v4392
        %v4457 = vmul.f32 %v3881, %v4393
        %v4458 = vmul.f32 %v3882, %v4394
        %v4459 = vmul.f32 %v3883, %v4395
        %v4460 = vmul.f32 %v3884, %v4396
        %v4461 = vmul.f32 %v3885, %v4397
        %v4462 = vpack.c.bf16 %v4414, %v4398
        %v4463 = vpack.c.bf16 %v4415, %v4399
        %v4464 = vpack.c.bf16 %v4416, %v4400
        %v4465 = vpack.c.bf16 %v4417, %v4401
        %v4466 = vpack.c.bf16 %v4418, %v4402
        %v4467 = vpack.c.bf16 %v4419, %v4403
        %v4468 = vpack.c.bf16 %v4420, %v4404
        %v4469 = vpack.c.bf16 %v4421, %v4405
        %v4470 = vpack.c.bf16 %v4422, %v4406
        %v4471 = vpack.c.bf16 %v4423, %v4407
        %v4472 = vpack.c.bf16 %v4424, %v4408
        %v4473 = vpack.c.bf16 %v4425, %v4409
        %v4474 = vpack.c.bf16 %v4426, %v4410
        %v4475 = vpack.c.bf16 %v4427, %v4411
        %v4476 = vpack.c.bf16 %v4428, %v4412
        %v4477 = vpack.c.bf16 %v4429, %v4413
        %v4478 = vpack.c.bf16 %v4446, %v4430
        %v4479 = vpack.c.bf16 %v4447, %v4431
        %v4480 = vpack.c.bf16 %v4448, %v4432
        %v4481 = vpack.c.bf16 %v4449, %v4433
        %v4482 = vpack.c.bf16 %v4450, %v4434
        %v4483 = vpack.c.bf16 %v4451, %v4435
        %v4484 = vpack.c.bf16 %v4452, %v4436
        %v4485 = vpack.c.bf16 %v4453, %v4437
        %v4486 = vpack.c.bf16 %v4454, %v4438
        %v4487 = vpack.c.bf16 %v4455, %v4439
        %v4488 = vpack.c.bf16 %v4456, %v4440
        %v4489 = vpack.c.bf16 %v4457, %v4441
        %v4490 = vpack.c.bf16 %v4458, %v4442
        %v4491 = vpack.c.bf16 %v4459, %v4443
        %v4492 = vpack.c.bf16 %v4460, %v4444
        %v4493 = vpack.c.bf16 %v4461, %v4445
        %4494 = vset.pattern.permute.xlu0 3
        %4495 = vperm.xlu0 %4494, %v1057
        %v4496 = vpop.permute.xlu0 %4495
        %4499 = vset.pattern.permute.xlu0 3
        %4500 = vperm.xlu0 %4499, %v1061
        %v4501 = vpop.permute.xlu0 %4500
        %v4505 = vunpack.c.l.b16 %v1050
        %v4506 = vunpack.c.l.b16 %v1051
        %v4507 = vpack.c.b16 %v4506, %v4505
        %vm4508 = vcmask 261120
        %v4510 = vsel %vm4508, %v4507, 0
        %4512 = vmatprep.subr.bf16.mxu0 %v4463
        %4513 = vmatpush1.bf16.msra.mxu0 %v4462
        %4514 = vmatprep.subr.bf16.mxu0 %v4479
        %4515 = vmatpush1.bf16.msra.mxu0 %v4478
        %4516 = vmatprep.subr.bf16.mxu0 0
        %4517 = vmatpush1.bf16.msra.mxu0 0
        %4518 = vmatprep.subr.bf16.mxu0 0
        %4519 = vmatpush1.bf16.msra.mxu0 0
        %4520 = vmatprep.subr.bf16.mxu0 0
        %4521 = vmatpush1.bf16.msra.mxu0 0
        %4522 = vmatprep.subr.bf16.mxu0 0
        %4523 = vmatpush1.bf16.msra.mxu0 0
        %4524 = vmatprep.subr.bf16.mxu0 0
        %4525 = vmatpush1.bf16.msra.mxu0 0
        %4526 = vmatprep.subr.bf16.mxu0 0
        %4527 = vmatpush1.bf16.msra.mxu0 0
        %4528 = vmatprep.subr.bf16.mxu0 0
        %4529 = vmatpush1.bf16.msra.mxu0 0
        %4530 = vmatprep.subr.bf16.mxu0 0
        %4531 = vmatpush1.bf16.msra.mxu0 0
        %4532 = vmatprep.subr.bf16.mxu0 0
        %4533 = vmatpush1.bf16.msra.mxu0 0
        %4534 = vmatprep.subr.bf16.mxu0 0
        %4535 = vmatpush1.bf16.msra.mxu0 0
        %4536 = vmatprep.subr.bf16.mxu0 0
        %4537 = vmatpush1.bf16.msra.mxu0 0
        %4538 = vmatprep.subr.bf16.mxu0 0
        %4539 = vmatpush1.bf16.msra.mxu0 0
        %4540 = vmatprep.subr.bf16.mxu0 0
        %4541 = vmatpush1.bf16.msra.mxu0 0
        %4542 = vmatprep.subr.bf16.mxu0 0
        %4543 = vmatpush1.bf16.msra.mxu0 0
        %4544 = vmatprep.mubr.bf16.mxu0 0
        %4545 = vmatmul.mubr.bf16.gmra.mrb[0].mxu0 %v4510
        %v4546 = vpop.f32.mrb[0].mxu0
        %v4547 = vadd.f32 %v4496, %v4546
        %v4548 = vpop.f32.mrb[0].mxu0
        %v4549 = vadd.f32 %v4496, %v4548
        %v4550 = vpop.f32.mrb[0].mxu0
        %v4551 = vadd.f32 %v4501, %v4550
        %v4552 = vpop.f32.mrb[0].mxu0
        %v4553 = vadd.f32 %v4501, %v4552
        %4554 = vdwg.mxu0
        %4555 = vmatprep.subr.bf16.mxu0 %v4465
        %4556 = vmatpush1.bf16.msra.mxu0 %v4464
        %4557 = vmatprep.subr.bf16.mxu0 %v4481
        %4558 = vmatpush1.bf16.msra.mxu0 %v4480
        %4559 = vmatprep.subr.bf16.mxu0 0
        %4560 = vmatpush1.bf16.msra.mxu0 0
        %4561 = vmatprep.subr.bf16.mxu0 0
        %4562 = vmatpush1.bf16.msra.mxu0 0
        %4563 = vmatprep.subr.bf16.mxu0 0
        %4564 = vmatpush1.bf16.msra.mxu0 0
        %4565 = vmatprep.subr.bf16.mxu0 0
        %4566 = vmatpush1.bf16.msra.mxu0 0
        %4567 = vmatprep.subr.bf16.mxu0 0
        %4568 = vmatpush1.bf16.msra.mxu0 0
        %4569 = vmatprep.subr.bf16.mxu0 0
        %4570 = vmatpush1.bf16.msra.mxu0 0
        %4571 = vmatprep.subr.bf16.mxu0 0
        %4572 = vmatpush1.bf16.msra.mxu0 0
        %4573 = vmatprep.subr.bf16.mxu0 0
        %4574 = vmatpush1.bf16.msra.mxu0 0
        %4575 = vmatprep.subr.bf16.mxu0 0
        %4576 = vmatpush1.bf16.msra.mxu0 0
        %4577 = vmatprep.subr.bf16.mxu0 0
        %4578 = vmatpush1.bf16.msra.mxu0 0
        %4579 = vmatprep.subr.bf16.mxu0 0
        %4580 = vmatpush1.bf16.msra.mxu0 0
        %4581 = vmatprep.subr.bf16.mxu0 0
        %4582 = vmatpush1.bf16.msra.mxu0 0
        %4583 = vmatprep.subr.bf16.mxu0 0
        %4584 = vmatpush1.bf16.msra.mxu0 0
        %4585 = vmatprep.subr.bf16.mxu0 0
        %4586 = vmatpush1.bf16.msra.mxu0 0
        %4587 = vmatprep.mubr.bf16.mxu0 0
        %4588 = vmatmul.mubr.bf16.gmra.mrb[0].mxu0 %v4510
        %v4589 = vpop.f32.mrb[0].mxu0
        %v4590 = vadd.f32 %v4496, %v4589
        %v4591 = vpop.f32.mrb[0].mxu0
        %v4592 = vadd.f32 %v4496, %v4591
        %v4593 = vpop.f32.mrb[0].mxu0
        %v4594 = vadd.f32 %v4501, %v4593
        %v4595 = vpop.f32.mrb[0].mxu0
        %v4596 = vadd.f32 %v4501, %v4595
        %4597 = vdwg.mxu0
        %4598 = vmatprep.subr.bf16.mxu0 %v4467
        %4599 = vmatpush1.bf16.msra.mxu0 %v4466
        %4600 = vmatprep.subr.bf16.mxu0 %v4483
        %4601 = vmatpush1.bf16.msra.mxu0 %v4482
        %4602 = vmatprep.subr.bf16.mxu0 0
        %4603 = vmatpush1.bf16.msra.mxu0 0
        %4604 = vmatprep.subr.bf16.mxu0 0
        %4605 = vmatpush1.bf16.msra.mxu0 0
        %4606 = vmatprep.subr.bf16.mxu0 0
        %4607 = vmatpush1.bf16.msra.mxu0 0
        %4608 = vmatprep.subr.bf16.mxu0 0
        %4609 = vmatpush1.bf16.msra.mxu0 0
        %4610 = vmatprep.subr.bf16.mxu0 0
        %4611 = vmatpush1.bf16.msra.mxu0 0
        %4612 = vmatprep.subr.bf16.mxu0 0
        %4613 = vmatpush1.bf16.msra.mxu0 0
        %4614 = vmatprep.subr.bf16.mxu0 0
        %4615 = vmatpush1.bf16.msra.mxu0 0
        %4616 = vmatprep.subr.bf16.mxu0 0
        %4617 = vmatpush1.bf16.msra.mxu0 0
        %4618 = vmatprep.subr.bf16.mxu0 0
        %4619 = vmatpush1.bf16.msra.mxu0 0
        %4620 = vmatprep.subr.bf16.mxu0 0
        %4621 = vmatpush1.bf16.msra.mxu0 0
        %4622 = vmatprep.subr.bf16.mxu0 0
        %4623 = vmatpush1.bf16.msra.mxu0 0
        %4624 = vmatprep.subr.bf16.mxu0 0
        %4625 = vmatpush1.bf16.msra.mxu0 0
        %4626 = vmatprep.subr.bf16.mxu0 0
        %4627 = vmatpush1.bf16.msra.mxu0 0
        %4628 = vmatprep.subr.bf16.mxu0 0
        %4629 = vmatpush1.bf16.msra.mxu0 0
        %4630 = vmatprep.mubr.bf16.mxu0 0
        %4631 = vmatmul.mubr.bf16.gmra.mrb[0].mxu0 %v4510
        %v4632 = vpop.f32.mrb[0].mxu0
        %v4633 = vadd.f32 %v4496, %v4632
        %v4634 = vpop.f32.mrb[0].mxu0
        %v4635 = vadd.f32 %v4496, %v4634
        %v4636 = vpop.f32.mrb[0].mxu0
        %v4637 = vadd.f32 %v4501, %v4636
        %v4638 = vpop.f32.mrb[0].mxu0
        %v4639 = vadd.f32 %v4501, %v4638
        %4640 = vdwg.mxu0
        %4641 = vmatprep.subr.bf16.mxu0 %v4469
        %4642 = vmatpush1.bf16.msra.mxu0 %v4468
        %4643 = vmatprep.subr.bf16.mxu0 %v4485
        %4644 = vmatpush1.bf16.msra.mxu0 %v4484
        %4645 = vmatprep.subr.bf16.mxu0 0
        %4646 = vmatpush1.bf16.msra.mxu0 0
        %4647 = vmatprep.subr.bf16.mxu0 0
        %4648 = vmatpush1.bf16.msra.mxu0 0
        %4649 = vmatprep.subr.bf16.mxu0 0
        %4650 = vmatpush1.bf16.msra.mxu0 0
        %4651 = vmatprep.subr.bf16.mxu0 0
        %4652 = vmatpush1.bf16.msra.mxu0 0
        %4653 = vmatprep.subr.bf16.mxu0 0
        %4654 = vmatpush1.bf16.msra.mxu0 0
        %4655 = vmatprep.subr.bf16.mxu0 0
        %4656 = vmatpush1.bf16.msra.mxu0 0
        %4657 = vmatprep.subr.bf16.mxu0 0
        %4658 = vmatpush1.bf16.msra.mxu0 0
        %4659 = vmatprep.subr.bf16.mxu0 0
        %4660 = vmatpush1.bf16.msra.mxu0 0
        %4661 = vmatprep.subr.bf16.mxu0 0
        %4662 = vmatpush1.bf16.msra.mxu0 0
        %4663 = vmatprep.subr.bf16.mxu0 0
        %4664 = vmatpush1.bf16.msra.mxu0 0
        %4665 = vmatprep.subr.bf16.mxu0 0
        %4666 = vmatpush1.bf16.msra.mxu0 0
        %4667 = vmatprep.subr.bf16.mxu0 0
        %4668 = vmatpush1.bf16.msra.mxu0 0
        %4669 = vmatprep.subr.bf16.mxu0 0
        %4670 = vmatpush1.bf16.msra.mxu0 0
        %4671 = vmatprep.subr.bf16.mxu0 0
        %4672 = vmatpush1.bf16.msra.mxu0 0
        %4673 = vmatprep.mubr.bf16.mxu0 0
        %4674 = vmatmul.mubr.bf16.gmra.mrb[0].mxu0 %v4510
        %v4675 = vpop.f32.mrb[0].mxu0
        %v4676 = vadd.f32 %v4496, %v4675
        %v4677 = vpop.f32.mrb[0].mxu0
        %v4678 = vadd.f32 %v4496, %v4677
        %v4679 = vpop.f32.mrb[0].mxu0
        %v4680 = vadd.f32 %v4501, %v4679
        %v4681 = vpop.f32.mrb[0].mxu0
        %v4682 = vadd.f32 %v4501, %v4681
        %4683 = vdwg.mxu0
        %4684 = vmatprep.subr.bf16.mxu0 %v4471
        %4685 = vmatpush1.bf16.msra.mxu0 %v4470
        %4686 = vmatprep.subr.bf16.mxu0 %v4487
        %4687 = vmatpush1.bf16.msra.mxu0 %v4486
        %4688 = vmatprep.subr.bf16.mxu0 0
        %4689 = vmatpush1.bf16.msra.mxu0 0
        %4690 = vmatprep.subr.bf16.mxu0 0
        %4691 = vmatpush1.bf16.msra.mxu0 0
        %4692 = vmatprep.subr.bf16.mxu0 0
        %4693 = vmatpush1.bf16.msra.mxu0 0
        %4694 = vmatprep.subr.bf16.mxu0 0
        %4695 = vmatpush1.bf16.msra.mxu0 0
        %4696 = vmatprep.subr.bf16.mxu0 0
        %4697 = vmatpush1.bf16.msra.mxu0 0
        %4698 = vmatprep.subr.bf16.mxu0 0
        %4699 = vmatpush1.bf16.msra.mxu0 0
        %4700 = vmatprep.subr.bf16.mxu0 0
        %4701 = vmatpush1.bf16.msra.mxu0 0
        %4702 = vmatprep.subr.bf16.mxu0 0
        %4703 = vmatpush1.bf16.msra.mxu0 0
        %4704 = vmatprep.subr.bf16.mxu0 0
        %4705 = vmatpush1.bf16.msra.mxu0 0
        %4706 = vmatprep.subr.bf16.mxu0 0
        %4707 = vmatpush1.bf16.msra.mxu0 0
        %4708 = vmatprep.subr.bf16.mxu0 0
        %4709 = vmatpush1.bf16.msra.mxu0 0
        %4710 = vmatprep.subr.bf16.mxu0 0
        %4711 = vmatpush1.bf16.msra.mxu0 0
        %4712 = vmatprep.subr.bf16.mxu0 0
        %4713 = vmatpush1.bf16.msra.mxu0 0
        %4714 = vmatprep.subr.bf16.mxu0 0
        %4715 = vmatpush1.bf16.msra.mxu0 0
        %4716 = vmatprep.mubr.bf16.mxu0 0
        %4717 = vmatmul.mubr.bf16.gmra.mrb[0].mxu0 %v4510
        %v4718 = vpop.f32.mrb[0].mxu0
        %v4719 = vadd.f32 %v4496, %v4718
        %v4720 = vpop.f32.mrb[0].mxu0
        %v4721 = vadd.f32 %v4496, %v4720
        %v4722 = vpop.f32.mrb[0].mxu0
        %v4723 = vadd.f32 %v4501, %v4722
        %v4724 = vpop.f32.mrb[0].mxu0
        %v4725 = vadd.f32 %v4501, %v4724
        %4726 = vdwg.mxu0
        %4727 = vmatprep.subr.bf16.mxu0 %v4473
        %4728 = vmatpush1.bf16.msra.mxu0 %v4472
        %4729 = vmatprep.subr.bf16.mxu0 %v4489
        %4730 = vmatpush1.bf16.msra.mxu0 %v4488
        %4731 = vmatprep.subr.bf16.mxu0 0
        %4732 = vmatpush1.bf16.msra.mxu0 0
        %4733 = vmatprep.subr.bf16.mxu0 0
        %4734 = vmatpush1.bf16.msra.mxu0 0
        %4735 = vmatprep.subr.bf16.mxu0 0
        %4736 = vmatpush1.bf16.msra.mxu0 0
        %4737 = vmatprep.subr.bf16.mxu0 0
        %4738 = vmatpush1.bf16.msra.mxu0 0
        %4739 = vmatprep.subr.bf16.mxu0 0
        %4740 = vmatpush1.bf16.msra.mxu0 0
        %4741 = vmatprep.subr.bf16.mxu0 0
        %4742 = vmatpush1.bf16.msra.mxu0 0
        %4743 = vmatprep.subr.bf16.mxu0 0
        %4744 = vmatpush1.bf16.msra.mxu0 0
        %4745 = vmatprep.subr.bf16.mxu0 0
        %4746 = vmatpush1.bf16.msra.mxu0 0
        %4747 = vmatprep.subr.bf16.mxu0 0
        %4748 = vmatpush1.bf16.msra.mxu0 0
        %4749 = vmatprep.subr.bf16.mxu0 0
        %4750 = vmatpush1.bf16.msra.mxu0 0
        %4751 = vmatprep.subr.bf16.mxu0 0
        %4752 = vmatpush1.bf16.msra.mxu0 0
        %4753 = vmatprep.subr.bf16.mxu0 0
        %4754 = vmatpush1.bf16.msra.mxu0 0
        %4755 = vmatprep.subr.bf16.mxu0 0
        %4756 = vmatpush1.bf16.msra.mxu0 0
        %4757 = vmatprep.subr.bf16.mxu0 0
        %4758 = vmatpush1.bf16.msra.mxu0 0
        %4759 = vmatprep.mubr.bf16.mxu0 0
        %4760 = vmatmul.mubr.bf16.gmra.mrb[0].mxu0 %v4510
        %v4761 = vpop.f32.mrb[0].mxu0
        %v4762 = vadd.f32 %v4496, %v4761
        %v4763 = vpop.f32.mrb[0].mxu0
        %v4764 = vadd.f32 %v4496, %v4763
        %v4765 = vpop.f32.mrb[0].mxu0
        %v4766 = vadd.f32 %v4501, %v4765
        %v4767 = vpop.f32.mrb[0].mxu0
        %v4768 = vadd.f32 %v4501, %v4767
        %4769 = vdwg.mxu0
        %4770 = vmatprep.subr.bf16.mxu0 %v4475
        %4771 = vmatpush1.bf16.msra.mxu0 %v4474
        %4772 = vmatprep.subr.bf16.mxu0 %v4491
        %4773 = vmatpush1.bf16.msra.mxu0 %v4490
        %4774 = vmatprep.subr.bf16.mxu0 0
        %4775 = vmatpush1.bf16.msra.mxu0 0
        %4776 = vmatprep.subr.bf16.mxu0 0
        %4777 = vmatpush1.bf16.msra.mxu0 0
        %4778 = vmatprep.subr.bf16.mxu0 0
        %4779 = vmatpush1.bf16.msra.mxu0 0
        %4780 = vmatprep.subr.bf16.mxu0 0
        %4781 = vmatpush1.bf16.msra.mxu0 0
        %4782 = vmatprep.subr.bf16.mxu0 0
        %4783 = vmatpush1.bf16.msra.mxu0 0
        %4784 = vmatprep.subr.bf16.mxu0 0
        %4785 = vmatpush1.bf16.msra.mxu0 0
        %4786 = vmatprep.subr.bf16.mxu0 0
        %4787 = vmatpush1.bf16.msra.mxu0 0
        %4788 = vmatprep.subr.bf16.mxu0 0
        %4789 = vmatpush1.bf16.msra.mxu0 0
        %4790 = vmatprep.subr.bf16.mxu0 0
        %4791 = vmatpush1.bf16.msra.mxu0 0
        %4792 = vmatprep.subr.bf16.mxu0 0
        %4793 = vmatpush1.bf16.msra.mxu0 0
        %4794 = vmatprep.subr.bf16.mxu0 0
        %4795 = vmatpush1.bf16.msra.mxu0 0
        %4796 = vmatprep.subr.bf16.mxu0 0
        %4797 = vmatpush1.bf16.msra.mxu0 0
        %4798 = vmatprep.subr.bf16.mxu0 0
        %4799 = vmatpush1.bf16.msra.mxu0 0
        %4800 = vmatprep.subr.bf16.mxu0 0
        %4801 = vmatpush1.bf16.msra.mxu0 0
        %4802 = vmatprep.mubr.bf16.mxu0 0
        %4803 = vmatmul.mubr.bf16.gmra.mrb[0].mxu0 %v4510
        %v4804 = vpop.f32.mrb[0].mxu0
        %v4805 = vadd.f32 %v4496, %v4804
        %v4806 = vpop.f32.mrb[0].mxu0
        %v4807 = vadd.f32 %v4496, %v4806
        %v4808 = vpop.f32.mrb[0].mxu0
        %v4809 = vadd.f32 %v4501, %v4808
        %v4810 = vpop.f32.mrb[0].mxu0
        %v4811 = vadd.f32 %v4501, %v4810
        %4812 = vdwg.mxu0
        %4813 = vmatprep.subr.bf16.mxu0 %v4477
        %4814 = vmatpush1.bf16.msra.mxu0 %v4476
        %4815 = vmatprep.subr.bf16.mxu0 %v4493
        %4816 = vmatpush1.bf16.msra.mxu0 %v4492
        %4817 = vmatprep.subr.bf16.mxu0 0
        %4818 = vmatpush1.bf16.msra.mxu0 0
        %4819 = vmatprep.subr.bf16.mxu0 0
        %4820 = vmatpush1.bf16.msra.mxu0 0
        %4821 = vmatprep.subr.bf16.mxu0 0
        %4822 = vmatpush1.bf16.msra.mxu0 0
        %4823 = vmatprep.subr.bf16.mxu0 0
        %4824 = vmatpush1.bf16.msra.mxu0 0
        %4825 = vmatprep.subr.bf16.mxu0 0
        %4826 = vmatpush1.bf16.msra.mxu0 0
        %4827 = vmatprep.subr.bf16.mxu0 0
        %4828 = vmatpush1.bf16.msra.mxu0 0
        %4829 = vmatprep.subr.bf16.mxu0 0
        %4830 = vmatpush1.bf16.msra.mxu0 0
        %4831 = vmatprep.subr.bf16.mxu0 0
        %4832 = vmatpush1.bf16.msra.mxu0 0
        %4833 = vmatprep.subr.bf16.mxu0 0
        %4834 = vmatpush1.bf16.msra.mxu0 0
        %4835 = vmatprep.subr.bf16.mxu0 0
        %4836 = vmatpush1.bf16.msra.mxu0 0
        %4837 = vmatprep.subr.bf16.mxu0 0
        %4838 = vmatpush1.bf16.msra.mxu0 0
        %4839 = vmatprep.subr.bf16.mxu0 0
        %4840 = vmatpush1.bf16.msra.mxu0 0
        %4841 = vmatprep.subr.bf16.mxu0 0
        %4842 = vmatpush1.bf16.msra.mxu0 0
        %4843 = vmatprep.subr.bf16.mxu0 0
        %4844 = vmatpush1.bf16.msra.mxu0 0
        %4845 = vmatprep.mubr.bf16.mxu0 0
        %4846 = vmatmul.mubr.bf16.gmra.mrb[0].mxu0 %v4510
        %v4847 = vpop.f32.mrb[0].mxu0
        %v4848 = vadd.f32 %v4496, %v4847
        %v4849 = vpop.f32.mrb[0].mxu0
        %v4850 = vadd.f32 %v4496, %v4849
        %v4851 = vpop.f32.mrb[0].mxu0
        %v4852 = vadd.f32 %v4501, %v4851
        %v4853 = vpop.f32.mrb[0].mxu0
        %v4854 = vadd.f32 %v4501, %v4853
        %4855 = vdwg.mxu0
        %vm4856 = vcmask 1044480
        %v4857 = vsel %vm4856, %v4551, 0.0
        %v4858 = vadd.f32 %v4547, %v4857
        %v4859 = vrot.slane %v4858, 4
        %v4860 = vadd.f32 %v4858, %v4859
        %v4861 = vrot.slane %v4860, 2
        %v4862 = vadd.f32 %v4860, %v4861
        %v4863 = vrot.slane %v4862, 1
        %v4864 = vadd.f32 %v4862, %v4863
        %v4865 = vsel %vm4856, %v4553, 0.0
        %v4866 = vadd.f32 %v4549, %v4865
        %v4867 = vrot.slane %v4866, 4
        %v4868 = vadd.f32 %v4866, %v4867
        %v4869 = vrot.slane %v4868, 2
        %v4870 = vadd.f32 %v4868, %v4869
        %v4871 = vrot.slane %v4870, 1
        %v4872 = vadd.f32 %v4870, %v4871
        %v4873 = vsel %vm4856, %v4594, 0.0
        %v4874 = vadd.f32 %v4590, %v4873
        %v4875 = vrot.slane %v4874, 4
        %v4876 = vadd.f32 %v4874, %v4875
        %v4877 = vrot.slane %v4876, 2
        %v4878 = vadd.f32 %v4876, %v4877
        %v4879 = vrot.slane %v4878, 1
        %v4880 = vadd.f32 %v4878, %v4879
        %v4881 = vsel %vm4856, %v4596, 0.0
        %v4882 = vadd.f32 %v4592, %v4881
        %v4883 = vrot.slane %v4882, 4
        %v4884 = vadd.f32 %v4882, %v4883
        %v4885 = vrot.slane %v4884, 2
        %v4886 = vadd.f32 %v4884, %v4885
        %v4887 = vrot.slane %v4886, 1
        %v4888 = vadd.f32 %v4886, %v4887
        %v4889 = vsel %vm4856, %v4637, 0.0
        %v4890 = vadd.f32 %v4633, %v4889
        %v4891 = vrot.slane %v4890, 4
        %v4892 = vadd.f32 %v4890, %v4891
        %v4893 = vrot.slane %v4892, 2
        %v4894 = vadd.f32 %v4892, %v4893
        %v4895 = vrot.slane %v4894, 1
        %v4896 = vadd.f32 %v4894, %v4895
        %v4897 = vsel %vm4856, %v4639, 0.0
        %v4898 = vadd.f32 %v4635, %v4897
        %v4899 = vrot.slane %v4898, 4
        %v4900 = vadd.f32 %v4898, %v4899
        %v4901 = vrot.slane %v4900, 2
        %v4902 = vadd.f32 %v4900, %v4901
        %v4903 = vrot.slane %v4902, 1
        %v4904 = vadd.f32 %v4902, %v4903
        %v4905 = vsel %vm4856, %v4680, 0.0
        %v4906 = vadd.f32 %v4676, %v4905
        %v4907 = vrot.slane %v4906, 4
        %v4908 = vadd.f32 %v4906, %v4907
        %v4909 = vrot.slane %v4908, 2
        %v4910 = vadd.f32 %v4908, %v4909
        %v4911 = vrot.slane %v4910, 1
        %v4912 = vadd.f32 %v4910, %v4911
        %v4913 = vsel %vm4856, %v4682, 0.0
        %v4914 = vadd.f32 %v4678, %v4913
        %v4915 = vrot.slane %v4914, 4
        %v4916 = vadd.f32 %v4914, %v4915
        %v4917 = vrot.slane %v4916, 2
        %v4918 = vadd.f32 %v4916, %v4917
        %v4919 = vrot.slane %v4918, 1
        %v4920 = vadd.f32 %v4918, %v4919
        %v4921 = vsel %vm4856, %v4723, 0.0
        %v4922 = vadd.f32 %v4719, %v4921
        %v4923 = vrot.slane %v4922, 4
        %v4924 = vadd.f32 %v4922, %v4923
        %v4925 = vrot.slane %v4924, 2
        %v4926 = vadd.f32 %v4924, %v4925
        %v4927 = vrot.slane %v4926, 1
        %v4928 = vadd.f32 %v4926, %v4927
        %v4929 = vsel %vm4856, %v4725, 0.0
        %v4930 = vadd.f32 %v4721, %v4929
        %v4931 = vrot.slane %v4930, 4
        %v4932 = vadd.f32 %v4930, %v4931
        %v4933 = vrot.slane %v4932, 2
        %v4934 = vadd.f32 %v4932, %v4933
        %v4935 = vrot.slane %v4934, 1
        %v4936 = vadd.f32 %v4934, %v4935
        %v4937 = vsel %vm4856, %v4766, 0.0
        %v4938 = vadd.f32 %v4762, %v4937
        %v4939 = vrot.slane %v4938, 4
        %v4940 = vadd.f32 %v4938, %v4939
        %v4941 = vrot.slane %v4940, 2
        %v4942 = vadd.f32 %v4940, %v4941
        %v4943 = vrot.slane %v4942, 1
        %v4944 = vadd.f32 %v4942, %v4943
        %v4945 = vsel %vm4856, %v4768, 0.0
        %v4946 = vadd.f32 %v4764, %v4945
        %v4947 = vrot.slane %v4946, 4
        %v4948 = vadd.f32 %v4946, %v4947
        %v4949 = vrot.slane %v4948, 2
        %v4950 = vadd.f32 %v4948, %v4949
        %v4951 = vrot.slane %v4950, 1
        %v4952 = vadd.f32 %v4950, %v4951
        %v4953 = vsel %vm4856, %v4809, 0.0
        %v4954 = vadd.f32 %v4805, %v4953
        %v4955 = vrot.slane %v4954, 4
        %v4956 = vadd.f32 %v4954, %v4955
        %v4957 = vrot.slane %v4956, 2
        %v4958 = vadd.f32 %v4956, %v4957
        %v4959 = vrot.slane %v4958, 1
        %v4960 = vadd.f32 %v4958, %v4959
        %v4961 = vsel %vm4856, %v4811, 0.0
        %v4962 = vadd.f32 %v4807, %v4961
        %v4963 = vrot.slane %v4962, 4
        %v4964 = vadd.f32 %v4962, %v4963
        %v4965 = vrot.slane %v4964, 2
        %v4966 = vadd.f32 %v4964, %v4965
        %v4967 = vrot.slane %v4966, 1
        %v4968 = vadd.f32 %v4966, %v4967
        %v4969 = vsel %vm4856, %v4852, 0.0
        %v4970 = vadd.f32 %v4848, %v4969
        %v4971 = vrot.slane %v4970, 4
        %v4972 = vadd.f32 %v4970, %v4971
        %v4973 = vrot.slane %v4972, 2
        %v4974 = vadd.f32 %v4972, %v4973
        %v4975 = vrot.slane %v4974, 1
        %v4976 = vadd.f32 %v4974, %v4975
        %v4977 = vsel %vm4856, %v4854, 0.0
        %v4978 = vadd.f32 %v4850, %v4977
        %v4979 = vrot.slane %v4978, 4
        %v4980 = vadd.f32 %v4978, %v4979
        %v4981 = vrot.slane %v4980, 2
        %v4982 = vadd.f32 %v4980, %v4981
        %v4983 = vrot.slane %v4982, 1
        %v4984 = vadd.f32 %v4982, %v4983
        %v4985 = vrcp.pop 13.0
        %v4986 = vmul.f32 %v4864, %v4985
        %v4987 = vmul.f32 %v4872, %v4985
        %v4988 = vmul.f32 %v4880, %v4985
        %v4989 = vmul.f32 %v4888, %v4985
        %v4990 = vmul.f32 %v4896, %v4985
        %v4991 = vmul.f32 %v4904, %v4985
        %v4992 = vmul.f32 %v4912, %v4985
        %v4993 = vmul.f32 %v4920, %v4985
        %v4994 = vmul.f32 %v4928, %v4985
        %v4995 = vmul.f32 %v4936, %v4985
        %v4996 = vmul.f32 %v4944, %v4985
        %v4997 = vmul.f32 %v4952, %v4985
        %v4998 = vmul.f32 %v4960, %v4985
        %v4999 = vmul.f32 %v4968, %v4985
        %v5000 = vmul.f32 %v4976, %v4985
        %v5001 = vmul.f32 %v4984, %v4985
        %v5002 = vmul.f32 %v4547, %v4547
        %v5003 = vmul.f32 %v4549, %v4549
        %v5004 = vmul.f32 %v4590, %v4590
        %v5005 = vmul.f32 %v4592, %v4592
        %v5006 = vmul.f32 %v4633, %v4633
        %v5007 = vmul.f32 %v4635, %v4635
        %v5008 = vmul.f32 %v4676, %v4676
        %v5009 = vmul.f32 %v4678, %v4678
        %v5010 = vmul.f32 %v4719, %v4719
        %v5011 = vmul.f32 %v4721, %v4721
        %v5012 = vmul.f32 %v4762, %v4762
        %v5013 = vmul.f32 %v4764, %v4764
        %v5014 = vmul.f32 %v4805, %v4805
        %v5015 = vmul.f32 %v4807, %v4807
        %v5016 = vmul.f32 %v4848, %v4848
        %v5017 = vmul.f32 %v4850, %v4850
        %v5018 = vmul.f32 %v4551, %v4551
        %v5019 = vmul.f32 %v4553, %v4553
        %v5020 = vmul.f32 %v4594, %v4594
        %v5021 = vmul.f32 %v4596, %v4596
        %v5022 = vmul.f32 %v4637, %v4637
        %v5023 = vmul.f32 %v4639, %v4639
        %v5024 = vmul.f32 %v4680, %v4680
        %v5025 = vmul.f32 %v4682, %v4682
        %v5026 = vmul.f32 %v4723, %v4723
        %v5027 = vmul.f32 %v4725, %v4725
        %v5028 = vmul.f32 %v4766, %v4766
        %v5029 = vmul.f32 %v4768, %v4768
        %v5030 = vmul.f32 %v4809, %v4809
        %v5031 = vmul.f32 %v4811, %v4811
        %v5032 = vmul.f32 %v4852, %v4852
        %v5033 = vmul.f32 %v4854, %v4854
        %v5034 = vsel %vm4856, %v5018, 0.0
        %v5035 = vadd.f32 %v5002, %v5034
        %v5036 = vrot.slane %v5035, 4
        %v5037 = vadd.f32 %v5035, %v5036
        %v5038 = vrot.slane %v5037, 2
        %v5039 = vadd.f32 %v5037, %v5038
        %v5040 = vrot.slane %v5039, 1
        %v5041 = vadd.f32 %v5039, %v5040
        %v5042 = vsel %vm4856, %v5019, 0.0
        %v5043 = vadd.f32 %v5003, %v5042
        %v5044 = vrot.slane %v5043, 4
        %v5045 = vadd.f32 %v5043, %v5044
        %v5046 = vrot.slane %v5045, 2
        %v5047 = vadd.f32 %v5045, %v5046
        %v5048 = vrot.slane %v5047, 1
        %v5049 = vadd.f32 %v5047, %v5048
        %v5050 = vsel %vm4856, %v5020, 0.0
        %v5051 = vadd.f32 %v5004, %v5050
        %v5052 = vrot.slane %v5051, 4
        %v5053 = vadd.f32 %v5051, %v5052
        %v5054 = vrot.slane %v5053, 2
        %v5055 = vadd.f32 %v5053, %v5054
        %v5056 = vrot.slane %v5055, 1
        %v5057 = vadd.f32 %v5055, %v5056
        %v5058 = vsel %vm4856, %v5021, 0.0
        %v5059 = vadd.f32 %v5005, %v5058
        %v5060 = vrot.slane %v5059, 4
        %v5061 = vadd.f32 %v5059, %v5060
        %v5062 = vrot.slane %v5061, 2
        %v5063 = vadd.f32 %v5061, %v5062
        %v5064 = vrot.slane %v5063, 1
        %v5065 = vadd.f32 %v5063, %v5064
        %v5066 = vsel %vm4856, %v5022, 0.0
        %v5067 = vadd.f32 %v5006, %v5066
        %v5068 = vrot.slane %v5067, 4
        %v5069 = vadd.f32 %v5067, %v5068
        %v5070 = vrot.slane %v5069, 2
        %v5071 = vadd.f32 %v5069, %v5070
        %v5072 = vrot.slane %v5071, 1
        %v5073 = vadd.f32 %v5071, %v5072
        %v5074 = vsel %vm4856, %v5023, 0.0
        %v5075 = vadd.f32 %v5007, %v5074
        %v5076 = vrot.slane %v5075, 4
        %v5077 = vadd.f32 %v5075, %v5076
        %v5078 = vrot.slane %v5077, 2
        %v5079 = vadd.f32 %v5077, %v5078
        %v5080 = vrot.slane %v5079, 1
        %v5081 = vadd.f32 %v5079, %v5080
        %v5082 = vsel %vm4856, %v5024, 0.0
        %v5083 = vadd.f32 %v5008, %v5082
        %v5084 = vrot.slane %v5083, 4
        %v5085 = vadd.f32 %v5083, %v5084
        %v5086 = vrot.slane %v5085, 2
        %v5087 = vadd.f32 %v5085, %v5086
        %v5088 = vrot.slane %v5087, 1
        %v5089 = vadd.f32 %v5087, %v5088
        %v5090 = vsel %vm4856, %v5025, 0.0
        %v5091 = vadd.f32 %v5009, %v5090
        %v5092 = vrot.slane %v5091, 4
        %v5093 = vadd.f32 %v5091, %v5092
        %v5094 = vrot.slane %v5093, 2
        %v5095 = vadd.f32 %v5093, %v5094
        %v5096 = vrot.slane %v5095, 1
        %v5097 = vadd.f32 %v5095, %v5096
        %v5098 = vsel %vm4856, %v5026, 0.0
        %v5099 = vadd.f32 %v5010, %v5098
        %v5100 = vrot.slane %v5099, 4
        %v5101 = vadd.f32 %v5099, %v5100
        %v5102 = vrot.slane %v5101, 2
        %v5103 = vadd.f32 %v5101, %v5102
        %v5104 = vrot.slane %v5103, 1
        %v5105 = vadd.f32 %v5103, %v5104
        %v5106 = vsel %vm4856, %v5027, 0.0
        %v5107 = vadd.f32 %v5011, %v5106
        %v5108 = vrot.slane %v5107, 4
        %v5109 = vadd.f32 %v5107, %v5108
        %v5110 = vrot.slane %v5109, 2
        %v5111 = vadd.f32 %v5109, %v5110
        %v5112 = vrot.slane %v5111, 1
        %v5113 = vadd.f32 %v5111, %v5112
        %v5114 = vsel %vm4856, %v5028, 0.0
        %v5115 = vadd.f32 %v5012, %v5114
        %v5116 = vrot.slane %v5115, 4
        %v5117 = vadd.f32 %v5115, %v5116
        %v5118 = vrot.slane %v5117, 2
        %v5119 = vadd.f32 %v5117, %v5118
        %v5120 = vrot.slane %v5119, 1
        %v5121 = vadd.f32 %v5119, %v5120
        %v5122 = vsel %vm4856, %v5029, 0.0
        %v5123 = vadd.f32 %v5013, %v5122
        %v5124 = vrot.slane %v5123, 4
        %v5125 = vadd.f32 %v5123, %v5124
        %v5126 = vrot.slane %v5125, 2
        %v5127 = vadd.f32 %v5125, %v5126
        %v5128 = vrot.slane %v5127, 1
        %v5129 = vadd.f32 %v5127, %v5128
        %v5130 = vsel %vm4856, %v5030, 0.0
        %v5131 = vadd.f32 %v5014, %v5130
        %v5132 = vrot.slane %v5131, 4
        %v5133 = vadd.f32 %v5131, %v5132
        %v5134 = vrot.slane %v5133, 2
        %v5135 = vadd.f32 %v5133, %v5134
        %v5136 = vrot.slane %v5135, 1
        %v5137 = vadd.f32 %v5135, %v5136
        %v5138 = vsel %vm4856, %v5031, 0.0
        %v5139 = vadd.f32 %v5015, %v5138
        %v5140 = vrot.slane %v5139, 4
        %v5141 = vadd.f32 %v5139, %v5140
        %v5142 = vrot.slane %v5141, 2
        %v5143 = vadd.f32 %v5141, %v5142
        %v5144 = vrot.slane %v5143, 1
        %v5145 = vadd.f32 %v5143, %v5144
        %v5146 = vsel %vm4856, %v5032, 0.0
        %v5147 = vadd.f32 %v5016, %v5146
        %v5148 = vrot.slane %v5147, 4
        %v5149 = vadd.f32 %v5147, %v5148
        %v5150 = vrot.slane %v5149, 2
        %v5151 = vadd.f32 %v5149, %v5150
        %v5152 = vrot.slane %v5151, 1
        %v5153 = vadd.f32 %v5151, %v5152
        %v5154 = vsel %vm4856, %v5033, 0.0
        %v5155 = vadd.f32 %v5017, %v5154
        %v5156 = vrot.slane %v5155, 4
        %v5157 = vadd.f32 %v5155, %v5156
        %v5158 = vrot.slane %v5157, 2
        %v5159 = vadd.f32 %v5157, %v5158
        %v5160 = vrot.slane %v5159, 1
        %v5161 = vadd.f32 %v5159, %v5160
        %v5162 = vmul.f32 %v5041, %v4985
        %v5163 = vmul.f32 %v5049, %v4985
        %v5164 = vmul.f32 %v5057, %v4985
        %v5165 = vmul.f32 %v5065, %v4985
        %v5166 = vmul.f32 %v5073, %v4985
        %v5167 = vmul.f32 %v5081, %v4985
        %v5168 = vmul.f32 %v5089, %v4985
        %v5169 = vmul.f32 %v5097, %v4985
        %v5170 = vmul.f32 %v5105, %v4985
        %v5171 = vmul.f32 %v5113, %v4985
        %v5172 = vmul.f32 %v5121, %v4985
        %v5173 = vmul.f32 %v5129, %v4985
        %v5174 = vmul.f32 %v5137, %v4985
        %v5175 = vmul.f32 %v5145, %v4985
        %v5176 = vmul.f32 %v5153, %v4985
        %v5177 = vmul.f32 %v5161, %v4985
        %v5178 = vmul.f32 %v4986, %v4986
        %v5179 = vmul.f32 %v4987, %v4987
        %v5180 = vmul.f32 %v4988, %v4988
        %v5181 = vmul.f32 %v4989, %v4989
        %v5182 = vmul.f32 %v4990, %v4990
        %v5183 = vmul.f32 %v4991, %v4991
        %v5184 = vmul.f32 %v4992, %v4992
        %v5185 = vmul.f32 %v4993, %v4993
        %v5186 = vmul.f32 %v4994, %v4994
        %v5187 = vmul.f32 %v4995, %v4995
        %v5188 = vmul.f32 %v4996, %v4996
        %v5189 = vmul.f32 %v4997, %v4997
        %v5190 = vmul.f32 %v4998, %v4998
        %v5191 = vmul.f32 %v4999, %v4999
        %v5192 = vmul.f32 %v5000, %v5000
        %v5193 = vmul.f32 %v5001, %v5001
        %v5194 = vsub.f32 %v5162, %v5178
        %v5195 = vsub.f32 %v5163, %v5179
        %v5196 = vsub.f32 %v5164, %v5180
        %v5197 = vsub.f32 %v5165, %v5181
        %v5198 = vsub.f32 %v5166, %v5182
        %v5199 = vsub.f32 %v5167, %v5183
        %v5200 = vsub.f32 %v5168, %v5184
        %v5201 = vsub.f32 %v5169, %v5185
        %v5202 = vsub.f32 %v5170, %v5186
        %v5203 = vsub.f32 %v5171, %v5187
        %v5204 = vsub.f32 %v5172, %v5188
        %v5205 = vsub.f32 %v5173, %v5189
        %v5206 = vsub.f32 %v5174, %v5190
        %v5207 = vsub.f32 %v5175, %v5191
        %v5208 = vsub.f32 %v5176, %v5192
        %v5209 = vsub.f32 %v5177, %v5193
        %v5210 = vsub.f32 %v4547, %v4986
        %v5211 = vsub.f32 %v4549, %v4987
        %v5212 = vsub.f32 %v4590, %v4988
        %v5213 = vsub.f32 %v4592, %v4989
        %v5214 = vsub.f32 %v4633, %v4990
        %v5215 = vsub.f32 %v4635, %v4991
        %v5216 = vsub.f32 %v4676, %v4992
        %v5217 = vsub.f32 %v4678, %v4993
        %v5218 = vsub.f32 %v4719, %v4994
        %v5219 = vsub.f32 %v4721, %v4995
        %v5220 = vsub.f32 %v4762, %v4996
        %v5221 = vsub.f32 %v4764, %v4997
        %v5222 = vsub.f32 %v4805, %v4998
        %v5223 = vsub.f32 %v4807, %v4999
        %v5224 = vsub.f32 %v4848, %v5000
        %v5225 = vsub.f32 %v4850, %v5001
        %v5226 = vsub.f32 %v4551, %v4986
        %v5227 = vsub.f32 %v4553, %v4987
        %v5228 = vsub.f32 %v4594, %v4988
        %v5229 = vsub.f32 %v4596, %v4989
        %v5230 = vsub.f32 %v4637, %v4990
        %v5231 = vsub.f32 %v4639, %v4991
        %v5232 = vsub.f32 %v4680, %v4992
        %v5233 = vsub.f32 %v4682, %v4993
        %v5234 = vsub.f32 %v4723, %v4994
        %v5235 = vsub.f32 %v4725, %v4995
        %v5236 = vsub.f32 %v4766, %v4996
        %v5237 = vsub.f32 %v4768, %v4997
        %v5238 = vsub.f32 %v4809, %v4998
        %v5239 = vsub.f32 %v4811, %v4999
        %v5240 = vsub.f32 %v4852, %v5000
        %v5241 = vsub.f32 %v4854, %v5001
        %v5242 = vadd.f32 %v5194, 1e-05
        %v5243 = vadd.f32 %v5195, 1e-05
        %v5244 = vadd.f32 %v5196, 1e-05
        %v5245 = vadd.f32 %v5197, 1e-05
        %v5246 = vadd.f32 %v5198, 1e-05
        %v5247 = vadd.f32 %v5199, 1e-05
        %v5248 = vadd.f32 %v5200, 1e-05
        %v5249 = vadd.f32 %v5201, 1e-05
        %v5250 = vadd.f32 %v5202, 1e-05
        %v5251 = vadd.f32 %v5203, 1e-05
        %v5252 = vadd.f32 %v5204, 1e-05
        %v5253 = vadd.f32 %v5205, 1e-05
        %v5254 = vadd.f32 %v5206, 1e-05
        %v5255 = vadd.f32 %v5207, 1e-05
        %v5256 = vadd.f32 %v5208, 1e-05
        %v5257 = vadd.f32 %v5209, 1e-05
        %v5258 = vrsqrt.pop %v5242
        %v5259 = vrsqrt.pop %v5243
        %v5260 = vrsqrt.pop %v5244
        %v5261 = vrsqrt.pop %v5245
        %v5262 = vrsqrt.pop %v5246
        %v5263 = vrsqrt.pop %v5247
        %v5264 = vrsqrt.pop %v5248
        %v5265 = vrsqrt.pop %v5249
        %v5266 = vrsqrt.pop %v5250
        %v5267 = vrsqrt.pop %v5251
        %v5268 = vrsqrt.pop %v5252
        %v5269 = vrsqrt.pop %v5253
        %v5270 = vrsqrt.pop %v5254
        %v5271 = vrsqrt.pop %v5255
        %v5272 = vrsqrt.pop %v5256
        %v5273 = vrsqrt.pop %v5257
        %v5274 = vmul.f32 %v5210, %v5258
        %v5275 = vmul.f32 %v5211, %v5259
        %v5276 = vmul.f32 %v5212, %v5260
        %v5277 = vmul.f32 %v5213, %v5261
        %v5278 = vmul.f32 %v5214, %v5262
        %v5279 = vmul.f32 %v5215, %v5263
        %v5280 = vmul.f32 %v5216, %v5264
        %v5281 = vmul.f32 %v5217, %v5265
        %v5282 = vmul.f32 %v5218, %v5266
        %v5283 = vmul.f32 %v5219, %v5267
        %v5284 = vmul.f32 %v5220, %v5268
        %v5285 = vmul.f32 %v5221, %v5269
        %v5286 = vmul.f32 %v5222, %v5270
        %v5287 = vmul.f32 %v5223, %v5271
        %v5288 = vmul.f32 %v5224, %v5272
        %v5289 = vmul.f32 %v5225, %v5273
        %v5290 = vmul.f32 %v5226, %v5258
        %v5291 = vmul.f32 %v5227, %v5259
        %v5292 = vmul.f32 %v5228, %v5260
        %v5293 = vmul.f32 %v5229, %v5261
        %v5294 = vmul.f32 %v5230, %v5262
        %v5295 = vmul.f32 %v5231, %v5263
        %v5296 = vmul.f32 %v5232, %v5264
        %v5297 = vmul.f32 %v5233, %v5265
        %v5298 = vmul.f32 %v5234, %v5266
        %v5299 = vmul.f32 %v5235, %v5267
        %v5300 = vmul.f32 %v5236, %v5268
        %v5301 = vmul.f32 %v5237, %v5269
        %v5302 = vmul.f32 %v5238, %v5270
        %v5303 = vmul.f32 %v5239, %v5271
        %v5304 = vmul.f32 %v5240, %v5272
        %v5305 = vmul.f32 %v5241, %v5273
        %5306 = vset.pattern.permute.xlu0 4
        %5307 = vperm.xlu0 %5306, %v1057
        %v5308 = vpop.permute.xlu0 %5307
        %5310 = vset.pattern.permute.xlu0 4
        %5311 = vperm.xlu0 %5310, %v1061
        %v5312 = vpop.permute.xlu0 %5311
        %v5314 = vmul.f32 %v5274, %v5308
        %v5315 = vmul.f32 %v5275, %v5308
        %v5316 = vmul.f32 %v5276, %v5308
        %v5317 = vmul.f32 %v5277, %v5308
        %v5318 = vmul.f32 %v5278, %v5308
        %v5319 = vmul.f32 %v5279, %v5308
        %v5320 = vmul.f32 %v5280, %v5308
        %v5321 = vmul.f32 %v5281, %v5308
        %v5322 = vmul.f32 %v5282, %v5308
        %v5323 = vmul.f32 %v5283, %v5308
        %v5324 = vmul.f32 %v5284, %v5308
        %v5325 = vmul.f32 %v5285, %v5308
        %v5326 = vmul.f32 %v5286, %v5308
        %v5327 = vmul.f32 %v5287, %v5308
        %v5328 = vmul.f32 %v5288, %v5308
        %v5329 = vmul.f32 %v5289, %v5308
        %v5330 = vmul.f32 %v5290, %v5312
        %v5331 = vmul.f32 %v5291, %v5312
        %v5332 = vmul.f32 %v5292, %v5312
        %v5333 = vmul.f32 %v5293, %v5312
        %v5334 = vmul.f32 %v5294, %v5312
        %v5335 = vmul.f32 %v5295, %v5312
        %v5336 = vmul.f32 %v5296, %v5312
        %v5337 = vmul.f32 %v5297, %v5312
        %v5338 = vmul.f32 %v5298, %v5312
        %v5339 = vmul.f32 %v5299, %v5312
        %v5340 = vmul.f32 %v5300, %v5312
        %v5341 = vmul.f32 %v5301, %v5312
        %v5342 = vmul.f32 %v5302, %v5312
        %v5343 = vmul.f32 %v5303, %v5312
        %v5344 = vmul.f32 %v5304, %v5312
        %v5345 = vmul.f32 %v5305, %v5312
        %5346 = vset.pattern.permute.xlu0 5
        %5347 = vperm.xlu0 %5346, %v1057
        %v5348 = vpop.permute.xlu0 %5347
        %5350 = vset.pattern.permute.xlu0 5
        %5351 = vperm.xlu0 %5350, %v1061
        %v5352 = vpop.permute.xlu0 %5351
        %v5354 = vadd.f32 %v5314, %v5348
        %v5355 = vadd.f32 %v5315, %v5348
        %v5356 = vadd.f32 %v5316, %v5348
        %v5357 = vadd.f32 %v5317, %v5348
        %v5358 = vadd.f32 %v5318, %v5348
        %v5359 = vadd.f32 %v5319, %v5348
        %v5360 = vadd.f32 %v5320, %v5348
        %v5361 = vadd.f32 %v5321, %v5348
        %v5362 = vadd.f32 %v5322, %v5348
        %v5363 = vadd.f32 %v5323, %v5348
        %v5364 = vadd.f32 %v5324, %v5348
        %v5365 = vadd.f32 %v5325, %v5348
        %v5366 = vadd.f32 %v5326, %v5348
        %v5367 = vadd.f32 %v5327, %v5348
        %v5368 = vadd.f32 %v5328, %v5348
        %v5369 = vadd.f32 %v5329, %v5348
        %v5370 = vadd.f32 %v5330, %v5352
        %v5371 = vadd.f32 %v5331, %v5352
        %v5372 = vadd.f32 %v5332, %v5352
        %v5373 = vadd.f32 %v5333, %v5352
        %v5374 = vadd.f32 %v5334, %v5352
        %v5375 = vadd.f32 %v5335, %v5352
        %v5376 = vadd.f32 %v5336, %v5352
        %v5377 = vadd.f32 %v5337, %v5352
        %v5378 = vadd.f32 %v5338, %v5352
        %v5379 = vadd.f32 %v5339, %v5352
        %v5380 = vadd.f32 %v5340, %v5352
        %v5381 = vadd.f32 %v5341, %v5352
        %v5382 = vadd.f32 %v5342, %v5352
        %v5383 = vadd.f32 %v5343, %v5352
        %v5384 = vadd.f32 %v5344, %v5352
        %v5385 = vadd.f32 %v5345, %v5352
        %v5386 = vmul.f32 %v5354, %v5354
        %v5387 = vmul.f32 %v5355, %v5355
        %v5388 = vmul.f32 %v5356, %v5356
        %v5389 = vmul.f32 %v5357, %v5357
        %v5390 = vmul.f32 %v5358, %v5358
        %v5391 = vmul.f32 %v5359, %v5359
        %v5392 = vmul.f32 %v5360, %v5360
        %v5393 = vmul.f32 %v5361, %v5361
        %v5394 = vmul.f32 %v5362, %v5362
        %v5395 = vmul.f32 %v5363, %v5363
        %v5396 = vmul.f32 %v5364, %v5364
        %v5397 = vmul.f32 %v5365, %v5365
        %v5398 = vmul.f32 %v5366, %v5366
        %v5399 = vmul.f32 %v5367, %v5367
        %v5400 = vmul.f32 %v5368, %v5368
        %v5401 = vmul.f32 %v5369, %v5369
        %v5402 = vmul.f32 %v5370, %v5370
        %v5403 = vmul.f32 %v5371, %v5371
        %v5404 = vmul.f32 %v5372, %v5372
        %v5405 = vmul.f32 %v5373, %v5373
        %v5406 = vmul.f32 %v5374, %v5374
        %v5407 = vmul.f32 %v5375, %v5375
        %v5408 = vmul.f32 %v5376, %v5376
        %v5409 = vmul.f32 %v5377, %v5377
        %v5410 = vmul.f32 %v5378, %v5378
        %v5411 = vmul.f32 %v5379, %v5379
        %v5412 = vmul.f32 %v5380, %v5380
        %v5413 = vmul.f32 %v5381, %v5381
        %v5414 = vmul.f32 %v5382, %v5382
        %v5415 = vmul.f32 %v5383, %v5383
        %v5416 = vmul.f32 %v5384, %v5384
        %v5417 = vmul.f32 %v5385, %v5385
        %v5418 = vmul.f32 %v5354, %v5386
        %v5419 = vmul.f32 %v5355, %v5387
        %v5420 = vmul.f32 %v5356, %v5388
        %v5421 = vmul.f32 %v5357, %v5389
        %v5422 = vmul.f32 %v5358, %v5390
        %v5423 = vmul.f32 %v5359, %v5391
        %v5424 = vmul.f32 %v5360, %v5392
        %v5425 = vmul.f32 %v5361, %v5393
        %v5426 = vmul.f32 %v5362, %v5394
        %v5427 = vmul.f32 %v5363, %v5395
        %v5428 = vmul.f32 %v5364, %v5396
        %v5429 = vmul.f32 %v5365, %v5397
        %v5430 = vmul.f32 %v5366, %v5398
        %v5431 = vmul.f32 %v5367, %v5399
        %v5432 = vmul.f32 %v5368, %v5400
        %v5433 = vmul.f32 %v5369, %v5401
        %v5434 = vmul.f32 %v5370, %v5402
        %v5435 = vmul.f32 %v5371, %v5403
        %v5436 = vmul.f32 %v5372, %v5404
        %v5437 = vmul.f32 %v5373, %v5405
        %v5438 = vmul.f32 %v5374, %v5406
        %v5439 = vmul.f32 %v5375, %v5407
        %v5440 = vmul.f32 %v5376, %v5408
        %v5441 = vmul.f32 %v5377, %v5409
        %v5442 = vmul.f32 %v5378, %v5410
        %v5443 = vmul.f32 %v5379, %v5411
        %v5444 = vmul.f32 %v5380, %v5412
        %v5445 = vmul.f32 %v5381, %v5413
        %v5446 = vmul.f32 %v5382, %v5414
        %v5447 = vmul.f32 %v5383, %v5415
        %v5448 = vmul.f32 %v5384, %v5416
        %v5449 = vmul.f32 %v5385, %v5417
        %v5450 = vmul.f32 %v5418, 0.044715
        %v5451 = vmul.f32 %v5419, 0.044715
        %v5452 = vmul.f32 %v5420, 0.044715
        %v5453 = vmul.f32 %v5421, 0.044715
        %v5454 = vmul.f32 %v5422, 0.044715
        %v5455 = vmul.f32 %v5423, 0.044715
        %v5456 = vmul.f32 %v5424, 0.044715
        %v5457 = vmul.f32 %v5425, 0.044715
        %v5458 = vmul.f32 %v5426, 0.044715
        %v5459 = vmul.f32 %v5427, 0.044715
        %v5460 = vmul.f32 %v5428, 0.044715
        %v5461 = vmul.f32 %v5429, 0.044715
        %v5462 = vmul.f32 %v5430, 0.044715
        %v5463 = vmul.f32 %v5431, 0.044715
        %v5464 = vmul.f32 %v5432, 0.044715
        %v5465 = vmul.f32 %v5433, 0.044715
        %v5466 = vmul.f32 %v5434, 0.044715
        %v5467 = vmul.f32 %v5435, 0.044715
        %v5468 = vmul.f32 %v5436, 0.044715
        %v5469 = vmul.f32 %v5437, 0.044715
        %v5470 = vmul.f32 %v5438, 0.044715
        %v5471 = vmul.f32 %v5439, 0.044715
        %v5472 = vmul.f32 %v5440, 0.044715
        %v5473 = vmul.f32 %v5441, 0.044715
        %v5474 = vmul.f32 %v5442, 0.044715
        %v5475 = vmul.f32 %v5443, 0.044715
        %v5476 = vmul.f32 %v5444, 0.044715
        %v5477 = vmul.f32 %v5445, 0.044715
        %v5478 = vmul.f32 %v5446, 0.044715
        %v5479 = vmul.f32 %v5447, 0.044715
        %v5480 = vmul.f32 %v5448, 0.044715
        %v5481 = vmul.f32 %v5449, 0.044715
        %v5482 = vadd.f32 %v5354, %v5450
        %v5483 = vadd.f32 %v5355, %v5451
        %v5484 = vadd.f32 %v5356, %v5452
        %v5485 = vadd.f32 %v5357, %v5453
        %v5486 = vadd.f32 %v5358, %v5454
        %v5487 = vadd.f32 %v5359, %v5455
        %v5488 = vadd.f32 %v5360, %v5456
        %v5489 = vadd.f32 %v5361, %v5457
        %v5490 = vadd.f32 %v5362, %v5458
        %v5491 = vadd.f32 %v5363, %v5459
        %v5492 = vadd.f32 %v5364, %v5460
        %v5493 = vadd.f32 %v5365, %v5461
        %v5494 = vadd.f32 %v5366, %v5462
        %v5495 = vadd.f32 %v5367, %v5463
        %v5496 = vadd.f32 %v5368, %v5464
        %v5497 = vadd.f32 %v5369, %v5465
        %v5498 = vadd.f32 %v5370, %v5466
        %v5499 = vadd.f32 %v5371, %v5467
        %v5500 = vadd.f32 %v5372, %v5468
        %v5501 = vadd.f32 %v5373, %v5469
        %v5502 = vadd.f32 %v5374, %v5470
        %v5503 = vadd.f32 %v5375, %v5471
        %v5504 = vadd.f32 %v5376, %v5472
        %v5505 = vadd.f32 %v5377, %v5473
        %v5506 = vadd.f32 %v5378, %v5474
        %v5507 = vadd.f32 %v5379, %v5475
        %v5508 = vadd.f32 %v5380, %v5476
        %v5509 = vadd.f32 %v5381, %v5477
        %v5510 = vadd.f32 %v5382, %v5478
        %v5511 = vadd.f32 %v5383, %v5479
        %v5512 = vadd.f32 %v5384, %v5480
        %v5513 = vadd.f32 %v5385, %v5481
        %v5514 = vmul.f32 %v5482, 0.7978846
        %v5515 = vmul.f32 %v5483, 0.7978846
        %v5516 = vmul.f32 %v5484, 0.7978846
        %v5517 = vmul.f32 %v5485, 0.7978846
        %v5518 = vmul.f32 %v5486, 0.7978846
        %v5519 = vmul.f32 %v5487, 0.7978846
        %v5520 = vmul.f32 %v5488, 0.7978846
        %v5521 = vmul.f32 %v5489, 0.7978846
        %v5522 = vmul.f32 %v5490, 0.7978846
        %v5523 = vmul.f32 %v5491, 0.7978846
        %v5524 = vmul.f32 %v5492, 0.7978846
        %v5525 = vmul.f32 %v5493, 0.7978846
        %v5526 = vmul.f32 %v5494, 0.7978846
        %v5527 = vmul.f32 %v5495, 0.7978846
        %v5528 = vmul.f32 %v5496, 0.7978846
        %v5529 = vmul.f32 %v5497, 0.7978846
        %v5530 = vmul.f32 %v5498, 0.7978846
        %v5531 = vmul.f32 %v5499, 0.7978846
        %v5532 = vmul.f32 %v5500, 0.7978846
        %v5533 = vmul.f32 %v5501, 0.7978846
        %v5534 = vmul.f32 %v5502, 0.7978846
        %v5535 = vmul.f32 %v5503, 0.7978846
        %v5536 = vmul.f32 %v5504, 0.7978846
        %v5537 = vmul.f32 %v5505, 0.7978846
        %v5538 = vmul.f32 %v5506, 0.7978846
        %v5539 = vmul.f32 %v5507, 0.7978846
        %v5540 = vmul.f32 %v5508, 0.7978846
        %v5541 = vmul.f32 %v5509, 0.7978846
        %v5542 = vmul.f32 %v5510, 0.7978846
        %v5543 = vmul.f32 %v5511, 0.7978846
        %v5544 = vmul.f32 %v5512, 0.7978846
        %v5545 = vmul.f32 %v5513, 0.7978846
        %v5546 = vtanh.pop %v5514
        %v5547 = vtanh.pop %v5515
        %v5548 = vtanh.pop %v5516
        %v5549 = vtanh.pop %v5517
        %v5550 = vtanh.pop %v5518
        %v5551 = vtanh.pop %v5519
        %v5552 = vtanh.pop %v5520
        %v5553 = vtanh.pop %v5521
        %v5554 = vtanh.pop %v5522
        %v5555 = vtanh.pop %v5523
        %v5556 = vtanh.pop %v5524
        %v5557 = vtanh.pop %v5525
        %v5558 = vtanh.pop %v5526
        %v5559 = vtanh.pop %v5527
        %v5560 = vtanh.pop %v5528
        %v5561 = vtanh.pop %v5529
        %v5562 = vtanh.pop %v5530
        %v5563 = vtanh.pop %v5531
        %v5564 = vtanh.pop %v5532
        %v5565 = vtanh.pop %v5533
        %v5566 = vtanh.pop %v5534
        %v5567 = vtanh.pop %v5535
        %v5568 = vtanh.pop %v5536
        %v5569 = vtanh.pop %v5537
        %v5570 = vtanh.pop %v5538
        %v5571 = vtanh.pop %v5539
        %v5572 = vtanh.pop %v5540
        %v5573 = vtanh.pop %v5541
        %v5574 = vtanh.pop %v5542
        %v5575 = vtanh.pop %v5543
        %v5576 = vtanh.pop %v5544
        %v5577 = vtanh.pop %v5545
        %v5578 = vadd.f32 %v5546, 1.0
        %v5579 = vadd.f32 %v5547, 1.0
        %v5580 = vadd.f32 %v5548, 1.0
        %v5581 = vadd.f32 %v5549, 1.0
        %v5582 = vadd.f32 %v5550, 1.0
        %v5583 = vadd.f32 %v5551, 1.0
        %v5584 = vadd.f32 %v5552, 1.0
        %v5585 = vadd.f32 %v5553, 1.0
        %v5586 = vadd.f32 %v5554, 1.0
        %v5587 = vadd.f32 %v5555, 1.0
        %v5588 = vadd.f32 %v5556, 1.0
        %v5589 = vadd.f32 %v5557, 1.0
        %v5590 = vadd.f32 %v5558, 1.0
        %v5591 = vadd.f32 %v5559, 1.0
        %v5592 = vadd.f32 %v5560, 1.0
        %v5593 = vadd.f32 %v5561, 1.0
        %v5594 = vadd.f32 %v5562, 1.0
        %v5595 = vadd.f32 %v5563, 1.0
        %v5596 = vadd.f32 %v5564, 1.0
        %v5597 = vadd.f32 %v5565, 1.0
        %v5598 = vadd.f32 %v5566, 1.0
        %v5599 = vadd.f32 %v5567, 1.0
        %v5600 = vadd.f32 %v5568, 1.0
        %v5601 = vadd.f32 %v5569, 1.0
        %v5602 = vadd.f32 %v5570, 1.0
        %v5603 = vadd.f32 %v5571, 1.0
        %v5604 = vadd.f32 %v5572, 1.0
        %v5605 = vadd.f32 %v5573, 1.0
        %v5606 = vadd.f32 %v5574, 1.0
        %v5607 = vadd.f32 %v5575, 1.0
        %v5608 = vadd.f32 %v5576, 1.0
        %v5609 = vadd.f32 %v5577, 1.0
        %v5610 = vmul.f32 %v5578, 0.5
        %v5611 = vmul.f32 %v5579, 0.5
        %v5612 = vmul.f32 %v5580, 0.5
        %v5613 = vmul.f32 %v5581, 0.5
        %v5614 = vmul.f32 %v5582, 0.5
        %v5615 = vmul.f32 %v5583, 0.5
        %v5616 = vmul.f32 %v5584, 0.5
        %v5617 = vmul.f32 %v5585, 0.5
        %v5618 = vmul.f32 %v5586, 0.5
        %v5619 = vmul.f32 %v5587, 0.5
        %v5620 = vmul.f32 %v5588, 0.5
        %v5621 = vmul.f32 %v5589, 0.5
        %v5622 = vmul.f32 %v5590, 0.5
        %v5623 = vmul.f32 %v5591, 0.5
        %v5624 = vmul.f32 %v5592, 0.5
        %v5625 = vmul.f32 %v5593, 0.5
        %v5626 = vmul.f32 %v5594, 0.5
        %v5627 = vmul.f32 %v5595, 0.5
        %v5628 = vmul.f32 %v5596, 0.5
        %v5629 = vmul.f32 %v5597, 0.5
        %v5630 = vmul.f32 %v5598, 0.5
        %v5631 = vmul.f32 %v5599, 0.5
        %v5632 = vmul.f32 %v5600, 0.5
        %v5633 = vmul.f32 %v5601, 0.5
        %v5634 = vmul.f32 %v5602, 0.5
        %v5635 = vmul.f32 %v5603, 0.5
        %v5636 = vmul.f32 %v5604, 0.5
        %v5637 = vmul.f32 %v5605, 0.5
        %v5638 = vmul.f32 %v5606, 0.5
        %v5639 = vmul.f32 %v5607, 0.5
        %v5640 = vmul.f32 %v5608, 0.5
        %v5641 = vmul.f32 %v5609, 0.5
        %v5642 = vmul.f32 %v5354, %v5610
        %v5643 = vmul.f32 %v5355, %v5611
        %v5644 = vmul.f32 %v5356, %v5612
        %v5645 = vmul.f32 %v5357, %v5613
        %v5646 = vmul.f32 %v5358, %v5614
        %v5647 = vmul.f32 %v5359, %v5615
        %v5648 = vmul.f32 %v5360, %v5616
        %v5649 = vmul.f32 %v5361, %v5617
        %v5650 = vmul.f32 %v5362, %v5618
        %v5651 = vmul.f32 %v5363, %v5619
        %v5652 = vmul.f32 %v5364, %v5620
        %v5653 = vmul.f32 %v5365, %v5621
        %v5654 = vmul.f32 %v5366, %v5622
        %v5655 = vmul.f32 %v5367, %v5623
        %v5656 = vmul.f32 %v5368, %v5624
        %v5657 = vmul.f32 %v5369, %v5625
        %v5658 = vmul.f32 %v5370, %v5626
        %v5659 = vmul.f32 %v5371, %v5627
        %v5660 = vmul.f32 %v5372, %v5628
        %v5661 = vmul.f32 %v5373, %v5629
        %v5662 = vmul.f32 %v5374, %v5630
        %v5663 = vmul.f32 %v5375, %v5631
        %v5664 = vmul.f32 %v5376, %v5632
        %v5665 = vmul.f32 %v5377, %v5633
        %v5666 = vmul.f32 %v5378, %v5634
        %v5667 = vmul.f32 %v5379, %v5635
        %v5668 = vmul.f32 %v5380, %v5636
        %v5669 = vmul.f32 %v5381, %v5637
        %v5670 = vmul.f32 %v5382, %v5638
        %v5671 = vmul.f32 %v5383, %v5639
        %v5672 = vmul.f32 %v5384, %v5640
        %v5673 = vmul.f32 %v5385, %v5641
        %v5674 = vpack.c.bf16 %v5658, %v5642
        %v5675 = vpack.c.bf16 %v5659, %v5643
        %v5676 = vpack.c.bf16 %v5660, %v5644
        %v5677 = vpack.c.bf16 %v5661, %v5645
        %v5678 = vpack.c.bf16 %v5662, %v5646
        %v5679 = vpack.c.bf16 %v5663, %v5647
        %v5680 = vpack.c.bf16 %v5664, %v5648
        %v5681 = vpack.c.bf16 %v5665, %v5649
        %v5682 = vpack.c.bf16 %v5666, %v5650
        %v5683 = vpack.c.bf16 %v5667, %v5651
        %v5684 = vpack.c.bf16 %v5668, %v5652
        %v5685 = vpack.c.bf16 %v5669, %v5653
        %v5686 = vpack.c.bf16 %v5670, %v5654
        %v5687 = vpack.c.bf16 %v5671, %v5655
        %v5688 = vpack.c.bf16 %v5672, %v5656
        %v5689 = vpack.c.bf16 %v5673, %v5657
        %v5694 = vunpack.c.l.b16 %v1052
        %v5695 = vunpack.c.l.b16 %v1053
        %v5696 = vunpack.c.l.b16 %v1054
        %v5697 = vunpack.c.l.b16 %v1055
        %v5698 = vpack.c.b16 %v5695, %v5694
        %v5699 = vpack.c.b16 %v5697, %v5696
        %vm5700 = vcmask 105472
        %v5702 = vsel %vm5700, %v5698, 0
        %v5705 = vsel %vm5700, %v5699, 0
        %vm5707 = vcmask 1045504
        %vm5708 = vcmask 1046528
        %v5709 = vsel %vm5707, 4294967295, 65535
        %v5710 = vsel %vm5708, %v5709, 0
        %v5712 = vand.u32 %v5674, %v5710
        %v5715 = vand.u32 %v5675, %v5710
        %v5718 = vand.u32 %v5676, %v5710
        %v5721 = vand.u32 %v5677, %v5710
        %v5724 = vand.u32 %v5678, %v5710
        %v5727 = vand.u32 %v5679, %v5710
        %v5730 = vand.u32 %v5680, %v5710
        %v5733 = vand.u32 %v5681, %v5710
        %v5736 = vand.u32 %v5682, %v5710
        %v5739 = vand.u32 %v5683, %v5710
        %v5742 = vand.u32 %v5684, %v5710
        %v5745 = vand.u32 %v5685, %v5710
        %v5748 = vand.u32 %v5686, %v5710
        %v5751 = vand.u32 %v5687, %v5710
        %v5754 = vand.u32 %v5688, %v5710
        %v5757 = vand.u32 %v5689, %v5710
        %5759 = vmatprep.subr.bf16.mxu0 %v5715
        %5760 = vmatpush1.bf16.msra.mxu0 %v5712
        %5761 = vmatprep.subr.bf16.mxu0 0
        %5762 = vmatpush1.bf16.msra.mxu0 0
        %5763 = vmatprep.subr.bf16.mxu0 0
        %5764 = vmatpush1.bf16.msra.mxu0 0
        %5765 = vmatprep.subr.bf16.mxu0 0
        %5766 = vmatpush1.bf16.msra.mxu0 0
        %5767 = vmatprep.subr.bf16.mxu0 0
        %5768 = vmatpush1.bf16.msra.mxu0 0
        %5769 = vmatprep.subr.bf16.mxu0 0
        %5770 = vmatpush1.bf16.msra.mxu0 0
        %5771 = vmatprep.subr.bf16.mxu0 0
        %5772 = vmatpush1.bf16.msra.mxu0 0
        %5773 = vmatprep.subr.bf16.mxu0 0
        %5774 = vmatpush1.bf16.msra.mxu0 0
        %5775 = vmatprep.subr.bf16.mxu0 0
        %5776 = vmatpush1.bf16.msra.mxu0 0
        %5777 = vmatprep.subr.bf16.mxu0 0
        %5778 = vmatpush1.bf16.msra.mxu0 0
        %5779 = vmatprep.subr.bf16.mxu0 0
        %5780 = vmatpush1.bf16.msra.mxu0 0
        %5781 = vmatprep.subr.bf16.mxu0 0
        %5782 = vmatpush1.bf16.msra.mxu0 0
        %5783 = vmatprep.subr.bf16.mxu0 0
        %5784 = vmatpush1.bf16.msra.mxu0 0
        %5785 = vmatprep.subr.bf16.mxu0 0
        %5786 = vmatpush1.bf16.msra.mxu0 0
        %5787 = vmatprep.subr.bf16.mxu0 0
        %5788 = vmatpush1.bf16.msra.mxu0 0
        %5789 = vmatprep.subr.bf16.mxu0 0
        %5790 = vmatpush1.bf16.msra.mxu0 0
        %5791 = vmatprep.mubr.bf16.mxu0 0
        %5792 = vmatmul.mubr.bf16.gmra.mrb[0].mxu0 %v5702
        %v5793 = vpop.f32.mrb[0].mxu0
        %v5794 = vadd.f32 %v2536, %v5793
        %v5795 = vpop.f32.mrb[0].mxu0
        %v5796 = vadd.f32 %v2538, %v5795
        %v5797 = vpop.f32.mrb[0].mxu0
        %v5798 = vadd.f32 %v2540, %v5797
        %v5799 = vpop.f32.mrb[0].mxu0
        %v5800 = vadd.f32 %v2542, %v5799
        %5801 = vmatprep.mubr.bf16.mxu0 0
        %5802 = vmatmul.mubr.bf16.gmra.mrb[0].mxu0 %v5705
        %v5803 = vpop.f32.mrb[0].mxu0
        %v5804 = vadd.f32 %v2546, %v5803
        %v5805 = vpop.f32.mrb[0].mxu0
        %v5806 = vadd.f32 %v2548, %v5805
        %v5807 = vpop.f32.mrb[0].mxu0
        %v5808 = vadd.f32 %v2550, %v5807
        %v5809 = vpop.f32.mrb[0].mxu0
        %v5810 = vadd.f32 %v2552, %v5809
        %5811 = vdwg.mxu0
        %5812 = vmatprep.subr.bf16.mxu0 %v5721
        %5813 = vmatpush1.bf16.msra.mxu0 %v5718
        %5814 = vmatprep.subr.bf16.mxu0 0
        %5815 = vmatpush1.bf16.msra.mxu0 0
        %5816 = vmatprep.subr.bf16.mxu0 0
        %5817 = vmatpush1.bf16.msra.mxu0 0
        %5818 = vmatprep.subr.bf16.mxu0 0
        %5819 = vmatpush1.bf16.msra.mxu0 0
        %5820 = vmatprep.subr.bf16.mxu0 0
        %5821 = vmatpush1.bf16.msra.mxu0 0
        %5822 = vmatprep.subr.bf16.mxu0 0
        %5823 = vmatpush1.bf16.msra.mxu0 0
        %5824 = vmatprep.subr.bf16.mxu0 0
        %5825 = vmatpush1.bf16.msra.mxu0 0
        %5826 = vmatprep.subr.bf16.mxu0 0
        %5827 = vmatpush1.bf16.msra.mxu0 0
        %5828 = vmatprep.subr.bf16.mxu0 0
        %5829 = vmatpush1.bf16.msra.mxu0 0
        %5830 = vmatprep.subr.bf16.mxu0 0
        %5831 = vmatpush1.bf16.msra.mxu0 0
        %5832 = vmatprep.subr.bf16.mxu0 0
        %5833 = vmatpush1.bf16.msra.mxu0 0
        %5834 = vmatprep.subr.bf16.mxu0 0
        %5835 = vmatpush1.bf16.msra.mxu0 0
        %5836 = vmatprep.subr.bf16.mxu0 0
        %5837 = vmatpush1.bf16.msra.mxu0 0
        %5838 = vmatprep.subr.bf16.mxu0 0
        %5839 = vmatpush1.bf16.msra.mxu0 0
        %5840 = vmatprep.subr.bf16.mxu0 0
        %5841 = vmatpush1.bf16.msra.mxu0 0
        %5842 = vmatprep.subr.bf16.mxu0 0
        %5843 = vmatpush1.bf16.msra.mxu0 0
        %5844 = vmatprep.mubr.bf16.mxu0 0
        %5845 = vmatmul.mubr.bf16.gmra.mrb[0].mxu0 %v5702
        %v5846 = vpop.f32.mrb[0].mxu0
        %v5847 = vadd.f32 %v2609, %v5846
        %v5848 = vpop.f32.mrb[0].mxu0
        %v5849 = vadd.f32 %v2611, %v5848
        %v5850 = vpop.f32.mrb[0].mxu0
        %v5851 = vadd.f32 %v2613, %v5850
        %v5852 = vpop.f32.mrb[0].mxu0
        %v5853 = vadd.f32 %v2615, %v5852
        %5854 = vmatprep.mubr.bf16.mxu0 0
        %5855 = vmatmul.mubr.bf16.gmra.mrb[0].mxu0 %v5705
        %v5856 = vpop.f32.mrb[0].mxu0
        %v5857 = vadd.f32 %v2619, %v5856
        %v5858 = vpop.f32.mrb[0].mxu0
        %v5859 = vadd.f32 %v2621, %v5858
        %v5860 = vpop.f32.mrb[0].mxu0
        %v5861 = vadd.f32 %v2623, %v5860
        %v5862 = vpop.f32.mrb[0].mxu0
        %v5863 = vadd.f32 %v2625, %v5862
        %5864 = vdwg.mxu0
        %5865 = vmatprep.subr.bf16.mxu0 %v5727
        %5866 = vmatpush1.bf16.msra.mxu0 %v5724
        %5867 = vmatprep.subr.bf16.mxu0 0
        %5868 = vmatpush1.bf16.msra.mxu0 0
        %5869 = vmatprep.subr.bf16.mxu0 0
        %5870 = vmatpush1.bf16.msra.mxu0 0
        %5871 = vmatprep.subr.bf16.mxu0 0
        %5872 = vmatpush1.bf16.msra.mxu0 0
        %5873 = vmatprep.subr.bf16.mxu0 0
        %5874 = vmatpush1.bf16.msra.mxu0 0
        %5875 = vmatprep.subr.bf16.mxu0 0
        %5876 = vmatpush1.bf16.msra.mxu0 0
        %5877 = vmatprep.subr.bf16.mxu0 0
        %5878 = vmatpush1.bf16.msra.mxu0 0
        %5879 = vmatprep.subr.bf16.mxu0 0
        %5880 = vmatpush1.bf16.msra.mxu0 0
        %5881 = vmatprep.subr.bf16.mxu0 0
        %5882 = vmatpush1.bf16.msra.mxu0 0
        %5883 = vmatprep.subr.bf16.mxu0 0
        %5884 = vmatpush1.bf16.msra.mxu0 0
        %5885 = vmatprep.subr.bf16.mxu0 0
        %5886 = vmatpush1.bf16.msra.mxu0 0
        %5887 = vmatprep.subr.bf16.mxu0 0
        %5888 = vmatpush1.bf16.msra.mxu0 0
        %5889 = vmatprep.subr.bf16.mxu0 0
        %5890 = vmatpush1.bf16.msra.mxu0 0
        %5891 = vmatprep.subr.bf16.mxu0 0
        %5892 = vmatpush1.bf16.msra.mxu0 0
        %5893 = vmatprep.subr.bf16.mxu0 0
        %5894 = vmatpush1.bf16.msra.mxu0 0
        %5895 = vmatprep.subr.bf16.mxu0 0
        %5896 = vmatpush1.bf16.msra.mxu0 0
        %5897 = vmatprep.mubr.bf16.mxu0 0
        %5898 = vmatmul.mubr.bf16.gmra.mrb[0].mxu0 %v5702
        %v5899 = vpop.f32.mrb[0].mxu0
        %v5900 = vadd.f32 %v2682, %v5899
        %v5901 = vpop.f32.mrb[0].mxu0
        %v5902 = vadd.f32 %v2684, %v5901
        %v5903 = vpop.f32.mrb[0].mxu0
        %v5904 = vadd.f32 %v2686, %v5903
        %v5905 = vpop.f32.mrb[0].mxu0
        %v5906 = vadd.f32 %v2688, %v5905
        %5907 = vmatprep.mubr.bf16.mxu0 0
        %5908 = vmatmul.mubr.bf16.gmra.mrb[0].mxu0 %v5705
        %v5909 = vpop.f32.mrb[0].mxu0
        %v5910 = vadd.f32 %v2692, %v5909
        %v5911 = vpop.f32.mrb[0].mxu0
        %v5912 = vadd.f32 %v2694, %v5911
        %v5913 = vpop.f32.mrb[0].mxu0
        %v5914 = vadd.f32 %v2696, %v5913
        %v5915 = vpop.f32.mrb[0].mxu0
        %v5916 = vadd.f32 %v2698, %v5915
        %5917 = vdwg.mxu0
        %5918 = vmatprep.subr.bf16.mxu0 %v5733
        %5919 = vmatpush1.bf16.msra.mxu0 %v5730
        %5920 = vmatprep.subr.bf16.mxu0 0
        %5921 = vmatpush1.bf16.msra.mxu0 0
        %5922 = vmatprep.subr.bf16.mxu0 0
        %5923 = vmatpush1.bf16.msra.mxu0 0
        %5924 = vmatprep.subr.bf16.mxu0 0
        %5925 = vmatpush1.bf16.msra.mxu0 0
        %5926 = vmatprep.subr.bf16.mxu0 0
        %5927 = vmatpush1.bf16.msra.mxu0 0
        %5928 = vmatprep.subr.bf16.mxu0 0
        %5929 = vmatpush1.bf16.msra.mxu0 0
        %5930 = vmatprep.subr.bf16.mxu0 0
        %5931 = vmatpush1.bf16.msra.mxu0 0
        %5932 = vmatprep.subr.bf16.mxu0 0
        %5933 = vmatpush1.bf16.msra.mxu0 0
        %5934 = vmatprep.subr.bf16.mxu0 0
        %5935 = vmatpush1.bf16.msra.mxu0 0
        %5936 = vmatprep.subr.bf16.mxu0 0
        %5937 = vmatpush1.bf16.msra.mxu0 0
        %5938 = vmatprep.subr.bf16.mxu0 0
        %5939 = vmatpush1.bf16.msra.mxu0 0
        %5940 = vmatprep.subr.bf16.mxu0 0
        %5941 = vmatpush1.bf16.msra.mxu0 0
        %5942 = vmatprep.subr.bf16.mxu0 0
        %5943 = vmatpush1.bf16.msra.mxu0 0
        %5944 = vmatprep.subr.bf16.mxu0 0
        %5945 = vmatpush1.bf16.msra.mxu0 0
        %5946 = vmatprep.subr.bf16.mxu0 0
        %5947 = vmatpush1.bf16.msra.mxu0 0
        %5948 = vmatprep.subr.bf16.mxu0 0
        %5949 = vmatpush1.bf16.msra.mxu0 0
        %5950 = vmatprep.mubr.bf16.mxu0 0
        %5951 = vmatmul.mubr.bf16.gmra.mrb[0].mxu0 %v5702
        %v5952 = vpop.f32.mrb[0].mxu0
        %v5953 = vadd.f32 %v2755, %v5952
        %v5954 = vpop.f32.mrb[0].mxu0
        %v5955 = vadd.f32 %v2757, %v5954
        %v5956 = vpop.f32.mrb[0].mxu0
        %v5957 = vadd.f32 %v2759, %v5956
        %v5958 = vpop.f32.mrb[0].mxu0
        %v5959 = vadd.f32 %v2761, %v5958
        %5960 = vmatprep.mubr.bf16.mxu0 0
        %5961 = vmatmul.mubr.bf16.gmra.mrb[0].mxu0 %v5705
        %v5962 = vpop.f32.mrb[0].mxu0
        %v5963 = vadd.f32 %v2765, %v5962
        %v5964 = vpop.f32.mrb[0].mxu0
        %v5965 = vadd.f32 %v2767, %v5964
        %v5966 = vpop.f32.mrb[0].mxu0
        %v5967 = vadd.f32 %v2769, %v5966
        %v5968 = vpop.f32.mrb[0].mxu0
        %v5969 = vadd.f32 %v2771, %v5968
        %5970 = vdwg.mxu0
        %5971 = vmatprep.subr.bf16.mxu0 %v5739
        %5972 = vmatpush1.bf16.msra.mxu0 %v5736
        %5973 = vmatprep.subr.bf16.mxu0 0
        %5974 = vmatpush1.bf16.msra.mxu0 0
        %5975 = vmatprep.subr.bf16.mxu0 0
        %5976 = vmatpush1.bf16.msra.mxu0 0
        %5977 = vmatprep.subr.bf16.mxu0 0
        %5978 = vmatpush1.bf16.msra.mxu0 0
        %5979 = vmatprep.subr.bf16.mxu0 0
        %5980 = vmatpush1.bf16.msra.mxu0 0
        %5981 = vmatprep.subr.bf16.mxu0 0
        %5982 = vmatpush1.bf16.msra.mxu0 0
        %5983 = vmatprep.subr.bf16.mxu0 0
        %5984 = vmatpush1.bf16.msra.mxu0 0
        %5985 = vmatprep.subr.bf16.mxu0 0
        %5986 = vmatpush1.bf16.msra.mxu0 0
        %5987 = vmatprep.subr.bf16.mxu0 0
        %5988 = vmatpush1.bf16.msra.mxu0 0
        %5989 = vmatprep.subr.bf16.mxu0 0
        %5990 = vmatpush1.bf16.msra.mxu0 0
        %5991 = vmatprep.subr.bf16.mxu0 0
        %5992 = vmatpush1.bf16.msra.mxu0 0
        %5993 = vmatprep.subr.bf16.mxu0 0
        %5994 = vmatpush1.bf16.msra.mxu0 0
        %5995 = vmatprep.subr.bf16.mxu0 0
        %5996 = vmatpush1.bf16.msra.mxu0 0
        %5997 = vmatprep.subr.bf16.mxu0 0
        %5998 = vmatpush1.bf16.msra.mxu0 0
        %5999 = vmatprep.subr.bf16.mxu0 0
        %6000 = vmatpush1.bf16.msra.mxu0 0
        %6001 = vmatprep.subr.bf16.mxu0 0
        %6002 = vmatpush1.bf16.msra.mxu0 0
        %6003 = vmatprep.mubr.bf16.mxu0 0
        %6004 = vmatmul.mubr.bf16.gmra.mrb[0].mxu0 %v5702
        %v6005 = vpop.f32.mrb[0].mxu0
        %v6006 = vadd.f32 %v2828, %v6005
        %v6007 = vpop.f32.mrb[0].mxu0
        %v6008 = vadd.f32 %v2830, %v6007
        %v6009 = vpop.f32.mrb[0].mxu0
        %v6010 = vadd.f32 %v2832, %v6009
        %v6011 = vpop.f32.mrb[0].mxu0
        %v6012 = vadd.f32 %v2834, %v6011
        %6013 = vmatprep.mubr.bf16.mxu0 0
        %6014 = vmatmul.mubr.bf16.gmra.mrb[0].mxu0 %v5705
        %v6015 = vpop.f32.mrb[0].mxu0
        %v6016 = vadd.f32 %v2838, %v6015
        %v6017 = vpop.f32.mrb[0].mxu0
        %v6018 = vadd.f32 %v2840, %v6017
        %v6019 = vpop.f32.mrb[0].mxu0
        %v6020 = vadd.f32 %v2842, %v6019
        %v6021 = vpop.f32.mrb[0].mxu0
        %v6022 = vadd.f32 %v2844, %v6021
        %6023 = vdwg.mxu0
        %6024 = vmatprep.subr.bf16.mxu0 %v5745
        %6025 = vmatpush1.bf16.msra.mxu0 %v5742
        %6026 = vmatprep.subr.bf16.mxu0 0
        %6027 = vmatpush1.bf16.msra.mxu0 0
        %6028 = vmatprep.subr.bf16.mxu0 0
        %6029 = vmatpush1.bf16.msra.mxu0 0
        %6030 = vmatprep.subr.bf16.mxu0 0
        %6031 = vmatpush1.bf16.msra.mxu0 0
        %6032 = vmatprep.subr.bf16.mxu0 0
        %6033 = vmatpush1.bf16.msra.mxu0 0
        %6034 = vmatprep.subr.bf16.mxu0 0
        %6035 = vmatpush1.bf16.msra.mxu0 0
        %6036 = vmatprep.subr.bf16.mxu0 0
        %6037 = vmatpush1.bf16.msra.mxu0 0
        %6038 = vmatprep.subr.bf16.mxu0 0
        %6039 = vmatpush1.bf16.msra.mxu0 0
        %6040 = vmatprep.subr.bf16.mxu0 0
        %6041 = vmatpush1.bf16.msra.mxu0 0
        %6042 = vmatprep.subr.bf16.mxu0 0
        %6043 = vmatpush1.bf16.msra.mxu0 0
        %6044 = vmatprep.subr.bf16.mxu0 0
        %6045 = vmatpush1.bf16.msra.mxu0 0
        %6046 = vmatprep.subr.bf16.mxu0 0
        %6047 = vmatpush1.bf16.msra.mxu0 0
        %6048 = vmatprep.subr.bf16.mxu0 0
        %6049 = vmatpush1.bf16.msra.mxu0 0
        %6050 = vmatprep.subr.bf16.mxu0 0
        %6051 = vmatpush1.bf16.msra.mxu0 0
        %6052 = vmatprep.subr.bf16.mxu0 0
        %6053 = vmatpush1.bf16.msra.mxu0 0
        %6054 = vmatprep.subr.bf16.mxu0 0
        %6055 = vmatpush1.bf16.msra.mxu0 0
        %6056 = vmatprep.mubr.bf16.mxu0 0
        %6057 = vmatmul.mubr.bf16.gmra.mrb[0].mxu0 %v5702
        %v6058 = vpop.f32.mrb[0].mxu0
        %v6059 = vadd.f32 %v2901, %v6058
        %v6060 = vpop.f32.mrb[0].mxu0
        %v6061 = vadd.f32 %v2903, %v6060
        %v6062 = vpop.f32.mrb[0].mxu0
        %v6063 = vadd.f32 %v2905, %v6062
        %v6064 = vpop.f32.mrb[0].mxu0
        %v6065 = vadd.f32 %v2907, %v6064
        %6066 = vmatprep.mubr.bf16.mxu0 0
        %6067 = vmatmul.mubr.bf16.gmra.mrb[0].mxu0 %v5705
        %v6068 = vpop.f32.mrb[0].mxu0
        %v6069 = vadd.f32 %v2911, %v6068
        %v6070 = vpop.f32.mrb[0].mxu0
        %v6071 = vadd.f32 %v2913, %v6070
        %v6072 = vpop.f32.mrb[0].mxu0
        %v6073 = vadd.f32 %v2915, %v6072
        %v6074 = vpop.f32.mrb[0].mxu0
        %v6075 = vadd.f32 %v2917, %v6074
        %6076 = vdwg.mxu0
        %6077 = vmatprep.subr.bf16.mxu0 %v5751
        %6078 = vmatpush1.bf16.msra.mxu0 %v5748
        %6079 = vmatprep.subr.bf16.mxu0 0
        %6080 = vmatpush1.bf16.msra.mxu0 0
        %6081 = vmatprep.subr.bf16.mxu0 0
        %6082 = vmatpush1.bf16.msra.mxu0 0
        %6083 = vmatprep.subr.bf16.mxu0 0
        %6084 = vmatpush1.bf16.msra.mxu0 0
        %6085 = vmatprep.subr.bf16.mxu0 0
        %6086 = vmatpush1.bf16.msra.mxu0 0
        %6087 = vmatprep.subr.bf16.mxu0 0
        %6088 = vmatpush1.bf16.msra.mxu0 0
        %6089 = vmatprep.subr.bf16.mxu0 0
        %6090 = vmatpush1.bf16.msra.mxu0 0
        %6091 = vmatprep.subr.bf16.mxu0 0
        %6092 = vmatpush1.bf16.msra.mxu0 0
        %6093 = vmatprep.subr.bf16.mxu0 0
        %6094 = vmatpush1.bf16.msra.mxu0 0
        %6095 = vmatprep.subr.bf16.mxu0 0
        %6096 = vmatpush1.bf16.msra.mxu0 0
        %6097 = vmatprep.subr.bf16.mxu0 0
        %6098 = vmatpush1.bf16.msra.mxu0 0
        %6099 = vmatprep.subr.bf16.mxu0 0
        %6100 = vmatpush1.bf16.msra.mxu0 0
        %6101 = vmatprep.subr.bf16.mxu0 0
        %6102 = vmatpush1.bf16.msra.mxu0 0
        %6103 = vmatprep.subr.bf16.mxu0 0
        %6104 = vmatpush1.bf16.msra.mxu0 0
        %6105 = vmatprep.subr.bf16.mxu0 0
        %6106 = vmatpush1.bf16.msra.mxu0 0
        %6107 = vmatprep.subr.bf16.mxu0 0
        %6108 = vmatpush1.bf16.msra.mxu0 0
        %6109 = vmatprep.mubr.bf16.mxu0 0
        %6110 = vmatmul.mubr.bf16.gmra.mrb[0].mxu0 %v5702
        %v6111 = vpop.f32.mrb[0].mxu0
        %v6112 = vadd.f32 %v2974, %v6111
        %v6113 = vpop.f32.mrb[0].mxu0
        %v6114 = vadd.f32 %v2976, %v6113
        %v6115 = vpop.f32.mrb[0].mxu0
        %v6116 = vadd.f32 %v2978, %v6115
        %v6117 = vpop.f32.mrb[0].mxu0
        %v6118 = vadd.f32 %v2980, %v6117
        %6119 = vmatprep.mubr.bf16.mxu0 0
        %6120 = vmatmul.mubr.bf16.gmra.mrb[0].mxu0 %v5705
        %v6121 = vpop.f32.mrb[0].mxu0
        %v6122 = vadd.f32 %v2984, %v6121
        %v6123 = vpop.f32.mrb[0].mxu0
        %v6124 = vadd.f32 %v2986, %v6123
        %v6125 = vpop.f32.mrb[0].mxu0
        %v6126 = vadd.f32 %v2988, %v6125
        %v6127 = vpop.f32.mrb[0].mxu0
        %v6128 = vadd.f32 %v2990, %v6127
        %6129 = vdwg.mxu0
        %6130 = vmatprep.subr.bf16.mxu0 %v5757
        %6131 = vmatpush1.bf16.msra.mxu0 %v5754
        %6132 = vmatprep.subr.bf16.mxu0 0
        %6133 = vmatpush1.bf16.msra.mxu0 0
        %6134 = vmatprep.subr.bf16.mxu0 0
        %6135 = vmatpush1.bf16.msra.mxu0 0
        %6136 = vmatprep.subr.bf16.mxu0 0
        %6137 = vmatpush1.bf16.msra.mxu0 0
        %6138 = vmatprep.subr.bf16.mxu0 0
        %6139 = vmatpush1.bf16.msra.mxu0 0
        %6140 = vmatprep.subr.bf16.mxu0 0
        %6141 = vmatpush1.bf16.msra.mxu0 0
        %6142 = vmatprep.subr.bf16.mxu0 0
        %6143 = vmatpush1.bf16.msra.mxu0 0
        %6144 = vmatprep.subr.bf16.mxu0 0
        %6145 = vmatpush1.bf16.msra.mxu0 0
        %6146 = vmatprep.subr.bf16.mxu0 0
        %6147 = vmatpush1.bf16.msra.mxu0 0
        %6148 = vmatprep.subr.bf16.mxu0 0
        %6149 = vmatpush1.bf16.msra.mxu0 0
        %6150 = vmatprep.subr.bf16.mxu0 0
        %6151 = vmatpush1.bf16.msra.mxu0 0
        %6152 = vmatprep.subr.bf16.mxu0 0
        %6153 = vmatpush1.bf16.msra.mxu0 0
        %6154 = vmatprep.subr.bf16.mxu0 0
        %6155 = vmatpush1.bf16.msra.mxu0 0
        %6156 = vmatprep.subr.bf16.mxu0 0
        %6157 = vmatpush1.bf16.msra.mxu0 0
        %6158 = vmatprep.subr.bf16.mxu0 0
        %6159 = vmatpush1.bf16.msra.mxu0 0
        %6160 = vmatprep.subr.bf16.mxu0 0
        %6161 = vmatpush1.bf16.msra.mxu0 0
        %6162 = vmatprep.mubr.bf16.mxu0 0
        %6163 = vmatmul.mubr.bf16.gmra.mrb[0].mxu0 %v5702
        %v6164 = vpop.f32.mrb[0].mxu0
        %v6165 = vadd.f32 %v3047, %v6164
        %v6166 = vpop.f32.mrb[0].mxu0
        %v6167 = vadd.f32 %v3049, %v6166
        %v6168 = vpop.f32.mrb[0].mxu0
        %v6169 = vadd.f32 %v3051, %v6168
        %v6170 = vpop.f32.mrb[0].mxu0
        %v6171 = vadd.f32 %v3053, %v6170
        %6172 = vmatprep.mubr.bf16.mxu0 0
        %6173 = vmatmul.mubr.bf16.gmra.mrb[0].mxu0 %v5705
        %v6174 = vpop.f32.mrb[0].mxu0
        %v6175 = vadd.f32 %v3057, %v6174
        %v6176 = vpop.f32.mrb[0].mxu0
        %v6177 = vadd.f32 %v3059, %v6176
        %v6178 = vpop.f32.mrb[0].mxu0
        %v6179 = vadd.f32 %v3061, %v6178
        %v6180 = vpop.f32.mrb[0].mxu0
        %v6181 = vadd.f32 %v3063, %v6180
        %6182 = vdwg.mxu0
        %6183 = vset.pattern.permute.xlu0 6
        %6184 = vperm.xlu0 %6183, %v1057
        %v6185 = vpop.permute.xlu0 %6184
        %6187 = vset.pattern.permute.xlu0 6
        %6188 = vperm.xlu0 %6187, %v1058
        %v6189 = vpop.permute.xlu0 %6188
        %6191 = vset.pattern.permute.xlu0 6
        %6192 = vperm.xlu0 %6191, %v1059
        %v6193 = vpop.permute.xlu0 %6192
        %6195 = vset.pattern.permute.xlu0 6
        %6196 = vperm.xlu0 %6195, %v1060
        %v6197 = vpop.permute.xlu0 %6196
        %v6199 = vadd.f32 %v5794, %v6185
        %v6200 = vadd.f32 %v5796, %v6185
        %v6201 = vadd.f32 %v5847, %v6185
        %v6202 = vadd.f32 %v5849, %v6185
        %v6203 = vadd.f32 %v5900, %v6185
        %v6204 = vadd.f32 %v5902, %v6185
        %v6205 = vadd.f32 %v5953, %v6185
        %v6206 = vadd.f32 %v5955, %v6185
        %v6207 = vadd.f32 %v6006, %v6185
        %v6208 = vadd.f32 %v6008, %v6185
        %v6209 = vadd.f32 %v6059, %v6185
        %v6210 = vadd.f32 %v6061, %v6185
        %v6211 = vadd.f32 %v6112, %v6185
        %v6212 = vadd.f32 %v6114, %v6185
        %v6213 = vadd.f32 %v6165, %v6185
        %v6214 = vadd.f32 %v6167, %v6185
        %v6215 = vadd.f32 %v5798, %v6189
        %v6216 = vadd.f32 %v5800, %v6189
        %v6217 = vadd.f32 %v5851, %v6189
        %v6218 = vadd.f32 %v5853, %v6189
        %v6219 = vadd.f32 %v5904, %v6189
        %v6220 = vadd.f32 %v5906, %v6189
        %v6221 = vadd.f32 %v5957, %v6189
        %v6222 = vadd.f32 %v5959, %v6189
        %v6223 = vadd.f32 %v6010, %v6189
        %v6224 = vadd.f32 %v6012, %v6189
        %v6225 = vadd.f32 %v6063, %v6189
        %v6226 = vadd.f32 %v6065, %v6189
        %v6227 = vadd.f32 %v6116, %v6189
        %v6228 = vadd.f32 %v6118, %v6189
        %v6229 = vadd.f32 %v6169, %v6189
        %v6230 = vadd.f32 %v6171, %v6189
        %v6231 = vadd.f32 %v5804, %v6193
        %v6232 = vadd.f32 %v5806, %v6193
        %v6233 = vadd.f32 %v5857, %v6193
        %v6234 = vadd.f32 %v5859, %v6193
        %v6235 = vadd.f32 %v5910, %v6193
        %v6236 = vadd.f32 %v5912, %v6193
        %v6237 = vadd.f32 %v5963, %v6193
        %v6238 = vadd.f32 %v5965, %v6193
        %v6239 = vadd.f32 %v6016, %v6193
        %v6240 = vadd.f32 %v6018, %v6193
        %v6241 = vadd.f32 %v6069, %v6193
        %v6242 = vadd.f32 %v6071, %v6193
        %v6243 = vadd.f32 %v6122, %v6193
        %v6244 = vadd.f32 %v6124, %v6193
        %v6245 = vadd.f32 %v6175, %v6193
        %v6246 = vadd.f32 %v6177, %v6193
        %v6247 = vadd.f32 %v5808, %v6197
        %v6248 = vadd.f32 %v5810, %v6197
        %v6249 = vadd.f32 %v5861, %v6197
        %v6250 = vadd.f32 %v5863, %v6197
        %v6251 = vadd.f32 %v5914, %v6197
        %v6252 = vadd.f32 %v5916, %v6197
        %v6253 = vadd.f32 %v5967, %v6197
        %v6254 = vadd.f32 %v5969, %v6197
        %v6255 = vadd.f32 %v6020, %v6197
        %v6256 = vadd.f32 %v6022, %v6197
        %v6257 = vadd.f32 %v6073, %v6197
        %v6258 = vadd.f32 %v6075, %v6197
        %v6259 = vadd.f32 %v6126, %v6197
        %v6260 = vadd.f32 %v6128, %v6197
        %v6261 = vadd.f32 %v6179, %v6197
        %v6262 = vadd.f32 %v6181, %v6197
        %v6263 = vadd.f32 %v6199, %v6215
        %v6264 = vadd.f32 %v6263, %v6231
        %v6265 = vadd.f32 %v6264, %v6247
        %v6266 = vrot.slane %v6265, 4
        %v6267 = vadd.f32 %v6265, %v6266
        %v6268 = vrot.slane %v6267, 2
        %v6269 = vadd.f32 %v6267, %v6268
        %v6270 = vrot.slane %v6269, 1
        %v6271 = vadd.f32 %v6269, %v6270
        %v6272 = vadd.f32 %v6200, %v6216
        %v6273 = vadd.f32 %v6272, %v6232
        %v6274 = vadd.f32 %v6273, %v6248
        %v6275 = vrot.slane %v6274, 4
        %v6276 = vadd.f32 %v6274, %v6275
        %v6277 = vrot.slane %v6276, 2
        %v6278 = vadd.f32 %v6276, %v6277
        %v6279 = vrot.slane %v6278, 1
        %v6280 = vadd.f32 %v6278, %v6279
        %v6281 = vadd.f32 %v6201, %v6217
        %v6282 = vadd.f32 %v6281, %v6233
        %v6283 = vadd.f32 %v6282, %v6249
        %v6284 = vrot.slane %v6283, 4
        %v6285 = vadd.f32 %v6283, %v6284
        %v6286 = vrot.slane %v6285, 2
        %v6287 = vadd.f32 %v6285, %v6286
        %v6288 = vrot.slane %v6287, 1
        %v6289 = vadd.f32 %v6287, %v6288
        %v6290 = vadd.f32 %v6202, %v6218
        %v6291 = vadd.f32 %v6290, %v6234
        %v6292 = vadd.f32 %v6291, %v6250
        %v6293 = vrot.slane %v6292, 4
        %v6294 = vadd.f32 %v6292, %v6293
        %v6295 = vrot.slane %v6294, 2
        %v6296 = vadd.f32 %v6294, %v6295
        %v6297 = vrot.slane %v6296, 1
        %v6298 = vadd.f32 %v6296, %v6297
        %v6299 = vadd.f32 %v6203, %v6219
        %v6300 = vadd.f32 %v6299, %v6235
        %v6301 = vadd.f32 %v6300, %v6251
        %v6302 = vrot.slane %v6301, 4
        %v6303 = vadd.f32 %v6301, %v6302
        %v6304 = vrot.slane %v6303, 2
        %v6305 = vadd.f32 %v6303, %v6304
        %v6306 = vrot.slane %v6305, 1
        %v6307 = vadd.f32 %v6305, %v6306
        %v6308 = vadd.f32 %v6204, %v6220
        %v6309 = vadd.f32 %v6308, %v6236
        %v6310 = vadd.f32 %v6309, %v6252
        %v6311 = vrot.slane %v6310, 4
        %v6312 = vadd.f32 %v6310, %v6311
        %v6313 = vrot.slane %v6312, 2
        %v6314 = vadd.f32 %v6312, %v6313
        %v6315 = vrot.slane %v6314, 1
        %v6316 = vadd.f32 %v6314, %v6315
        %v6317 = vadd.f32 %v6205, %v6221
        %v6318 = vadd.f32 %v6317, %v6237
        %v6319 = vadd.f32 %v6318, %v6253
        %v6320 = vrot.slane %v6319, 4
        %v6321 = vadd.f32 %v6319, %v6320
        %v6322 = vrot.slane %v6321, 2
        %v6323 = vadd.f32 %v6321, %v6322
        %v6324 = vrot.slane %v6323, 1
        %v6325 = vadd.f32 %v6323, %v6324
        %v6326 = vadd.f32 %v6206, %v6222
        %v6327 = vadd.f32 %v6326, %v6238
        %v6328 = vadd.f32 %v6327, %v6254
        %v6329 = vrot.slane %v6328, 4
        %v6330 = vadd.f32 %v6328, %v6329
        %v6331 = vrot.slane %v6330, 2
        %v6332 = vadd.f32 %v6330, %v6331
        %v6333 = vrot.slane %v6332, 1
        %v6334 = vadd.f32 %v6332, %v6333
        %v6335 = vadd.f32 %v6207, %v6223
        %v6336 = vadd.f32 %v6335, %v6239
        %v6337 = vadd.f32 %v6336, %v6255
        %v6338 = vrot.slane %v6337, 4
        %v6339 = vadd.f32 %v6337, %v6338
        %v6340 = vrot.slane %v6339, 2
        %v6341 = vadd.f32 %v6339, %v6340
        %v6342 = vrot.slane %v6341, 1
        %v6343 = vadd.f32 %v6341, %v6342
        %v6344 = vadd.f32 %v6208, %v6224
        %v6345 = vadd.f32 %v6344, %v6240
        %v6346 = vadd.f32 %v6345, %v6256
        %v6347 = vrot.slane %v6346, 4
        %v6348 = vadd.f32 %v6346, %v6347
        %v6349 = vrot.slane %v6348, 2
        %v6350 = vadd.f32 %v6348, %v6349
        %v6351 = vrot.slane %v6350, 1
        %v6352 = vadd.f32 %v6350, %v6351
        %v6353 = vadd.f32 %v6209, %v6225
        %v6354 = vadd.f32 %v6353, %v6241
        %v6355 = vadd.f32 %v6354, %v6257
        %v6356 = vrot.slane %v6355, 4
        %v6357 = vadd.f32 %v6355, %v6356
        %v6358 = vrot.slane %v6357, 2
        %v6359 = vadd.f32 %v6357, %v6358
        %v6360 = vrot.slane %v6359, 1
        %v6361 = vadd.f32 %v6359, %v6360
        %v6362 = vadd.f32 %v6210, %v6226
        %v6363 = vadd.f32 %v6362, %v6242
        %v6364 = vadd.f32 %v6363, %v6258
        %v6365 = vrot.slane %v6364, 4
        %v6366 = vadd.f32 %v6364, %v6365
        %v6367 = vrot.slane %v6366, 2
        %v6368 = vadd.f32 %v6366, %v6367
        %v6369 = vrot.slane %v6368, 1
        %v6370 = vadd.f32 %v6368, %v6369
        %v6371 = vadd.f32 %v6211, %v6227
        %v6372 = vadd.f32 %v6371, %v6243
        %v6373 = vadd.f32 %v6372, %v6259
        %v6374 = vrot.slane %v6373, 4
        %v6375 = vadd.f32 %v6373, %v6374
        %v6376 = vrot.slane %v6375, 2
        %v6377 = vadd.f32 %v6375, %v6376
        %v6378 = vrot.slane %v6377, 1
        %v6379 = vadd.f32 %v6377, %v6378
        %v6380 = vadd.f32 %v6212, %v6228
        %v6381 = vadd.f32 %v6380, %v6244
        %v6382 = vadd.f32 %v6381, %v6260
        %v6383 = vrot.slane %v6382, 4
        %v6384 = vadd.f32 %v6382, %v6383
        %v6385 = vrot.slane %v6384, 2
        %v6386 = vadd.f32 %v6384, %v6385
        %v6387 = vrot.slane %v6386, 1
        %v6388 = vadd.f32 %v6386, %v6387
        %v6389 = vadd.f32 %v6213, %v6229
        %v6390 = vadd.f32 %v6389, %v6245
        %v6391 = vadd.f32 %v6390, %v6261
        %v6392 = vrot.slane %v6391, 4
        %v6393 = vadd.f32 %v6391, %v6392
        %v6394 = vrot.slane %v6393, 2
        %v6395 = vadd.f32 %v6393, %v6394
        %v6396 = vrot.slane %v6395, 1
        %v6397 = vadd.f32 %v6395, %v6396
        %v6398 = vadd.f32 %v6214, %v6230
        %v6399 = vadd.f32 %v6398, %v6246
        %v6400 = vadd.f32 %v6399, %v6262
        %v6401 = vrot.slane %v6400, 4
        %v6402 = vadd.f32 %v6400, %v6401
        %v6403 = vrot.slane %v6402, 2
        %v6404 = vadd.f32 %v6402, %v6403
        %v6405 = vrot.slane %v6404, 1
        %v6406 = vadd.f32 %v6404, %v6405
        %v6407 = vmul.f32 %v6271, %v3293
        %v6408 = vmul.f32 %v6280, %v3293
        %v6409 = vmul.f32 %v6289, %v3293
        %v6410 = vmul.f32 %v6298, %v3293
        %v6411 = vmul.f32 %v6307, %v3293
        %v6412 = vmul.f32 %v6316, %v3293
        %v6413 = vmul.f32 %v6325, %v3293
        %v6414 = vmul.f32 %v6334, %v3293
        %v6415 = vmul.f32 %v6343, %v3293
        %v6416 = vmul.f32 %v6352, %v3293
        %v6417 = vmul.f32 %v6361, %v3293
        %v6418 = vmul.f32 %v6370, %v3293
        %v6419 = vmul.f32 %v6379, %v3293
        %v6420 = vmul.f32 %v6388, %v3293
        %v6421 = vmul.f32 %v6397, %v3293
        %v6422 = vmul.f32 %v6406, %v3293
        %v6423 = vmul.f32 %v6199, %v6199
        %v6424 = vmul.f32 %v6200, %v6200
        %v6425 = vmul.f32 %v6201, %v6201
        %v6426 = vmul.f32 %v6202, %v6202
        %v6427 = vmul.f32 %v6203, %v6203
        %v6428 = vmul.f32 %v6204, %v6204
        %v6429 = vmul.f32 %v6205, %v6205
        %v6430 = vmul.f32 %v6206, %v6206
        %v6431 = vmul.f32 %v6207, %v6207
        %v6432 = vmul.f32 %v6208, %v6208
        %v6433 = vmul.f32 %v6209, %v6209
        %v6434 = vmul.f32 %v6210, %v6210
        %v6435 = vmul.f32 %v6211, %v6211
        %v6436 = vmul.f32 %v6212, %v6212
        %v6437 = vmul.f32 %v6213, %v6213
        %v6438 = vmul.f32 %v6214, %v6214
        %v6439 = vmul.f32 %v6215, %v6215
        %v6440 = vmul.f32 %v6216, %v6216
        %v6441 = vmul.f32 %v6217, %v6217
        %v6442 = vmul.f32 %v6218, %v6218
        %v6443 = vmul.f32 %v6219, %v6219
        %v6444 = vmul.f32 %v6220, %v6220
        %v6445 = vmul.f32 %v6221, %v6221
        %v6446 = vmul.f32 %v6222, %v6222
        %v6447 = vmul.f32 %v6223, %v6223
        %v6448 = vmul.f32 %v6224, %v6224
        %v6449 = vmul.f32 %v6225, %v6225
        %v6450 = vmul.f32 %v6226, %v6226
        %v6451 = vmul.f32 %v6227, %v6227
        %v6452 = vmul.f32 %v6228, %v6228
        %v6453 = vmul.f32 %v6229, %v6229
        %v6454 = vmul.f32 %v6230, %v6230
        %v6455 = vmul.f32 %v6231, %v6231
        %v6456 = vmul.f32 %v6232, %v6232
        %v6457 = vmul.f32 %v6233, %v6233
        %v6458 = vmul.f32 %v6234, %v6234
        %v6459 = vmul.f32 %v6235, %v6235
        %v6460 = vmul.f32 %v6236, %v6236
        %v6461 = vmul.f32 %v6237, %v6237
        %v6462 = vmul.f32 %v6238, %v6238
        %v6463 = vmul.f32 %v6239, %v6239
        %v6464 = vmul.f32 %v6240, %v6240
        %v6465 = vmul.f32 %v6241, %v6241
        %v6466 = vmul.f32 %v6242, %v6242
        %v6467 = vmul.f32 %v6243, %v6243
        %v6468 = vmul.f32 %v6244, %v6244
        %v6469 = vmul.f32 %v6245, %v6245
        %v6470 = vmul.f32 %v6246, %v6246
        %v6471 = vmul.f32 %v6247, %v6247
        %v6472 = vmul.f32 %v6248, %v6248
        %v6473 = vmul.f32 %v6249, %v6249
        %v6474 = vmul.f32 %v6250, %v6250
        %v6475 = vmul.f32 %v6251, %v6251
        %v6476 = vmul.f32 %v6252, %v6252
        %v6477 = vmul.f32 %v6253, %v6253
        %v6478 = vmul.f32 %v6254, %v6254
        %v6479 = vmul.f32 %v6255, %v6255
        %v6480 = vmul.f32 %v6256, %v6256
        %v6481 = vmul.f32 %v6257, %v6257
        %v6482 = vmul.f32 %v6258, %v6258
        %v6483 = vmul.f32 %v6259, %v6259
        %v6484 = vmul.f32 %v6260, %v6260
        %v6485 = vmul.f32 %v6261, %v6261
        %v6486 = vmul.f32 %v6262, %v6262
        %v6487 = vadd.f32 %v6423, %v6439
        %v6488 = vadd.f32 %v6487, %v6455
        %v6489 = vadd.f32 %v6488, %v6471
        %v6490 = vrot.slane %v6489, 4
        %v6491 = vadd.f32 %v6489, %v6490
        %v6492 = vrot.slane %v6491, 2
        %v6493 = vadd.f32 %v6491, %v6492
        %v6494 = vrot.slane %v6493, 1
        %v6495 = vadd.f32 %v6493, %v6494
        %v6496 = vadd.f32 %v6424, %v6440
        %v6497 = vadd.f32 %v6496, %v6456
        %v6498 = vadd.f32 %v6497, %v6472
        %v6499 = vrot.slane %v6498, 4
        %v6500 = vadd.f32 %v6498, %v6499
        %v6501 = vrot.slane %v6500, 2
        %v6502 = vadd.f32 %v6500, %v6501
        %v6503 = vrot.slane %v6502, 1
        %v6504 = vadd.f32 %v6502, %v6503
        %v6505 = vadd.f32 %v6425, %v6441
        %v6506 = vadd.f32 %v6505, %v6457
        %v6507 = vadd.f32 %v6506, %v6473
        %v6508 = vrot.slane %v6507, 4
        %v6509 = vadd.f32 %v6507, %v6508
        %v6510 = vrot.slane %v6509, 2
        %v6511 = vadd.f32 %v6509, %v6510
        %v6512 = vrot.slane %v6511, 1
        %v6513 = vadd.f32 %v6511, %v6512
        %v6514 = vadd.f32 %v6426, %v6442
        %v6515 = vadd.f32 %v6514, %v6458
        %v6516 = vadd.f32 %v6515, %v6474
        %v6517 = vrot.slane %v6516, 4
        %v6518 = vadd.f32 %v6516, %v6517
        %v6519 = vrot.slane %v6518, 2
        %v6520 = vadd.f32 %v6518, %v6519
        %v6521 = vrot.slane %v6520, 1
        %v6522 = vadd.f32 %v6520, %v6521
        %v6523 = vadd.f32 %v6427, %v6443
        %v6524 = vadd.f32 %v6523, %v6459
        %v6525 = vadd.f32 %v6524, %v6475
        %v6526 = vrot.slane %v6525, 4
        %v6527 = vadd.f32 %v6525, %v6526
        %v6528 = vrot.slane %v6527, 2
        %v6529 = vadd.f32 %v6527, %v6528
        %v6530 = vrot.slane %v6529, 1
        %v6531 = vadd.f32 %v6529, %v6530
        %v6532 = vadd.f32 %v6428, %v6444
        %v6533 = vadd.f32 %v6532, %v6460
        %v6534 = vadd.f32 %v6533, %v6476
        %v6535 = vrot.slane %v6534, 4
        %v6536 = vadd.f32 %v6534, %v6535
        %v6537 = vrot.slane %v6536, 2
        %v6538 = vadd.f32 %v6536, %v6537
        %v6539 = vrot.slane %v6538, 1
        %v6540 = vadd.f32 %v6538, %v6539
        %v6541 = vadd.f32 %v6429, %v6445
        %v6542 = vadd.f32 %v6541, %v6461
        %v6543 = vadd.f32 %v6542, %v6477
        %v6544 = vrot.slane %v6543, 4
        %v6545 = vadd.f32 %v6543, %v6544
        %v6546 = vrot.slane %v6545, 2
        %v6547 = vadd.f32 %v6545, %v6546
        %v6548 = vrot.slane %v6547, 1
        %v6549 = vadd.f32 %v6547, %v6548
        %v6550 = vadd.f32 %v6430, %v6446
        %v6551 = vadd.f32 %v6550, %v6462
        %v6552 = vadd.f32 %v6551, %v6478
        %v6553 = vrot.slane %v6552, 4
        %v6554 = vadd.f32 %v6552, %v6553
        %v6555 = vrot.slane %v6554, 2
        %v6556 = vadd.f32 %v6554, %v6555
        %v6557 = vrot.slane %v6556, 1
        %v6558 = vadd.f32 %v6556, %v6557
        %v6559 = vadd.f32 %v6431, %v6447
        %v6560 = vadd.f32 %v6559, %v6463
        %v6561 = vadd.f32 %v6560, %v6479
        %v6562 = vrot.slane %v6561, 4
        %v6563 = vadd.f32 %v6561, %v6562
        %v6564 = vrot.slane %v6563, 2
        %v6565 = vadd.f32 %v6563, %v6564
        %v6566 = vrot.slane %v6565, 1
        %v6567 = vadd.f32 %v6565, %v6566
        %v6568 = vadd.f32 %v6432, %v6448
        %v6569 = vadd.f32 %v6568, %v6464
        %v6570 = vadd.f32 %v6569, %v6480
        %v6571 = vrot.slane %v6570, 4
        %v6572 = vadd.f32 %v6570, %v6571
        %v6573 = vrot.slane %v6572, 2
        %v6574 = vadd.f32 %v6572, %v6573
        %v6575 = vrot.slane %v6574, 1
        %v6576 = vadd.f32 %v6574, %v6575
        %v6577 = vadd.f32 %v6433, %v6449
        %v6578 = vadd.f32 %v6577, %v6465
        %v6579 = vadd.f32 %v6578, %v6481
        %v6580 = vrot.slane %v6579, 4
        %v6581 = vadd.f32 %v6579, %v6580
        %v6582 = vrot.slane %v6581, 2
        %v6583 = vadd.f32 %v6581, %v6582
        %v6584 = vrot.slane %v6583, 1
        %v6585 = vadd.f32 %v6583, %v6584
        %v6586 = vadd.f32 %v6434, %v6450
        %v6587 = vadd.f32 %v6586, %v6466
        %v6588 = vadd.f32 %v6587, %v6482
        %v6589 = vrot.slane %v6588, 4
        %v6590 = vadd.f32 %v6588, %v6589
        %v6591 = vrot.slane %v6590, 2
        %v6592 = vadd.f32 %v6590, %v6591
        %v6593 = vrot.slane %v6592, 1
        %v6594 = vadd.f32 %v6592, %v6593
        %v6595 = vadd.f32 %v6435, %v6451
        %v6596 = vadd.f32 %v6595, %v6467
        %v6597 = vadd.f32 %v6596, %v6483
        %v6598 = vrot.slane %v6597, 4
        %v6599 = vadd.f32 %v6597, %v6598
        %v6600 = vrot.slane %v6599, 2
        %v6601 = vadd.f32 %v6599, %v6600
        %v6602 = vrot.slane %v6601, 1
        %v6603 = vadd.f32 %v6601, %v6602
        %v6604 = vadd.f32 %v6436, %v6452
        %v6605 = vadd.f32 %v6604, %v6468
        %v6606 = vadd.f32 %v6605, %v6484
        %v6607 = vrot.slane %v6606, 4
        %v6608 = vadd.f32 %v6606, %v6607
        %v6609 = vrot.slane %v6608, 2
        %v6610 = vadd.f32 %v6608, %v6609
        %v6611 = vrot.slane %v6610, 1
        %v6612 = vadd.f32 %v6610, %v6611
        %v6613 = vadd.f32 %v6437, %v6453
        %v6614 = vadd.f32 %v6613, %v6469
        %v6615 = vadd.f32 %v6614, %v6485
        %v6616 = vrot.slane %v6615, 4
        %v6617 = vadd.f32 %v6615, %v6616
        %v6618 = vrot.slane %v6617, 2
        %v6619 = vadd.f32 %v6617, %v6618
        %v6620 = vrot.slane %v6619, 1
        %v6621 = vadd.f32 %v6619, %v6620
        %v6622 = vadd.f32 %v6438, %v6454
        %v6623 = vadd.f32 %v6622, %v6470
        %v6624 = vadd.f32 %v6623, %v6486
        %v6625 = vrot.slane %v6624, 4
        %v6626 = vadd.f32 %v6624, %v6625
        %v6627 = vrot.slane %v6626, 2
        %v6628 = vadd.f32 %v6626, %v6627
        %v6629 = vrot.slane %v6628, 1
        %v6630 = vadd.f32 %v6628, %v6629
        %v6631 = vmul.f32 %v6495, %v3293
        %v6632 = vmul.f32 %v6504, %v3293
        %v6633 = vmul.f32 %v6513, %v3293
        %v6634 = vmul.f32 %v6522, %v3293
        %v6635 = vmul.f32 %v6531, %v3293
        %v6636 = vmul.f32 %v6540, %v3293
        %v6637 = vmul.f32 %v6549, %v3293
        %v6638 = vmul.f32 %v6558, %v3293
        %v6639 = vmul.f32 %v6567, %v3293
        %v6640 = vmul.f32 %v6576, %v3293
        %v6641 = vmul.f32 %v6585, %v3293
        %v6642 = vmul.f32 %v6594, %v3293
        %v6643 = vmul.f32 %v6603, %v3293
        %v6644 = vmul.f32 %v6612, %v3293
        %v6645 = vmul.f32 %v6621, %v3293
        %v6646 = vmul.f32 %v6630, %v3293
        %v6647 = vmul.f32 %v6407, %v6407
        %v6648 = vmul.f32 %v6408, %v6408
        %v6649 = vmul.f32 %v6409, %v6409
        %v6650 = vmul.f32 %v6410, %v6410
        %v6651 = vmul.f32 %v6411, %v6411
        %v6652 = vmul.f32 %v6412, %v6412
        %v6653 = vmul.f32 %v6413, %v6413
        %v6654 = vmul.f32 %v6414, %v6414
        %v6655 = vmul.f32 %v6415, %v6415
        %v6656 = vmul.f32 %v6416, %v6416
        %v6657 = vmul.f32 %v6417, %v6417
        %v6658 = vmul.f32 %v6418, %v6418
        %v6659 = vmul.f32 %v6419, %v6419
        %v6660 = vmul.f32 %v6420, %v6420
        %v6661 = vmul.f32 %v6421, %v6421
        %v6662 = vmul.f32 %v6422, %v6422
        %v6663 = vsub.f32 %v6631, %v6647
        %v6664 = vsub.f32 %v6632, %v6648
        %v6665 = vsub.f32 %v6633, %v6649
        %v6666 = vsub.f32 %v6634, %v6650
        %v6667 = vsub.f32 %v6635, %v6651
        %v6668 = vsub.f32 %v6636, %v6652
        %v6669 = vsub.f32 %v6637, %v6653
        %v6670 = vsub.f32 %v6638, %v6654
        %v6671 = vsub.f32 %v6639, %v6655
        %v6672 = vsub.f32 %v6640, %v6656
        %v6673 = vsub.f32 %v6641, %v6657
        %v6674 = vsub.f32 %v6642, %v6658
        %v6675 = vsub.f32 %v6643, %v6659
        %v6676 = vsub.f32 %v6644, %v6660
        %v6677 = vsub.f32 %v6645, %v6661
        %v6678 = vsub.f32 %v6646, %v6662
        %v6679 = vsub.f32 %v6199, %v6407
        %v6680 = vsub.f32 %v6200, %v6408
        %v6681 = vsub.f32 %v6201, %v6409
        %v6682 = vsub.f32 %v6202, %v6410
        %v6683 = vsub.f32 %v6203, %v6411
        %v6684 = vsub.f32 %v6204, %v6412
        %v6685 = vsub.f32 %v6205, %v6413
        %v6686 = vsub.f32 %v6206, %v6414
        %v6687 = vsub.f32 %v6207, %v6415
        %v6688 = vsub.f32 %v6208, %v6416
        %v6689 = vsub.f32 %v6209, %v6417
        %v6690 = vsub.f32 %v6210, %v6418
        %v6691 = vsub.f32 %v6211, %v6419
        %v6692 = vsub.f32 %v6212, %v6420
        %v6693 = vsub.f32 %v6213, %v6421
        %v6694 = vsub.f32 %v6214, %v6422
        %v6695 = vsub.f32 %v6215, %v6407
        %v6696 = vsub.f32 %v6216, %v6408
        %v6697 = vsub.f32 %v6217, %v6409
        %v6698 = vsub.f32 %v6218, %v6410
        %v6699 = vsub.f32 %v6219, %v6411
        %v6700 = vsub.f32 %v6220, %v6412
        %v6701 = vsub.f32 %v6221, %v6413
        %v6702 = vsub.f32 %v6222, %v6414
        %v6703 = vsub.f32 %v6223, %v6415
        %v6704 = vsub.f32 %v6224, %v6416
        %v6705 = vsub.f32 %v6225, %v6417
        %v6706 = vsub.f32 %v6226, %v6418
        %v6707 = vsub.f32 %v6227, %v6419
        %v6708 = vsub.f32 %v6228, %v6420
        %v6709 = vsub.f32 %v6229, %v6421
        %v6710 = vsub.f32 %v6230, %v6422
        %v6711 = vsub.f32 %v6231, %v6407
        %v6712 = vsub.f32 %v6232, %v6408
        %v6713 = vsub.f32 %v6233, %v6409
        %v6714 = vsub.f32 %v6234, %v6410
        %v6715 = vsub.f32 %v6235, %v6411
        %v6716 = vsub.f32 %v6236, %v6412
        %v6717 = vsub.f32 %v6237, %v6413
        %v6718 = vsub.f32 %v6238, %v6414
        %v6719 = vsub.f32 %v6239, %v6415
        %v6720 = vsub.f32 %v6240, %v6416
        %v6721 = vsub.f32 %v6241, %v6417
        %v6722 = vsub.f32 %v6242, %v6418
        %v6723 = vsub.f32 %v6243, %v6419
        %v6724 = vsub.f32 %v6244, %v6420
        %v6725 = vsub.f32 %v6245, %v6421
        %v6726 = vsub.f32 %v6246, %v6422
        %v6727 = vsub.f32 %v6247, %v6407
        %v6728 = vsub.f32 %v6248, %v6408
        %v6729 = vsub.f32 %v6249, %v6409
        %v6730 = vsub.f32 %v6250, %v6410
        %v6731 = vsub.f32 %v6251, %v6411
        %v6732 = vsub.f32 %v6252, %v6412
        %v6733 = vsub.f32 %v6253, %v6413
        %v6734 = vsub.f32 %v6254, %v6414
        %v6735 = vsub.f32 %v6255, %v6415
        %v6736 = vsub.f32 %v6256, %v6416
        %v6737 = vsub.f32 %v6257, %v6417
        %v6738 = vsub.f32 %v6258, %v6418
        %v6739 = vsub.f32 %v6259, %v6419
        %v6740 = vsub.f32 %v6260, %v6420
        %v6741 = vsub.f32 %v6261, %v6421
        %v6742 = vsub.f32 %v6262, %v6422
        %v6743 = vadd.f32 %v6663, 1e-05
        %v6744 = vadd.f32 %v6664, 1e-05
        %v6745 = vadd.f32 %v6665, 1e-05
        %v6746 = vadd.f32 %v6666, 1e-05
        %v6747 = vadd.f32 %v6667, 1e-05
        %v6748 = vadd.f32 %v6668, 1e-05
        %v6749 = vadd.f32 %v6669, 1e-05
        %v6750 = vadd.f32 %v6670, 1e-05
        %v6751 = vadd.f32 %v6671, 1e-05
        %v6752 = vadd.f32 %v6672, 1e-05
        %v6753 = vadd.f32 %v6673, 1e-05
        %v6754 = vadd.f32 %v6674, 1e-05
        %v6755 = vadd.f32 %v6675, 1e-05
        %v6756 = vadd.f32 %v6676, 1e-05
        %v6757 = vadd.f32 %v6677, 1e-05
        %v6758 = vadd.f32 %v6678, 1e-05
        %v6759 = vrsqrt.pop %v6743
        %v6760 = vrsqrt.pop %v6744
        %v6761 = vrsqrt.pop %v6745
        %v6762 = vrsqrt.pop %v6746
        %v6763 = vrsqrt.pop %v6747
        %v6764 = vrsqrt.pop %v6748
        %v6765 = vrsqrt.pop %v6749
        %v6766 = vrsqrt.pop %v6750
        %v6767 = vrsqrt.pop %v6751
        %v6768 = vrsqrt.pop %v6752
        %v6769 = vrsqrt.pop %v6753
        %v6770 = vrsqrt.pop %v6754
        %v6771 = vrsqrt.pop %v6755
        %v6772 = vrsqrt.pop %v6756
        %v6773 = vrsqrt.pop %v6757
        %v6774 = vrsqrt.pop %v6758
        %v6775 = vmul.f32 %v6679, %v6759
        %v6776 = vmul.f32 %v6680, %v6760
        %v6777 = vmul.f32 %v6681, %v6761
        %v6778 = vmul.f32 %v6682, %v6762
        %v6779 = vmul.f32 %v6683, %v6763
        %v6780 = vmul.f32 %v6684, %v6764
        %v6781 = vmul.f32 %v6685, %v6765
        %v6782 = vmul.f32 %v6686, %v6766
        %v6783 = vmul.f32 %v6687, %v6767
        %v6784 = vmul.f32 %v6688, %v6768
        %v6785 = vmul.f32 %v6689, %v6769
        %v6786 = vmul.f32 %v6690, %v6770
        %v6787 = vmul.f32 %v6691, %v6771
        %v6788 = vmul.f32 %v6692, %v6772
        %v6789 = vmul.f32 %v6693, %v6773
        %v6790 = vmul.f32 %v6694, %v6774
        %v6791 = vmul.f32 %v6695, %v6759
        %v6792 = vmul.f32 %v6696, %v6760
        %v6793 = vmul.f32 %v6697, %v6761
        %v6794 = vmul.f32 %v6698, %v6762
        %v6795 = vmul.f32 %v6699, %v6763
        %v6796 = vmul.f32 %v6700, %v6764
        %v6797 = vmul.f32 %v6701, %v6765
        %v6798 = vmul.f32 %v6702, %v6766
        %v6799 = vmul.f32 %v6703, %v6767
        %v6800 = vmul.f32 %v6704, %v6768
        %v6801 = vmul.f32 %v6705, %v6769
        %v6802 = vmul.f32 %v6706, %v6770
        %v6803 = vmul.f32 %v6707, %v6771
        %v6804 = vmul.f32 %v6708, %v6772
        %v6805 = vmul.f32 %v6709, %v6773
        %v6806 = vmul.f32 %v6710, %v6774
        %v6807 = vmul.f32 %v6711, %v6759
        %v6808 = vmul.f32 %v6712, %v6760
        %v6809 = vmul.f32 %v6713, %v6761
        %v6810 = vmul.f32 %v6714, %v6762
        %v6811 = vmul.f32 %v6715, %v6763
        %v6812 = vmul.f32 %v6716, %v6764
        %v6813 = vmul.f32 %v6717, %v6765
        %v6814 = vmul.f32 %v6718, %v6766
        %v6815 = vmul.f32 %v6719, %v6767
        %v6816 = vmul.f32 %v6720, %v6768
        %v6817 = vmul.f32 %v6721, %v6769
        %v6818 = vmul.f32 %v6722, %v6770
        %v6819 = vmul.f32 %v6723, %v6771
        %v6820 = vmul.f32 %v6724, %v6772
        %v6821 = vmul.f32 %v6725, %v6773
        %v6822 = vmul.f32 %v6726, %v6774
        %v6823 = vmul.f32 %v6727, %v6759
        %v6824 = vmul.f32 %v6728, %v6760
        %v6825 = vmul.f32 %v6729, %v6761
        %v6826 = vmul.f32 %v6730, %v6762
        %v6827 = vmul.f32 %v6731, %v6763
        %v6828 = vmul.f32 %v6732, %v6764
        %v6829 = vmul.f32 %v6733, %v6765
        %v6830 = vmul.f32 %v6734, %v6766
        %v6831 = vmul.f32 %v6735, %v6767
        %v6832 = vmul.f32 %v6736, %v6768
        %v6833 = vmul.f32 %v6737, %v6769
        %v6834 = vmul.f32 %v6738, %v6770
        %v6835 = vmul.f32 %v6739, %v6771
        %v6836 = vmul.f32 %v6740, %v6772
        %v6837 = vmul.f32 %v6741, %v6773
        %v6838 = vmul.f32 %v6742, %v6774
        %6839 = vset.pattern.permute.xlu0 7
        %6840 = vperm.xlu0 %6839, %v1057
        %v6841 = vpop.permute.xlu0 %6840
        %6843 = vset.pattern.permute.xlu0 7
        %6844 = vperm.xlu0 %6843, %v1058
        %v6845 = vpop.permute.xlu0 %6844
        %6847 = vset.pattern.permute.xlu0 7
        %6848 = vperm.xlu0 %6847, %v1059
        %v6849 = vpop.permute.xlu0 %6848
        %6851 = vset.pattern.permute.xlu0 7
        %6852 = vperm.xlu0 %6851, %v1060
        %v6853 = vpop.permute.xlu0 %6852
        %v6855 = vmul.f32 %v6775, %v6841
        %v6856 = vmul.f32 %v6776, %v6841
        %v6857 = vmul.f32 %v6777, %v6841
        %v6858 = vmul.f32 %v6778, %v6841
        %v6859 = vmul.f32 %v6779, %v6841
        %v6860 = vmul.f32 %v6780, %v6841
        %v6861 = vmul.f32 %v6781, %v6841
        %v6862 = vmul.f32 %v6782, %v6841
        %v6863 = vmul.f32 %v6783, %v6841
        %v6864 = vmul.f32 %v6784, %v6841
        %v6865 = vmul.f32 %v6785, %v6841
        %v6866 = vmul.f32 %v6786, %v6841
        %v6867 = vmul.f32 %v6787, %v6841
        %v6868 = vmul.f32 %v6788, %v6841
        %v6869 = vmul.f32 %v6789, %v6841
        %v6870 = vmul.f32 %v6790, %v6841
        %v6871 = vmul.f32 %v6791, %v6845
        %v6872 = vmul.f32 %v6792, %v6845
        %v6873 = vmul.f32 %v6793, %v6845
        %v6874 = vmul.f32 %v6794, %v6845
        %v6875 = vmul.f32 %v6795, %v6845
        %v6876 = vmul.f32 %v6796, %v6845
        %v6877 = vmul.f32 %v6797, %v6845
        %v6878 = vmul.f32 %v6798, %v6845
        %v6879 = vmul.f32 %v6799, %v6845
        %v6880 = vmul.f32 %v6800, %v6845
        %v6881 = vmul.f32 %v6801, %v6845
        %v6882 = vmul.f32 %v6802, %v6845
        %v6883 = vmul.f32 %v6803, %v6845
        %v6884 = vmul.f32 %v6804, %v6845
        %v6885 = vmul.f32 %v6805, %v6845
        %v6886 = vmul.f32 %v6806, %v6845
        %v6887 = vmul.f32 %v6807, %v6849
        %v6888 = vmul.f32 %v6808, %v6849
        %v6889 = vmul.f32 %v6809, %v6849
        %v6890 = vmul.f32 %v6810, %v6849
        %v6891 = vmul.f32 %v6811, %v6849
        %v6892 = vmul.f32 %v6812, %v6849
        %v6893 = vmul.f32 %v6813, %v6849
        %v6894 = vmul.f32 %v6814, %v6849
        %v6895 = vmul.f32 %v6815, %v6849
        %v6896 = vmul.f32 %v6816, %v6849
        %v6897 = vmul.f32 %v6817, %v6849
        %v6898 = vmul.f32 %v6818, %v6849
        %v6899 = vmul.f32 %v6819, %v6849
        %v6900 = vmul.f32 %v6820, %v6849
        %v6901 = vmul.f32 %v6821, %v6849
        %v6902 = vmul.f32 %v6822, %v6849
        %v6903 = vmul.f32 %v6823, %v6853
        %v6904 = vmul.f32 %v6824, %v6853
        %v6905 = vmul.f32 %v6825, %v6853
        %v6906 = vmul.f32 %v6826, %v6853
        %v6907 = vmul.f32 %v6827, %v6853
        %v6908 = vmul.f32 %v6828, %v6853
        %v6909 = vmul.f32 %v6829, %v6853
        %v6910 = vmul.f32 %v6830, %v6853
        %v6911 = vmul.f32 %v6831, %v6853
        %v6912 = vmul.f32 %v6832, %v6853
        %v6913 = vmul.f32 %v6833, %v6853
        %v6914 = vmul.f32 %v6834, %v6853
        %v6915 = vmul.f32 %v6835, %v6853
        %v6916 = vmul.f32 %v6836, %v6853
        %v6917 = vmul.f32 %v6837, %v6853
        %v6918 = vmul.f32 %v6838, %v6853
        %6919 = vset.pattern.permute.xlu0 8
        %6920 = vperm.xlu0 %6919, %v1057
        %v6921 = vpop.permute.xlu0 %6920
        %6923 = vset.pattern.permute.xlu0 8
        %6924 = vperm.xlu0 %6923, %v1058
        %v6925 = vpop.permute.xlu0 %6924
        %6927 = vset.pattern.permute.xlu0 8
        %6928 = vperm.xlu0 %6927, %v1059
        %v6929 = vpop.permute.xlu0 %6928
        %6931 = vset.pattern.permute.xlu0 8
        %6932 = vperm.xlu0 %6931, %v1060
        %v6933 = vpop.permute.xlu0 %6932
        %v6935 = vadd.f32 %v6855, %v6921
        %v6936 = vadd.f32 %v6856, %v6921
        %v6937 = vadd.f32 %v6857, %v6921
        %v6938 = vadd.f32 %v6858, %v6921
        %v6939 = vadd.f32 %v6859, %v6921
        %v6940 = vadd.f32 %v6860, %v6921
        %v6941 = vadd.f32 %v6861, %v6921
        %v6942 = vadd.f32 %v6862, %v6921
        %v6943 = vadd.f32 %v6863, %v6921
        %v6944 = vadd.f32 %v6864, %v6921
        %v6945 = vadd.f32 %v6865, %v6921
        %v6946 = vadd.f32 %v6866, %v6921
        %v6947 = vadd.f32 %v6867, %v6921
        %v6948 = vadd.f32 %v6868, %v6921
        %v6949 = vadd.f32 %v6869, %v6921
        %v6950 = vadd.f32 %v6870, %v6921
        %v6951 = vadd.f32 %v6871, %v6925
        %v6952 = vadd.f32 %v6872, %v6925
        %v6953 = vadd.f32 %v6873, %v6925
        %v6954 = vadd.f32 %v6874, %v6925
        %v6955 = vadd.f32 %v6875, %v6925
        %v6956 = vadd.f32 %v6876, %v6925
        %v6957 = vadd.f32 %v6877, %v6925
        %v6958 = vadd.f32 %v6878, %v6925
        %v6959 = vadd.f32 %v6879, %v6925
        %v6960 = vadd.f32 %v6880, %v6925
        %v6961 = vadd.f32 %v6881, %v6925
        %v6962 = vadd.f32 %v6882, %v6925
        %v6963 = vadd.f32 %v6883, %v6925
        %v6964 = vadd.f32 %v6884, %v6925
        %v6965 = vadd.f32 %v6885, %v6925
        %v6966 = vadd.f32 %v6886, %v6925
        %v6967 = vadd.f32 %v6887, %v6929
        %v6968 = vadd.f32 %v6888, %v6929
        %v6969 = vadd.f32 %v6889, %v6929
        %v6970 = vadd.f32 %v6890, %v6929
        %v6971 = vadd.f32 %v6891, %v6929
        %v6972 = vadd.f32 %v6892, %v6929
        %v6973 = vadd.f32 %v6893, %v6929
        %v6974 = vadd.f32 %v6894, %v6929
        %v6975 = vadd.f32 %v6895, %v6929
        %v6976 = vadd.f32 %v6896, %v6929
        %v6977 = vadd.f32 %v6897, %v6929
        %v6978 = vadd.f32 %v6898, %v6929
        %v6979 = vadd.f32 %v6899, %v6929
        %v6980 = vadd.f32 %v6900, %v6929
        %v6981 = vadd.f32 %v6901, %v6929
        %v6982 = vadd.f32 %v6902, %v6929
        %v6983 = vadd.f32 %v6903, %v6933
        %v6984 = vadd.f32 %v6904, %v6933
        %v6985 = vadd.f32 %v6905, %v6933
        %v6986 = vadd.f32 %v6906, %v6933
        %v6987 = vadd.f32 %v6907, %v6933
        %v6988 = vadd.f32 %v6908, %v6933
        %v6989 = vadd.f32 %v6909, %v6933
        %v6990 = vadd.f32 %v6910, %v6933
        %v6991 = vadd.f32 %v6911, %v6933
        %v6992 = vadd.f32 %v6912, %v6933
        %v6993 = vadd.f32 %v6913, %v6933
        %v6994 = vadd.f32 %v6914, %v6933
        %v6995 = vadd.f32 %v6915, %v6933
        %v6996 = vadd.f32 %v6916, %v6933
        %v6997 = vadd.f32 %v6917, %v6933
        %v6998 = vadd.f32 %v6918, %v6933
        %v6999 = vmul.f32 %v6935, %v6935
        %v7000 = vmul.f32 %v6936, %v6936
        %v7001 = vmul.f32 %v6937, %v6937
        %v7002 = vmul.f32 %v6938, %v6938
        %v7003 = vmul.f32 %v6939, %v6939
        %v7004 = vmul.f32 %v6940, %v6940
        %v7005 = vmul.f32 %v6941, %v6941
        %v7006 = vmul.f32 %v6942, %v6942
        %v7007 = vmul.f32 %v6943, %v6943
        %v7008 = vmul.f32 %v6944, %v6944
        %v7009 = vmul.f32 %v6945, %v6945
        %v7010 = vmul.f32 %v6946, %v6946
        %v7011 = vmul.f32 %v6947, %v6947
        %v7012 = vmul.f32 %v6948, %v6948
        %v7013 = vmul.f32 %v6949, %v6949
        %v7014 = vmul.f32 %v6950, %v6950
        %v7015 = vmul.f32 %v6951, %v6951
        %v7016 = vmul.f32 %v6952, %v6952
        %v7017 = vmul.f32 %v6953, %v6953
        %v7018 = vmul.f32 %v6954, %v6954
        %v7019 = vmul.f32 %v6955, %v6955
        %v7020 = vmul.f32 %v6956, %v6956
        %v7021 = vmul.f32 %v6957, %v6957
        %v7022 = vmul.f32 %v6958, %v6958
        %v7023 = vmul.f32 %v6959, %v6959
        %v7024 = vmul.f32 %v6960, %v6960
        %v7025 = vmul.f32 %v6961, %v6961
        %v7026 = vmul.f32 %v6962, %v6962
        %v7027 = vmul.f32 %v6963, %v6963
        %v7028 = vmul.f32 %v6964, %v6964
        %v7029 = vmul.f32 %v6965, %v6965
        %v7030 = vmul.f32 %v6966, %v6966
        %v7031 = vmul.f32 %v6967, %v6967
        %v7032 = vmul.f32 %v6968, %v6968
        %v7033 = vmul.f32 %v6969, %v6969
        %v7034 = vmul.f32 %v6970, %v6970
        %v7035 = vmul.f32 %v6971, %v6971
        %v7036 = vmul.f32 %v6972, %v6972
        %v7037 = vmul.f32 %v6973, %v6973
        %v7038 = vmul.f32 %v6974, %v6974
        %v7039 = vmul.f32 %v6975, %v6975
        %v7040 = vmul.f32 %v6976, %v6976
        %v7041 = vmul.f32 %v6977, %v6977
        %v7042 = vmul.f32 %v6978, %v6978
        %v7043 = vmul.f32 %v6979, %v6979
        %v7044 = vmul.f32 %v6980, %v6980
        %v7045 = vmul.f32 %v6981, %v6981
        %v7046 = vmul.f32 %v6982, %v6982
        %v7047 = vmul.f32 %v6983, %v6983
        %v7048 = vmul.f32 %v6984, %v6984
        %v7049 = vmul.f32 %v6985, %v6985
        %v7050 = vmul.f32 %v6986, %v6986
        %v7051 = vmul.f32 %v6987, %v6987
        %v7052 = vmul.f32 %v6988, %v6988
        %v7053 = vmul.f32 %v6989, %v6989
        %v7054 = vmul.f32 %v6990, %v6990
        %v7055 = vmul.f32 %v6991, %v6991
        %v7056 = vmul.f32 %v6992, %v6992
        %v7057 = vmul.f32 %v6993, %v6993
        %v7058 = vmul.f32 %v6994, %v6994
        %v7059 = vmul.f32 %v6995, %v6995
        %v7060 = vmul.f32 %v6996, %v6996
        %v7061 = vmul.f32 %v6997, %v6997
        %v7062 = vmul.f32 %v6998, %v6998
        %v7063 = vmul.f32 %v6935, %v6999
        %v7064 = vmul.f32 %v6936, %v7000
        %v7065 = vmul.f32 %v6937, %v7001
        %v7066 = vmul.f32 %v6938, %v7002
        %v7067 = vmul.f32 %v6939, %v7003
        %v7068 = vmul.f32 %v6940, %v7004
        %v7069 = vmul.f32 %v6941, %v7005
        %v7070 = vmul.f32 %v6942, %v7006
        %v7071 = vmul.f32 %v6943, %v7007
        %v7072 = vmul.f32 %v6944, %v7008
        %v7073 = vmul.f32 %v6945, %v7009
        %v7074 = vmul.f32 %v6946, %v7010
        %v7075 = vmul.f32 %v6947, %v7011
        %v7076 = vmul.f32 %v6948, %v7012
        %v7077 = vmul.f32 %v6949, %v7013
        %v7078 = vmul.f32 %v6950, %v7014
        %v7079 = vmul.f32 %v6951, %v7015
        %v7080 = vmul.f32 %v6952, %v7016
        %v7081 = vmul.f32 %v6953, %v7017
        %v7082 = vmul.f32 %v6954, %v7018
        %v7083 = vmul.f32 %v6955, %v7019
        %v7084 = vmul.f32 %v6956, %v7020
        %v7085 = vmul.f32 %v6957, %v7021
        %v7086 = vmul.f32 %v6958, %v7022
        %v7087 = vmul.f32 %v6959, %v7023
        %v7088 = vmul.f32 %v6960, %v7024
        %v7089 = vmul.f32 %v6961, %v7025
        %v7090 = vmul.f32 %v6962, %v7026
        %v7091 = vmul.f32 %v6963, %v7027
        %v7092 = vmul.f32 %v6964, %v7028
        %v7093 = vmul.f32 %v6965, %v7029
        %v7094 = vmul.f32 %v6966, %v7030
        %v7095 = vmul.f32 %v6967, %v7031
        %v7096 = vmul.f32 %v6968, %v7032
        %v7097 = vmul.f32 %v6969, %v7033
        %v7098 = vmul.f32 %v6970, %v7034
        %v7099 = vmul.f32 %v6971, %v7035
        %v7100 = vmul.f32 %v6972, %v7036
        %v7101 = vmul.f32 %v6973, %v7037
        %v7102 = vmul.f32 %v6974, %v7038
        %v7103 = vmul.f32 %v6975, %v7039
        %v7104 = vmul.f32 %v6976, %v7040
        %v7105 = vmul.f32 %v6977, %v7041
        %v7106 = vmul.f32 %v6978, %v7042
        %v7107 = vmul.f32 %v6979, %v7043
        %v7108 = vmul.f32 %v6980, %v7044
        %v7109 = vmul.f32 %v6981, %v7045
        %v7110 = vmul.f32 %v6982, %v7046
        %v7111 = vmul.f32 %v6983, %v7047
        %v7112 = vmul.f32 %v6984, %v7048
        %v7113 = vmul.f32 %v6985, %v7049
        %v7114 = vmul.f32 %v6986, %v7050
        %v7115 = vmul.f32 %v6987, %v7051
        %v7116 = vmul.f32 %v6988, %v7052
        %v7117 = vmul.f32 %v6989, %v7053
        %v7118 = vmul.f32 %v6990, %v7054
        %v7119 = vmul.f32 %v6991, %v7055
        %v7120 = vmul.f32 %v6992, %v7056
        %v7121 = vmul.f32 %v6993, %v7057
        %v7122 = vmul.f32 %v6994, %v7058
        %v7123 = vmul.f32 %v6995, %v7059
        %v7124 = vmul.f32 %v6996, %v7060
        %v7125 = vmul.f32 %v6997, %v7061
        %v7126 = vmul.f32 %v6998, %v7062
        %v7127 = vmul.f32 %v7063, 0.044715
        %v7128 = vmul.f32 %v7064, 0.044715
        %v7129 = vmul.f32 %v7065, 0.044715
        %v7130 = vmul.f32 %v7066, 0.044715
        %v7131 = vmul.f32 %v7067, 0.044715
        %v7132 = vmul.f32 %v7068, 0.044715
        %v7133 = vmul.f32 %v7069, 0.044715
        %v7134 = vmul.f32 %v7070, 0.044715
        %v7135 = vmul.f32 %v7071, 0.044715
        %v7136 = vmul.f32 %v7072, 0.044715
        %v7137 = vmul.f32 %v7073, 0.044715
        %v7138 = vmul.f32 %v7074, 0.044715
        %v7139 = vmul.f32 %v7075, 0.044715
        %v7140 = vmul.f32 %v7076, 0.044715
        %v7141 = vmul.f32 %v7077, 0.044715
        %v7142 = vmul.f32 %v7078, 0.044715
        %v7143 = vmul.f32 %v7079, 0.044715
        %v7144 = vmul.f32 %v7080, 0.044715
        %v7145 = vmul.f32 %v7081, 0.044715
        %v7146 = vmul.f32 %v7082, 0.044715
        %v7147 = vmul.f32 %v7083, 0.044715
        %v7148 = vmul.f32 %v7084, 0.044715
        %v7149 = vmul.f32 %v7085, 0.044715
        %v7150 = vmul.f32 %v7086, 0.044715
        %v7151 = vmul.f32 %v7087, 0.044715
        %v7152 = vmul.f32 %v7088, 0.044715
        %v7153 = vmul.f32 %v7089, 0.044715
        %v7154 = vmul.f32 %v7090, 0.044715
        %v7155 = vmul.f32 %v7091, 0.044715
        %v7156 = vmul.f32 %v7092, 0.044715
        %v7157 = vmul.f32 %v7093, 0.044715
        %v7158 = vmul.f32 %v7094, 0.044715
        %v7159 = vmul.f32 %v7095, 0.044715
        %v7160 = vmul.f32 %v7096, 0.044715
        %v7161 = vmul.f32 %v7097, 0.044715
        %v7162 = vmul.f32 %v7098, 0.044715
        %v7163 = vmul.f32 %v7099, 0.044715
        %v7164 = vmul.f32 %v7100, 0.044715
        %v7165 = vmul.f32 %v7101, 0.044715
        %v7166 = vmul.f32 %v7102, 0.044715
        %v7167 = vmul.f32 %v7103, 0.044715
        %v7168 = vmul.f32 %v7104, 0.044715
        %v7169 = vmul.f32 %v7105, 0.044715
        %v7170 = vmul.f32 %v7106, 0.044715
        %v7171 = vmul.f32 %v7107, 0.044715
        %v7172 = vmul.f32 %v7108, 0.044715
        %v7173 = vmul.f32 %v7109, 0.044715
        %v7174 = vmul.f32 %v7110, 0.044715
        %v7175 = vmul.f32 %v7111, 0.044715
        %v7176 = vmul.f32 %v7112, 0.044715
        %v7177 = vmul.f32 %v7113, 0.044715
        %v7178 = vmul.f32 %v7114, 0.044715
        %v7179 = vmul.f32 %v7115, 0.044715
        %v7180 = vmul.f32 %v7116, 0.044715
        %v7181 = vmul.f32 %v7117, 0.044715
        %v7182 = vmul.f32 %v7118, 0.044715
        %v7183 = vmul.f32 %v7119, 0.044715
        %v7184 = vmul.f32 %v7120, 0.044715
        %v7185 = vmul.f32 %v7121, 0.044715
        %v7186 = vmul.f32 %v7122, 0.044715
        %v7187 = vmul.f32 %v7123, 0.044715
        %v7188 = vmul.f32 %v7124, 0.044715
        %v7189 = vmul.f32 %v7125, 0.044715
        %v7190 = vmul.f32 %v7126, 0.044715
        %v7191 = vadd.f32 %v6935, %v7127
        %v7192 = vadd.f32 %v6936, %v7128
        %v7193 = vadd.f32 %v6937, %v7129
        %v7194 = vadd.f32 %v6938, %v7130
        %v7195 = vadd.f32 %v6939, %v7131
        %v7196 = vadd.f32 %v6940, %v7132
        %v7197 = vadd.f32 %v6941, %v7133
        %v7198 = vadd.f32 %v6942, %v7134
        %v7199 = vadd.f32 %v6943, %v7135
        %v7200 = vadd.f32 %v6944, %v7136
        %v7201 = vadd.f32 %v6945, %v7137
        %v7202 = vadd.f32 %v6946, %v7138
        %v7203 = vadd.f32 %v6947, %v7139
        %v7204 = vadd.f32 %v6948, %v7140
        %v7205 = vadd.f32 %v6949, %v7141
        %v7206 = vadd.f32 %v6950, %v7142
        %v7207 = vadd.f32 %v6951, %v7143
        %v7208 = vadd.f32 %v6952, %v7144
        %v7209 = vadd.f32 %v6953, %v7145
        %v7210 = vadd.f32 %v6954, %v7146
        %v7211 = vadd.f32 %v6955, %v7147
        %v7212 = vadd.f32 %v6956, %v7148
        %v7213 = vadd.f32 %v6957, %v7149
        %v7214 = vadd.f32 %v6958, %v7150
        %v7215 = vadd.f32 %v6959, %v7151
        %v7216 = vadd.f32 %v6960, %v7152
        %v7217 = vadd.f32 %v6961, %v7153
        %v7218 = vadd.f32 %v6962, %v7154
        %v7219 = vadd.f32 %v6963, %v7155
        %v7220 = vadd.f32 %v6964, %v7156
        %v7221 = vadd.f32 %v6965, %v7157
        %v7222 = vadd.f32 %v6966, %v7158
        %v7223 = vadd.f32 %v6967, %v7159
        %v7224 = vadd.f32 %v6968, %v7160
        %v7225 = vadd.f32 %v6969, %v7161
        %v7226 = vadd.f32 %v6970, %v7162
        %v7227 = vadd.f32 %v6971, %v7163
        %v7228 = vadd.f32 %v6972, %v7164
        %v7229 = vadd.f32 %v6973, %v7165
        %v7230 = vadd.f32 %v6974, %v7166
        %v7231 = vadd.f32 %v6975, %v7167
        %v7232 = vadd.f32 %v6976, %v7168
        %v7233 = vadd.f32 %v6977, %v7169
        %v7234 = vadd.f32 %v6978, %v7170
        %v7235 = vadd.f32 %v6979, %v7171
        %v7236 = vadd.f32 %v6980, %v7172
        %v7237 = vadd.f32 %v6981, %v7173
        %v7238 = vadd.f32 %v6982, %v7174
        %v7239 = vadd.f32 %v6983, %v7175
        %v7240 = vadd.f32 %v6984, %v7176
        %v7241 = vadd.f32 %v6985, %v7177
        %v7242 = vadd.f32 %v6986, %v7178
        %v7243 = vadd.f32 %v6987, %v7179
        %v7244 = vadd.f32 %v6988, %v7180
        %v7245 = vadd.f32 %v6989, %v7181
        %v7246 = vadd.f32 %v6990, %v7182
        %v7247 = vadd.f32 %v6991, %v7183
        %v7248 = vadd.f32 %v6992, %v7184
        %v7249 = vadd.f32 %v6993, %v7185
        %v7250 = vadd.f32 %v6994, %v7186
        %v7251 = vadd.f32 %v6995, %v7187
        %v7252 = vadd.f32 %v6996, %v7188
        %v7253 = vadd.f32 %v6997, %v7189
        %v7254 = vadd.f32 %v6998, %v7190
        %v7255 = vmul.f32 %v7191, 0.7978846
        %v7256 = vmul.f32 %v7192, 0.7978846
        %v7257 = vmul.f32 %v7193, 0.7978846
        %v7258 = vmul.f32 %v7194, 0.7978846
        %v7259 = vmul.f32 %v7195, 0.7978846
        %v7260 = vmul.f32 %v7196, 0.7978846
        %v7261 = vmul.f32 %v7197, 0.7978846
        %v7262 = vmul.f32 %v7198, 0.7978846
        %v7263 = vmul.f32 %v7199, 0.7978846
        %v7264 = vmul.f32 %v7200, 0.7978846
        %v7265 = vmul.f32 %v7201, 0.7978846
        %v7266 = vmul.f32 %v7202, 0.7978846
        %v7267 = vmul.f32 %v7203, 0.7978846
        %v7268 = vmul.f32 %v7204, 0.7978846
        %v7269 = vmul.f32 %v7205, 0.7978846
        %v7270 = vmul.f32 %v7206, 0.7978846
        %v7271 = vmul.f32 %v7207, 0.7978846
        %v7272 = vmul.f32 %v7208, 0.7978846
        %v7273 = vmul.f32 %v7209, 0.7978846
        %v7274 = vmul.f32 %v7210, 0.7978846
        %v7275 = vmul.f32 %v7211, 0.7978846
        %v7276 = vmul.f32 %v7212, 0.7978846
        %v7277 = vmul.f32 %v7213, 0.7978846
        %v7278 = vmul.f32 %v7214, 0.7978846
        %v7279 = vmul.f32 %v7215, 0.7978846
        %v7280 = vmul.f32 %v7216, 0.7978846
        %v7281 = vmul.f32 %v7217, 0.7978846
        %v7282 = vmul.f32 %v7218, 0.7978846
        %v7283 = vmul.f32 %v7219, 0.7978846
        %v7284 = vmul.f32 %v7220, 0.7978846
        %v7285 = vmul.f32 %v7221, 0.7978846
        %v7286 = vmul.f32 %v7222, 0.7978846
        %v7287 = vmul.f32 %v7223, 0.7978846
        %v7288 = vmul.f32 %v7224, 0.7978846
        %v7289 = vmul.f32 %v7225, 0.7978846
        %v7290 = vmul.f32 %v7226, 0.7978846
        %v7291 = vmul.f32 %v7227, 0.7978846
        %v7292 = vmul.f32 %v7228, 0.7978846
        %v7293 = vmul.f32 %v7229, 0.7978846
        %v7294 = vmul.f32 %v7230, 0.7978846
        %v7295 = vmul.f32 %v7231, 0.7978846
        %v7296 = vmul.f32 %v7232, 0.7978846
        %v7297 = vmul.f32 %v7233, 0.7978846
        %v7298 = vmul.f32 %v7234, 0.7978846
        %v7299 = vmul.f32 %v7235, 0.7978846
        %v7300 = vmul.f32 %v7236, 0.7978846
        %v7301 = vmul.f32 %v7237, 0.7978846
        %v7302 = vmul.f32 %v7238, 0.7978846
        %v7303 = vmul.f32 %v7239, 0.7978846
        %v7304 = vmul.f32 %v7240, 0.7978846
        %v7305 = vmul.f32 %v7241, 0.7978846
        %v7306 = vmul.f32 %v7242, 0.7978846
        %v7307 = vmul.f32 %v7243, 0.7978846
        %v7308 = vmul.f32 %v7244, 0.7978846
        %v7309 = vmul.f32 %v7245, 0.7978846
        %v7310 = vmul.f32 %v7246, 0.7978846
        %v7311 = vmul.f32 %v7247, 0.7978846
        %v7312 = vmul.f32 %v7248, 0.7978846
        %v7313 = vmul.f32 %v7249, 0.7978846
        %v7314 = vmul.f32 %v7250, 0.7978846
        %v7315 = vmul.f32 %v7251, 0.7978846
        %v7316 = vmul.f32 %v7252, 0.7978846
        %v7317 = vmul.f32 %v7253, 0.7978846
        %v7318 = vmul.f32 %v7254, 0.7978846
        %v7319 = vtanh.pop %v7255
        %v7320 = vtanh.pop %v7256
        %v7321 = vtanh.pop %v7257
        %v7322 = vtanh.pop %v7258
        %v7323 = vtanh.pop %v7259
        %v7324 = vtanh.pop %v7260
        %v7325 = vtanh.pop %v7261
        %v7326 = vtanh.pop %v7262
        %v7327 = vtanh.pop %v7263
        %v7328 = vtanh.pop %v7264
        %v7329 = vtanh.pop %v7265
        %v7330 = vtanh.pop %v7266
        %v7331 = vtanh.pop %v7267
        %v7332 = vtanh.pop %v7268
        %v7333 = vtanh.pop %v7269
        %v7334 = vtanh.pop %v7270
        %v7335 = vtanh.pop %v7271
        %v7336 = vtanh.pop %v7272
        %v7337 = vtanh.pop %v7273
        %v7338 = vtanh.pop %v7274
        %v7339 = vtanh.pop %v7275
        %v7340 = vtanh.pop %v7276
        %v7341 = vtanh.pop %v7277
        %v7342 = vtanh.pop %v7278
        %v7343 = vtanh.pop %v7279
        %v7344 = vtanh.pop %v7280
        %v7345 = vtanh.pop %v7281
        %v7346 = vtanh.pop %v7282
        %v7347 = vtanh.pop %v7283
        %v7348 = vtanh.pop %v7284
        %v7349 = vtanh.pop %v7285
        %v7350 = vtanh.pop %v7286
        %v7351 = vtanh.pop %v7287
        %v7352 = vtanh.pop %v7288
        %v7353 = vtanh.pop %v7289
        %v7354 = vtanh.pop %v7290
        %v7355 = vtanh.pop %v7291
        %v7356 = vtanh.pop %v7292
        %v7357 = vtanh.pop %v7293
        %v7358 = vtanh.pop %v7294
        %v7359 = vtanh.pop %v7295
        %v7360 = vtanh.pop %v7296
        %v7361 = vtanh.pop %v7297
        %v7362 = vtanh.pop %v7298
        %v7363 = vtanh.pop %v7299
        %v7364 = vtanh.pop %v7300
        %v7365 = vtanh.pop %v7301
        %v7366 = vtanh.pop %v7302
        %v7367 = vtanh.pop %v7303
        %v7368 = vtanh.pop %v7304
        %v7369 = vtanh.pop %v7305
        %v7370 = vtanh.pop %v7306
        %v7371 = vtanh.pop %v7307
        %v7372 = vtanh.pop %v7308
        %v7373 = vtanh.pop %v7309
        %v7374 = vtanh.pop %v7310
        %v7375 = vtanh.pop %v7311
        %v7376 = vtanh.pop %v7312
        %v7377 = vtanh.pop %v7313
        %v7378 = vtanh.pop %v7314
        %v7379 = vtanh.pop %v7315
        %v7380 = vtanh.pop %v7316
        %v7381 = vtanh.pop %v7317
        %v7382 = vtanh.pop %v7318
        %v7383 = vadd.f32 %v7319, 1.0
        %v7384 = vadd.f32 %v7320, 1.0
        %v7385 = vadd.f32 %v7321, 1.0
        %v7386 = vadd.f32 %v7322, 1.0
        %v7387 = vadd.f32 %v7323, 1.0
        %v7388 = vadd.f32 %v7324, 1.0
        %v7389 = vadd.f32 %v7325, 1.0
        %v7390 = vadd.f32 %v7326, 1.0
        %v7391 = vadd.f32 %v7327, 1.0
        %v7392 = vadd.f32 %v7328, 1.0
        %v7393 = vadd.f32 %v7329, 1.0
        %v7394 = vadd.f32 %v7330, 1.0
        %v7395 = vadd.f32 %v7331, 1.0
        %v7396 = vadd.f32 %v7332, 1.0
        %v7397 = vadd.f32 %v7333, 1.0
        %v7398 = vadd.f32 %v7334, 1.0
        %v7399 = vadd.f32 %v7335, 1.0
        %v7400 = vadd.f32 %v7336, 1.0
        %v7401 = vadd.f32 %v7337, 1.0
        %v7402 = vadd.f32 %v7338, 1.0
        %v7403 = vadd.f32 %v7339, 1.0
        %v7404 = vadd.f32 %v7340, 1.0
        %v7405 = vadd.f32 %v7341, 1.0
        %v7406 = vadd.f32 %v7342, 1.0
        %v7407 = vadd.f32 %v7343, 1.0
        %v7408 = vadd.f32 %v7344, 1.0
        %v7409 = vadd.f32 %v7345, 1.0
        %v7410 = vadd.f32 %v7346, 1.0
        %v7411 = vadd.f32 %v7347, 1.0
        %v7412 = vadd.f32 %v7348, 1.0
        %v7413 = vadd.f32 %v7349, 1.0
        %v7414 = vadd.f32 %v7350, 1.0
        %v7415 = vadd.f32 %v7351, 1.0
        %v7416 = vadd.f32 %v7352, 1.0
        %v7417 = vadd.f32 %v7353, 1.0
        %v7418 = vadd.f32 %v7354, 1.0
        %v7419 = vadd.f32 %v7355, 1.0
        %v7420 = vadd.f32 %v7356, 1.0
        %v7421 = vadd.f32 %v7357, 1.0
        %v7422 = vadd.f32 %v7358, 1.0
        %v7423 = vadd.f32 %v7359, 1.0
        %v7424 = vadd.f32 %v7360, 1.0
        %v7425 = vadd.f32 %v7361, 1.0
        %v7426 = vadd.f32 %v7362, 1.0
        %v7427 = vadd.f32 %v7363, 1.0
        %v7428 = vadd.f32 %v7364, 1.0
        %v7429 = vadd.f32 %v7365, 1.0
        %v7430 = vadd.f32 %v7366, 1.0
        %v7431 = vadd.f32 %v7367, 1.0
        %v7432 = vadd.f32 %v7368, 1.0
        %v7433 = vadd.f32 %v7369, 1.0
        %v7434 = vadd.f32 %v7370, 1.0
        %v7435 = vadd.f32 %v7371, 1.0
        %v7436 = vadd.f32 %v7372, 1.0
        %v7437 = vadd.f32 %v7373, 1.0
        %v7438 = vadd.f32 %v7374, 1.0
        %v7439 = vadd.f32 %v7375, 1.0
        %v7440 = vadd.f32 %v7376, 1.0
        %v7441 = vadd.f32 %v7377, 1.0
        %v7442 = vadd.f32 %v7378, 1.0
        %v7443 = vadd.f32 %v7379, 1.0
        %v7444 = vadd.f32 %v7380, 1.0
        %v7445 = vadd.f32 %v7381, 1.0
        %v7446 = vadd.f32 %v7382, 1.0
        %v7447 = vmul.f32 %v7383, 0.5
        %v7448 = vmul.f32 %v7384, 0.5
        %v7449 = vmul.f32 %v7385, 0.5
        %v7450 = vmul.f32 %v7386, 0.5
        %v7451 = vmul.f32 %v7387, 0.5
        %v7452 = vmul.f32 %v7388, 0.5
        %v7453 = vmul.f32 %v7389, 0.5
        %v7454 = vmul.f32 %v7390, 0.5
        %v7455 = vmul.f32 %v7391, 0.5
        %v7456 = vmul.f32 %v7392, 0.5
        %v7457 = vmul.f32 %v7393, 0.5
        %v7458 = vmul.f32 %v7394, 0.5
        %v7459 = vmul.f32 %v7395, 0.5
        %v7460 = vmul.f32 %v7396, 0.5
        %v7461 = vmul.f32 %v7397, 0.5
        %v7462 = vmul.f32 %v7398, 0.5
        %v7463 = vmul.f32 %v7399, 0.5
        %v7464 = vmul.f32 %v7400, 0.5
        %v7465 = vmul.f32 %v7401, 0.5
        %v7466 = vmul.f32 %v7402, 0.5
        %v7467 = vmul.f32 %v7403, 0.5
        %v7468 = vmul.f32 %v7404, 0.5
        %v7469 = vmul.f32 %v7405, 0.5
        %v7470 = vmul.f32 %v7406, 0.5
        %v7471 = vmul.f32 %v7407, 0.5
        %v7472 = vmul.f32 %v7408, 0.5
        %v7473 = vmul.f32 %v7409, 0.5
        %v7474 = vmul.f32 %v7410, 0.5
        %v7475 = vmul.f32 %v7411, 0.5
        %v7476 = vmul.f32 %v7412, 0.5
        %v7477 = vmul.f32 %v7413, 0.5
        %v7478 = vmul.f32 %v7414, 0.5
        %v7479 = vmul.f32 %v7415, 0.5
        %v7480 = vmul.f32 %v7416, 0.5
        %v7481 = vmul.f32 %v7417, 0.5
        %v7482 = vmul.f32 %v7418, 0.5
        %v7483 = vmul.f32 %v7419, 0.5
        %v7484 = vmul.f32 %v7420, 0.5
        %v7485 = vmul.f32 %v7421, 0.5
        %v7486 = vmul.f32 %v7422, 0.5
        %v7487 = vmul.f32 %v7423, 0.5
        %v7488 = vmul.f32 %v7424, 0.5
        %v7489 = vmul.f32 %v7425, 0.5
        %v7490 = vmul.f32 %v7426, 0.5
        %v7491 = vmul.f32 %v7427, 0.5
        %v7492 = vmul.f32 %v7428, 0.5
        %v7493 = vmul.f32 %v7429, 0.5
        %v7494 = vmul.f32 %v7430, 0.5
        %v7495 = vmul.f32 %v7431, 0.5
        %v7496 = vmul.f32 %v7432, 0.5
        %v7497 = vmul.f32 %v7433, 0.5
        %v7498 = vmul.f32 %v7434, 0.5
        %v7499 = vmul.f32 %v7435, 0.5
        %v7500 = vmul.f32 %v7436, 0.5
        %v7501 = vmul.f32 %v7437, 0.5
        %v7502 = vmul.f32 %v7438, 0.5
        %v7503 = vmul.f32 %v7439, 0.5
        %v7504 = vmul.f32 %v7440, 0.5
        %v7505 = vmul.f32 %v7441, 0.5
        %v7506 = vmul.f32 %v7442, 0.5
        %v7507 = vmul.f32 %v7443, 0.5
        %v7508 = vmul.f32 %v7444, 0.5
        %v7509 = vmul.f32 %v7445, 0.5
        %v7510 = vmul.f32 %v7446, 0.5
        %v7511 = vmul.f32 %v6935, %v7447
        %v7512 = vmul.f32 %v6936, %v7448
        %v7513 = vmul.f32 %v6937, %v7449
        %v7514 = vmul.f32 %v6938, %v7450
        %v7515 = vmul.f32 %v6939, %v7451
        %v7516 = vmul.f32 %v6940, %v7452
        %v7517 = vmul.f32 %v6941, %v7453
        %v7518 = vmul.f32 %v6942, %v7454
        %v7519 = vmul.f32 %v6943, %v7455
        %v7520 = vmul.f32 %v6944, %v7456
        %v7521 = vmul.f32 %v6945, %v7457
        %v7522 = vmul.f32 %v6946, %v7458
        %v7523 = vmul.f32 %v6947, %v7459
        %v7524 = vmul.f32 %v6948, %v7460
        %v7525 = vmul.f32 %v6949, %v7461
        %v7526 = vmul.f32 %v6950, %v7462
        %v7527 = vmul.f32 %v6951, %v7463
        %v7528 = vmul.f32 %v6952, %v7464
        %v7529 = vmul.f32 %v6953, %v7465
        %v7530 = vmul.f32 %v6954, %v7466
        %v7531 = vmul.f32 %v6955, %v7467
        %v7532 = vmul.f32 %v6956, %v7468
        %v7533 = vmul.f32 %v6957, %v7469
        %v7534 = vmul.f32 %v6958, %v7470
        %v7535 = vmul.f32 %v6959, %v7471
        %v7536 = vmul.f32 %v6960, %v7472
        %v7537 = vmul.f32 %v6961, %v7473
        %v7538 = vmul.f32 %v6962, %v7474
        %v7539 = vmul.f32 %v6963, %v7475
        %v7540 = vmul.f32 %v6964, %v7476
        %v7541 = vmul.f32 %v6965, %v7477
        %v7542 = vmul.f32 %v6966, %v7478
        %v7543 = vmul.f32 %v6967, %v7479
        %v7544 = vmul.f32 %v6968, %v7480
        %v7545 = vmul.f32 %v6969, %v7481
        %v7546 = vmul.f32 %v6970, %v7482
        %v7547 = vmul.f32 %v6971, %v7483
        %v7548 = vmul.f32 %v6972, %v7484
        %v7549 = vmul.f32 %v6973, %v7485
        %v7550 = vmul.f32 %v6974, %v7486
        %v7551 = vmul.f32 %v6975, %v7487
        %v7552 = vmul.f32 %v6976, %v7488
        %v7553 = vmul.f32 %v6977, %v7489
        %v7554 = vmul.f32 %v6978, %v7490
        %v7555 = vmul.f32 %v6979, %v7491
        %v7556 = vmul.f32 %v6980, %v7492
        %v7557 = vmul.f32 %v6981, %v7493
        %v7558 = vmul.f32 %v6982, %v7494
        %v7559 = vmul.f32 %v6983, %v7495
        %v7560 = vmul.f32 %v6984, %v7496
        %v7561 = vmul.f32 %v6985, %v7497
        %v7562 = vmul.f32 %v6986, %v7498
        %v7563 = vmul.f32 %v6987, %v7499
        %v7564 = vmul.f32 %v6988, %v7500
        %v7565 = vmul.f32 %v6989, %v7501
        %v7566 = vmul.f32 %v6990, %v7502
        %v7567 = vmul.f32 %v6991, %v7503
        %v7568 = vmul.f32 %v6992, %v7504
        %v7569 = vmul.f32 %v6993, %v7505
        %v7570 = vmul.f32 %v6994, %v7506
        %v7571 = vmul.f32 %v6995, %v7507
        %v7572 = vmul.f32 %v6996, %v7508
        %v7573 = vmul.f32 %v6997, %v7509
        %v7574 = vmul.f32 %v6998, %v7510
        %v7575 = vpack.c.bf16 %v7527, %v7511
        %v7576 = vpack.c.bf16 %v7528, %v7512
        %v7577 = vpack.c.bf16 %v7529, %v7513
        %v7578 = vpack.c.bf16 %v7530, %v7514
        %v7579 = vpack.c.bf16 %v7531, %v7515
        %v7580 = vpack.c.bf16 %v7532, %v7516
        %v7581 = vpack.c.bf16 %v7533, %v7517
        %v7582 = vpack.c.bf16 %v7534, %v7518
        %v7583 = vpack.c.bf16 %v7535, %v7519
        %v7584 = vpack.c.bf16 %v7536, %v7520
        %v7585 = vpack.c.bf16 %v7537, %v7521
        %v7586 = vpack.c.bf16 %v7538, %v7522
        %v7587 = vpack.c.bf16 %v7539, %v7523
        %v7588 = vpack.c.bf16 %v7540, %v7524
        %v7589 = vpack.c.bf16 %v7541, %v7525
        %v7590 = vpack.c.bf16 %v7542, %v7526
        %v7591 = vpack.c.bf16 %v7559, %v7543
        %v7592 = vpack.c.bf16 %v7560, %v7544
        %v7593 = vpack.c.bf16 %v7561, %v7545
        %v7594 = vpack.c.bf16 %v7562, %v7546
        %v7595 = vpack.c.bf16 %v7563, %v7547
        %v7596 = vpack.c.bf16 %v7564, %v7548
        %v7597 = vpack.c.bf16 %v7565, %v7549
        %v7598 = vpack.c.bf16 %v7566, %v7550
        %v7599 = vpack.c.bf16 %v7567, %v7551
        %v7600 = vpack.c.bf16 %v7568, %v7552
        %v7601 = vpack.c.bf16 %v7569, %v7553
        %v7602 = vpack.c.bf16 %v7570, %v7554
        %v7603 = vpack.c.bf16 %v7571, %v7555
        %v7604 = vpack.c.bf16 %v7572, %v7556
        %v7605 = vpack.c.bf16 %v7573, %v7557
        %v7606 = vpack.c.bf16 %v7574, %v7558
        %7608 = vset.pattern.permute.xlu0 9
        %7609 = vperm.xlu0 %7608, %v1062
        %v7610 = vpop.permute.xlu0 %7609
        %v7613 = vsel %vm4508, %v1056, 0
        %7615 = vmatprep.subr.bf16.mxu0 %v7576
        %7616 = vmatpush1.bf16.msra.mxu0 %v7575
        %7617 = vmatprep.subr.bf16.mxu0 %v7592
        %7618 = vmatpush1.bf16.msra.mxu0 %v7591
        %7619 = vmatprep.subr.bf16.mxu0 0
        %7620 = vmatpush1.bf16.msra.mxu0 0
        %7621 = vmatprep.subr.bf16.mxu0 0
        %7622 = vmatpush1.bf16.msra.mxu0 0
        %7623 = vmatprep.subr.bf16.mxu0 0
        %7624 = vmatpush1.bf16.msra.mxu0 0
        %7625 = vmatprep.subr.bf16.mxu0 0
        %7626 = vmatpush1.bf16.msra.mxu0 0
        %7627 = vmatprep.subr.bf16.mxu0 0
        %7628 = vmatpush1.bf16.msra.mxu0 0
        %7629 = vmatprep.subr.bf16.mxu0 0
        %7630 = vmatpush1.bf16.msra.mxu0 0
        %7631 = vmatprep.subr.bf16.mxu0 0
        %7632 = vmatpush1.bf16.msra.mxu0 0
        %7633 = vmatprep.subr.bf16.mxu0 0
        %7634 = vmatpush1.bf16.msra.mxu0 0
        %7635 = vmatprep.subr.bf16.mxu0 0
        %7636 = vmatpush1.bf16.msra.mxu0 0
        %7637 = vmatprep.subr.bf16.mxu0 0
        %7638 = vmatpush1.bf16.msra.mxu0 0
        %7639 = vmatprep.subr.bf16.mxu0 0
        %7640 = vmatpush1.bf16.msra.mxu0 0
        %7641 = vmatprep.subr.bf16.mxu0 0
        %7642 = vmatpush1.bf16.msra.mxu0 0
        %7643 = vmatprep.subr.bf16.mxu0 0
        %7644 = vmatpush1.bf16.msra.mxu0 0
        %7645 = vmatprep.subr.bf16.mxu0 0
        %7646 = vmatpush1.bf16.msra.mxu0 0
        %7647 = vmatprep.mubr.bf16.mxu0 0
        %7648 = vmatmul.mubr.bf16.gmra.mrb[0].mxu0 %v7613
        %v7649 = vpop.f32.mrb[0].mxu0
        %v7650 = vadd.f32 %v7610, %v7649
        %v7651 = vpop.f32.mrb[0].mxu0
        %v7652 = vadd.f32 %v7610, %v7651
        %v7653 = vpop.f32.mrb[0].mxu0
        %v7654 = vpop.f32.mrb[0].mxu0
        %7655 = vdwg.mxu0
        %7656 = vmatprep.subr.bf16.mxu0 %v7578
        %7657 = vmatpush1.bf16.msra.mxu0 %v7577
        %7658 = vmatprep.subr.bf16.mxu0 %v7594
        %7659 = vmatpush1.bf16.msra.mxu0 %v7593
        %7660 = vmatprep.subr.bf16.mxu0 0
        %7661 = vmatpush1.bf16.msra.mxu0 0
        %7662 = vmatprep.subr.bf16.mxu0 0
        %7663 = vmatpush1.bf16.msra.mxu0 0
        %7664 = vmatprep.subr.bf16.mxu0 0
        %7665 = vmatpush1.bf16.msra.mxu0 0
        %7666 = vmatprep.subr.bf16.mxu0 0
        %7667 = vmatpush1.bf16.msra.mxu0 0
        %7668 = vmatprep.subr.bf16.mxu0 0
        %7669 = vmatpush1.bf16.msra.mxu0 0
        %7670 = vmatprep.subr.bf16.mxu0 0
        %7671 = vmatpush1.bf16.msra.mxu0 0
        %7672 = vmatprep.subr.bf16.mxu0 0
        %7673 = vmatpush1.bf16.msra.mxu0 0
        %7674 = vmatprep.subr.bf16.mxu0 0
        %7675 = vmatpush1.bf16.msra.mxu0 0
        %7676 = vmatprep.subr.bf16.mxu0 0
        %7677 = vmatpush1.bf16.msra.mxu0 0
        %7678 = vmatprep.subr.bf16.mxu0 0
        %7679 = vmatpush1.bf16.msra.mxu0 0
        %7680 = vmatprep.subr.bf16.mxu0 0
        %7681 = vmatpush1.bf16.msra.mxu0 0
        %7682 = vmatprep.subr.bf16.mxu0 0
        %7683 = vmatpush1.bf16.msra.mxu0 0
        %7684 = vmatprep.subr.bf16.mxu0 0
        %7685 = vmatpush1.bf16.msra.mxu0 0
        %7686 = vmatprep.subr.bf16.mxu0 0
        %7687 = vmatpush1.bf16.msra.mxu0 0
        %7688 = vmatprep.mubr.bf16.mxu0 0
        %7689 = vmatmul.mubr.bf16.gmra.mrb[0].mxu0 %v7613
        %v7690 = vpop.f32.mrb[0].mxu0
        %v7691 = vadd.f32 %v7610, %v7690
        %v7692 = vpop.f32.mrb[0].mxu0
        %v7693 = vadd.f32 %v7610, %v7692
        %v7694 = vpop.f32.mrb[0].mxu0
        %v7695 = vpop.f32.mrb[0].mxu0
        %7696 = vdwg.mxu0
        %7697 = vmatprep.subr.bf16.mxu0 %v7580
        %7698 = vmatpush1.bf16.msra.mxu0 %v7579
        %7699 = vmatprep.subr.bf16.mxu0 %v7596
        %7700 = vmatpush1.bf16.msra.mxu0 %v7595
        %7701 = vmatprep.subr.bf16.mxu0 0
        %7702 = vmatpush1.bf16.msra.mxu0 0
        %7703 = vmatprep.subr.bf16.mxu0 0
        %7704 = vmatpush1.bf16.msra.mxu0 0
        %7705 = vmatprep.subr.bf16.mxu0 0
        %7706 = vmatpush1.bf16.msra.mxu0 0
        %7707 = vmatprep.subr.bf16.mxu0 0
        %7708 = vmatpush1.bf16.msra.mxu0 0
        %7709 = vmatprep.subr.bf16.mxu0 0
        %7710 = vmatpush1.bf16.msra.mxu0 0
        %7711 = vmatprep.subr.bf16.mxu0 0
        %7712 = vmatpush1.bf16.msra.mxu0 0
        %7713 = vmatprep.subr.bf16.mxu0 0
        %7714 = vmatpush1.bf16.msra.mxu0 0
        %7715 = vmatprep.subr.bf16.mxu0 0
        %7716 = vmatpush1.bf16.msra.mxu0 0
        %7717 = vmatprep.subr.bf16.mxu0 0
        %7718 = vmatpush1.bf16.msra.mxu0 0
        %7719 = vmatprep.subr.bf16.mxu0 0
        %7720 = vmatpush1.bf16.msra.mxu0 0
        %7721 = vmatprep.subr.bf16.mxu0 0
        %7722 = vmatpush1.bf16.msra.mxu0 0
        %7723 = vmatprep.subr.bf16.mxu0 0
        %7724 = vmatpush1.bf16.msra.mxu0 0
        %7725 = vmatprep.subr.bf16.mxu0 0
        %7726 = vmatpush1.bf16.msra.mxu0 0
        %7727 = vmatprep.subr.bf16.mxu0 0
        %7728 = vmatpush1.bf16.msra.mxu0 0
        %7729 = vmatprep.mubr.bf16.mxu0 0
        %7730 = vmatmul.mubr.bf16.gmra.mrb[0].mxu0 %v7613
        %v7731 = vpop.f32.mrb[0].mxu0
        %v7732 = vadd.f32 %v7610, %v7731
        %v7733 = vpop.f32.mrb[0].mxu0
        %v7734 = vadd.f32 %v7610, %v7733
        %v7735 = vpop.f32.mrb[0].mxu0
        %v7736 = vpop.f32.mrb[0].mxu0
        %7737 = vdwg.mxu0
        %7738 = vmatprep.subr.bf16.mxu0 %v7582
        %7739 = vmatpush1.bf16.msra.mxu0 %v7581
        %7740 = vmatprep.subr.bf16.mxu0 %v7598
        %7741 = vmatpush1.bf16.msra.mxu0 %v7597
        %7742 = vmatprep.subr.bf16.mxu0 0
        %7743 = vmatpush1.bf16.msra.mxu0 0
        %7744 = vmatprep.subr.bf16.mxu0 0
        %7745 = vmatpush1.bf16.msra.mxu0 0
        %7746 = vmatprep.subr.bf16.mxu0 0
        %7747 = vmatpush1.bf16.msra.mxu0 0
        %7748 = vmatprep.subr.bf16.mxu0 0
        %7749 = vmatpush1.bf16.msra.mxu0 0
        %7750 = vmatprep.subr.bf16.mxu0 0
        %7751 = vmatpush1.bf16.msra.mxu0 0
        %7752 = vmatprep.subr.bf16.mxu0 0
        %7753 = vmatpush1.bf16.msra.mxu0 0
        %7754 = vmatprep.subr.bf16.mxu0 0
        %7755 = vmatpush1.bf16.msra.mxu0 0
        %7756 = vmatprep.subr.bf16.mxu0 0
        %7757 = vmatpush1.bf16.msra.mxu0 0
        %7758 = vmatprep.subr.bf16.mxu0 0
        %7759 = vmatpush1.bf16.msra.mxu0 0
        %7760 = vmatprep.subr.bf16.mxu0 0
        %7761 = vmatpush1.bf16.msra.mxu0 0
        %7762 = vmatprep.subr.bf16.mxu0 0
        %7763 = vmatpush1.bf16.msra.mxu0 0
        %7764 = vmatprep.subr.bf16.mxu0 0
        %7765 = vmatpush1.bf16.msra.mxu0 0
        %7766 = vmatprep.subr.bf16.mxu0 0
        %7767 = vmatpush1.bf16.msra.mxu0 0
        %7768 = vmatprep.subr.bf16.mxu0 0
        %7769 = vmatpush1.bf16.msra.mxu0 0
        %7770 = vmatprep.mubr.bf16.mxu0 0
        %7771 = vmatmul.mubr.bf16.gmra.mrb[0].mxu0 %v7613
        %v7772 = vpop.f32.mrb[0].mxu0
        %v7773 = vadd.f32 %v7610, %v7772
        %v7774 = vpop.f32.mrb[0].mxu0
        %v7775 = vadd.f32 %v7610, %v7774
        %v7776 = vpop.f32.mrb[0].mxu0
        %v7777 = vpop.f32.mrb[0].mxu0
        %7778 = vdwg.mxu0
        %7779 = vmatprep.subr.bf16.mxu0 %v7584
        %7780 = vmatpush1.bf16.msra.mxu0 %v7583
        %7781 = vmatprep.subr.bf16.mxu0 %v7600
        %7782 = vmatpush1.bf16.msra.mxu0 %v7599
        %7783 = vmatprep.subr.bf16.mxu0 0
        %7784 = vmatpush1.bf16.msra.mxu0 0
        %7785 = vmatprep.subr.bf16.mxu0 0
        %7786 = vmatpush1.bf16.msra.mxu0 0
        %7787 = vmatprep.subr.bf16.mxu0 0
        %7788 = vmatpush1.bf16.msra.mxu0 0
        %7789 = vmatprep.subr.bf16.mxu0 0
        %7790 = vmatpush1.bf16.msra.mxu0 0
        %7791 = vmatprep.subr.bf16.mxu0 0
        %7792 = vmatpush1.bf16.msra.mxu0 0
        %7793 = vmatprep.subr.bf16.mxu0 0
        %7794 = vmatpush1.bf16.msra.mxu0 0
        %7795 = vmatprep.subr.bf16.mxu0 0
        %7796 = vmatpush1.bf16.msra.mxu0 0
        %7797 = vmatprep.subr.bf16.mxu0 0
        %7798 = vmatpush1.bf16.msra.mxu0 0
        %7799 = vmatprep.subr.bf16.mxu0 0
        %7800 = vmatpush1.bf16.msra.mxu0 0
        %7801 = vmatprep.subr.bf16.mxu0 0
        %7802 = vmatpush1.bf16.msra.mxu0 0
        %7803 = vmatprep.subr.bf16.mxu0 0
        %7804 = vmatpush1.bf16.msra.mxu0 0
        %7805 = vmatprep.subr.bf16.mxu0 0
        %7806 = vmatpush1.bf16.msra.mxu0 0
        %7807 = vmatprep.subr.bf16.mxu0 0
        %7808 = vmatpush1.bf16.msra.mxu0 0
        %7809 = vmatprep.subr.bf16.mxu0 0
        %7810 = vmatpush1.bf16.msra.mxu0 0
        %7811 = vmatprep.mubr.bf16.mxu0 0
        %7812 = vmatmul.mubr.bf16.gmra.mrb[0].mxu0 %v7613
        %v7813 = vpop.f32.mrb[0].mxu0
        %v7814 = vadd.f32 %v7610, %v7813
        %v7815 = vpop.f32.mrb[0].mxu0
        %v7816 = vadd.f32 %v7610, %v7815
        %v7817 = vpop.f32.mrb[0].mxu0
        %v7818 = vpop.f32.mrb[0].mxu0
        %7819 = vdwg.mxu0
        %7820 = vmatprep.subr.bf16.mxu0 %v7586
        %7821 = vmatpush1.bf16.msra.mxu0 %v7585
        %7822 = vmatprep.subr.bf16.mxu0 %v7602
        %7823 = vmatpush1.bf16.msra.mxu0 %v7601
        %7824 = vmatprep.subr.bf16.mxu0 0
        %7825 = vmatpush1.bf16.msra.mxu0 0
        %7826 = vmatprep.subr.bf16.mxu0 0
        %7827 = vmatpush1.bf16.msra.mxu0 0
        %7828 = vmatprep.subr.bf16.mxu0 0
        %7829 = vmatpush1.bf16.msra.mxu0 0
        %7830 = vmatprep.subr.bf16.mxu0 0
        %7831 = vmatpush1.bf16.msra.mxu0 0
        %7832 = vmatprep.subr.bf16.mxu0 0
        %7833 = vmatpush1.bf16.msra.mxu0 0
        %7834 = vmatprep.subr.bf16.mxu0 0
        %7835 = vmatpush1.bf16.msra.mxu0 0
        %7836 = vmatprep.subr.bf16.mxu0 0
        %7837 = vmatpush1.bf16.msra.mxu0 0
        %7838 = vmatprep.subr.bf16.mxu0 0
        %7839 = vmatpush1.bf16.msra.mxu0 0
        %7840 = vmatprep.subr.bf16.mxu0 0
        %7841 = vmatpush1.bf16.msra.mxu0 0
        %7842 = vmatprep.subr.bf16.mxu0 0
        %7843 = vmatpush1.bf16.msra.mxu0 0
        %7844 = vmatprep.subr.bf16.mxu0 0
        %7845 = vmatpush1.bf16.msra.mxu0 0
        %7846 = vmatprep.subr.bf16.mxu0 0
        %7847 = vmatpush1.bf16.msra.mxu0 0
        %7848 = vmatprep.subr.bf16.mxu0 0
        %7849 = vmatpush1.bf16.msra.mxu0 0
        %7850 = vmatprep.subr.bf16.mxu0 0
        %7851 = vmatpush1.bf16.msra.mxu0 0
        %7852 = vmatprep.mubr.bf16.mxu0 0
        %7853 = vmatmul.mubr.bf16.gmra.mrb[0].mxu0 %v7613
        %v7854 = vpop.f32.mrb[0].mxu0
        %v7855 = vadd.f32 %v7610, %v7854
        %v7856 = vpop.f32.mrb[0].mxu0
        %v7857 = vadd.f32 %v7610, %v7856
        %v7858 = vpop.f32.mrb[0].mxu0
        %v7859 = vpop.f32.mrb[0].mxu0
        %7860 = vdwg.mxu0
        %7861 = vmatprep.subr.bf16.mxu0 %v7588
        %7862 = vmatpush1.bf16.msra.mxu0 %v7587
        %7863 = vmatprep.subr.bf16.mxu0 %v7604
        %7864 = vmatpush1.bf16.msra.mxu0 %v7603
        %7865 = vmatprep.subr.bf16.mxu0 0
        %7866 = vmatpush1.bf16.msra.mxu0 0
        %7867 = vmatprep.subr.bf16.mxu0 0
        %7868 = vmatpush1.bf16.msra.mxu0 0
        %7869 = vmatprep.subr.bf16.mxu0 0
        %7870 = vmatpush1.bf16.msra.mxu0 0
        %7871 = vmatprep.subr.bf16.mxu0 0
        %7872 = vmatpush1.bf16.msra.mxu0 0
        %7873 = vmatprep.subr.bf16.mxu0 0
        %7874 = vmatpush1.bf16.msra.mxu0 0
        %7875 = vmatprep.subr.bf16.mxu0 0
        %7876 = vmatpush1.bf16.msra.mxu0 0
        %7877 = vmatprep.subr.bf16.mxu0 0
        %7878 = vmatpush1.bf16.msra.mxu0 0
        %7879 = vmatprep.subr.bf16.mxu0 0
        %7880 = vmatpush1.bf16.msra.mxu0 0
        %7881 = vmatprep.subr.bf16.mxu0 0
        %7882 = vmatpush1.bf16.msra.mxu0 0
        %7883 = vmatprep.subr.bf16.mxu0 0
        %7884 = vmatpush1.bf16.msra.mxu0 0
        %7885 = vmatprep.subr.bf16.mxu0 0
        %7886 = vmatpush1.bf16.msra.mxu0 0
        %7887 = vmatprep.subr.bf16.mxu0 0
        %7888 = vmatpush1.bf16.msra.mxu0 0
        %7889 = vmatprep.subr.bf16.mxu0 0
        %7890 = vmatpush1.bf16.msra.mxu0 0
        %7891 = vmatprep.subr.bf16.mxu0 0
        %7892 = vmatpush1.bf16.msra.mxu0 0
        %7893 = vmatprep.mubr.bf16.mxu0 0
        %7894 = vmatmul.mubr.bf16.gmra.mrb[0].mxu0 %v7613
        %v7895 = vpop.f32.mrb[0].mxu0
        %v7896 = vadd.f32 %v7610, %v7895
        %v7897 = vpop.f32.mrb[0].mxu0
        %v7898 = vadd.f32 %v7610, %v7897
        %v7899 = vpop.f32.mrb[0].mxu0
        %v7900 = vpop.f32.mrb[0].mxu0
        %7901 = vdwg.mxu0
        %7902 = vmatprep.subr.bf16.mxu0 %v7590
        %7903 = vmatpush1.bf16.msra.mxu0 %v7589
        %7904 = vmatprep.subr.bf16.mxu0 %v7606
        %7905 = vmatpush1.bf16.msra.mxu0 %v7605
        %7906 = vmatprep.subr.bf16.mxu0 0
        %7907 = vmatpush1.bf16.msra.mxu0 0
        %7908 = vmatprep.subr.bf16.mxu0 0
        %7909 = vmatpush1.bf16.msra.mxu0 0
        %7910 = vmatprep.subr.bf16.mxu0 0
        %7911 = vmatpush1.bf16.msra.mxu0 0
        %7912 = vmatprep.subr.bf16.mxu0 0
        %7913 = vmatpush1.bf16.msra.mxu0 0
        %7914 = vmatprep.subr.bf16.mxu0 0
        %7915 = vmatpush1.bf16.msra.mxu0 0
        %7916 = vmatprep.subr.bf16.mxu0 0
        %7917 = vmatpush1.bf16.msra.mxu0 0
        %7918 = vmatprep.subr.bf16.mxu0 0
        %7919 = vmatpush1.bf16.msra.mxu0 0
        %7920 = vmatprep.subr.bf16.mxu0 0
        %7921 = vmatpush1.bf16.msra.mxu0 0
        %7922 = vmatprep.subr.bf16.mxu0 0
        %7923 = vmatpush1.bf16.msra.mxu0 0
        %7924 = vmatprep.subr.bf16.mxu0 0
        %7925 = vmatpush1.bf16.msra.mxu0 0
        %7926 = vmatprep.subr.bf16.mxu0 0
        %7927 = vmatpush1.bf16.msra.mxu0 0
        %7928 = vmatprep.subr.bf16.mxu0 0
        %7929 = vmatpush1.bf16.msra.mxu0 0
        %7930 = vmatprep.subr.bf16.mxu0 0
        %7931 = vmatpush1.bf16.msra.mxu0 0
        %7932 = vmatprep.subr.bf16.mxu0 0
        %7933 = vmatpush1.bf16.msra.mxu0 0
        %7934 = vmatprep.mubr.bf16.mxu0 0
        %7935 = vmatmul.mubr.bf16.gmra.mrb[0].mxu0 %v7613
        %v7936 = vpop.f32.mrb[0].mxu0
        %v7937 = vadd.f32 %v7610, %v7936
        %v7938 = vpop.f32.mrb[0].mxu0
        %v7939 = vadd.f32 %v7610, %v7938
        %v7940 = vpop.f32.mrb[0].mxu0
        %v7941 = vpop.f32.mrb[0].mxu0
        %7942 = vdwg.mxu0
        %v7943 = vtanh.pop %v7650
        %v7944 = vtanh.pop %v7652
        %v7945 = vtanh.pop %v7691
        %v7946 = vtanh.pop %v7693
        %v7947 = vtanh.pop %v7732
        %v7948 = vtanh.pop %v7734
        %v7949 = vtanh.pop %v7773
        %v7950 = vtanh.pop %v7775
        %v7951 = vtanh.pop %v7814
        %v7952 = vtanh.pop %v7816
        %v7953 = vtanh.pop %v7855
        %v7954 = vtanh.pop %v7857
        %v7955 = vtanh.pop %v7896
        %v7956 = vtanh.pop %v7898
        %v7957 = vtanh.pop %v7937
        %v7958 = vtanh.pop %v7939
        %v7975 = vcombine.low %v7943, %v7944
        %v7976 = vcombine.low %v7945, %v7946
        %v7977 = vcombine.low %v7947, %v7948
        %v7978 = vcombine.low %v7949, %v7950
        %v7980 = vunpack.c.l.s4 1966171168
        %v7981 = vunpack.c.0.s8 %v7980
        %v7982 = vlaneseq
        %v7983 = vshrl.u32 %v7982, 7
        %v7984 = vsub.s32 %v7981, %v7983
        %v7985 = vrot.slane %v7975, %v7984
        %v7987 = vunpack.c.l.s4 1966171168
        %v7988 = vunpack.c.0.s8 %v7987
        %v7989 = vlaneseq
        %v7990 = vshrl.u32 %v7989, 7
        %v7991 = vsub.s32 %v7988, %v7990
        %v7992 = vrot.slane %v7976, %v7991
        %v7994 = vunpack.c.l.s4 1966171168
        %v7995 = vunpack.c.0.s8 %v7994
        %v7996 = vlaneseq
        %v7997 = vshrl.u32 %v7996, 7
        %v7998 = vsub.s32 %v7995, %v7997
        %v7999 = vrot.slane %v7977, %v7998
        %v8001 = vunpack.c.l.s4 1966171168
        %v8002 = vunpack.c.0.s8 %v8001
        %v8003 = vlaneseq
        %v8004 = vshrl.u32 %v8003, 7
        %v8005 = vsub.s32 %v8002, %v8004
        %v8006 = vrot.slane %v7978, %v8005
        %v8007 = vcombine.low %v7985, %v7992
        %v8008 = vcombine.low %v7999, %v8006
        %v8010 = vunpack.c.l.s4 1966171168
        %v8011 = vunpack.c.0.s8 %v8010
        %v8012 = vlaneseq
        %v8013 = vshrl.u32 %v8012, 7
        %v8014 = vsub.s32 %v8011, %v8013
        %v8015 = vrot.slane %v8007, %v8014
        %v8017 = vunpack.c.l.s4 1966171168
        %v8018 = vunpack.c.0.s8 %v8017
        %v8019 = vlaneseq
        %v8020 = vshrl.u32 %v8019, 7
        %v8021 = vsub.s32 %v8018, %v8020
        %v8022 = vrot.slane %v8008, %v8021
        %v8023 = vcombine.low %v8015, %v8022
        %v8024 = vcombine.low %v7951, %v7952
        %v8025 = vcombine.low %v7953, %v7954
        %v8026 = vcombine.low %v7955, %v7956
        %v8027 = vcombine.low %v7957, %v7958
        %v8029 = vunpack.c.l.s4 1966171168
        %v8030 = vunpack.c.0.s8 %v8029
        %v8031 = vlaneseq
        %v8032 = vshrl.u32 %v8031, 7
        %v8033 = vsub.s32 %v8030, %v8032
        %v8034 = vrot.slane %v8024, %v8033
        %v8036 = vunpack.c.l.s4 1966171168
        %v8037 = vunpack.c.0.s8 %v8036
        %v8038 = vlaneseq
        %v8039 = vshrl.u32 %v8038, 7
        %v8040 = vsub.s32 %v8037, %v8039
        %v8041 = vrot.slane %v8025, %v8040
        %v8043 = vunpack.c.l.s4 1966171168
        %v8044 = vunpack.c.0.s8 %v8043
        %v8045 = vlaneseq
        %v8046 = vshrl.u32 %v8045, 7
        %v8047 = vsub.s32 %v8044, %v8046
        %v8048 = vrot.slane %v8026, %v8047
        %v8050 = vunpack.c.l.s4 1966171168
        %v8051 = vunpack.c.0.s8 %v8050
        %v8052 = vlaneseq
        %v8053 = vshrl.u32 %v8052, 7
        %v8054 = vsub.s32 %v8051, %v8053
        %v8055 = vrot.slane %v8027, %v8054
        %v8056 = vcombine.low %v8034, %v8041
        %v8057 = vcombine.low %v8048, %v8055
        %v8059 = vunpack.c.l.s4 1966171168
        %v8060 = vunpack.c.0.s8 %v8059
        %v8061 = vlaneseq
        %v8062 = vshrl.u32 %v8061, 7
        %v8063 = vsub.s32 %v8060, %v8062
        %v8064 = vrot.slane %v8056, %v8063
        %v8066 = vunpack.c.l.s4 1966171168
        %v8067 = vunpack.c.0.s8 %v8066
        %v8068 = vlaneseq
        %v8069 = vshrl.u32 %v8068, 7
        %v8070 = vsub.s32 %v8067, %v8069
        %v8071 = vrot.slane %v8057, %v8070
        %v8072 = vcombine.low %v8064, %v8071
        %8075 = vst [vmem:[%s231] sm:$0xff] %v8023
        %8076 = vst [vmem:[%s231 + $0x8] sm:$0xff] %v8072
        %s8077 = sand.u32 %s120, 1
        %s8078 = scalar_lea.sflag [#allocation3], %s8077
        %s8079 = sand.u32 %s120, 1
        %s8080 = smul.addr %s8079, 16
        %s8081 = scalar_lea.vmem [#allocation2], %s8080
        // Predicated region
        $region37: #{sdf_decoder_forward.1} parent=35 // pred_check
          %p8082 = pneg %p130
        $region38: #{sdf_decoder_forward.1} parent=35 // pred_check_branch
          %8084 = sbr.rel (%p8082) target = $region40
        $region39: #{sdf_decoder_forward.1} parent=35 // pred_region
          %s8085 = smul.u32 16, %s18
          %s8086 = ssub.s32 24, %s8085
          %p8087 = scmp.lt.s32.totalorder %s8086, 16
          %s8088 = scalar_select %p8087, %s8086, 16
          %s8089 = smul.u32 16, %s8088
          %s8091 = ssub.s32 256, %s8089
          %8092 = vsyncadd %s8078, %s8091
          %p8093 = scmp.ne.s32.totalorder 0, %s8089
          %s8094 = smul.addr %s8085, 16
          %s8095 = scalar_lea.hbm %s4, %s8094
          %s8096 = sshll.u32 %s8088, 4
          %s8097 = sshll.u32 %s8081, 4
          %s8098 = int_to_ptr.vmem [resolvable:$true] %s8097
          %8100 = dma.vmem_to_hbm [thread:$0]  (%p8093), %s8098, %s8096, %s8095, %s8078
        $region40: #{sdf_decoder_forward.1} parent=35 // pred_fallthru
          _
      $region36: #{sdf_decoder_forward.1} parent=5 // pred_fallthru
        _
      %p8101 = scmp.le.s32.totalorder 2, %s13
      // Predicated region
      $region41: #{sdf_decoder_forward.1} parent=5 // pred_check
        %p8102 = pneg %p8101
      $region42: #{sdf_decoder_forward.1} parent=5 // pred_check_branch
        %8104 = sbr.rel (%p8102) target = $region44
      $region43: #{sdf_decoder_forward.1} parent=5 // pred_region
        %s8105 = ssub.s32 %s13, 2
        // Predicated region
        $region45: #{sdf_decoder_forward.1} parent=43 // pred_check
          %p8106 = pneg %p136
        $region46: #{sdf_decoder_forward.1} parent=43 // pred_check_branch
          %8108 = sbr.rel (%p8106) target = $region48
        $region47: #{sdf_decoder_forward.1} parent=43 // pred_region
          %s8109 = sand.u32 %s121, 1
          %s8110 = scalar_lea.sflag [#allocation3], %s8109
          %s8111 = sand.u32 %s121, 1
          %s8112 = smul.addr %s8111, 16
          %s8113 = scalar_lea.vmem [#allocation2], %s8112
          %8114 = dma.done %s8110, 256
        $region48: #{sdf_decoder_forward.1} parent=43 // pred_fallthru
          _
      $region44: #{sdf_decoder_forward.1} parent=5 // pred_fallthru
        _
    $region6: #{sdf_decoder_forward.1} parent=1 // loop_footer
      %s17 = sadd.s32 1, %s13
    $region7: #{sdf_decoder_forward.1} parent=1 // loop_footer_branch
      %12 = sbr.rel target = $region3
    $region8: #{sdf_decoder_forward.1} parent=1 // loop_exit
      _
    %8115 = vsyncpa [#allocation3], 1
    %s8116 = scalar_lea.sflag [#allocation3], 1
    %8117 = vsyncpa %s8116, 1

</llo_original>
